<compile_context>
chip_gen: v7x
topology: tpu7x:2x2x1
jax: 0.10.0
libtpu: 0.0.40
codegen_flags: <defaults>
</compile_context>

<pallas_src>
import math

import numpy as np
import jax
import jax.numpy as jnp
from jax import lax
from jax.experimental import pallas as pl
from jax.experimental.pallas import tpu as pltpu

CPAD = 128  # lane-dense channel padding (vreg lane width)


def _rup(x, m=8):
    return (x + m - 1) // m * m


# ---------------------------------------------------------------------------
# Static geometry for one Conv2d -> ReLU -> MaxPool2d block on the flat layout
# ---------------------------------------------------------------------------
def _conv_geometry(hin, win, cfg):
    k, s, p = cfg["kernel_size"], cfg["stride"], cfg["padding"]
    pk, ps = cfg["pool_kernel_size"], cfg["pool_stride"]
    hp, wp = hin + 2 * p, win + 2 * p
    oh = (hp - k) // s + 1
    ow = (wp - k) // s + 1
    ph = (oh - pk) // ps + 1
    pw = (ow - pk) // ps + 1
    # conv taps as flat row shifts in the zero-padded input layout
    tap_shifts = tuple(kh * wp + kw for kh in range(k) for kw in range(k))
    # max-pool window offsets as flat row shifts in conv-output (anchor) space
    pool_shifts = tuple(di * s * wp + dj * s for di in range(pk) for dj in range(pk))
    bs_row, bs_col = ps * s * wp, ps * s          # pooled-output anchor strides
    l_anchor = (ph - 1) * bs_row + (pw - 1) * bs_col + 1
    l_z = _rup(l_anchor + max(pool_shifts))       # conv rows computed (8-aligned)
    # pool anchors must correspond to valid conv positions (no wrap-around reads)
    assert (pw - 1) * ps + (pk - 1) <= ow - 1
    assert (ph - 1) * ps + (pk - 1) <= oh - 1
    # per-sample flat-row capacity: covers the padded image and 8-aligned tap reads
    S = _rup(max(hp * wp, l_z + max(tap_shifts)))
    return dict(k=k, s=s, p=p, pk=pk, ps=ps, hp=hp, wp=wp, oh=oh, ow=ow,
                ph=ph, pw=pw, tap_shifts=tap_shifts, pool_shifts=pool_shifts,
                bs_row=bs_row, bs_col=bs_col, l_anchor=l_anchor, l_z=l_z, S=S,
                cin=cfg["in_channels"], cout=cfg["out_channels"])


# ---------------------------------------------------------------------------
# Fully fused forward: one pallas_call for conv blocks + avgpool + classifiers
# ---------------------------------------------------------------------------
def flexible_cnn_forward(x, params, conv_cfgs, avgpool_output_size, num_chunks=None):
    B, cin0, H, W = x.shape
    assert cin0 == conv_cfgs[0]["in_channels"]
    for i in range(1, len(conv_cfgs)):
        assert conv_cfgs[i]["in_channels"] == conv_cfgs[i - 1]["out_channels"]

    geoms = []
    hin, win = H, W
    for cfg in conv_cfgs:
        g = _conv_geometry(hin, win, cfg)
        assert g["cout"] <= CPAD and g["cin"] <= CPAD  # hard scalability limit
        geoms.append(g)
        hin, win = g["ph"], g["pw"]

    avg_oh, avg_ow = avgpool_output_size
    g_last = geoms[-1]
    assert g_last["ph"] % avg_oh == 0 and g_last["pw"] % avg_ow == 0, \
        "uniform adaptive pooling only"
    # TODO(synk): non-uniform AdaptiveAvgPool2d windows (H % out != 0) not implemented.
    P = avg_oh * avg_ow
    c_last = g_last["cout"]
    R = g_last["ph"] * g_last["pw"]
    R_pad = _rup(R)

    # Batch folding: at most 2 grid steps (one per v7x TensorCore); each step
    # folds BC samples along the matmul M dimension (amortizes grid overhead
    # on single-core v5e / v6e and makes the classifier matmuls M = HB).
    if num_chunks is None:
        num_chunks = min(B, 2) if B > 1 else 1
    BC = -(-B // num_chunks)          # samples per grid step
    B_pad = num_chunks * BC
    HB = _rup(BC)                     # classifier-head rows (>= 8, aligned)

    n_conv = len(geoms)

    # ---- host-side interface plumbing (tiny) ------------------------------
    g0 = geoms[0]
    x_nhwc = jnp.transpose(x, (0, 2, 3, 1))
    x_nhwc = jnp.pad(x_nhwc, ((0, B_pad - B), (g0["p"], g0["p"]),
                              (g0["p"], g0["p"]), (0, CPAD - g0["cin"])))
    x_flat = x_nhwc.reshape(B_pad, g0["hp"] * g0["wp"], CPAD)
    x_flat = jnp.pad(x_flat, ((0, 0), (0, g0["S"] - g0["hp"] * g0["wp"]), (0, 0)))
    x_flat = x_flat.reshape(num_chunks, BC * g0["S"], CPAD)

    def _const_spec(arr):
        nd = arr.ndim
        return pl.BlockSpec(arr.shape, lambda b, _nd=nd: (0,) * _nd)

    inputs = [x_flat]
    in_specs = [pl.BlockSpec((None, BC * g0["S"], CPAD), lambda b: (b, 0, 0))]

    # conv weights: k*k taps stacked along rows, each tap a [CPAD, CPAD] block
    # (K stays 128 for every tap matmul); bias: [1, CPAD]
    for (w, b), g in zip(params["conv"], geoms):
        cout, cin, k, _ = w.shape
        wt = jnp.transpose(w, (2, 3, 1, 0)).reshape(k * k, cin, cout)
        wt = jnp.pad(wt, ((0, 0), (0, CPAD - cin), (0, CPAD - cout)))
        wm = wt.reshape(k * k * CPAD, CPAD)
        bm = jnp.pad(b, (0, CPAD - cout)).reshape(1, CPAD)
        inputs += [wm, bm]
        in_specs += [_const_spec(wm), _const_spec(bm)]

    # AdaptiveAvgPool2d (uniform) as a host-built matrix: avg = A @ pooled,
    # rows ordered (p, bc) with an 8-aligned stride HB per spatial position p.
    wh, ww = g_last["ph"] // avg_oh, g_last["pw"] // avg_ow
    a_np = np.zeros((P * HB, BC * R_pad), np.float32)
    inv = 1.0 / float(wh * ww)
    for bc in range(BC):
        for u in range(avg_oh):
            for v in range(avg_ow):
                pidx = u * avg_ow + v
                for di in range(wh):
                    for dj in range(ww):
                        r = (u * wh + di) * g_last["pw"] + (v * ww + dj)
                        a_np[pidx * HB + bc, bc * R_pad + r] = inv
    abig = jnp.asarray(a_np)
    inputs += [abig]
    in_specs += [_const_spec(abig)]

    # first classifier layer consumes the (C,H,W)-order flatten: decompose its
    # weight into P slices of shape [CPAD, CPAD] (one per avgpool position).
    fc_list = list(params["fc"])
    if fc_list:
        gw, gb = fc_list[0]
        g_relu = True
        dense_layers = [(wk, bk, True) for (wk, bk) in fc_list[1:]]
        dense_layers.append((params["final"][0], params["final"][1], False))
    else:
        gw, gb = params["final"]
        g_relu = False
        dense_layers = []
    out_f, in_f = gw.shape
    assert in_f == c_last * P and out_f <= CPAD
    gsplit = gw.T.reshape(c_last, P, out_f)            # [c, p, o]
    gsplit = jnp.transpose(gsplit, (1, 0, 2))          # [p, c, o]
    gsplit = jnp.pad(gsplit, ((0, 0), (0, CPAD - c_last), (0, CPAD - out_f)))
    gmat = gsplit.reshape(P * CPAD, CPAD)
    gbias = jnp.pad(gb, (0, CPAD - out_f)).reshape(1, CPAD)
    inputs += [gmat, gbias]
    in_specs += [_const_spec(gmat), _const_spec(gbias)]

    dense_relu_flags = []
    for (wk, bk, relu) in dense_layers:
        o, i = wk.shape
        assert i <= CPAD and o <= CPAD
        wkp = jnp.pad(wk.T, ((0, CPAD - i), (0, CPAD - o)))
        bkp = jnp.pad(bk, (0, CPAD - o)).reshape(1, CPAD)
        inputs += [wkp, bkp]
        in_specs += [_const_spec(wkp), _const_spec(bkp)]
        dense_relu_flags.append(relu)

    out_features = params["final"][0].shape[0]
    n_dense = len(dense_relu_flags)

    # VMEM scratches (all row counts multiples of 8; total well under 2 MiB).
    z_rows = max((BC - 1) * g["S"] + g["l_z"] for g in geoms)
    scratch_shapes = (
        [pltpu.VMEM((z_rows, CPAD), jnp.float32)]                       # conv out
        + [pltpu.VMEM((BC * geoms[li]["S"], CPAD), jnp.float32)         # repack
           for li in range(1, n_conv)]
        + [pltpu.VMEM((BC * R_pad, CPAD), jnp.float32),                 # pooled
           pltpu.VMEM((P * HB, CPAD), jnp.float32)]                     # avgpool
    )

    # ---- the fused kernel --------------------------------------------------
    def kernel(*refs):
        it = iter(refs)
        x_ref = next(it)
        conv_wb = [(next(it), next(it)) for _ in range(n_conv)]
        a_ref = next(it)
        g_ref = next(it)
        gb_ref = next(it)
        dense_wb = [(next(it), next(it)) for _ in range(n_dense)]
        out_ref = next(it)
        z_ref = next(it)
        rep_refs = [next(it) for _ in range(n_conv - 1)]
        pooled_ref = next(it)
        avg_ref = next(it)

        # Zero the repack scratch every step (one contiguous store): only the
        # halo rows survive, and with "parallel" megacore each TensorCore owns
        # its own scratch, so a program_id==0-gated one-time zero would leave
        # the second core's halo uninitialized on v7x.
        for rep in rep_refs:
            rep[...] = jnp.zeros_like(rep)
        if R_pad != R:
            pooled_ref[...] = jnp.zeros_like(pooled_ref)

        act_ref = x_ref                      # flat padded layout, 128 lanes
        for li, geo in enumerate(geoms):
            w_ref, b_ref = conv_wb[li]
            S, lz = geo["S"], geo["l_z"]
            Mz = (BC - 1) * S + lz           # rows covering all folded samples
            last = li == n_conv - 1

            # Conv2d as k*k ref-sliced shifted matmuls (K = 128), f32 accumulate.
            acc = None
            for t, sh in enumerate(geo["tap_shifts"]):
                lhs = act_ref[pl.ds(sh, Mz), :]
                rhs = w_ref[pl.ds(t * CPAD, CPAD), :]
                part = jnp.dot(lhs, rhs, preferred_element_type=jnp.float32)
                acc = part if acc is None else acc + part
            z_ref[pl.ds(0, Mz), :] = acc     # raw conv output (no bias/ReLU yet)

            # MaxPool fused into the repack via strided ref reads; bias + ReLU
            # applied after the max (exact: both are monotone) on the small tile.
            bias_b = jnp.broadcast_to(b_ref[...], (geo["pw"], CPAD))
            if not last:
                ng = geoms[li + 1]
                rep = rep_refs[li]
            for bc in range(BC):
                for i in range(geo["ph"]):
                    base = bc * S + i * geo["bs_row"]
                    zm = None
                    for d in geo["pool_shifts"]:
                        piece = z_ref[pl.ds(base + d, geo["pw"],
                                            stride=geo["bs_col"]), :]
                        zm = piece if zm is None else jnp.maximum(zm, piece)
                    row = jnp.maximum(zm + bias_b, 0.0)        # [pw, CPAD]
                    if not last:
                        dst = bc * ng["S"] + (i + ng["p"]) * ng["wp"] + ng["p"]
                        rep[pl.ds(dst, geo["pw"]), :] = row
                    else:
                        pooled_ref[pl.ds(bc * R_pad + i * geo["pw"],
                                         geo["pw"]), :] = row
            if not last:
                act_ref = rep

        # AdaptiveAvgPool2d (uniform windows) as one small MXU matmul.
        avg_ref[...] = jnp.dot(a_ref[...], pooled_ref[...],
                               preferred_element_type=jnp.float32)

        # Classifier head.  Dropout(p=0.5) is identity in eval mode.
        # First Linear via P spatial weight slices, M = HB aligned rows.
        h = None
        for p_idx in range(P):
            lhs = avg_ref[pl.ds(p_idx * HB, HB), :]
            rhs = g_ref[pl.ds(p_idx * CPAD, CPAD), :]
            part = jnp.dot(lhs, rhs, preferred_element_type=jnp.float32)
            h = part if h is None else h + part
        h = h + gb_ref[...]
        if g_relu:
            h = jnp.maximum(h, 0.0)
        for (wk_ref, bk_ref), relu in zip(dense_wb, dense_relu_flags):
            h = jnp.dot(h, wk_ref[...],
                        preferred_element_type=jnp.float32) + bk_ref[...]
            if relu:
                h = jnp.maximum(h, 0.0)
        out_ref[...] = h                     # [HB, CPAD] lane/sublane-dense store

    fused = pl.pallas_call(
        kernel,
        out_shape=jax.ShapeDtypeStruct((num_chunks, HB, CPAD), jnp.float32),
        grid=(num_chunks,),
        in_specs=in_specs,
        out_specs=pl.BlockSpec((None, HB, CPAD), lambda b: (b, 0, 0)),
        scratch_shapes=scratch_shapes,
        compiler_params=pltpu.CompilerParams(
            dimension_semantics=("parallel",),     # batch chunks -> v7x dual TC
            vmem_limit_bytes=64 * 1024 * 1024),
    )
    out = fused(*inputs)
    out = out[:, :BC, :].reshape(num_chunks * BC, CPAD)
    return out[:B, :out_features]


# ---------------------------------------------------------------------------
# Pure-JAX reference for correctness check
# ---------------------------------------------------------------------------
def reference_forward(x, params, conv_cfgs, avgpool_output_size):
    for (w, b), cfg in zip(params["conv"], conv_cfgs):
        s, p = cfg["stride"], cfg["padding"]
        y = lax.conv_general_dilated(
            x, w, (s, s), [(p, p), (p, p)],
            dimension_numbers=("NCHW", "OIHW", "NCHW"))
        y = jnp.maximum(y + b[None, :, None, None], 0.0)
        pk, ps = cfg["pool_kernel_size"], cfg["pool_stride"]
        x = lax.reduce_window(y, -jnp.inf, lax.max,
                              (1, 1, pk, pk), (1, 1, ps, ps), "VALID")
    B, C, H, W = x.shape
    oh, ow = avgpool_output_size
    kh, kw = H // oh, W // ow
    x = lax.reduce_window(x, 0.0, lax.add,
                          (1, 1, kh, kw), (1, 1, kh, kw), "VALID") / (kh * kw)
    x = x.reshape(B, -1)
    for (w, b) in params["fc"]:
        x = jnp.maximum(x @ w.T + b, 0.0)
    wf, bf = params["final"]
    return x @ wf.T + bf


# ---------------------------------------------------------------------------
# Deterministic parameter init (PyTorch-default-like uniform bounds)
# ---------------------------------------------------------------------------
def _init_linear(key, in_f, out_f):
    k1, k2 = jax.random.split(key)
    bound = 1.0 / math.sqrt(in_f)
    w = jax.random.uniform(k1, (out_f, in_f), jnp.float32, -bound, bound)
    b = jax.random.uniform(k2, (out_f,), jnp.float32, -bound, bound)
    return w, b


def _init_conv(key, cout, cin, k):
    k1, k2 = jax.random.split(key)
    bound = 1.0 / math.sqrt(cin * k * k)
    w = jax.random.uniform(k1, (cout, cin, k, k), jnp.float32, -bound, bound)
    b = jax.random.uniform(k2, (cout,), jnp.float32, -bound, bound)
    return w, b


if __name__ == "__main__":
    conv_module_params = [
        dict(in_channels=4, out_channels=8, kernel_size=3, stride=1, padding=1,
             pool_kernel_size=2, pool_stride=2),
        dict(in_channels=8, out_channels=16, kernel_size=3, stride=1, padding=1,
             pool_kernel_size=2, pool_stride=2),
    ]
    classifier_params = [
        dict(in_features=16 * 2 * 2, out_features=32),
        dict(in_features=32, out_features=10),
    ]
    avgpool_output_size = (2, 2)

    key = jax.random.PRNGKey(0)
    keys = jax.random.split(key, 1 + len(conv_module_params) + len(classifier_params))
    x = jax.random.normal(keys[0], (2, 4, 16, 16), dtype=jnp.float32)

    params = {"conv": [], "fc": [], "final": None}
    ki = 1
    for cfg in conv_module_params:
        params["conv"].append(_init_conv(keys[ki], cfg["out_channels"],
                                         cfg["in_channels"], cfg["kernel_size"]))
        ki += 1
    for cfg in classifier_params[:-1]:
        params["fc"].append(_init_linear(keys[ki], cfg["in_features"],
                                         cfg["out_features"]))
        ki += 1
    params["final"] = _init_linear(keys[ki],
                                   classifier_params[-1]["in_features"],
                                   classifier_params[-1]["out_features"])

    out = flexible_cnn_forward(x, params, conv_module_params, avgpool_output_size)
    out = jax.block_until_ready(out)

    ref = reference_forward(x, params, conv_module_params, avgpool_output_size)
    assert out.shape == (2, 10), out.shape
    assert jnp.allclose(out, ref, atol=2e-4, rtol=2e-4), \
        float(jnp.max(jnp.abs(out - ref)))

    print("KERNEL_OK")
</pallas_src>

<mosaic_0001>
module attributes {stable_mosaic.version = 11 : i64} {
  func.func @kernel(%arg0: i32, %arg1: memref<1x328x128xf32, #tpu.memory_space<vmem>>, %arg2: memref<1152x128xf32, #tpu.memory_space<vmem>>, %arg3: memref<1x128xf32, #tpu.memory_space<vmem>>, %arg4: memref<1152x128xf32, #tpu.memory_space<vmem>>, %arg5: memref<1x128xf32, #tpu.memory_space<vmem>>, %arg6: memref<32x16xf32, #tpu.memory_space<vmem>>, %arg7: memref<512x128xf32, #tpu.memory_space<vmem>>, %arg8: memref<1x128xf32, #tpu.memory_space<vmem>>, %arg9: memref<128x128xf32, #tpu.memory_space<vmem>>, %arg10: memref<1x128xf32, #tpu.memory_space<vmem>>, %arg11: memref<1x8x128xf32, #tpu.memory_space<vmem>>, %arg12: memref<288x128xf32, #tpu.memory_space<vmem>>, %arg13: memref<104x128xf32, #tpu.memory_space<vmem>>, %arg14: memref<16x128xf32, #tpu.memory_space<vmem>>, %arg15: memref<32x128xf32, #tpu.memory_space<vmem>>) attributes {dimension_semantics = [#tpu.dimension_semantics<parallel>], iteration_bounds = array<i64: 2>, scalar_prefetch = 0 : i64, scratch_operands = 4 : i64, tpu.core_type = #tpu.core_type<tc>, window_params = [{transform_indices = @transform_0, window_bounds = array<i64: 1, 328, 128>}, {pipeline_mode = #tpu.pipeline_mode<synchronous>, transform_indices = @transform_1, window_bounds = array<i64: 1152, 128>}, {pipeline_mode = #tpu.pipeline_mode<synchronous>, transform_indices = @transform_2, window_bounds = array<i64: 1, 128>}, {pipeline_mode = #tpu.pipeline_mode<synchronous>, transform_indices = @transform_3, window_bounds = array<i64: 1152, 128>}, {pipeline_mode = #tpu.pipeline_mode<synchronous>, transform_indices = @transform_4, window_bounds = array<i64: 1, 128>}, {pipeline_mode = #tpu.pipeline_mode<synchronous>, transform_indices = @transform_5, window_bounds = array<i64: 32, 16>}, {pipeline_mode = #tpu.pipeline_mode<synchronous>, transform_indices = @transform_6, window_bounds = array<i64: 512, 128>}, {pipeline_mode = #tpu.pipeline_mode<synchronous>, transform_indices = @transform_7, window_bounds = array<i64: 1, 128>}, {pipeline_mode = #tpu.pipeline_mode<synchronous>, transform_indices = @transform_8, window_bounds = array<i64: 128, 128>}, {pipeline_mode = #tpu.pipeline_mode<synchronous>, transform_indices = @transform_9, window_bounds = array<i64: 1, 128>}, {transform_indices = @transform_10, window_bounds = array<i64: 1, 8, 128>}]} {
    %cst = arith.constant 0.000000e+00 : f32
    %0 = vector.broadcast %cst : f32 to vector<104x128xf32>
    %c0 = arith.constant 0 : index
    %c0_0 = arith.constant 0 : index
    %1 = vector.load %arg13[%c0, %c0_0] : memref<104x128xf32, #tpu.memory_space<vmem>>, vector<104x128xf32>
    tpu.vector_store %arg13[%c0, %c0_0], %0 {strides = array<i32>} : memref<104x128xf32, #tpu.memory_space<vmem>>, vector<104x128xf32>,
    %c0_1 = arith.constant 0 : index
    %c0_2 = arith.constant 0 : index
    %c0_3 = arith.constant 0 : index
    %2 = vector.load %arg1[%c0_1, %c0_2, %c0_3] : memref<1x328x128xf32, #tpu.memory_space<vmem>>, vector<1x288x128xf32>
    %3 = vector.shape_cast %2 : vector<1x288x128xf32> to vector<288x128xf32>
    %c0_4 = arith.constant 0 : index
    %c0_5 = arith.constant 0 : index
    %4 = vector.load %arg2[%c0_4, %c0_5] : memref<1152x128xf32, #tpu.memory_space<vmem>>, vector<128x128xf32>
    %cst_6 = arith.constant dense<0.000000e+00> : vector<288x128xf32>
    %5 = tpu.matmul %3, %4, %cst_6 {dimension_numbers = #tpu.dot_dimension_numbers<[1], [0], [0], [1], [0, 0, 1, 1], [], []>} : vector<288x128xf32>, vector<128x128xf32>, vector<288x128xf32> -> vector<288x128xf32>
    %c0_7 = arith.constant 0 : index
    %c1 = arith.constant 1 : index
    %c0_8 = arith.constant 0 : index
    %6 = vector.load %arg1[%c0_7, %c1, %c0_8] : memref<1x328x128xf32, #tpu.memory_space<vmem>>, vector<1x288x128xf32>
    %7 = vector.shape_cast %6 : vector<1x288x128xf32> to vector<288x128xf32>
    %c128 = arith.constant 128 : index
    %c0_9 = arith.constant 0 : index
    %8 = vector.load %arg2[%c128, %c0_9] : memref<1152x128xf32, #tpu.memory_space<vmem>>, vector<128x128xf32>
    %cst_10 = arith.constant dense<0.000000e+00> : vector<288x128xf32>
    %9 = tpu.matmul %7, %8, %cst_10 {dimension_numbers = #tpu.dot_dimension_numbers<[1], [0], [0], [1], [0, 0, 1, 1], [], []>} : vector<288x128xf32>, vector<128x128xf32>, vector<288x128xf32> -> vector<288x128xf32>
    %10 = arith.addf %5, %9 : vector<288x128xf32>
    %c0_11 = arith.constant 0 : index
    %c2 = arith.constant 2 : index
    %c0_12 = arith.constant 0 : index
    %11 = vector.load %arg1[%c0_11, %c2, %c0_12] : memref<1x328x128xf32, #tpu.memory_space<vmem>>, vector<1x288x128xf32>
    %12 = vector.shape_cast %11 : vector<1x288x128xf32> to vector<288x128xf32>
    %c256 = arith.constant 256 : index
    %c0_13 = arith.constant 0 : index
    %13 = vector.load %arg2[%c256, %c0_13] : memref<1152x128xf32, #tpu.memory_space<vmem>>, vector<128x128xf32>
    %cst_14 = arith.constant dense<0.000000e+00> : vector<288x128xf32>
    %14 = tpu.matmul %12, %13, %cst_14 {dimension_numbers = #tpu.dot_dimension_numbers<[1], [0], [0], [1], [0, 0, 1, 1], [], []>} : vector<288x128xf32>, vector<128x128xf32>, vector<288x128xf32> -> vector<288x128xf32>
    %15 = arith.addf %10, %14 : vector<288x128xf32>
    %c0_15 = arith.constant 0 : index
    %c18 = arith.constant 18 : index
    %c0_16 = arith.constant 0 : index
    %16 = vector.load %arg1[%c0_15, %c18, %c0_16] : memref<1x328x128xf32, #tpu.memory_space<vmem>>, vector<1x288x128xf32>
    %17 = vector.shape_cast %16 : vector<1x288x128xf32> to vector<288x128xf32>
    %c384 = arith.constant 384 : index
    %c0_17 = arith.constant 0 : index
    %18 = vector.load %arg2[%c384, %c0_17] : memref<1152x128xf32, #tpu.memory_space<vmem>>, vector<128x128xf32>
    %cst_18 = arith.constant dense<0.000000e+00> : vector<288x128xf32>
    %19 = tpu.matmul %17, %18, %cst_18 {dimension_numbers = #tpu.dot_dimension_numbers<[1], [0], [0], [1], [0, 0, 1, 1], [], []>} : vector<288x128xf32>, vector<128x128xf32>, vector<288x128xf32> -> vector<288x128xf32>
    %20 = arith.addf %15, %19 : vector<288x128xf32>
    %c0_19 = arith.constant 0 : index
    %c19 = arith.constant 19 : index
    %c0_20 = arith.constant 0 : index
    %21 = vector.load %arg1[%c0_19, %c19, %c0_20] : memref<1x328x128xf32, #tpu.memory_space<vmem>>, vector<1x288x128xf32>
    %22 = vector.shape_cast %21 : vector<1x288x128xf32> to vector<288x128xf32>
    %c512 = arith.constant 512 : index
    %c0_21 = arith.constant 0 : index
    %23 = vector.load %arg2[%c512, %c0_21] : memref<1152x128xf32, #tpu.memory_space<vmem>>, vector<128x128xf32>
    %cst_22 = arith.constant dense<0.000000e+00> : vector<288x128xf32>
    %24 = tpu.matmul %22, %23, %cst_22 {dimension_numbers = #tpu.dot_dimension_numbers<[1], [0], [0], [1], [0, 0, 1, 1], [], []>} : vector<288x128xf32>, vector<128x128xf32>, vector<288x128xf32> -> vector<288x128xf32>
    %25 = arith.addf %20, %24 : vector<288x128xf32>
    %c0_23 = arith.constant 0 : index
    %c20 = arith.constant 20 : index
    %c0_24 = arith.constant 0 : index
    %26 = vector.load %arg1[%c0_23, %c20, %c0_24] : memref<1x328x128xf32, #tpu.memory_space<vmem>>, vector<1x288x128xf32>
    %27 = vector.shape_cast %26 : vector<1x288x128xf32> to vector<288x128xf32>
    %c640 = arith.constant 640 : index
    %c0_25 = arith.constant 0 : index
    %28 = vector.load %arg2[%c640, %c0_25] : memref<1152x128xf32, #tpu.memory_space<vmem>>, vector<128x128xf32>
    %cst_26 = arith.constant dense<0.000000e+00> : vector<288x128xf32>
    %29 = tpu.matmul %27, %28, %cst_26 {dimension_numbers = #tpu.dot_dimension_numbers<[1], [0], [0], [1], [0, 0, 1, 1], [], []>} : vector<288x128xf32>, vector<128x128xf32>, vector<288x128xf32> -> vector<288x128xf32>
    %30 = arith.addf %25, %29 : vector<288x128xf32>
    %c0_27 = arith.constant 0 : index
    %c36 = arith.constant 36 : index
    %c0_28 = arith.constant 0 : index
    %31 = vector.load %arg1[%c0_27, %c36, %c0_28] : memref<1x328x128xf32, #tpu.memory_space<vmem>>, vector<1x288x128xf32>
    %32 = vector.shape_cast %31 : vector<1x288x128xf32> to vector<288x128xf32>
    %c768 = arith.constant 768 : index
    %c0_29 = arith.constant 0 : index
    %33 = vector.load %arg2[%c768, %c0_29] : memref<1152x128xf32, #tpu.memory_space<vmem>>, vector<128x128xf32>
    %cst_30 = arith.constant dense<0.000000e+00> : vector<288x128xf32>
    %34 = tpu.matmul %32, %33, %cst_30 {dimension_numbers = #tpu.dot_dimension_numbers<[1], [0], [0], [1], [0, 0, 1, 1], [], []>} : vector<288x128xf32>, vector<128x128xf32>, vector<288x128xf32> -> vector<288x128xf32>
    %35 = arith.addf %30, %34 : vector<288x128xf32>
    %c0_31 = arith.constant 0 : index
    %c37 = arith.constant 37 : index
    %c0_32 = arith.constant 0 : index
    %36 = vector.load %arg1[%c0_31, %c37, %c0_32] : memref<1x328x128xf32, #tpu.memory_space<vmem>>, vector<1x288x128xf32>
    %37 = vector.shape_cast %36 : vector<1x288x128xf32> to vector<288x128xf32>
    %c896 = arith.constant 896 : index
    %c0_33 = arith.constant 0 : index
    %38 = vector.load %arg2[%c896, %c0_33] : memref<1152x128xf32, #tpu.memory_space<vmem>>, vector<128x128xf32>
    %cst_34 = arith.constant dense<0.000000e+00> : vector<288x128xf32>
    %39 = tpu.matmul %37, %38, %cst_34 {dimension_numbers = #tpu.dot_dimension_numbers<[1], [0], [0], [1], [0, 0, 1, 1], [], []>} : vector<288x128xf32>, vector<128x128xf32>, vector<288x128xf32> -> vector<288x128xf32>
    %40 = arith.addf %35, %39 : vector<288x128xf32>
    %c0_35 = arith.constant 0 : index
    %c38 = arith.constant 38 : index
    %c0_36 = arith.constant 0 : index
    %41 = vector.load %arg1[%c0_35, %c38, %c0_36] : memref<1x328x128xf32, #tpu.memory_space<vmem>>, vector<1x288x128xf32>
    %42 = vector.shape_cast %41 : vector<1x288x128xf32> to vector<288x128xf32>
    %c1024 = arith.constant 1024 : index
    %c0_37 = arith.constant 0 : index
    %43 = vector.load %arg2[%c1024, %c0_37] : memref<1152x128xf32, #tpu.memory_space<vmem>>, vector<128x128xf32>
    %cst_38 = arith.constant dense<0.000000e+00> : vector<288x128xf32>
    %44 = tpu.matmul %42, %43, %cst_38 {dimension_numbers = #tpu.dot_dimension_numbers<[1], [0], [0], [1], [0, 0, 1, 1], [], []>} : vector<288x128xf32>, vector<128x128xf32>, vector<288x128xf32> -> vector<288x128xf32>
    %45 = arith.addf %40, %44 : vector<288x128xf32>
    %c0_39 = arith.constant 0 : index
    %c0_40 = arith.constant 0 : index
    %46 = vector.load %arg12[%c0_39, %c0_40] : memref<288x128xf32, #tpu.memory_space<vmem>>, vector<288x128xf32>
    tpu.vector_store %arg12[%c0_39, %c0_40], %45 {strides = array<i32>} : memref<288x128xf32, #tpu.memory_space<vmem>>, vector<288x128xf32>,
    %c0_41 = arith.constant 0 : index
    %c0_42 = arith.constant 0 : index
    %47 = vector.load %arg3[%c0_41, %c0_42] : memref<1x128xf32, #tpu.memory_space<vmem>>, vector<1x128xf32>
    %48 = vector.shape_cast %47 : vector<1x128xf32> to vector<1x128xf32>
    %49 = vector.broadcast %48 : vector<1x128xf32> to vector<8x128xf32>
    %c0_43 = arith.constant 0 : index
    %c0_44 = arith.constant 0 : index
    %50 = tpu.strided_load %arg12[%c0_43, %c0_44] {strides = array<i32: 2, 1>} : memref<288x128xf32, #tpu.memory_space<vmem>>, vector<8x128xf32>
    %c1_45 = arith.constant 1 : index
    %c0_46 = arith.constant 0 : index
    %51 = tpu.strided_load %arg12[%c1_45, %c0_46] {strides = array<i32: 2, 1>} : memref<288x128xf32, #tpu.memory_space<vmem>>, vector<8x128xf32>
    %52 = arith.maximumf %50, %51 : vector<8x128xf32>
    %c18_47 = arith.constant 18 : index
    %c0_48 = arith.constant 0 : index
    %53 = tpu.strided_load %arg12[%c18_47, %c0_48] {strides = array<i32: 2, 1>} : memref<288x128xf32, #tpu.memory_space<vmem>>, vector<8x128xf32>
    %54 = arith.maximumf %52, %53 : vector<8x128xf32>
    %c19_49 = arith.constant 19 : index
    %c0_50 = arith.constant 0 : index
    %55 = tpu.strided_load %arg12[%c19_49, %c0_50] {strides = array<i32: 2, 1>} : memref<288x128xf32, #tpu.memory_space<vmem>>, vector<8x128xf32>
    %56 = arith.maximumf %54, %55 : vector<8x128xf32>
    %57 = arith.addf %56, %49 : vector<8x128xf32>
    %cst_51 = arith.constant 0.000000e+00 : f32
    %58 = vector.broadcast %cst_51 : f32 to vector<8x128xf32>
    %59 = arith.maximumf %57, %58 : vector<8x128xf32>
    %c11 = arith.constant 11 : index
    %c0_52 = arith.constant 0 : index
    %60 = vector.load %arg13[%c11, %c0_52] : memref<104x128xf32, #tpu.memory_space<vmem>>, vector<8x128xf32>
    tpu.vector_store %arg13[%c11, %c0_52], %59 {strides = array<i32>} : memref<104x128xf32, #tpu.memory_space<vmem>>, vector<8x128xf32>,
    %c36_53 = arith.constant 36 : index
    %c0_54 = arith.constant 0 : index
    %61 = tpu.strided_load %arg12[%c36_53, %c0_54] {strides = array<i32: 2, 1>} : memref<288x128xf32, #tpu.memory_space<vmem>>, vector<8x128xf32>
    %c37_55 = arith.constant 37 : index
    %c0_56 = arith.constant 0 : index
    %62 = tpu.strided_load %arg12[%c37_55, %c0_56] {strides = array<i32: 2, 1>} : memref<288x128xf32, #tpu.memory_space<vmem>>, vector<8x128xf32>
    %63 = arith.maximumf %61, %62 : vector<8x128xf32>
    %c54 = arith.constant 54 : index
    %c0_57 = arith.constant 0 : index
    %64 = tpu.strided_load %arg12[%c54, %c0_57] {strides = array<i32: 2, 1>} : memref<288x128xf32, #tpu.memory_space<vmem>>, vector<8x128xf32>
    %65 = arith.maximumf %63, %64 : vector<8x128xf32>
    %c55 = arith.constant 55 : index
    %c0_58 = arith.constant 0 : index
    %66 = tpu.strided_load %arg12[%c55, %c0_58] {strides = array<i32: 2, 1>} : memref<288x128xf32, #tpu.memory_space<vmem>>, vector<8x128xf32>
    %67 = arith.maximumf %65, %66 : vector<8x128xf32>
    %68 = arith.addf %67, %49 : vector<8x128xf32>
    %cst_59 = arith.constant 0.000000e+00 : f32
    %69 = vector.broadcast %cst_59 : f32 to vector<8x128xf32>
    %70 = arith.maximumf %68, %69 : vector<8x128xf32>
    %c21 = arith.constant 21 : index
    %c0_60 = arith.constant 0 : index
    %71 = vector.load %arg13[%c21, %c0_60] : memref<104x128xf32, #tpu.memory_space<vmem>>, vector<8x128xf32>
    tpu.vector_store %arg13[%c21, %c0_60], %70 {strides = array<i32>} : memref<104x128xf32, #tpu.memory_space<vmem>>, vector<8x128xf32>,
    %c72 = arith.constant 72 : index
    %c0_61 = arith.constant 0 : index
    %72 = tpu.strided_load %arg12[%c72, %c0_61] {strides = array<i32: 2, 1>} : memref<288x128xf32, #tpu.memory_space<vmem>>, vector<8x128xf32>
    %c73 = arith.constant 73 : index
    %c0_62 = arith.constant 0 : index
    %73 = tpu.strided_load %arg12[%c73, %c0_62] {strides = array<i32: 2, 1>} : memref<288x128xf32, #tpu.memory_space<vmem>>, vector<8x128xf32>
    %74 = arith.maximumf %72, %73 : vector<8x128xf32>
    %c90 = arith.constant 90 : index
    %c0_63 = arith.constant 0 : index
    %75 = tpu.strided_load %arg12[%c90, %c0_63] {strides = array<i32: 2, 1>} : memref<288x128xf32, #tpu.memory_space<vmem>>, vector<8x128xf32>
    %76 = arith.maximumf %74, %75 : vector<8x128xf32>
    %c91 = arith.constant 91 : index
    %c0_64 = arith.constant 0 : index
    %77 = tpu.strided_load %arg12[%c91, %c0_64] {strides = array<i32: 2, 1>} : memref<288x128xf32, #tpu.memory_space<vmem>>, vector<8x128xf32>
    %78 = arith.maximumf %76, %77 : vector<8x128xf32>
    %79 = arith.addf %78, %49 : vector<8x128xf32>
    %cst_65 = arith.constant 0.000000e+00 : f32
    %80 = vector.broadcast %cst_65 : f32 to vector<8x128xf32>
    %81 = arith.maximumf %79, %80 : vector<8x128xf32>
    %c31 = arith.constant 31 : index
    %c0_66 = arith.constant 0 : index
    %82 = vector.load %arg13[%c31, %c0_66] : memref<104x128xf32, #tpu.memory_space<vmem>>, vector<8x128xf32>
    tpu.vector_store %arg13[%c31, %c0_66], %81 {strides = array<i32>} : memref<104x128xf32, #tpu.memory_space<vmem>>, vector<8x128xf32>,
    %c108 = arith.constant 108 : index
    %c0_67 = arith.constant 0 : index
    %83 = tpu.strided_load %arg12[%c108, %c0_67] {strides = array<i32: 2, 1>} : memref<288x128xf32, #tpu.memory_space<vmem>>, vector<8x128xf32>
    %c109 = arith.constant 109 : index
    %c0_68 = arith.constant 0 : index
    %84 = tpu.strided_load %arg12[%c109, %c0_68] {strides = array<i32: 2, 1>} : memref<288x128xf32, #tpu.memory_space<vmem>>, vector<8x128xf32>
    %85 = arith.maximumf %83, %84 : vector<8x128xf32>
    %c126 = arith.constant 126 : index
    %c0_69 = arith.constant 0 : index
    %86 = tpu.strided_load %arg12[%c126, %c0_69] {strides = array<i32: 2, 1>} : memref<288x128xf32, #tpu.memory_space<vmem>>, vector<8x128xf32>
    %87 = arith.maximumf %85, %86 : vector<8x128xf32>
    %c127 = arith.constant 127 : index
    %c0_70 = arith.constant 0 : index
    %88 = tpu.strided_load %arg12[%c127, %c0_70] {strides = array<i32: 2, 1>} : memref<288x128xf32, #tpu.memory_space<vmem>>, vector<8x128xf32>
    %89 = arith.maximumf %87, %88 : vector<8x128xf32>
    %90 = arith.addf %89, %49 : vector<8x128xf32>
    %cst_71 = arith.constant 0.000000e+00 : f32
    %91 = vector.broadcast %cst_71 : f32 to vector<8x128xf32>
    %92 = arith.maximumf %90, %91 : vector<8x128xf32>
    %c41 = arith.constant 41 : index
    %c0_72 = arith.constant 0 : index
    %93 = vector.load %arg13[%c41, %c0_72] : memref<104x128xf32, #tpu.memory_space<vmem>>, vector<8x128xf32>
    tpu.vector_store %arg13[%c41, %c0_72], %92 {strides = array<i32>} : memref<104x128xf32, #tpu.memory_space<vmem>>, vector<8x128xf32>,
    %c144 = arith.constant 144 : index
    %c0_73 = arith.constant 0 : index
    %94 = tpu.strided_load %arg12[%c144, %c0_73] {strides = array<i32: 2, 1>} : memref<288x128xf32, #tpu.memory_space<vmem>>, vector<8x128xf32>
    %c145 = arith.constant 145 : index
    %c0_74 = arith.constant 0 : index
    %95 = tpu.strided_load %arg12[%c145, %c0_74] {strides = array<i32: 2, 1>} : memref<288x128xf32, #tpu.memory_space<vmem>>, vector<8x128xf32>
    %96 = arith.maximumf %94, %95 : vector<8x128xf32>
    %c162 = arith.constant 162 : index
    %c0_75 = arith.constant 0 : index
    %97 = tpu.strided_load %arg12[%c162, %c0_75] {strides = array<i32: 2, 1>} : memref<288x128xf32, #tpu.memory_space<vmem>>, vector<8x128xf32>
    %98 = arith.maximumf %96, %97 : vector<8x128xf32>
    %c163 = arith.constant 163 : index
    %c0_76 = arith.constant 0 : index
    %99 = tpu.strided_load %arg12[%c163, %c0_76] {strides = array<i32: 2, 1>} : memref<288x128xf32, #tpu.memory_space<vmem>>, vector<8x128xf32>
    %100 = arith.maximumf %98, %99 : vector<8x128xf32>
    %101 = arith.addf %100, %49 : vector<8x128xf32>
    %cst_77 = arith.constant 0.000000e+00 : f32
    %102 = vector.broadcast %cst_77 : f32 to vector<8x128xf32>
    %103 = arith.maximumf %101, %102 : vector<8x128xf32>
    %c51 = arith.constant 51 : index
    %c0_78 = arith.constant 0 : index
    %104 = vector.load %arg13[%c51, %c0_78] : memref<104x128xf32, #tpu.memory_space<vmem>>, vector<8x128xf32>
    tpu.vector_store %arg13[%c51, %c0_78], %103 {strides = array<i32>} : memref<104x128xf32, #tpu.memory_space<vmem>>, vector<8x128xf32>,
    %c180 = arith.constant 180 : index
    %c0_79 = arith.constant 0 : index
    %105 = tpu.strided_load %arg12[%c180, %c0_79] {strides = array<i32: 2, 1>} : memref<288x128xf32, #tpu.memory_space<vmem>>, vector<8x128xf32>
    %c181 = arith.constant 181 : index
    %c0_80 = arith.constant 0 : index
    %106 = tpu.strided_load %arg12[%c181, %c0_80] {strides = array<i32: 2, 1>} : memref<288x128xf32, #tpu.memory_space<vmem>>, vector<8x128xf32>
    %107 = arith.maximumf %105, %106 : vector<8x128xf32>
    %c198 = arith.constant 198 : index
    %c0_81 = arith.constant 0 : index
    %108 = tpu.strided_load %arg12[%c198, %c0_81] {strides = array<i32: 2, 1>} : memref<288x128xf32, #tpu.memory_space<vmem>>, vector<8x128xf32>
    %109 = arith.maximumf %107, %108 : vector<8x128xf32>
    %c199 = arith.constant 199 : index
    %c0_82 = arith.constant 0 : index
    %110 = tpu.strided_load %arg12[%c199, %c0_82] {strides = array<i32: 2, 1>} : memref<288x128xf32, #tpu.memory_space<vmem>>, vector<8x128xf32>
    %111 = arith.maximumf %109, %110 : vector<8x128xf32>
    %112 = arith.addf %111, %49 : vector<8x128xf32>
    %cst_83 = arith.constant 0.000000e+00 : f32
    %113 = vector.broadcast %cst_83 : f32 to vector<8x128xf32>
    %114 = arith.maximumf %112, %113 : vector<8x128xf32>
    %c61 = arith.constant 61 : index
    %c0_84 = arith.constant 0 : index
    %115 = vector.load %arg13[%c61, %c0_84] : memref<104x128xf32, #tpu.memory_space<vmem>>, vector<8x128xf32>
    tpu.vector_store %arg13[%c61, %c0_84], %114 {strides = array<i32>} : memref<104x128xf32, #tpu.memory_space<vmem>>, vector<8x128xf32>,
    %c216 = arith.constant 216 : index
    %c0_85 = arith.constant 0 : index
    %116 = tpu.strided_load %arg12[%c216, %c0_85] {strides = array<i32: 2, 1>} : memref<288x128xf32, #tpu.memory_space<vmem>>, vector<8x128xf32>
    %c217 = arith.constant 217 : index
    %c0_86 = arith.constant 0 : index
    %117 = tpu.strided_load %arg12[%c217, %c0_86] {strides = array<i32: 2, 1>} : memref<288x128xf32, #tpu.memory_space<vmem>>, vector<8x128xf32>
    %118 = arith.maximumf %116, %117 : vector<8x128xf32>
    %c234 = arith.constant 234 : index
    %c0_87 = arith.constant 0 : index
    %119 = tpu.strided_load %arg12[%c234, %c0_87] {strides = array<i32: 2, 1>} : memref<288x128xf32, #tpu.memory_space<vmem>>, vector<8x128xf32>
    %120 = arith.maximumf %118, %119 : vector<8x128xf32>
    %c235 = arith.constant 235 : index
    %c0_88 = arith.constant 0 : index
    %121 = tpu.strided_load %arg12[%c235, %c0_88] {strides = array<i32: 2, 1>} : memref<288x128xf32, #tpu.memory_space<vmem>>, vector<8x128xf32>
    %122 = arith.maximumf %120, %121 : vector<8x128xf32>
    %123 = arith.addf %122, %49 : vector<8x128xf32>
    %cst_89 = arith.constant 0.000000e+00 : f32
    %124 = vector.broadcast %cst_89 : f32 to vector<8x128xf32>
    %125 = arith.maximumf %123, %124 : vector<8x128xf32>
    %c71 = arith.constant 71 : index
    %c0_90 = arith.constant 0 : index
    %126 = vector.load %arg13[%c71, %c0_90] : memref<104x128xf32, #tpu.memory_space<vmem>>, vector<8x128xf32>
    tpu.vector_store %arg13[%c71, %c0_90], %125 {strides = array<i32>} : memref<104x128xf32, #tpu.memory_space<vmem>>, vector<8x128xf32>,
    %c252 = arith.constant 252 : index
    %c0_91 = arith.constant 0 : index
    %127 = tpu.strided_load %arg12[%c252, %c0_91] {strides = array<i32: 2, 1>} : memref<288x128xf32, #tpu.memory_space<vmem>>, vector<8x128xf32>
    %c253 = arith.constant 253 : index
    %c0_92 = arith.constant 0 : index
    %128 = tpu.strided_load %arg12[%c253, %c0_92] {strides = array<i32: 2, 1>} : memref<288x128xf32, #tpu.memory_space<vmem>>, vector<8x128xf32>
    %129 = arith.maximumf %127, %128 : vector<8x128xf32>
    %c270 = arith.constant 270 : index
    %c0_93 = arith.constant 0 : index
    %130 = tpu.strided_load %arg12[%c270, %c0_93] {strides = array<i32: 2, 1>} : memref<288x128xf32, #tpu.memory_space<vmem>>, vector<8x128xf32>
    %131 = arith.maximumf %129, %130 : vector<8x128xf32>
    %c271 = arith.constant 271 : index
    %c0_94 = arith.constant 0 : index
    %132 = tpu.strided_load %arg12[%c271, %c0_94] {strides = array<i32: 2, 1>} : memref<288x128xf32, #tpu.memory_space<vmem>>, vector<8x128xf32>
    %133 = arith.maximumf %131, %132 : vector<8x128xf32>
    %134 = arith.addf %133, %49 : vector<8x128xf32>
    %cst_95 = arith.constant 0.000000e+00 : f32
    %135 = vector.broadcast %cst_95 : f32 to vector<8x128xf32>
    %136 = arith.maximumf %134, %135 : vector<8x128xf32>
    %c81 = arith.constant 81 : index
    %c0_96 = arith.constant 0 : index
    %137 = vector.load %arg13[%c81, %c0_96] : memref<104x128xf32, #tpu.memory_space<vmem>>, vector<8x128xf32>
    tpu.vector_store %arg13[%c81, %c0_96], %136 {strides = array<i32>} : memref<104x128xf32, #tpu.memory_space<vmem>>, vector<8x128xf32>,
    %c0_97 = arith.constant 0 : index
    %c0_98 = arith.constant 0 : index
    %138 = vector.load %arg13[%c0_97, %c0_98] : memref<104x128xf32, #tpu.memory_space<vmem>>, vector<80x128xf32>
    %c0_99 = arith.constant 0 : index
    %c0_100 = arith.constant 0 : index
    %139 = vector.load %arg4[%c0_99, %c0_100] : memref<1152x128xf32, #tpu.memory_space<vmem>>, vector<128x128xf32>
    %cst_101 = arith.constant dense<0.000000e+00> : vector<80x128xf32>
    %140 = tpu.matmul %138, %139, %cst_101 {dimension_numbers = #tpu.dot_dimension_numbers<[1], [0], [0], [1], [0, 0, 1, 1], [], []>} : vector<80x128xf32>, vector<128x128xf32>, vector<80x128xf32> -> vector<80x128xf32>
    %c1_102 = arith.constant 1 : index
    %c0_103 = arith.constant 0 : index
    %141 = vector.load %arg13[%c1_102, %c0_103] : memref<104x128xf32, #tpu.memory_space<vmem>>, vector<80x128xf32>
    %c128_104 = arith.constant 128 : index
    %c0_105 = arith.constant 0 : index
    %142 = vector.load %arg4[%c128_104, %c0_105] : memref<1152x128xf32, #tpu.memory_space<vmem>>, vector<128x128xf32>
    %cst_106 = arith.constant dense<0.000000e+00> : vector<80x128xf32>
    %143 = tpu.matmul %141, %142, %cst_106 {dimension_numbers = #tpu.dot_dimension_numbers<[1], [0], [0], [1], [0, 0, 1, 1], [], []>} : vector<80x128xf32>, vector<128x128xf32>, vector<80x128xf32> -> vector<80x128xf32>
    %144 = arith.addf %140, %143 : vector<80x128xf32>
    %c2_107 = arith.constant 2 : index
    %c0_108 = arith.constant 0 : index
    %145 = vector.load %arg13[%c2_107, %c0_108] : memref<104x128xf32, #tpu.memory_space<vmem>>, vector<80x128xf32>
    %c256_109 = arith.constant 256 : index
    %c0_110 = arith.constant 0 : index
    %146 = vector.load %arg4[%c256_109, %c0_110] : memref<1152x128xf32, #tpu.memory_space<vmem>>, vector<128x128xf32>
    %cst_111 = arith.constant dense<0.000000e+00> : vector<80x128xf32>
    %147 = tpu.matmul %145, %146, %cst_111 {dimension_numbers = #tpu.dot_dimension_numbers<[1], [0], [0], [1], [0, 0, 1, 1], [], []>} : vector<80x128xf32>, vector<128x128xf32>, vector<80x128xf32> -> vector<80x128xf32>
    %148 = arith.addf %144, %147 : vector<80x128xf32>
    %c10 = arith.constant 10 : index
    %c0_112 = arith.constant 0 : index
    %149 = vector.load %arg13[%c10, %c0_112] : memref<104x128xf32, #tpu.memory_space<vmem>>, vector<80x128xf32>
    %c384_113 = arith.constant 384 : index
    %c0_114 = arith.constant 0 : index
    %150 = vector.load %arg4[%c384_113, %c0_114] : memref<1152x128xf32, #tpu.memory_space<vmem>>, vector<128x128xf32>
    %cst_115 = arith.constant dense<0.000000e+00> : vector<80x128xf32>
    %151 = tpu.matmul %149, %150, %cst_115 {dimension_numbers = #tpu.dot_dimension_numbers<[1], [0], [0], [1], [0, 0, 1, 1], [], []>} : vector<80x128xf32>, vector<128x128xf32>, vector<80x128xf32> -> vector<80x128xf32>
    %152 = arith.addf %148, %151 : vector<80x128xf32>
    %c11_116 = arith.constant 11 : index
    %c0_117 = arith.constant 0 : index
    %153 = vector.load %arg13[%c11_116, %c0_117] : memref<104x128xf32, #tpu.memory_space<vmem>>, vector<80x128xf32>
    %c512_118 = arith.constant 512 : index
    %c0_119 = arith.constant 0 : index
    %154 = vector.load %arg4[%c512_118, %c0_119] : memref<1152x128xf32, #tpu.memory_space<vmem>>, vector<128x128xf32>
    %cst_120 = arith.constant dense<0.000000e+00> : vector<80x128xf32>
    %155 = tpu.matmul %153, %154, %cst_120 {dimension_numbers = #tpu.dot_dimension_numbers<[1], [0], [0], [1], [0, 0, 1, 1], [], []>} : vector<80x128xf32>, vector<128x128xf32>, vector<80x128xf32> -> vector<80x128xf32>
    %156 = arith.addf %152, %155 : vector<80x128xf32>
    %c12 = arith.constant 12 : index
    %c0_121 = arith.constant 0 : index
    %157 = vector.load %arg13[%c12, %c0_121] : memref<104x128xf32, #tpu.memory_space<vmem>>, vector<80x128xf32>
    %c640_122 = arith.constant 640 : index
    %c0_123 = arith.constant 0 : index
    %158 = vector.load %arg4[%c640_122, %c0_123] : memref<1152x128xf32, #tpu.memory_space<vmem>>, vector<128x128xf32>
    %cst_124 = arith.constant dense<0.000000e+00> : vector<80x128xf32>
    %159 = tpu.matmul %157, %158, %cst_124 {dimension_numbers = #tpu.dot_dimension_numbers<[1], [0], [0], [1], [0, 0, 1, 1], [], []>} : vector<80x128xf32>, vector<128x128xf32>, vector<80x128xf32> -> vector<80x128xf32>
    %160 = arith.addf %156, %159 : vector<80x128xf32>
    %c20_125 = arith.constant 20 : index
    %c0_126 = arith.constant 0 : index
    %161 = vector.load %arg13[%c20_125, %c0_126] : memref<104x128xf32, #tpu.memory_space<vmem>>, vector<80x128xf32>
    %c768_127 = arith.constant 768 : index
    %c0_128 = arith.constant 0 : index
    %162 = vector.load %arg4[%c768_127, %c0_128] : memref<1152x128xf32, #tpu.memory_space<vmem>>, vector<128x128xf32>
    %cst_129 = arith.constant dense<0.000000e+00> : vector<80x128xf32>
    %163 = tpu.matmul %161, %162, %cst_129 {dimension_numbers = #tpu.dot_dimension_numbers<[1], [0], [0], [1], [0, 0, 1, 1], [], []>} : vector<80x128xf32>, vector<128x128xf32>, vector<80x128xf32> -> vector<80x128xf32>
    %164 = arith.addf %160, %163 : vector<80x128xf32>
    %c21_130 = arith.constant 21 : index
    %c0_131 = arith.constant 0 : index
    %165 = vector.load %arg13[%c21_130, %c0_131] : memref<104x128xf32, #tpu.memory_space<vmem>>, vector<80x128xf32>
    %c896_132 = arith.constant 896 : index
    %c0_133 = arith.constant 0 : index
    %166 = vector.load %arg4[%c896_132, %c0_133] : memref<1152x128xf32, #tpu.memory_space<vmem>>, vector<128x128xf32>
    %cst_134 = arith.constant dense<0.000000e+00> : vector<80x128xf32>
    %167 = tpu.matmul %165, %166, %cst_134 {dimension_numbers = #tpu.dot_dimension_numbers<[1], [0], [0], [1], [0, 0, 1, 1], [], []>} : vector<80x128xf32>, vector<128x128xf32>, vector<80x128xf32> -> vector<80x128xf32>
    %168 = arith.addf %164, %167 : vector<80x128xf32>
    %c22 = arith.constant 22 : index
    %c0_135 = arith.constant 0 : index
    %169 = vector.load %arg13[%c22, %c0_135] : memref<104x128xf32, #tpu.memory_space<vmem>>, vector<80x128xf32>
    %c1024_136 = arith.constant 1024 : index
    %c0_137 = arith.constant 0 : index
    %170 = vector.load %arg4[%c1024_136, %c0_137] : memref<1152x128xf32, #tpu.memory_space<vmem>>, vector<128x128xf32>
    %cst_138 = arith.constant dense<0.000000e+00> : vector<80x128xf32>
    %171 = tpu.matmul %169, %170, %cst_138 {dimension_numbers = #tpu.dot_dimension_numbers<[1], [0], [0], [1], [0, 0, 1, 1], [], []>} : vector<80x128xf32>, vector<128x128xf32>, vector<80x128xf32> -> vector<80x128xf32>
    %172 = arith.addf %168, %171 : vector<80x128xf32>
    %c0_139 = arith.constant 0 : index
    %c0_140 = arith.constant 0 : index
    %173 = vector.load %arg12[%c0_139, %c0_140] : memref<288x128xf32, #tpu.memory_space<vmem>>, vector<80x128xf32>
    tpu.vector_store %arg12[%c0_139, %c0_140], %172 {strides = array<i32>} : memref<288x128xf32, #tpu.memory_space<vmem>>, vector<80x128xf32>,
    %c0_141 = arith.constant 0 : index
    %c0_142 = arith.constant 0 : index
    %174 = vector.load %arg5[%c0_141, %c0_142] : memref<1x128xf32, #tpu.memory_space<vmem>>, vector<1x128xf32>
    %175 = vector.shape_cast %174 : vector<1x128xf32> to vector<1x128xf32>
    %176 = vector.broadcast %175 : vector<1x128xf32> to vector<4x128xf32>
    %c0_143 = arith.constant 0 : index
    %c0_144 = arith.constant 0 : index
    %177 = tpu.strided_load %arg12[%c0_143, %c0_144] {strides = array<i32: 2, 1>} : memref<288x128xf32, #tpu.memory_space<vmem>>, vector<4x128xf32>
    %c1_145 = arith.constant 1 : index
    %c0_146 = arith.constant 0 : index
    %178 = tpu.strided_load %arg12[%c1_145, %c0_146] {strides = array<i32: 2, 1>} : memref<288x128xf32, #tpu.memory_space<vmem>>, vector<4x128xf32>
    %179 = arith.maximumf %177, %178 : vector<4x128xf32>
    %c10_147 = arith.constant 10 : index
    %c0_148 = arith.constant 0 : index
    %180 = tpu.strided_load %arg12[%c10_147, %c0_148] {strides = array<i32: 2, 1>} : memref<288x128xf32, #tpu.memory_space<vmem>>, vector<4x128xf32>
    %181 = arith.maximumf %179, %180 : vector<4x128xf32>
    %c11_149 = arith.constant 11 : index
    %c0_150 = arith.constant 0 : index
    %182 = tpu.strided_load %arg12[%c11_149, %c0_150] {strides = array<i32: 2, 1>} : memref<288x128xf32, #tpu.memory_space<vmem>>, vector<4x128xf32>
    %183 = arith.maximumf %181, %182 : vector<4x128xf32>
    %184 = arith.addf %183, %176 : vector<4x128xf32>
    %cst_151 = arith.constant 0.000000e+00 : f32
    %185 = vector.broadcast %cst_151 : f32 to vector<4x128xf32>
    %186 = arith.maximumf %184, %185 : vector<4x128xf32>
    %c0_152 = arith.constant 0 : index
    %c0_153 = arith.constant 0 : index
    %187 = vector.load %arg14[%c0_152, %c0_153] : memref<16x128xf32, #tpu.memory_space<vmem>>, vector<4x128xf32>
    tpu.vector_store %arg14[%c0_152, %c0_153], %186 {strides = array<i32>} : memref<16x128xf32, #tpu.memory_space<vmem>>, vector<4x128xf32>,
    %c20_154 = arith.constant 20 : index
    %c0_155 = arith.constant 0 : index
    %188 = tpu.strided_load %arg12[%c20_154, %c0_155] {strides = array<i32: 2, 1>} : memref<288x128xf32, #tpu.memory_space<vmem>>, vector<4x128xf32>
    %c21_156 = arith.constant 21 : index
    %c0_157 = arith.constant 0 : index
    %189 = tpu.strided_load %arg12[%c21_156, %c0_157] {strides = array<i32: 2, 1>} : memref<288x128xf32, #tpu.memory_space<vmem>>, vector<4x128xf32>
    %190 = arith.maximumf %188, %189 : vector<4x128xf32>
    %c30 = arith.constant 30 : index
    %c0_158 = arith.constant 0 : index
    %191 = tpu.strided_load %arg12[%c30, %c0_158] {strides = array<i32: 2, 1>} : memref<288x128xf32, #tpu.memory_space<vmem>>, vector<4x128xf32>
    %192 = arith.maximumf %190, %191 : vector<4x128xf32>
    %c31_159 = arith.constant 31 : index
    %c0_160 = arith.constant 0 : index
    %193 = tpu.strided_load %arg12[%c31_159, %c0_160] {strides = array<i32: 2, 1>} : memref<288x128xf32, #tpu.memory_space<vmem>>, vector<4x128xf32>
    %194 = arith.maximumf %192, %193 : vector<4x128xf32>
    %195 = arith.addf %194, %176 : vector<4x128xf32>
    %cst_161 = arith.constant 0.000000e+00 : f32
    %196 = vector.broadcast %cst_161 : f32 to vector<4x128xf32>
    %197 = arith.maximumf %195, %196 : vector<4x128xf32>
    %c4 = arith.constant 4 : index
    %c0_162 = arith.constant 0 : index
    %198 = vector.load %arg14[%c4, %c0_162] : memref<16x128xf32, #tpu.memory_space<vmem>>, vector<4x128xf32>
    tpu.vector_store %arg14[%c4, %c0_162], %197 {strides = array<i32>} : memref<16x128xf32, #tpu.memory_space<vmem>>, vector<4x128xf32>,
    %c40 = arith.constant 40 : index
    %c0_163 = arith.constant 0 : index
    %199 = tpu.strided_load %arg12[%c40, %c0_163] {strides = array<i32: 2, 1>} : memref<288x128xf32, #tpu.memory_space<vmem>>, vector<4x128xf32>
    %c41_164 = arith.constant 41 : index
    %c0_165 = arith.constant 0 : index
    %200 = tpu.strided_load %arg12[%c41_164, %c0_165] {strides = array<i32: 2, 1>} : memref<288x128xf32, #tpu.memory_space<vmem>>, vector<4x128xf32>
    %201 = arith.maximumf %199, %200 : vector<4x128xf32>
    %c50 = arith.constant 50 : index
    %c0_166 = arith.constant 0 : index
    %202 = tpu.strided_load %arg12[%c50, %c0_166] {strides = array<i32: 2, 1>} : memref<288x128xf32, #tpu.memory_space<vmem>>, vector<4x128xf32>
    %203 = arith.maximumf %201, %202 : vector<4x128xf32>
    %c51_167 = arith.constant 51 : index
    %c0_168 = arith.constant 0 : index
    %204 = tpu.strided_load %arg12[%c51_167, %c0_168] {strides = array<i32: 2, 1>} : memref<288x128xf32, #tpu.memory_space<vmem>>, vector<4x128xf32>
    %205 = arith.maximumf %203, %204 : vector<4x128xf32>
    %206 = arith.addf %205, %176 : vector<4x128xf32>
    %cst_169 = arith.constant 0.000000e+00 : f32
    %207 = vector.broadcast %cst_169 : f32 to vector<4x128xf32>
    %208 = arith.maximumf %206, %207 : vector<4x128xf32>
    %c8 = arith.constant 8 : index
    %c0_170 = arith.constant 0 : index
    %209 = vector.load %arg14[%c8, %c0_170] : memref<16x128xf32, #tpu.memory_space<vmem>>, vector<4x128xf32>
    tpu.vector_store %arg14[%c8, %c0_170], %208 {strides = array<i32>} : memref<16x128xf32, #tpu.memory_space<vmem>>, vector<4x128xf32>,
    %c60 = arith.constant 60 : index
    %c0_171 = arith.constant 0 : index
    %210 = tpu.strided_load %arg12[%c60, %c0_171] {strides = array<i32: 2, 1>} : memref<288x128xf32, #tpu.memory_space<vmem>>, vector<4x128xf32>
    %c61_172 = arith.constant 61 : index
    %c0_173 = arith.constant 0 : index
    %211 = tpu.strided_load %arg12[%c61_172, %c0_173] {strides = array<i32: 2, 1>} : memref<288x128xf32, #tpu.memory_space<vmem>>, vector<4x128xf32>
    %212 = arith.maximumf %210, %211 : vector<4x128xf32>
    %c70 = arith.constant 70 : index
    %c0_174 = arith.constant 0 : index
    %213 = tpu.strided_load %arg12[%c70, %c0_174] {strides = array<i32: 2, 1>} : memref<288x128xf32, #tpu.memory_space<vmem>>, vector<4x128xf32>
    %214 = arith.maximumf %212, %213 : vector<4x128xf32>
    %c71_175 = arith.constant 71 : index
    %c0_176 = arith.constant 0 : index
    %215 = tpu.strided_load %arg12[%c71_175, %c0_176] {strides = array<i32: 2, 1>} : memref<288x128xf32, #tpu.memory_space<vmem>>, vector<4x128xf32>
    %216 = arith.maximumf %214, %215 : vector<4x128xf32>
    %217 = arith.addf %216, %176 : vector<4x128xf32>
    %cst_177 = arith.constant 0.000000e+00 : f32
    %218 = vector.broadcast %cst_177 : f32 to vector<4x128xf32>
    %219 = arith.maximumf %217, %218 : vector<4x128xf32>
    %c12_178 = arith.constant 12 : index
    %c0_179 = arith.constant 0 : index
    %220 = vector.load %arg14[%c12_178, %c0_179] : memref<16x128xf32, #tpu.memory_space<vmem>>, vector<4x128xf32>
    tpu.vector_store %arg14[%c12_178, %c0_179], %219 {strides = array<i32>} : memref<16x128xf32, #tpu.memory_space<vmem>>, vector<4x128xf32>,
    %c0_180 = arith.constant 0 : index
    %c0_181 = arith.constant 0 : index
    %221 = vector.load %arg6[%c0_180, %c0_181] : memref<32x16xf32, #tpu.memory_space<vmem>>, vector<32x16xf32>
    %c0_182 = arith.constant 0 : index
    %c0_183 = arith.constant 0 : index
    %222 = vector.load %arg14[%c0_182, %c0_183] : memref<16x128xf32, #tpu.memory_space<vmem>>, vector<16x128xf32>
    %cst_184 = arith.constant dense<0.000000e+00> : vector<32x128xf32>
    %223 = tpu.matmul %221, %222, %cst_184 {dimension_numbers = #tpu.dot_dimension_numbers<[1], [0], [0], [1], [0, 0, 1, 1], [], []>} : vector<32x16xf32>, vector<16x128xf32>, vector<32x128xf32> -> vector<32x128xf32>
    %c0_185 = arith.constant 0 : index
    %c0_186 = arith.constant 0 : index
    %224 = vector.load %arg15[%c0_185, %c0_186] : memref<32x128xf32, #tpu.memory_space<vmem>>, vector<32x128xf32>
    tpu.vector_store %arg15[%c0_185, %c0_186], %223 {strides = array<i32>} : memref<32x128xf32, #tpu.memory_space<vmem>>, vector<32x128xf32>,
    %c0_187 = arith.constant 0 : index
    %c0_188 = arith.constant 0 : index
    %225 = vector.load %arg15[%c0_187, %c0_188] : memref<32x128xf32, #tpu.memory_space<vmem>>, vector<8x128xf32>
    %c0_189 = arith.constant 0 : index
    %c0_190 = arith.constant 0 : index
    %226 = vector.load %arg7[%c0_189, %c0_190] : memref<512x128xf32, #tpu.memory_space<vmem>>, vector<128x128xf32>
    %cst_191 = arith.constant dense<0.000000e+00> : vector<8x128xf32>
    %227 = tpu.matmul %225, %226, %cst_191 {dimension_numbers = #tpu.dot_dimension_numbers<[1], [0], [0], [1], [0, 0, 1, 1], [], []>} : vector<8x128xf32>, vector<128x128xf32>, vector<8x128xf32> -> vector<8x128xf32>
    %c8_192 = arith.constant 8 : index
    %c0_193 = arith.constant 0 : index
    %228 = vector.load %arg15[%c8_192, %c0_193] : memref<32x128xf32, #tpu.memory_space<vmem>>, vector<8x128xf32>
    %c128_194 = arith.constant 128 : index
    %c0_195 = arith.constant 0 : index
    %229 = vector.load %arg7[%c128_194, %c0_195] : memref<512x128xf32, #tpu.memory_space<vmem>>, vector<128x128xf32>
    %cst_196 = arith.constant dense<0.000000e+00> : vector<8x128xf32>
    %230 = tpu.matmul %228, %229, %cst_196 {dimension_numbers = #tpu.dot_dimension_numbers<[1], [0], [0], [1], [0, 0, 1, 1], [], []>} : vector<8x128xf32>, vector<128x128xf32>, vector<8x128xf32> -> vector<8x128xf32>
    %231 = arith.addf %227, %230 : vector<8x128xf32>
    %c16 = arith.constant 16 : index
    %c0_197 = arith.constant 0 : index
    %232 = vector.load %arg15[%c16, %c0_197] : memref<32x128xf32, #tpu.memory_space<vmem>>, vector<8x128xf32>
    %c256_198 = arith.constant 256 : index
    %c0_199 = arith.constant 0 : index
    %233 = vector.load %arg7[%c256_198, %c0_199] : memref<512x128xf32, #tpu.memory_space<vmem>>, vector<128x128xf32>
    %cst_200 = arith.constant dense<0.000000e+00> : vector<8x128xf32>
    %234 = tpu.matmul %232, %233, %cst_200 {dimension_numbers = #tpu.dot_dimension_numbers<[1], [0], [0], [1], [0, 0, 1, 1], [], []>} : vector<8x128xf32>, vector<128x128xf32>, vector<8x128xf32> -> vector<8x128xf32>
    %235 = arith.addf %231, %234 : vector<8x128xf32>
    %c24 = arith.constant 24 : index
    %c0_201 = arith.constant 0 : index
    %236 = vector.load %arg15[%c24, %c0_201] : memref<32x128xf32, #tpu.memory_space<vmem>>, vector<8x128xf32>
    %c384_202 = arith.constant 384 : index
    %c0_203 = arith.constant 0 : index
    %237 = vector.load %arg7[%c384_202, %c0_203] : memref<512x128xf32, #tpu.memory_space<vmem>>, vector<128x128xf32>
    %cst_204 = arith.constant dense<0.000000e+00> : vector<8x128xf32>
    %238 = tpu.matmul %236, %237, %cst_204 {dimension_numbers = #tpu.dot_dimension_numbers<[1], [0], [0], [1], [0, 0, 1, 1], [], []>} : vector<8x128xf32>, vector<128x128xf32>, vector<8x128xf32> -> vector<8x128xf32>
    %239 = arith.addf %235, %238 : vector<8x128xf32>
    %c0_205 = arith.constant 0 : index
    %c0_206 = arith.constant 0 : index
    %240 = vector.load %arg8[%c0_205, %c0_206] : memref<1x128xf32, #tpu.memory_space<vmem>>, vector<1x128xf32>
    %241 = vector.broadcast %240 : vector<1x128xf32> to vector<8x128xf32>
    %242 = arith.addf %239, %241 : vector<8x128xf32>
    %cst_207 = arith.constant 0.000000e+00 : f32
    %243 = vector.broadcast %cst_207 : f32 to vector<8x128xf32>
    %244 = arith.maximumf %242, %243 : vector<8x128xf32>
    %c0_208 = arith.constant 0 : index
    %c0_209 = arith.constant 0 : index
    %245 = vector.load %arg9[%c0_208, %c0_209] : memref<128x128xf32, #tpu.memory_space<vmem>>, vector<128x128xf32>
    %cst_210 = arith.constant dense<0.000000e+00> : vector<8x128xf32>
    %246 = tpu.matmul %244, %245, %cst_210 {dimension_numbers = #tpu.dot_dimension_numbers<[1], [0], [0], [1], [0, 0, 1, 1], [], []>} : vector<8x128xf32>, vector<128x128xf32>, vector<8x128xf32> -> vector<8x128xf32>
    %c0_211 = arith.constant 0 : index
    %c0_212 = arith.constant 0 : index
    %247 = vector.load %arg10[%c0_211, %c0_212] : memref<1x128xf32, #tpu.memory_space<vmem>>, vector<1x128xf32>
    %248 = vector.broadcast %247 : vector<1x128xf32> to vector<8x128xf32>
    %249 = arith.addf %246, %248 : vector<8x128xf32>
    %c0_213 = arith.constant 0 : index
    %c0_214 = arith.constant 0 : index
    %c0_215 = arith.constant 0 : index
    %250 = vector.load %arg11[%c0_213, %c0_214, %c0_215] : memref<1x8x128xf32, #tpu.memory_space<vmem>>, vector<1x8x128xf32>
    %251 = vector.shape_cast %250 : vector<1x8x128xf32> to vector<8x128xf32>
    %252 = vector.shape_cast %249 : vector<8x128xf32> to vector<1x8x128xf32>
    tpu.vector_store %arg11[%c0_213, %c0_214, %c0_215], %252 {strides = array<i32>} : memref<1x8x128xf32, #tpu.memory_space<vmem>>, vector<1x8x128xf32>,
    return
  }
  func.func @transform_0(%arg0: i32) -> (i32, i32, i32) {
    %c0_i32 = arith.constant 0 : i32
    %c0_i32_0 = arith.constant 0 : i32
    %c0_i32_1 = arith.constant 0 : i32
    return %arg0, %c0_i32, %c0_i32_0 : i32, i32, i32
  }
  func.func @transform_1(%arg0: i32) -> (i32, i32) {
    %c0_i32 = arith.constant 0 : i32
    %c0_i32_0 = arith.constant 0 : i32
    %c0_i32_1 = arith.constant 0 : i32
    return %c0_i32, %c0_i32_0 : i32, i32
  }
  func.func @transform_2(%arg0: i32) -> (i32, i32) {
    %c0_i32 = arith.constant 0 : i32
    %c0_i32_0 = arith.constant 0 : i32
    %c0_i32_1 = arith.constant 0 : i32
    return %c0_i32, %c0_i32_0 : i32, i32
  }
  func.func @transform_3(%arg0: i32) -> (i32, i32) {
    %c0_i32 = arith.constant 0 : i32
    %c0_i32_0 = arith.constant 0 : i32
    %c0_i32_1 = arith.constant 0 : i32
    return %c0_i32, %c0_i32_0 : i32, i32
  }
  func.func @transform_4(%arg0: i32) -> (i32, i32) {
    %c0_i32 = arith.constant 0 : i32
    %c0_i32_0 = arith.constant 0 : i32
    %c0_i32_1 = arith.constant 0 : i32
    return %c0_i32, %c0_i32_0 : i32, i32
  }
  func.func @transform_5(%arg0: i32) -> (i32, i32) {
    %c0_i32 = arith.constant 0 : i32
    %c0_i32_0 = arith.constant 0 : i32
    %c0_i32_1 = arith.constant 0 : i32
    return %c0_i32, %c0_i32_0 : i32, i32
  }
  func.func @transform_6(%arg0: i32) -> (i32, i32) {
    %c0_i32 = arith.constant 0 : i32
    %c0_i32_0 = arith.constant 0 : i32
    %c0_i32_1 = arith.constant 0 : i32
    return %c0_i32, %c0_i32_0 : i32, i32
  }
  func.func @transform_7(%arg0: i32) -> (i32, i32) {
    %c0_i32 = arith.constant 0 : i32
    %c0_i32_0 = arith.constant 0 : i32
    %c0_i32_1 = arith.constant 0 : i32
    return %c0_i32, %c0_i32_0 : i32, i32
  }
  func.func @transform_8(%arg0: i32) -> (i32, i32) {
    %c0_i32 = arith.constant 0 : i32
    %c0_i32_0 = arith.constant 0 : i32
    %c0_i32_1 = arith.constant 0 : i32
    return %c0_i32, %c0_i32_0 : i32, i32
  }
  func.func @transform_9(%arg0: i32) -> (i32, i32) {
    %c0_i32 = arith.constant 0 : i32
    %c0_i32_0 = arith.constant 0 : i32
    %c0_i32_1 = arith.constant 0 : i32
    return %c0_i32, %c0_i32_0 : i32, i32
  }
  func.func @transform_10(%arg0: i32) -> (i32, i32, i32) {
    %c0_i32 = arith.constant 0 : i32
    %c0_i32_0 = arith.constant 0 : i32
    %c0_i32_1 = arith.constant 0 : i32
    return %arg0, %c0_i32, %c0_i32_0 : i32, i32, i32
  }
}

</mosaic_0001>

<llo_original>
// kernel: tpu_custom_call.1
$region0: #{tpu_custom_call.1}
  #allocation0 [shape = 'u32[]', space=smem, size = 0x4, offset = 0x4, fixed_abs, tag = 'smem constant byte address 0x4 - core index']
  #allocation1 [shape = 'u32[144,128]{1,0:T(1,128)}', space=vmem, size = 0x12000, scoped, tag = 'internal scratch']
  #allocation2 [shape = 'f32[288,128]{1,0:T(8,128)}', space=vmem, size = 0x24000, scoped, tag = 'scratch operand']
  #allocation3 [shape = 'f32[104,128]{1,0:T(8,128)}', space=vmem, size = 0xd000, scoped, tag = 'scratch operand']
  #allocation4 [shape = 'f32[16,128]{1,0:T(8,128)}', space=vmem, size = 0x2000, scoped, tag = 'scratch operand']
  #allocation5 [shape = 'f32[32,128]{1,0:T(8,128)}', space=vmem, size = 0x4000, scoped, tag = 'scratch operand']
  %s0 = inlined_call_operand.hbm [shape: f32[2,328,128], index: 0, kind: input, shape index: {}]
  %s1 = inlined_call_operand.hbm [shape: f32[1152,128], index: 1, kind: input, shape index: {}]
  %s2 = inlined_call_operand.hbm [shape: f32[1,128], index: 2, kind: input, shape index: {}]
  %s3 = inlined_call_operand.hbm [shape: f32[1152,128], index: 3, kind: input, shape index: {}]
  %s4 = inlined_call_operand.hbm [shape: f32[1,128], index: 4, kind: input, shape index: {}]
  %s5 = inlined_call_operand.hbm [shape: f32[32,16], index: 5, kind: input, shape index: {}]
  %s6 = inlined_call_operand.hbm [shape: f32[512,128], index: 6, kind: input, shape index: {}]
  %s7 = inlined_call_operand.hbm [shape: f32[1,128], index: 7, kind: input, shape index: {}]
  %s8 = inlined_call_operand.hbm [shape: f32[128,128], index: 8, kind: input, shape index: {}]
  %s9 = inlined_call_operand.hbm [shape: f32[1,128], index: 9, kind: input, shape index: {}]
  %s10 = inlined_call_operand.hbm [shape: f32[2,8,128], index: 10, kind: output, shape index: {}]
  %s11 = sld [smem:[#allocation0]]
  $region113: #{tpu_custom_call.1} parent=0
    _
  %s13 = ssub.s32 1, %s11
  %s14 = scalar_select 0, %s13, %s11
  $region1: #{tpu_custom_call.1} parent=0
    #allocation6 [shape = 'u8[335872]{0}', space=vmem, size = 0x52000, scoped, tag = 'input window, operand 0']
    #allocation7 [shape = 's32[2]{0}', space=sflag, size = 0x8, scoped, tag = 'scoped memory for tpu_custom_call.1']
    #allocation8 [shape = 's32[2]{0}', space=sflag, size = 0x8, scoped, tag = 'scoped memory for tpu_custom_call.1']
    #allocation9 [shape = 'u8[589824]{0}', space=vmem, size = 0x90000, scoped, tag = 'input window, operand 1, single buffered']
    #allocation10 [shape = 's32[1]{0}', space=sflag, size = 0x4, scoped, tag = 'scoped memory for tpu_custom_call.1']
    #allocation11 [shape = 'u8[512]{0}', space=vmem, size = 0x400, scoped, tag = 'input window, operand 2, single buffered']
    #allocation12 [shape = 'u8[589824]{0}', space=vmem, size = 0x90000, scoped, tag = 'input window, operand 3, single buffered']
    #allocation13 [shape = 's32[1]{0}', space=sflag, size = 0x4, scoped, tag = 'scoped memory for tpu_custom_call.1']
    #allocation14 [shape = 'u8[512]{0}', space=vmem, size = 0x400, scoped, tag = 'input window, operand 4, single buffered']
    #allocation15 [shape = 'u8[16384]{0}', space=vmem, size = 0x4000, scoped, tag = 'input window, operand 5, single buffered']
    #allocation16 [shape = 's32[1]{0}', space=sflag, size = 0x4, scoped, tag = 'scoped memory for tpu_custom_call.1']
    #allocation17 [shape = 'u8[262144]{0}', space=vmem, size = 0x40000, scoped, tag = 'input window, operand 6, single buffered']
    #allocation18 [shape = 'u8[512]{0}', space=vmem, size = 0x400, scoped, tag = 'input window, operand 7, single buffered']
    #allocation19 [shape = 's32[1]{0}', space=sflag, size = 0x4, scoped, tag = 'scoped memory for tpu_custom_call.1']
    #allocation20 [shape = 'u8[65536]{0}', space=vmem, size = 0x10000, scoped, tag = 'input window, operand 8, single buffered']
    #allocation21 [shape = 'u8[512]{0}', space=vmem, size = 0x400, scoped, tag = 'input window, operand 9, single buffered']
    #allocation22 [shape = 's32[1]{0}', space=sflag, size = 0x4, scoped, tag = 'scoped memory for tpu_custom_call.1']
    #allocation23 [shape = 'u8[8192]{0}', space=vmem, size = 0x2000, scoped, tag = 'output window, operand 0']
    %15 = vsyncpa [#allocation7], 0
    %s16 = scalar_lea.sflag [#allocation7], 1
    %17 = vsyncpa %s16, 0
    %18 = vsyncpa [#allocation10], 0
    %19 = vsyncpa [#allocation13], 0
    %20 = vsyncpa [#allocation16], 0
    %21 = vsyncpa [#allocation19], 0
    %22 = vsyncpa [#allocation22], 0
    %23 = vsyncpa [#allocation8], 0
    %s24 = scalar_lea.sflag [#allocation8], 1
    %25 = vsyncpa %s24, 0
    loop: start=0, step=1, limit=4
    $region2: #{tpu_custom_call.1} parent=1 // loop_pre_header
      _
    $region3: #{tpu_custom_call.1} parent=1 // loop_header
      %s27 = sphi 0, %s31
      %p28 = scmp.ge.s32.totalorder %s27, 4
      %s37 = sphi 0, %s39
      %s40 = sphi 0, %s37
      %s41 = sphi 0, %s40
      %s57 = sphi 0, %s41
      %s61 = sphi 0, %s61
      %s63 = sphi 0, %s61
      %s64 = sphi 0, %s63
      %s78 = sphi 0, %s64
      %s82 = sphi 0, %s82
      %s84 = sphi 0, %s82
      %s85 = sphi 0, %s84
      %s99 = sphi 0, %s85
      %s103 = sphi 0, %s103
      %s105 = sphi 0, %s103
      %s106 = sphi 0, %s105
      %s120 = sphi 0, %s106
      %s124 = sphi 0, %s124
      %s126 = sphi 0, %s124
      %s127 = sphi 0, %s126
      %s141 = sphi 0, %s127
      %s145 = sphi 0, %s145
      %s147 = sphi 0, %s145
      %s148 = sphi 0, %s147
      %s162 = sphi 0, %s148
      %s166 = sphi 0, %s166
      %s168 = sphi 0, %s166
      %s169 = sphi 0, %s168
      %s183 = sphi 0, %s169
      %s187 = sphi 0, %s187
      %s189 = sphi 0, %s187
      %s190 = sphi 0, %s189
      %s204 = sphi 0, %s190
      %s208 = sphi 0, %s208
      %s210 = sphi 0, %s208
      %s211 = sphi 0, %s210
      %s225 = sphi 0, %s211
      %s229 = sphi 0, %s229
      %s231 = sphi 0, %s229
      %s232 = sphi 0, %s231
      %s246 = sphi 0, %s232
      %s252 = sphi 0, %s254
      %s255 = sphi 0, %s252
      %s256 = sphi 0, %s255
      %s272 = sphi 0, %s256
    $region4: #{tpu_custom_call.1} parent=1 // loop_header_branch
      %30 = sbr.rel (%p28) target = $region8
    $region5: #{tpu_custom_call.1} parent=1 // loop_body
      %s32 = ssub.s32 %s27, 1
      %s33 = ssub.s32 %s27, 2
      %s34 = sadd.s32 %s27, 1
      %s35 = ssub.s32 %s27, %s34
      %p36 = scmp.eq.s32.totalorder %s35, 0
      %s38 = sadd.s32 %s37, 1
      %s39 = scalar_select %p36, %s37, %s38
      %p42 = pneg %p36
      %p43 = scmp.eq.s32.totalorder %s27, 1
      %p44 = por %p42, %p43
      %p45 = scmp.ne.s32.totalorder %s37, %s40
      %p46 = scmp.eq.s32.totalorder %s27, 0
      %p47 = por %p45, %p46
      %p48 = scmp.ne.s32.totalorder %s37, %s40
      %p49 = scmp.eq.s32.totalorder %s32, 1
      %p50 = por %p48, %p49
      %p51 = scmp.ne.s32.totalorder %s40, %s41
      %p52 = scmp.eq.s32.totalorder %s32, 0
      %p53 = por %p51, %p52
      %p54 = scmp.ne.s32.totalorder %s40, %s41
      %p55 = scmp.eq.s32.totalorder %s33, 1
      %p56 = por %p54, %p55
      %p58 = scmp.ne.s32.totalorder %s41, %s57
      %p59 = scmp.eq.s32.totalorder %s33, 0
      %p60 = por %p58, %p59
      %s62 = sadd.s32 %s61, 1
      %p65 = scmp.eq.s32.totalorder %s27, 1
      %p66 = scmp.ne.s32.totalorder %s61, %s63
      %p67 = scmp.eq.s32.totalorder %s27, 0
      %p68 = por %p66, %p67
      %p69 = scmp.ne.s32.totalorder %s61, %s63
      %p70 = scmp.eq.s32.totalorder %s32, 1
      %p71 = por %p69, %p70
      %p72 = scmp.ne.s32.totalorder %s63, %s64
      %p73 = scmp.eq.s32.totalorder %s32, 0
      %p74 = por %p72, %p73
      %p75 = scmp.ne.s32.totalorder %s63, %s64
      %p76 = scmp.eq.s32.totalorder %s33, 1
      %p77 = por %p75, %p76
      %p79 = scmp.ne.s32.totalorder %s64, %s78
      %p80 = scmp.eq.s32.totalorder %s33, 0
      %p81 = por %p79, %p80
      %s83 = sadd.s32 %s82, 1
      %p86 = scmp.eq.s32.totalorder %s27, 1
      %p87 = scmp.ne.s32.totalorder %s82, %s84
      %p88 = scmp.eq.s32.totalorder %s27, 0
      %p89 = por %p87, %p88
      %p90 = scmp.ne.s32.totalorder %s82, %s84
      %p91 = scmp.eq.s32.totalorder %s32, 1
      %p92 = por %p90, %p91
      %p93 = scmp.ne.s32.totalorder %s84, %s85
      %p94 = scmp.eq.s32.totalorder %s32, 0
      %p95 = por %p93, %p94
      %p96 = scmp.ne.s32.totalorder %s84, %s85
      %p97 = scmp.eq.s32.totalorder %s33, 1
      %p98 = por %p96, %p97
      %p100 = scmp.ne.s32.totalorder %s85, %s99
      %p101 = scmp.eq.s32.totalorder %s33, 0
      %p102 = por %p100, %p101
      %s104 = sadd.s32 %s103, 1
      %p107 = scmp.eq.s32.totalorder %s27, 1
      %p108 = scmp.ne.s32.totalorder %s103, %s105
      %p109 = scmp.eq.s32.totalorder %s27, 0
      %p110 = por %p108, %p109
      %p111 = scmp.ne.s32.totalorder %s103, %s105
      %p112 = scmp.eq.s32.totalorder %s32, 1
      %p113 = por %p111, %p112
      %p114 = scmp.ne.s32.totalorder %s105, %s106
      %p115 = scmp.eq.s32.totalorder %s32, 0
      %p116 = por %p114, %p115
      %p117 = scmp.ne.s32.totalorder %s105, %s106
      %p118 = scmp.eq.s32.totalorder %s33, 1
      %p119 = por %p117, %p118
      %p121 = scmp.ne.s32.totalorder %s106, %s120
      %p122 = scmp.eq.s32.totalorder %s33, 0
      %p123 = por %p121, %p122
      %s125 = sadd.s32 %s124, 1
      %p128 = scmp.eq.s32.totalorder %s27, 1
      %p129 = scmp.ne.s32.totalorder %s124, %s126
      %p130 = scmp.eq.s32.totalorder %s27, 0
      %p131 = por %p129, %p130
      %p132 = scmp.ne.s32.totalorder %s124, %s126
      %p133 = scmp.eq.s32.totalorder %s32, 1
      %p134 = por %p132, %p133
      %p135 = scmp.ne.s32.totalorder %s126, %s127
      %p136 = scmp.eq.s32.totalorder %s32, 0
      %p137 = por %p135, %p136
      %p138 = scmp.ne.s32.totalorder %s126, %s127
      %p139 = scmp.eq.s32.totalorder %s33, 1
      %p140 = por %p138, %p139
      %p142 = scmp.ne.s32.totalorder %s127, %s141
      %p143 = scmp.eq.s32.totalorder %s33, 0
      %p144 = por %p142, %p143
      %s146 = sadd.s32 %s145, 1
      %p149 = scmp.eq.s32.totalorder %s27, 1
      %p150 = scmp.ne.s32.totalorder %s145, %s147
      %p151 = scmp.eq.s32.totalorder %s27, 0
      %p152 = por %p150, %p151
      %p153 = scmp.ne.s32.totalorder %s145, %s147
      %p154 = scmp.eq.s32.totalorder %s32, 1
      %p155 = por %p153, %p154
      %p156 = scmp.ne.s32.totalorder %s147, %s148
      %p157 = scmp.eq.s32.totalorder %s32, 0
      %p158 = por %p156, %p157
      %p159 = scmp.ne.s32.totalorder %s147, %s148
      %p160 = scmp.eq.s32.totalorder %s33, 1
      %p161 = por %p159, %p160
      %p163 = scmp.ne.s32.totalorder %s148, %s162
      %p164 = scmp.eq.s32.totalorder %s33, 0
      %p165 = por %p163, %p164
      %s167 = sadd.s32 %s166, 1
      %p170 = scmp.eq.s32.totalorder %s27, 1
      %p171 = scmp.ne.s32.totalorder %s166, %s168
      %p172 = scmp.eq.s32.totalorder %s27, 0
      %p173 = por %p171, %p172
      %p174 = scmp.ne.s32.totalorder %s166, %s168
      %p175 = scmp.eq.s32.totalorder %s32, 1
      %p176 = por %p174, %p175
      %p177 = scmp.ne.s32.totalorder %s168, %s169
      %p178 = scmp.eq.s32.totalorder %s32, 0
      %p179 = por %p177, %p178
      %p180 = scmp.ne.s32.totalorder %s168, %s169
      %p181 = scmp.eq.s32.totalorder %s33, 1
      %p182 = por %p180, %p181
      %p184 = scmp.ne.s32.totalorder %s169, %s183
      %p185 = scmp.eq.s32.totalorder %s33, 0
      %p186 = por %p184, %p185
      %s188 = sadd.s32 %s187, 1
      %p191 = scmp.eq.s32.totalorder %s27, 1
      %p192 = scmp.ne.s32.totalorder %s187, %s189
      %p193 = scmp.eq.s32.totalorder %s27, 0
      %p194 = por %p192, %p193
      %p195 = scmp.ne.s32.totalorder %s187, %s189
      %p196 = scmp.eq.s32.totalorder %s32, 1
      %p197 = por %p195, %p196
      %p198 = scmp.ne.s32.totalorder %s189, %s190
      %p199 = scmp.eq.s32.totalorder %s32, 0
      %p200 = por %p198, %p199
      %p201 = scmp.ne.s32.totalorder %s189, %s190
      %p202 = scmp.eq.s32.totalorder %s33, 1
      %p203 = por %p201, %p202
      %p205 = scmp.ne.s32.totalorder %s190, %s204
      %p206 = scmp.eq.s32.totalorder %s33, 0
      %p207 = por %p205, %p206
      %s209 = sadd.s32 %s208, 1
      %p212 = scmp.eq.s32.totalorder %s27, 1
      %p213 = scmp.ne.s32.totalorder %s208, %s210
      %p214 = scmp.eq.s32.totalorder %s27, 0
      %p215 = por %p213, %p214
      %p216 = scmp.ne.s32.totalorder %s208, %s210
      %p217 = scmp.eq.s32.totalorder %s32, 1
      %p218 = por %p216, %p217
      %p219 = scmp.ne.s32.totalorder %s210, %s211
      %p220 = scmp.eq.s32.totalorder %s32, 0
      %p221 = por %p219, %p220
      %p222 = scmp.ne.s32.totalorder %s210, %s211
      %p223 = scmp.eq.s32.totalorder %s33, 1
      %p224 = por %p222, %p223
      %p226 = scmp.ne.s32.totalorder %s211, %s225
      %p227 = scmp.eq.s32.totalorder %s33, 0
      %p228 = por %p226, %p227
      %s230 = sadd.s32 %s229, 1
      %p233 = scmp.eq.s32.totalorder %s27, 1
      %p234 = scmp.ne.s32.totalorder %s229, %s231
      %p235 = scmp.eq.s32.totalorder %s27, 0
      %p236 = por %p234, %p235
      %p237 = scmp.ne.s32.totalorder %s229, %s231
      %p238 = scmp.eq.s32.totalorder %s32, 1
      %p239 = por %p237, %p238
      %p240 = scmp.ne.s32.totalorder %s231, %s232
      %p241 = scmp.eq.s32.totalorder %s32, 0
      %p242 = por %p240, %p241
      %p243 = scmp.ne.s32.totalorder %s231, %s232
      %p244 = scmp.eq.s32.totalorder %s33, 1
      %p245 = por %p243, %p244
      %p247 = scmp.ne.s32.totalorder %s232, %s246
      %p248 = scmp.eq.s32.totalorder %s33, 0
      %p249 = por %p247, %p248
      %s250 = ssub.s32 %s27, %s34
      %p251 = scmp.eq.s32.totalorder %s250, 0
      %s253 = sadd.s32 %s252, 1
      %s254 = scalar_select %p251, %s252, %s253
      %p257 = pneg %p251
      %p258 = scmp.eq.s32.totalorder %s27, 1
      %p259 = por %p257, %p258
      %p260 = scmp.ne.s32.totalorder %s252, %s255
      %p261 = scmp.eq.s32.totalorder %s27, 0
      %p262 = por %p260, %p261
      %p263 = scmp.ne.s32.totalorder %s252, %s255
      %p264 = scmp.eq.s32.totalorder %s32, 1
      %p265 = por %p263, %p264
      %p266 = scmp.ne.s32.totalorder %s255, %s256
      %p267 = scmp.eq.s32.totalorder %s32, 0
      %p268 = por %p266, %p267
      %p269 = scmp.ne.s32.totalorder %s255, %s256
      %p270 = scmp.eq.s32.totalorder %s33, 1
      %p271 = por %p269, %p270
      %p273 = scmp.ne.s32.totalorder %s256, %s272
      %p274 = scmp.eq.s32.totalorder %s33, 0
      %p275 = por %p273, %p274
      %p276 = scmp.le.s32.totalorder 1, %s27
      %p277 = scmp.lt.s32.totalorder %s27, 3
      %p278 = pnand %p276, %p277
      %p279 = pneg %p278
      // Predicated region
      $region9: #{tpu_custom_call.1} parent=5 // pred_check
        _
      $region10: #{tpu_custom_call.1} parent=5 // pred_check_branch
        %281 = sbr.rel (%p278) target = $region12
      $region11: #{tpu_custom_call.1} parent=5 // pred_region
        %s282 = ssub.s32 %s27, 1
        // Predicated region
        $region13: #{tpu_custom_call.1} parent=11 // pred_check
          %p283 = pneg %p74
        $region14: #{tpu_custom_call.1} parent=11 // pred_check_branch
          %285 = sbr.rel (%p283) target = $region16
        $region15: #{tpu_custom_call.1} parent=11 // pred_region
          %s287 = ssub.s32 18432, 18432
          %288 = vsyncadd [#allocation10], %s287
          %s289 = sshll.u32 [#allocation9], 4
          %s290 = int_to_ptr.vmem [resolvable:$true] %s289
          %295 = dma.hbm_to_vmem [thread:$0]  %s1, 18432, %s290, [#allocation10], 128, 128, 8
        $region16: #{tpu_custom_call.1} parent=11 // pred_fallthru
          _
        // Predicated region
        $region17: #{tpu_custom_call.1} parent=11 // pred_check
          %p296 = pneg %p95
        $region18: #{tpu_custom_call.1} parent=11 // pred_check_branch
          %298 = sbr.rel (%p296) target = $region20
        $region19: #{tpu_custom_call.1} parent=11 // pred_region
          %s300 = ssub.s32 16, 16
          %301 = vsyncadd [#allocation10], %s300
          %s303 = sshll.u32 [#allocation11], 4
          %s304 = int_to_ptr.vmem [resolvable:$true] %s303
          %306 = dma.hbm_to_vmem [thread:$0]  %s2, 16, %s304, [#allocation10]
        $region20: #{tpu_custom_call.1} parent=11 // pred_fallthru
          _
        // Predicated region
        $region21: #{tpu_custom_call.1} parent=11 // pred_check
          %p307 = pneg %p116
        $region22: #{tpu_custom_call.1} parent=11 // pred_check_branch
          %309 = sbr.rel (%p307) target = $region24
        $region23: #{tpu_custom_call.1} parent=11 // pred_region
          %s311 = ssub.s32 18432, 18432
          %312 = vsyncadd [#allocation13], %s311
          %s313 = sshll.u32 [#allocation12], 4
          %s314 = int_to_ptr.vmem [resolvable:$true] %s313
          %319 = dma.hbm_to_vmem [thread:$0]  %s3, 18432, %s314, [#allocation13], 128, 128, 8
        $region24: #{tpu_custom_call.1} parent=11 // pred_fallthru
          _
        // Predicated region
        $region25: #{tpu_custom_call.1} parent=11 // pred_check
          %p320 = pneg %p137
        $region26: #{tpu_custom_call.1} parent=11 // pred_check_branch
          %322 = sbr.rel (%p320) target = $region28
        $region27: #{tpu_custom_call.1} parent=11 // pred_region
          %s324 = ssub.s32 16, 16
          %325 = vsyncadd [#allocation13], %s324
          %s327 = sshll.u32 [#allocation14], 4
          %s328 = int_to_ptr.vmem [resolvable:$true] %s327
          %330 = dma.hbm_to_vmem [thread:$0]  %s4, 16, %s328, [#allocation13]
        $region28: #{tpu_custom_call.1} parent=11 // pred_fallthru
          _
        // Predicated region
        $region29: #{tpu_custom_call.1} parent=11 // pred_check
          %p331 = pneg %p158
        $region30: #{tpu_custom_call.1} parent=11 // pred_check_branch
          %333 = sbr.rel (%p331) target = $region32
        $region31: #{tpu_custom_call.1} parent=11 // pred_region
          %s335 = ssub.s32 512, 512
          %336 = vsyncadd [#allocation16], %s335
          %s337 = sshll.u32 [#allocation15], 4
          %s338 = int_to_ptr.vmem [resolvable:$true] %s337
          %343 = dma.hbm_to_vmem [thread:$0]  %s5, 512, %s338, [#allocation16], 128, 128, 8
        $region32: #{tpu_custom_call.1} parent=11 // pred_fallthru
          _
        // Predicated region
        $region33: #{tpu_custom_call.1} parent=11 // pred_check
          %p344 = pneg %p179
        $region34: #{tpu_custom_call.1} parent=11 // pred_check_branch
          %346 = sbr.rel (%p344) target = $region36
        $region35: #{tpu_custom_call.1} parent=11 // pred_region
          %s348 = ssub.s32 8192, 8192
          %349 = vsyncadd [#allocation16], %s348
          %s350 = sshll.u32 [#allocation17], 4
          %s351 = int_to_ptr.vmem [resolvable:$true] %s350
          %356 = dma.hbm_to_vmem [thread:$0]  %s6, 8192, %s351, [#allocation16], 128, 128, 8
        $region36: #{tpu_custom_call.1} parent=11 // pred_fallthru
          _
        // Predicated region
        $region37: #{tpu_custom_call.1} parent=11 // pred_check
          %p357 = pneg %p200
        $region38: #{tpu_custom_call.1} parent=11 // pred_check_branch
          %359 = sbr.rel (%p357) target = $region40
        $region39: #{tpu_custom_call.1} parent=11 // pred_region
          %s361 = ssub.s32 16, 16
          %362 = vsyncadd [#allocation19], %s361
          %s364 = sshll.u32 [#allocation18], 4
          %s365 = int_to_ptr.vmem [resolvable:$true] %s364
          %367 = dma.hbm_to_vmem [thread:$0]  %s7, 16, %s365, [#allocation19]
        $region40: #{tpu_custom_call.1} parent=11 // pred_fallthru
          _
        // Predicated region
        $region41: #{tpu_custom_call.1} parent=11 // pred_check
          %p368 = pneg %p221
        $region42: #{tpu_custom_call.1} parent=11 // pred_check_branch
          %370 = sbr.rel (%p368) target = $region44
        $region43: #{tpu_custom_call.1} parent=11 // pred_region
          %s372 = ssub.s32 2048, 2048
          %373 = vsyncadd [#allocation19], %s372
          %s374 = sshll.u32 [#allocation20], 4
          %s375 = int_to_ptr.vmem [resolvable:$true] %s374
          %380 = dma.hbm_to_vmem [thread:$0]  %s8, 2048, %s375, [#allocation19], 128, 128, 8
        $region44: #{tpu_custom_call.1} parent=11 // pred_fallthru
          _
        // Predicated region
        $region45: #{tpu_custom_call.1} parent=11 // pred_check
          %p381 = pneg %p242
        $region46: #{tpu_custom_call.1} parent=11 // pred_check_branch
          %383 = sbr.rel (%p381) target = $region48
        $region47: #{tpu_custom_call.1} parent=11 // pred_region
          %s385 = ssub.s32 16, 16
          %386 = vsyncadd [#allocation22], %s385
          %s388 = sshll.u32 [#allocation21], 4
          %s389 = int_to_ptr.vmem [resolvable:$true] %s388
          %391 = dma.hbm_to_vmem [thread:$0]  %s9, 16, %s389, [#allocation22]
        $region48: #{tpu_custom_call.1} parent=11 // pred_fallthru
          _
      $region12: #{tpu_custom_call.1} parent=5 // pred_fallthru
        _
      %p392 = scmp.lt.s32.totalorder %s27, 2
      // Predicated region
      $region49: #{tpu_custom_call.1} parent=5 // pred_check
        %p393 = pneg %p392
      $region50: #{tpu_custom_call.1} parent=5 // pred_check_branch
        %395 = sbr.rel (%p393) target = $region52
      $region51: #{tpu_custom_call.1} parent=5 // pred_region
        // Predicated region
        $region53: #{tpu_custom_call.1} parent=51 // pred_check
          %p396 = pneg %p47
        $region54: #{tpu_custom_call.1} parent=51 // pred_check_branch
          %398 = sbr.rel (%p396) target = $region56
        $region55: #{tpu_custom_call.1} parent=51 // pred_region
          %s399 = sand.u32 %s37, 1
          %s400 = scalar_lea.sflag [#allocation7], %s399
          %s401 = sand.u32 %s37, 1
          %s402 = smul.addr %s401, 328
          %s403 = scalar_lea.vmem [#allocation6], %s402
          %s405 = ssub.s32 5248, 5248
          %406 = vsyncadd %s400, %s405
          %s407 = smul.addr %s27, 41
          %s408 = smul.addr %s407, 128
          %s409 = scalar_lea.hbm %s0, %s408
          %s410 = sshll.u32 %s403, 4
          %s411 = int_to_ptr.vmem [resolvable:$true] %s410
          %416 = dma.hbm_to_vmem [thread:$0]  %s409, 5248, %s411, %s400, 128, 128, 8
        $region56: #{tpu_custom_call.1} parent=51 // pred_fallthru
          _
      $region52: #{tpu_custom_call.1} parent=5 // pred_fallthru
        _
      %p417 = scmp.le.s32.totalorder 1, %s27
      %p418 = scmp.lt.s32.totalorder %s27, 3
      %p419 = pnand %p417, %p418
      %p420 = pneg %p419
      // Predicated region
      $region57: #{tpu_custom_call.1} parent=5 // pred_check
        _
      $region58: #{tpu_custom_call.1} parent=5 // pred_check_branch
        %422 = sbr.rel (%p419) target = $region60
      $region59: #{tpu_custom_call.1} parent=5 // pred_region
        %s423 = ssub.s32 %s27, 1
        %s424 = sand.u32 %s40, 1
        %s425 = scalar_lea.sflag [#allocation7], %s424
        %s426 = sand.u32 %s40, 1
        %s427 = smul.addr %s426, 328
        %s428 = scalar_lea.vmem [#allocation6], %s427
        // Predicated region
        $region61: #{tpu_custom_call.1} parent=59 // pred_check
          %p429 = pneg %p53
        $region62: #{tpu_custom_call.1} parent=59 // pred_check_branch
          %431 = sbr.rel (%p429) target = $region64
        $region63: #{tpu_custom_call.1} parent=59 // pred_region
          %432 = dma.done %s425, 5248
        $region64: #{tpu_custom_call.1} parent=59 // pred_fallthru
          _
        // Predicated region
        $region65: #{tpu_custom_call.1} parent=59 // pred_check
          %p433 = pneg %p74
        $region66: #{tpu_custom_call.1} parent=59 // pred_check_branch
          %435 = sbr.rel (%p433) target = $region68
        $region67: #{tpu_custom_call.1} parent=59 // pred_region
          %436 = dma.done [#allocation10], 18432
        $region68: #{tpu_custom_call.1} parent=59 // pred_fallthru
          _
        // Predicated region
        $region69: #{tpu_custom_call.1} parent=59 // pred_check
          %p437 = pneg %p95
        $region70: #{tpu_custom_call.1} parent=59 // pred_check_branch
          %439 = sbr.rel (%p437) target = $region72
        $region71: #{tpu_custom_call.1} parent=59 // pred_region
          %440 = dma.done [#allocation10], 16
        $region72: #{tpu_custom_call.1} parent=59 // pred_fallthru
          _
        // Predicated region
        $region73: #{tpu_custom_call.1} parent=59 // pred_check
          %p441 = pneg %p116
        $region74: #{tpu_custom_call.1} parent=59 // pred_check_branch
          %443 = sbr.rel (%p441) target = $region76
        $region75: #{tpu_custom_call.1} parent=59 // pred_region
          %444 = dma.done [#allocation13], 18432
        $region76: #{tpu_custom_call.1} parent=59 // pred_fallthru
          _
        // Predicated region
        $region77: #{tpu_custom_call.1} parent=59 // pred_check
          %p445 = pneg %p137
        $region78: #{tpu_custom_call.1} parent=59 // pred_check_branch
          %447 = sbr.rel (%p445) target = $region80
        $region79: #{tpu_custom_call.1} parent=59 // pred_region
          %448 = dma.done [#allocation13], 16
        $region80: #{tpu_custom_call.1} parent=59 // pred_fallthru
          _
        // Predicated region
        $region81: #{tpu_custom_call.1} parent=59 // pred_check
          %p449 = pneg %p158
        $region82: #{tpu_custom_call.1} parent=59 // pred_check_branch
          %451 = sbr.rel (%p449) target = $region84
        $region83: #{tpu_custom_call.1} parent=59 // pred_region
          %452 = dma.done [#allocation16], 512
        $region84: #{tpu_custom_call.1} parent=59 // pred_fallthru
          _
        // Predicated region
        $region85: #{tpu_custom_call.1} parent=59 // pred_check
          %p453 = pneg %p179
        $region86: #{tpu_custom_call.1} parent=59 // pred_check_branch
          %455 = sbr.rel (%p453) target = $region88
        $region87: #{tpu_custom_call.1} parent=59 // pred_region
          %456 = dma.done [#allocation16], 8192
        $region88: #{tpu_custom_call.1} parent=59 // pred_fallthru
          _
        // Predicated region
        $region89: #{tpu_custom_call.1} parent=59 // pred_check
          %p457 = pneg %p200
        $region90: #{tpu_custom_call.1} parent=59 // pred_check_branch
          %459 = sbr.rel (%p457) target = $region92
        $region91: #{tpu_custom_call.1} parent=59 // pred_region
          %460 = dma.done [#allocation19], 16
        $region92: #{tpu_custom_call.1} parent=59 // pred_fallthru
          _
        // Predicated region
        $region93: #{tpu_custom_call.1} parent=59 // pred_check
          %p461 = pneg %p221
        $region94: #{tpu_custom_call.1} parent=59 // pred_check_branch
          %463 = sbr.rel (%p461) target = $region96
        $region95: #{tpu_custom_call.1} parent=59 // pred_region
          %464 = dma.done [#allocation19], 2048
        $region96: #{tpu_custom_call.1} parent=59 // pred_fallthru
          _
        // Predicated region
        $region97: #{tpu_custom_call.1} parent=59 // pred_check
          %p465 = pneg %p242
        $region98: #{tpu_custom_call.1} parent=59 // pred_check_branch
          %467 = sbr.rel (%p465) target = $region100
        $region99: #{tpu_custom_call.1} parent=59 // pred_region
          %468 = dma.done [#allocation22], 16
        $region100: #{tpu_custom_call.1} parent=59 // pred_fallthru
          _
        %s469 = sand.u32 %s40, 1
        %s470 = scalar_lea.sflag [#allocation7], %s469
        %s471 = sand.u32 %s40, 1
        %s472 = smul.addr %s471, 328
        %s473 = scalar_lea.vmem [#allocation6], %s472
        %p474 = pneg %p53
        %p475 = pneg %p50
        %p476 = pneg %p74
        %p477 = pneg %p71
        %p478 = pneg %p95
        %p479 = pneg %p92
        %p480 = pneg %p116
        %p481 = pneg %p113
        %p482 = pneg %p137
        %p483 = pneg %p134
        %p484 = pneg %p158
        %p485 = pneg %p155
        %p486 = pneg %p179
        %p487 = pneg %p176
        %p488 = pneg %p200
        %p489 = pneg %p197
        %p490 = pneg %p221
        %p491 = pneg %p218
        %p492 = pneg %p242
        %p493 = pneg %p239
        %p494 = pneg %p268
        %p495 = pneg %p265
        %s496 = sand.u32 %s255, 1
        %s497 = scalar_lea.sflag [#allocation8], %s496
        %s498 = sand.u32 %s255, 1
        %s499 = smul.addr %s498, 8
        %s500 = scalar_lea.vmem [#allocation23], %s499
        %501 = vst [vmem:[#allocation3] sm:$0xff] 0.0
        %502 = vst [vmem:[#allocation3 + $0x8] sm:$0xff] 0.0
        %503 = vst [vmem:[#allocation3 + $0x10] sm:$0xff] 0.0
        %504 = vst [vmem:[#allocation3 + $0x18] sm:$0xff] 0.0
        %505 = vst [vmem:[#allocation3 + $0x20] sm:$0xff] 0.0
        %506 = vst [vmem:[#allocation3 + $0x28] sm:$0xff] 0.0
        %507 = vst [vmem:[#allocation3 + $0x30] sm:$0xff] 0.0
        %508 = vst [vmem:[#allocation3 + $0x38] sm:$0xff] 0.0
        %509 = vst [vmem:[#allocation3 + $0x40] sm:$0xff] 0.0
        %510 = vst [vmem:[#allocation3 + $0x48] sm:$0xff] 0.0
        %511 = vst [vmem:[#allocation3 + $0x50] sm:$0xff] 0.0
        %512 = vst [vmem:[#allocation3 + $0x58] sm:$0xff] 0.0
        %513 = vst [vmem:[#allocation3 + $0x60] sm:$0xff] 0.0
        %v514 = vld [vmem:[%s428] sm:$0xff]
        %v515 = vld [vmem:[%s428 + $0x8] sm:$0xff]
        %v516 = vld [vmem:[%s428 + $0x10] sm:$0xff]
        %v517 = vld [vmem:[%s428 + $0x18] sm:$0xff]
        %v518 = vld [vmem:[%s428 + $0x20] sm:$0xff]
        %v519 = vld [vmem:[%s428 + $0x28] sm:$0xff]
        %v520 = vld [vmem:[%s428 + $0x30] sm:$0xff]
        %v521 = vld [vmem:[%s428 + $0x38] sm:$0xff]
        %v522 = vld [vmem:[%s428 + $0x40] sm:$0xff]
        %v523 = vld [vmem:[%s428 + $0x48] sm:$0xff]
        %v524 = vld [vmem:[%s428 + $0x50] sm:$0xff]
        %v525 = vld [vmem:[%s428 + $0x58] sm:$0xff]
        %v526 = vld [vmem:[%s428 + $0x60] sm:$0xff]
        %v527 = vld [vmem:[%s428 + $0x68] sm:$0xff]
        %v528 = vld [vmem:[%s428 + $0x70] sm:$0xff]
        %v529 = vld [vmem:[%s428 + $0x78] sm:$0xff]
        %v530 = vld [vmem:[%s428 + $0x80] sm:$0xff]
        %v531 = vld [vmem:[%s428 + $0x88] sm:$0xff]
        %v532 = vld [vmem:[%s428 + $0x90] sm:$0xff]
        %v533 = vld [vmem:[%s428 + $0x98] sm:$0xff]
        %v534 = vld [vmem:[%s428 + $0xa0] sm:$0xff]
        %v535 = vld [vmem:[%s428 + $0xa8] sm:$0xff]
        %v536 = vld [vmem:[%s428 + $0xb0] sm:$0xff]
        %v537 = vld [vmem:[%s428 + $0xb8] sm:$0xff]
        %v538 = vld [vmem:[%s428 + $0xc0] sm:$0xff]
        %v539 = vld [vmem:[%s428 + $0xc8] sm:$0xff]
        %v540 = vld [vmem:[%s428 + $0xd0] sm:$0xff]
        %v541 = vld [vmem:[%s428 + $0xd8] sm:$0xff]
        %v542 = vld [vmem:[%s428 + $0xe0] sm:$0xff]
        %v543 = vld [vmem:[%s428 + $0xe8] sm:$0xff]
        %v544 = vld [vmem:[%s428 + $0xf0] sm:$0xff]
        %v545 = vld [vmem:[%s428 + $0xf8] sm:$0xff]
        %v546 = vld [vmem:[%s428 + $0x100] sm:$0xff]
        %v547 = vld [vmem:[%s428 + $0x108] sm:$0xff]
        %v548 = vld [vmem:[%s428 + $0x110] sm:$0xff]
        %v549 = vld [vmem:[%s428 + $0x118] sm:$0xff]
        %v550 = vld [vmem:[#allocation9] sm:$0xff]
        %v551 = vld [vmem:[#allocation9 + $0x8] sm:$0xff]
        %v552 = vld [vmem:[#allocation9 + $0x10] sm:$0xff]
        %v553 = vld [vmem:[#allocation9 + $0x18] sm:$0xff]
        %v554 = vld [vmem:[#allocation9 + $0x20] sm:$0xff]
        %v555 = vld [vmem:[#allocation9 + $0x28] sm:$0xff]
        %v556 = vld [vmem:[#allocation9 + $0x30] sm:$0xff]
        %v557 = vld [vmem:[#allocation9 + $0x38] sm:$0xff]
        %v558 = vld [vmem:[#allocation9 + $0x40] sm:$0xff]
        %v559 = vld [vmem:[#allocation9 + $0x48] sm:$0xff]
        %v560 = vld [vmem:[#allocation9 + $0x50] sm:$0xff]
        %v561 = vld [vmem:[#allocation9 + $0x58] sm:$0xff]
        %v562 = vld [vmem:[#allocation9 + $0x60] sm:$0xff]
        %v563 = vld [vmem:[#allocation9 + $0x68] sm:$0xff]
        %v564 = vld [vmem:[#allocation9 + $0x70] sm:$0xff]
        %v565 = vld [vmem:[#allocation9 + $0x78] sm:$0xff]
        %v566 = vld [vmem:[%s428 + $0x1] sm:$0xff]
        %v567 = vld [vmem:[%s428 + $0x9] sm:$0xff]
        %v568 = vld [vmem:[%s428 + $0x11] sm:$0xff]
        %v569 = vld [vmem:[%s428 + $0x19] sm:$0xff]
        %v570 = vld [vmem:[%s428 + $0x21] sm:$0xff]
        %v571 = vld [vmem:[%s428 + $0x29] sm:$0xff]
        %v572 = vld [vmem:[%s428 + $0x31] sm:$0xff]
        %v573 = vld [vmem:[%s428 + $0x39] sm:$0xff]
        %v574 = vld [vmem:[%s428 + $0x41] sm:$0xff]
        %v575 = vld [vmem:[%s428 + $0x49] sm:$0xff]
        %v576 = vld [vmem:[%s428 + $0x51] sm:$0xff]
        %v577 = vld [vmem:[%s428 + $0x59] sm:$0xff]
        %v578 = vld [vmem:[%s428 + $0x61] sm:$0xff]
        %v579 = vld [vmem:[%s428 + $0x69] sm:$0xff]
        %v580 = vld [vmem:[%s428 + $0x71] sm:$0xff]
        %v581 = vld [vmem:[%s428 + $0x79] sm:$0xff]
        %v582 = vld [vmem:[%s428 + $0x81] sm:$0xff]
        %v583 = vld [vmem:[%s428 + $0x89] sm:$0xff]
        %v584 = vld [vmem:[%s428 + $0x91] sm:$0xff]
        %v585 = vld [vmem:[%s428 + $0x99] sm:$0xff]
        %v586 = vld [vmem:[%s428 + $0xa1] sm:$0xff]
        %v587 = vld [vmem:[%s428 + $0xa9] sm:$0xff]
        %v588 = vld [vmem:[%s428 + $0xb1] sm:$0xff]
        %v589 = vld [vmem:[%s428 + $0xb9] sm:$0xff]
        %v590 = vld [vmem:[%s428 + $0xc1] sm:$0xff]
        %v591 = vld [vmem:[%s428 + $0xc9] sm:$0xff]
        %v592 = vld [vmem:[%s428 + $0xd1] sm:$0xff]
        %v593 = vld [vmem:[%s428 + $0xd9] sm:$0xff]
        %v594 = vld [vmem:[%s428 + $0xe1] sm:$0xff]
        %v595 = vld [vmem:[%s428 + $0xe9] sm:$0xff]
        %v596 = vld [vmem:[%s428 + $0xf1] sm:$0xff]
        %v597 = vld [vmem:[%s428 + $0xf9] sm:$0xff]
        %v598 = vld [vmem:[%s428 + $0x101] sm:$0xff]
        %v599 = vld [vmem:[%s428 + $0x109] sm:$0xff]
        %v600 = vld [vmem:[%s428 + $0x111] sm:$0xff]
        %v601 = vld [vmem:[%s428 + $0x119] sm:$0xff]
        %v602 = vld [vmem:[#allocation9 + $0x80] sm:$0xff]
        %v603 = vld [vmem:[#allocation9 + $0x88] sm:$0xff]
        %v604 = vld [vmem:[#allocation9 + $0x90] sm:$0xff]
        %v605 = vld [vmem:[#allocation9 + $0x98] sm:$0xff]
        %v606 = vld [vmem:[#allocation9 + $0xa0] sm:$0xff]
        %v607 = vld [vmem:[#allocation9 + $0xa8] sm:$0xff]
        %v608 = vld [vmem:[#allocation9 + $0xb0] sm:$0xff]
        %v609 = vld [vmem:[#allocation9 + $0xb8] sm:$0xff]
        %v610 = vld [vmem:[#allocation9 + $0xc0] sm:$0xff]
        %v611 = vld [vmem:[#allocation9 + $0xc8] sm:$0xff]
        %v612 = vld [vmem:[#allocation9 + $0xd0] sm:$0xff]
        %v613 = vld [vmem:[#allocation9 + $0xd8] sm:$0xff]
        %v614 = vld [vmem:[#allocation9 + $0xe0] sm:$0xff]
        %v615 = vld [vmem:[#allocation9 + $0xe8] sm:$0xff]
        %v616 = vld [vmem:[#allocation9 + $0xf0] sm:$0xff]
        %v617 = vld [vmem:[#allocation9 + $0xf8] sm:$0xff]
        %618 = vmatprep.subr.mxu0 0.0
        %619 = vmatpush1.msra.mxu0 %v602
        %620 = vmatprep.subr.mxu0 0.0
        %621 = vmatpush1.msra.mxu0 %v603
        %622 = vmatprep.subr.mxu0 0.0
        %623 = vmatpush1.msra.mxu0 %v604
        %624 = vmatprep.subr.mxu0 0.0
        %625 = vmatpush1.msra.mxu0 %v605
        %626 = vmatprep.subr.mxu0 0.0
        %627 = vmatpush1.msra.mxu0 %v606
        %628 = vmatprep.subr.mxu0 0.0
        %629 = vmatpush1.msra.mxu0 %v607
        %630 = vmatprep.subr.mxu0 0.0
        %631 = vmatpush1.msra.mxu0 %v608
        %632 = vmatprep.subr.mxu0 0.0
        %633 = vmatpush1.msra.mxu0 %v609
        %634 = vmatprep.subr.mxu0 0.0
        %635 = vmatpush1.msra.mxu0 %v610
        %636 = vmatprep.subr.mxu0 0.0
        %637 = vmatpush1.msra.mxu0 %v611
        %638 = vmatprep.subr.mxu0 0.0
        %639 = vmatpush1.msra.mxu0 %v612
        %640 = vmatprep.subr.mxu0 0.0
        %641 = vmatpush1.msra.mxu0 %v613
        %642 = vmatprep.subr.mxu0 0.0
        %643 = vmatpush1.msra.mxu0 %v614
        %644 = vmatprep.subr.mxu0 0.0
        %645 = vmatpush1.msra.mxu0 %v615
        %646 = vmatprep.subr.mxu0 0.0
        %647 = vmatpush1.msra.mxu0 %v616
        %648 = vmatprep.subr.mxu0 0.0
        %649 = vmatpush1.msra.mxu0 %v617
        %650 = vmatprep.subr.mxu0 0.0
        %651 = vmatpush1.msra.mxu0 0.0
        %652 = vmatprep.subr.mxu0 0.0
        %653 = vmatpush1.msra.mxu0 0.0
        %654 = vmatprep.subr.mxu0 0.0
        %655 = vmatpush1.msra.mxu0 0.0
        %656 = vmatprep.subr.mxu0 0.0
        %657 = vmatpush1.msra.mxu0 0.0
        %658 = vmatprep.subr.mxu0 0.0
        %659 = vmatpush1.msra.mxu0 0.0
        %660 = vmatprep.subr.mxu0 0.0
        %661 = vmatpush1.msra.mxu0 0.0
        %662 = vmatprep.subr.mxu0 0.0
        %663 = vmatpush1.msra.mxu0 0.0
        %664 = vmatprep.subr.mxu0 0.0
        %665 = vmatpush1.msra.mxu0 0.0
        %666 = vmatprep.subr.mxu0 0.0
        %667 = vmatpush1.msra.mxu0 0.0
        %668 = vmatprep.subr.mxu0 0.0
        %669 = vmatpush1.msra.mxu0 0.0
        %670 = vmatprep.subr.mxu0 0.0
        %671 = vmatpush1.msra.mxu0 0.0
        %672 = vmatprep.subr.mxu0 0.0
        %673 = vmatpush1.msra.mxu0 0.0
        %674 = vmatprep.subr.mxu0 0.0
        %675 = vmatpush1.msra.mxu0 0.0
        %676 = vmatprep.subr.mxu0 0.0
        %677 = vmatpush1.msra.mxu0 0.0
        %678 = vmatprep.subr.mxu0 0.0
        %679 = vmatpush1.msra.mxu0 0.0
        %680 = vmatprep.subr.mxu0 0.0
        %681 = vmatpush1.msra.mxu0 0.0
        %682 = vmatprep.mubr.f32.mxu0 0.0
        %683 = vmatmul.mubr.f32.gmra.mrb[0].mxu0 %v566
        %v684 = vpop.f32.mrb[0].mxu0
        %v685 = vadd.f32 0.0, %v684
        %v686 = vpop.f32.mrb[0].mxu0
        %687 = vmatprep.mubr.f32.mxu0 0.0
        %688 = vmatmul.mubr.f32.gmra.mrb[0].mxu0 %v567
        %v689 = vpop.f32.mrb[0].mxu0
        %v690 = vadd.f32 0.0, %v689
        %v691 = vpop.f32.mrb[0].mxu0
        %692 = vmatprep.mubr.f32.mxu0 0.0
        %693 = vmatmul.mubr.f32.gmra.mrb[0].mxu0 %v568
        %v694 = vpop.f32.mrb[0].mxu0
        %v695 = vadd.f32 0.0, %v694
        %v696 = vpop.f32.mrb[0].mxu0
        %697 = vmatprep.mubr.f32.mxu0 0.0
        %698 = vmatmul.mubr.f32.gmra.mrb[0].mxu0 %v569
        %v699 = vpop.f32.mrb[0].mxu0
        %v700 = vadd.f32 0.0, %v699
        %v701 = vpop.f32.mrb[0].mxu0
        %702 = vmatprep.mubr.f32.mxu0 0.0
        %703 = vmatmul.mubr.f32.gmra.mrb[0].mxu0 %v570
        %v704 = vpop.f32.mrb[0].mxu0
        %v705 = vadd.f32 0.0, %v704
        %v706 = vpop.f32.mrb[0].mxu0
        %707 = vmatprep.mubr.f32.mxu0 0.0
        %708 = vmatmul.mubr.f32.gmra.mrb[0].mxu0 %v571
        %v709 = vpop.f32.mrb[0].mxu0
        %v710 = vadd.f32 0.0, %v709
        %v711 = vpop.f32.mrb[0].mxu0
        %712 = vmatprep.mubr.f32.mxu0 0.0
        %713 = vmatmul.mubr.f32.gmra.mrb[0].mxu0 %v572
        %v714 = vpop.f32.mrb[0].mxu0
        %v715 = vadd.f32 0.0, %v714
        %v716 = vpop.f32.mrb[0].mxu0
        %717 = vmatprep.mubr.f32.mxu0 0.0
        %718 = vmatmul.mubr.f32.gmra.mrb[0].mxu0 %v573
        %v719 = vpop.f32.mrb[0].mxu0
        %v720 = vadd.f32 0.0, %v719
        %v721 = vpop.f32.mrb[0].mxu0
        %722 = vmatprep.mubr.f32.mxu0 0.0
        %723 = vmatmul.mubr.f32.gmra.mrb[0].mxu0 %v574
        %v724 = vpop.f32.mrb[0].mxu0
        %v725 = vadd.f32 0.0, %v724
        %v726 = vpop.f32.mrb[0].mxu0
        %727 = vmatprep.mubr.f32.mxu0 0.0
        %728 = vmatmul.mubr.f32.gmra.mrb[0].mxu0 %v575
        %v729 = vpop.f32.mrb[0].mxu0
        %v730 = vadd.f32 0.0, %v729
        %v731 = vpop.f32.mrb[0].mxu0
        %732 = vmatprep.mubr.f32.mxu0 0.0
        %733 = vmatmul.mubr.f32.gmra.mrb[0].mxu0 %v576
        %v734 = vpop.f32.mrb[0].mxu0
        %v735 = vadd.f32 0.0, %v734
        %v736 = vpop.f32.mrb[0].mxu0
        %737 = vmatprep.mubr.f32.mxu0 0.0
        %738 = vmatmul.mubr.f32.gmra.mrb[0].mxu0 %v577
        %v739 = vpop.f32.mrb[0].mxu0
        %v740 = vadd.f32 0.0, %v739
        %v741 = vpop.f32.mrb[0].mxu0
        %742 = vmatprep.mubr.f32.mxu0 0.0
        %743 = vmatmul.mubr.f32.gmra.mrb[0].mxu0 %v578
        %v744 = vpop.f32.mrb[0].mxu0
        %v745 = vadd.f32 0.0, %v744
        %v746 = vpop.f32.mrb[0].mxu0
        %747 = vmatprep.mubr.f32.mxu0 0.0
        %748 = vmatmul.mubr.f32.gmra.mrb[0].mxu0 %v579
        %v749 = vpop.f32.mrb[0].mxu0
        %v750 = vadd.f32 0.0, %v749
        %v751 = vpop.f32.mrb[0].mxu0
        %752 = vmatprep.mubr.f32.mxu0 0.0
        %753 = vmatmul.mubr.f32.gmra.mrb[0].mxu0 %v580
        %v754 = vpop.f32.mrb[0].mxu0
        %v755 = vadd.f32 0.0, %v754
        %v756 = vpop.f32.mrb[0].mxu0
        %757 = vmatprep.mubr.f32.mxu0 0.0
        %758 = vmatmul.mubr.f32.gmra.mrb[0].mxu0 %v581
        %v759 = vpop.f32.mrb[0].mxu0
        %v760 = vadd.f32 0.0, %v759
        %v761 = vpop.f32.mrb[0].mxu0
        %762 = vmatprep.mubr.f32.mxu0 0.0
        %763 = vmatmul.mubr.f32.gmra.mrb[0].mxu0 %v582
        %v764 = vpop.f32.mrb[0].mxu0
        %v765 = vadd.f32 0.0, %v764
        %v766 = vpop.f32.mrb[0].mxu0
        %767 = vmatprep.mubr.f32.mxu0 0.0
        %768 = vmatmul.mubr.f32.gmra.mrb[0].mxu0 %v583
        %v769 = vpop.f32.mrb[0].mxu0
        %v770 = vadd.f32 0.0, %v769
        %v771 = vpop.f32.mrb[0].mxu0
        %772 = vmatprep.mubr.f32.mxu0 0.0
        %773 = vmatmul.mubr.f32.gmra.mrb[0].mxu0 %v584
        %v774 = vpop.f32.mrb[0].mxu0
        %v775 = vadd.f32 0.0, %v774
        %v776 = vpop.f32.mrb[0].mxu0
        %777 = vmatprep.mubr.f32.mxu0 0.0
        %778 = vmatmul.mubr.f32.gmra.mrb[0].mxu0 %v585
        %v779 = vpop.f32.mrb[0].mxu0
        %v780 = vadd.f32 0.0, %v779
        %v781 = vpop.f32.mrb[0].mxu0
        %782 = vmatprep.mubr.f32.mxu0 0.0
        %783 = vmatmul.mubr.f32.gmra.mrb[0].mxu0 %v586
        %v784 = vpop.f32.mrb[0].mxu0
        %v785 = vadd.f32 0.0, %v784
        %v786 = vpop.f32.mrb[0].mxu0
        %787 = vmatprep.mubr.f32.mxu0 0.0
        %788 = vmatmul.mubr.f32.gmra.mrb[0].mxu0 %v587
        %v789 = vpop.f32.mrb[0].mxu0
        %v790 = vadd.f32 0.0, %v789
        %v791 = vpop.f32.mrb[0].mxu0
        %792 = vmatprep.mubr.f32.mxu0 0.0
        %793 = vmatmul.mubr.f32.gmra.mrb[0].mxu0 %v588
        %v794 = vpop.f32.mrb[0].mxu0
        %v795 = vadd.f32 0.0, %v794
        %v796 = vpop.f32.mrb[0].mxu0
        %797 = vmatprep.mubr.f32.mxu0 0.0
        %798 = vmatmul.mubr.f32.gmra.mrb[0].mxu0 %v589
        %v799 = vpop.f32.mrb[0].mxu0
        %v800 = vadd.f32 0.0, %v799
        %v801 = vpop.f32.mrb[0].mxu0
        %802 = vmatprep.mubr.f32.mxu0 0.0
        %803 = vmatmul.mubr.f32.gmra.mrb[0].mxu0 %v590
        %v804 = vpop.f32.mrb[0].mxu0
        %v805 = vadd.f32 0.0, %v804
        %v806 = vpop.f32.mrb[0].mxu0
        %807 = vmatprep.mubr.f32.mxu0 0.0
        %808 = vmatmul.mubr.f32.gmra.mrb[0].mxu0 %v591
        %v809 = vpop.f32.mrb[0].mxu0
        %v810 = vadd.f32 0.0, %v809
        %v811 = vpop.f32.mrb[0].mxu0
        %812 = vmatprep.mubr.f32.mxu0 0.0
        %813 = vmatmul.mubr.f32.gmra.mrb[0].mxu0 %v592
        %v814 = vpop.f32.mrb[0].mxu0
        %v815 = vadd.f32 0.0, %v814
        %v816 = vpop.f32.mrb[0].mxu0
        %817 = vmatprep.mubr.f32.mxu0 0.0
        %818 = vmatmul.mubr.f32.gmra.mrb[0].mxu0 %v593
        %v819 = vpop.f32.mrb[0].mxu0
        %v820 = vadd.f32 0.0, %v819
        %v821 = vpop.f32.mrb[0].mxu0
        %822 = vmatprep.mubr.f32.mxu0 0.0
        %823 = vmatmul.mubr.f32.gmra.mrb[0].mxu0 %v594
        %v824 = vpop.f32.mrb[0].mxu0
        %v825 = vadd.f32 0.0, %v824
        %v826 = vpop.f32.mrb[0].mxu0
        %827 = vmatprep.mubr.f32.mxu0 0.0
        %828 = vmatmul.mubr.f32.gmra.mrb[0].mxu0 %v595
        %v829 = vpop.f32.mrb[0].mxu0
        %v830 = vadd.f32 0.0, %v829
        %v831 = vpop.f32.mrb[0].mxu0
        %832 = vmatprep.mubr.f32.mxu0 0.0
        %833 = vmatmul.mubr.f32.gmra.mrb[0].mxu0 %v596
        %v834 = vpop.f32.mrb[0].mxu0
        %v835 = vadd.f32 0.0, %v834
        %v836 = vpop.f32.mrb[0].mxu0
        %837 = vmatprep.mubr.f32.mxu0 0.0
        %838 = vmatmul.mubr.f32.gmra.mrb[0].mxu0 %v597
        %v839 = vpop.f32.mrb[0].mxu0
        %v840 = vadd.f32 0.0, %v839
        %v841 = vpop.f32.mrb[0].mxu0
        %842 = vmatprep.mubr.f32.mxu0 0.0
        %843 = vmatmul.mubr.f32.gmra.mrb[0].mxu0 %v598
        %v844 = vpop.f32.mrb[0].mxu0
        %v845 = vadd.f32 0.0, %v844
        %v846 = vpop.f32.mrb[0].mxu0
        %847 = vmatprep.mubr.f32.mxu0 0.0
        %848 = vmatmul.mubr.f32.gmra.mrb[0].mxu0 %v599
        %v849 = vpop.f32.mrb[0].mxu0
        %v850 = vadd.f32 0.0, %v849
        %v851 = vpop.f32.mrb[0].mxu0
        %852 = vmatprep.mubr.f32.mxu0 0.0
        %853 = vmatmul.mubr.f32.gmra.mrb[0].mxu0 %v600
        %v854 = vpop.f32.mrb[0].mxu0
        %v855 = vadd.f32 0.0, %v854
        %v856 = vpop.f32.mrb[0].mxu0
        %857 = vmatprep.mubr.f32.mxu0 0.0
        %858 = vmatmul.mubr.f32.gmra.mrb[0].mxu0 %v601
        %v859 = vpop.f32.mrb[0].mxu0
        %v860 = vadd.f32 0.0, %v859
        %v861 = vpop.f32.mrb[0].mxu0
        %862 = vdwg.mxu0
        %863 = vmatprep.subr.mxu0 0.0
        %864 = vmatpush1.msra.mxu0 %v550
        %865 = vmatprep.subr.mxu0 0.0
        %866 = vmatpush1.msra.mxu0 %v551
        %867 = vmatprep.subr.mxu0 0.0
        %868 = vmatpush1.msra.mxu0 %v552
        %869 = vmatprep.subr.mxu0 0.0
        %870 = vmatpush1.msra.mxu0 %v553
        %871 = vmatprep.subr.mxu0 0.0
        %872 = vmatpush1.msra.mxu0 %v554
        %873 = vmatprep.subr.mxu0 0.0
        %874 = vmatpush1.msra.mxu0 %v555
        %875 = vmatprep.subr.mxu0 0.0
        %876 = vmatpush1.msra.mxu0 %v556
        %877 = vmatprep.subr.mxu0 0.0
        %878 = vmatpush1.msra.mxu0 %v557
        %879 = vmatprep.subr.mxu0 0.0
        %880 = vmatpush1.msra.mxu0 %v558
        %881 = vmatprep.subr.mxu0 0.0
        %882 = vmatpush1.msra.mxu0 %v559
        %883 = vmatprep.subr.mxu0 0.0
        %884 = vmatpush1.msra.mxu0 %v560
        %885 = vmatprep.subr.mxu0 0.0
        %886 = vmatpush1.msra.mxu0 %v561
        %887 = vmatprep.subr.mxu0 0.0
        %888 = vmatpush1.msra.mxu0 %v562
        %889 = vmatprep.subr.mxu0 0.0
        %890 = vmatpush1.msra.mxu0 %v563
        %891 = vmatprep.subr.mxu0 0.0
        %892 = vmatpush1.msra.mxu0 %v564
        %893 = vmatprep.subr.mxu0 0.0
        %894 = vmatpush1.msra.mxu0 %v565
        %895 = vmatprep.subr.mxu0 0.0
        %896 = vmatpush1.msra.mxu0 0.0
        %897 = vmatprep.subr.mxu0 0.0
        %898 = vmatpush1.msra.mxu0 0.0
        %899 = vmatprep.subr.mxu0 0.0
        %900 = vmatpush1.msra.mxu0 0.0
        %901 = vmatprep.subr.mxu0 0.0
        %902 = vmatpush1.msra.mxu0 0.0
        %903 = vmatprep.subr.mxu0 0.0
        %904 = vmatpush1.msra.mxu0 0.0
        %905 = vmatprep.subr.mxu0 0.0
        %906 = vmatpush1.msra.mxu0 0.0
        %907 = vmatprep.subr.mxu0 0.0
        %908 = vmatpush1.msra.mxu0 0.0
        %909 = vmatprep.subr.mxu0 0.0
        %910 = vmatpush1.msra.mxu0 0.0
        %911 = vmatprep.subr.mxu0 0.0
        %912 = vmatpush1.msra.mxu0 0.0
        %913 = vmatprep.subr.mxu0 0.0
        %914 = vmatpush1.msra.mxu0 0.0
        %915 = vmatprep.subr.mxu0 0.0
        %916 = vmatpush1.msra.mxu0 0.0
        %917 = vmatprep.subr.mxu0 0.0
        %918 = vmatpush1.msra.mxu0 0.0
        %919 = vmatprep.subr.mxu0 0.0
        %920 = vmatpush1.msra.mxu0 0.0
        %921 = vmatprep.subr.mxu0 0.0
        %922 = vmatpush1.msra.mxu0 0.0
        %923 = vmatprep.subr.mxu0 0.0
        %924 = vmatpush1.msra.mxu0 0.0
        %925 = vmatprep.subr.mxu0 0.0
        %926 = vmatpush1.msra.mxu0 0.0
        %927 = vmatprep.mubr.f32.mxu0 0.0
        %928 = vmatmul.mubr.f32.gmra.mrb[0].mxu0 %v514
        %v929 = vpop.f32.mrb[0].mxu0
        %v930 = vadd.f32 %v685, %v929
        %v931 = vpop.f32.mrb[0].mxu0
        %932 = vmatprep.mubr.f32.mxu0 0.0
        %933 = vmatmul.mubr.f32.gmra.mrb[0].mxu0 %v515
        %v934 = vpop.f32.mrb[0].mxu0
        %v935 = vadd.f32 %v690, %v934
        %v936 = vpop.f32.mrb[0].mxu0
        %937 = vmatprep.mubr.f32.mxu0 0.0
        %938 = vmatmul.mubr.f32.gmra.mrb[0].mxu0 %v516
        %v939 = vpop.f32.mrb[0].mxu0
        %v940 = vadd.f32 %v695, %v939
        %v941 = vpop.f32.mrb[0].mxu0
        %942 = vmatprep.mubr.f32.mxu0 0.0
        %943 = vmatmul.mubr.f32.gmra.mrb[0].mxu0 %v517
        %v944 = vpop.f32.mrb[0].mxu0
        %v945 = vadd.f32 %v700, %v944
        %v946 = vpop.f32.mrb[0].mxu0
        %947 = vmatprep.mubr.f32.mxu0 0.0
        %948 = vmatmul.mubr.f32.gmra.mrb[0].mxu0 %v518
        %v949 = vpop.f32.mrb[0].mxu0
        %v950 = vadd.f32 %v705, %v949
        %v951 = vpop.f32.mrb[0].mxu0
        %952 = vmatprep.mubr.f32.mxu0 0.0
        %953 = vmatmul.mubr.f32.gmra.mrb[0].mxu0 %v519
        %v954 = vpop.f32.mrb[0].mxu0
        %v955 = vadd.f32 %v710, %v954
        %v956 = vpop.f32.mrb[0].mxu0
        %957 = vmatprep.mubr.f32.mxu0 0.0
        %958 = vmatmul.mubr.f32.gmra.mrb[0].mxu0 %v520
        %v959 = vpop.f32.mrb[0].mxu0
        %v960 = vadd.f32 %v715, %v959
        %v961 = vpop.f32.mrb[0].mxu0
        %962 = vmatprep.mubr.f32.mxu0 0.0
        %963 = vmatmul.mubr.f32.gmra.mrb[0].mxu0 %v521
        %v964 = vpop.f32.mrb[0].mxu0
        %v965 = vadd.f32 %v720, %v964
        %v966 = vpop.f32.mrb[0].mxu0
        %967 = vmatprep.mubr.f32.mxu0 0.0
        %968 = vmatmul.mubr.f32.gmra.mrb[0].mxu0 %v522
        %v969 = vpop.f32.mrb[0].mxu0
        %v970 = vadd.f32 %v725, %v969
        %v971 = vpop.f32.mrb[0].mxu0
        %972 = vmatprep.mubr.f32.mxu0 0.0
        %973 = vmatmul.mubr.f32.gmra.mrb[0].mxu0 %v523
        %v974 = vpop.f32.mrb[0].mxu0
        %v975 = vadd.f32 %v730, %v974
        %v976 = vpop.f32.mrb[0].mxu0
        %977 = vmatprep.mubr.f32.mxu0 0.0
        %978 = vmatmul.mubr.f32.gmra.mrb[0].mxu0 %v524
        %v979 = vpop.f32.mrb[0].mxu0
        %v980 = vadd.f32 %v735, %v979
        %v981 = vpop.f32.mrb[0].mxu0
        %982 = vmatprep.mubr.f32.mxu0 0.0
        %983 = vmatmul.mubr.f32.gmra.mrb[0].mxu0 %v525
        %v984 = vpop.f32.mrb[0].mxu0
        %v985 = vadd.f32 %v740, %v984
        %v986 = vpop.f32.mrb[0].mxu0
        %987 = vmatprep.mubr.f32.mxu0 0.0
        %988 = vmatmul.mubr.f32.gmra.mrb[0].mxu0 %v526
        %v989 = vpop.f32.mrb[0].mxu0
        %v990 = vadd.f32 %v745, %v989
        %v991 = vpop.f32.mrb[0].mxu0
        %992 = vmatprep.mubr.f32.mxu0 0.0
        %993 = vmatmul.mubr.f32.gmra.mrb[0].mxu0 %v527
        %v994 = vpop.f32.mrb[0].mxu0
        %v995 = vadd.f32 %v750, %v994
        %v996 = vpop.f32.mrb[0].mxu0
        %997 = vmatprep.mubr.f32.mxu0 0.0
        %998 = vmatmul.mubr.f32.gmra.mrb[0].mxu0 %v528
        %v999 = vpop.f32.mrb[0].mxu0
        %v1000 = vadd.f32 %v755, %v999
        %v1001 = vpop.f32.mrb[0].mxu0
        %1002 = vmatprep.mubr.f32.mxu0 0.0
        %1003 = vmatmul.mubr.f32.gmra.mrb[0].mxu0 %v529
        %v1004 = vpop.f32.mrb[0].mxu0
        %v1005 = vadd.f32 %v760, %v1004
        %v1006 = vpop.f32.mrb[0].mxu0
        %1007 = vmatprep.mubr.f32.mxu0 0.0
        %1008 = vmatmul.mubr.f32.gmra.mrb[0].mxu0 %v530
        %v1009 = vpop.f32.mrb[0].mxu0
        %v1010 = vadd.f32 %v765, %v1009
        %v1011 = vpop.f32.mrb[0].mxu0
        %1012 = vmatprep.mubr.f32.mxu0 0.0
        %1013 = vmatmul.mubr.f32.gmra.mrb[0].mxu0 %v531
        %v1014 = vpop.f32.mrb[0].mxu0
        %v1015 = vadd.f32 %v770, %v1014
        %v1016 = vpop.f32.mrb[0].mxu0
        %1017 = vmatprep.mubr.f32.mxu0 0.0
        %1018 = vmatmul.mubr.f32.gmra.mrb[0].mxu0 %v532
        %v1019 = vpop.f32.mrb[0].mxu0
        %v1020 = vadd.f32 %v775, %v1019
        %v1021 = vpop.f32.mrb[0].mxu0
        %1022 = vmatprep.mubr.f32.mxu0 0.0
        %1023 = vmatmul.mubr.f32.gmra.mrb[0].mxu0 %v533
        %v1024 = vpop.f32.mrb[0].mxu0
        %v1025 = vadd.f32 %v780, %v1024
        %v1026 = vpop.f32.mrb[0].mxu0
        %1027 = vmatprep.mubr.f32.mxu0 0.0
        %1028 = vmatmul.mubr.f32.gmra.mrb[0].mxu0 %v534
        %v1029 = vpop.f32.mrb[0].mxu0
        %v1030 = vadd.f32 %v785, %v1029
        %v1031 = vpop.f32.mrb[0].mxu0
        %1032 = vmatprep.mubr.f32.mxu0 0.0
        %1033 = vmatmul.mubr.f32.gmra.mrb[0].mxu0 %v535
        %v1034 = vpop.f32.mrb[0].mxu0
        %v1035 = vadd.f32 %v790, %v1034
        %v1036 = vpop.f32.mrb[0].mxu0
        %1037 = vmatprep.mubr.f32.mxu0 0.0
        %1038 = vmatmul.mubr.f32.gmra.mrb[0].mxu0 %v536
        %v1039 = vpop.f32.mrb[0].mxu0
        %v1040 = vadd.f32 %v795, %v1039
        %v1041 = vpop.f32.mrb[0].mxu0
        %1042 = vmatprep.mubr.f32.mxu0 0.0
        %1043 = vmatmul.mubr.f32.gmra.mrb[0].mxu0 %v537
        %v1044 = vpop.f32.mrb[0].mxu0
        %v1045 = vadd.f32 %v800, %v1044
        %v1046 = vpop.f32.mrb[0].mxu0
        %1047 = vmatprep.mubr.f32.mxu0 0.0
        %1048 = vmatmul.mubr.f32.gmra.mrb[0].mxu0 %v538
        %v1049 = vpop.f32.mrb[0].mxu0
        %v1050 = vadd.f32 %v805, %v1049
        %v1051 = vpop.f32.mrb[0].mxu0
        %1052 = vmatprep.mubr.f32.mxu0 0.0
        %1053 = vmatmul.mubr.f32.gmra.mrb[0].mxu0 %v539
        %v1054 = vpop.f32.mrb[0].mxu0
        %v1055 = vadd.f32 %v810, %v1054
        %v1056 = vpop.f32.mrb[0].mxu0
        %1057 = vmatprep.mubr.f32.mxu0 0.0
        %1058 = vmatmul.mubr.f32.gmra.mrb[0].mxu0 %v540
        %v1059 = vpop.f32.mrb[0].mxu0
        %v1060 = vadd.f32 %v815, %v1059
        %v1061 = vpop.f32.mrb[0].mxu0
        %1062 = vmatprep.mubr.f32.mxu0 0.0
        %1063 = vmatmul.mubr.f32.gmra.mrb[0].mxu0 %v541
        %v1064 = vpop.f32.mrb[0].mxu0
        %v1065 = vadd.f32 %v820, %v1064
        %v1066 = vpop.f32.mrb[0].mxu0
        %1067 = vmatprep.mubr.f32.mxu0 0.0
        %1068 = vmatmul.mubr.f32.gmra.mrb[0].mxu0 %v542
        %v1069 = vpop.f32.mrb[0].mxu0
        %v1070 = vadd.f32 %v825, %v1069
        %v1071 = vpop.f32.mrb[0].mxu0
        %1072 = vmatprep.mubr.f32.mxu0 0.0
        %1073 = vmatmul.mubr.f32.gmra.mrb[0].mxu0 %v543
        %v1074 = vpop.f32.mrb[0].mxu0
        %v1075 = vadd.f32 %v830, %v1074
        %v1076 = vpop.f32.mrb[0].mxu0
        %1077 = vmatprep.mubr.f32.mxu0 0.0
        %1078 = vmatmul.mubr.f32.gmra.mrb[0].mxu0 %v544
        %v1079 = vpop.f32.mrb[0].mxu0
        %v1080 = vadd.f32 %v835, %v1079
        %v1081 = vpop.f32.mrb[0].mxu0
        %1082 = vmatprep.mubr.f32.mxu0 0.0
        %1083 = vmatmul.mubr.f32.gmra.mrb[0].mxu0 %v545
        %v1084 = vpop.f32.mrb[0].mxu0
        %v1085 = vadd.f32 %v840, %v1084
        %v1086 = vpop.f32.mrb[0].mxu0
        %1087 = vmatprep.mubr.f32.mxu0 0.0
        %1088 = vmatmul.mubr.f32.gmra.mrb[0].mxu0 %v546
        %v1089 = vpop.f32.mrb[0].mxu0
        %v1090 = vadd.f32 %v845, %v1089
        %v1091 = vpop.f32.mrb[0].mxu0
        %1092 = vmatprep.mubr.f32.mxu0 0.0
        %1093 = vmatmul.mubr.f32.gmra.mrb[0].mxu0 %v547
        %v1094 = vpop.f32.mrb[0].mxu0
        %v1095 = vadd.f32 %v850, %v1094
        %v1096 = vpop.f32.mrb[0].mxu0
        %1097 = vmatprep.mubr.f32.mxu0 0.0
        %1098 = vmatmul.mubr.f32.gmra.mrb[0].mxu0 %v548
        %v1099 = vpop.f32.mrb[0].mxu0
        %v1100 = vadd.f32 %v855, %v1099
        %v1101 = vpop.f32.mrb[0].mxu0
        %1102 = vmatprep.mubr.f32.mxu0 0.0
        %1103 = vmatmul.mubr.f32.gmra.mrb[0].mxu0 %v549
        %v1104 = vpop.f32.mrb[0].mxu0
        %v1105 = vadd.f32 %v860, %v1104
        %v1106 = vpop.f32.mrb[0].mxu0
        %1107 = vdwg.mxu0
        %v1108 = vld [vmem:[%s428 + $0x2] sm:$0xff]
        %v1109 = vld [vmem:[%s428 + $0xa] sm:$0xff]
        %v1110 = vld [vmem:[%s428 + $0x12] sm:$0xff]
        %v1111 = vld [vmem:[%s428 + $0x1a] sm:$0xff]
        %v1112 = vld [vmem:[%s428 + $0x22] sm:$0xff]
        %v1113 = vld [vmem:[%s428 + $0x2a] sm:$0xff]
        %v1114 = vld [vmem:[%s428 + $0x32] sm:$0xff]
        %v1115 = vld [vmem:[%s428 + $0x3a] sm:$0xff]
        %v1116 = vld [vmem:[%s428 + $0x42] sm:$0xff]
        %v1117 = vld [vmem:[%s428 + $0x4a] sm:$0xff]
        %v1118 = vld [vmem:[%s428 + $0x52] sm:$0xff]
        %v1119 = vld [vmem:[%s428 + $0x5a] sm:$0xff]
        %v1120 = vld [vmem:[%s428 + $0x62] sm:$0xff]
        %v1121 = vld [vmem:[%s428 + $0x6a] sm:$0xff]
        %v1122 = vld [vmem:[%s428 + $0x72] sm:$0xff]
        %v1123 = vld [vmem:[%s428 + $0x7a] sm:$0xff]
        %v1124 = vld [vmem:[%s428 + $0x82] sm:$0xff]
        %v1125 = vld [vmem:[%s428 + $0x8a] sm:$0xff]
        %v1126 = vld [vmem:[%s428 + $0x92] sm:$0xff]
        %v1127 = vld [vmem:[%s428 + $0x9a] sm:$0xff]
        %v1128 = vld [vmem:[%s428 + $0xa2] sm:$0xff]
        %v1129 = vld [vmem:[%s428 + $0xaa] sm:$0xff]
        %v1130 = vld [vmem:[%s428 + $0xb2] sm:$0xff]
        %v1131 = vld [vmem:[%s428 + $0xba] sm:$0xff]
        %v1132 = vld [vmem:[%s428 + $0xc2] sm:$0xff]
        %v1133 = vld [vmem:[%s428 + $0xca] sm:$0xff]
        %v1134 = vld [vmem:[%s428 + $0xd2] sm:$0xff]
        %v1135 = vld [vmem:[%s428 + $0xda] sm:$0xff]
        %v1136 = vld [vmem:[%s428 + $0xe2] sm:$0xff]
        %v1137 = vld [vmem:[%s428 + $0xea] sm:$0xff]
        %v1138 = vld [vmem:[%s428 + $0xf2] sm:$0xff]
        %v1139 = vld [vmem:[%s428 + $0xfa] sm:$0xff]
        %v1140 = vld [vmem:[%s428 + $0x102] sm:$0xff]
        %v1141 = vld [vmem:[%s428 + $0x10a] sm:$0xff]
        %v1142 = vld [vmem:[%s428 + $0x112] sm:$0xff]
        %v1143 = vld [vmem:[%s428 + $0x11a] sm:$0xff]
        %v1144 = vld [vmem:[#allocation9 + $0x100] sm:$0xff]
        %v1145 = vld [vmem:[#allocation9 + $0x108] sm:$0xff]
        %v1146 = vld [vmem:[#allocation9 + $0x110] sm:$0xff]
        %v1147 = vld [vmem:[#allocation9 + $0x118] sm:$0xff]
        %v1148 = vld [vmem:[#allocation9 + $0x120] sm:$0xff]
        %v1149 = vld [vmem:[#allocation9 + $0x128] sm:$0xff]
        %v1150 = vld [vmem:[#allocation9 + $0x130] sm:$0xff]
        %v1151 = vld [vmem:[#allocation9 + $0x138] sm:$0xff]
        %v1152 = vld [vmem:[#allocation9 + $0x140] sm:$0xff]
        %v1153 = vld [vmem:[#allocation9 + $0x148] sm:$0xff]
        %v1154 = vld [vmem:[#allocation9 + $0x150] sm:$0xff]
        %v1155 = vld [vmem:[#allocation9 + $0x158] sm:$0xff]
        %v1156 = vld [vmem:[#allocation9 + $0x160] sm:$0xff]
        %v1157 = vld [vmem:[#allocation9 + $0x168] sm:$0xff]
        %v1158 = vld [vmem:[#allocation9 + $0x170] sm:$0xff]
        %v1159 = vld [vmem:[#allocation9 + $0x178] sm:$0xff]
        %1160 = vmatprep.subr.mxu0 0.0
        %1161 = vmatpush1.msra.mxu0 %v1144
        %1162 = vmatprep.subr.mxu0 0.0
        %1163 = vmatpush1.msra.mxu0 %v1145
        %1164 = vmatprep.subr.mxu0 0.0
        %1165 = vmatpush1.msra.mxu0 %v1146
        %1166 = vmatprep.subr.mxu0 0.0
        %1167 = vmatpush1.msra.mxu0 %v1147
        %1168 = vmatprep.subr.mxu0 0.0
        %1169 = vmatpush1.msra.mxu0 %v1148
        %1170 = vmatprep.subr.mxu0 0.0
        %1171 = vmatpush1.msra.mxu0 %v1149
        %1172 = vmatprep.subr.mxu0 0.0
        %1173 = vmatpush1.msra.mxu0 %v1150
        %1174 = vmatprep.subr.mxu0 0.0
        %1175 = vmatpush1.msra.mxu0 %v1151
        %1176 = vmatprep.subr.mxu0 0.0
        %1177 = vmatpush1.msra.mxu0 %v1152
        %1178 = vmatprep.subr.mxu0 0.0
        %1179 = vmatpush1.msra.mxu0 %v1153
        %1180 = vmatprep.subr.mxu0 0.0
        %1181 = vmatpush1.msra.mxu0 %v1154
        %1182 = vmatprep.subr.mxu0 0.0
        %1183 = vmatpush1.msra.mxu0 %v1155
        %1184 = vmatprep.subr.mxu0 0.0
        %1185 = vmatpush1.msra.mxu0 %v1156
        %1186 = vmatprep.subr.mxu0 0.0
        %1187 = vmatpush1.msra.mxu0 %v1157
        %1188 = vmatprep.subr.mxu0 0.0
        %1189 = vmatpush1.msra.mxu0 %v1158
        %1190 = vmatprep.subr.mxu0 0.0
        %1191 = vmatpush1.msra.mxu0 %v1159
        %1192 = vmatprep.subr.mxu0 0.0
        %1193 = vmatpush1.msra.mxu0 0.0
        %1194 = vmatprep.subr.mxu0 0.0
        %1195 = vmatpush1.msra.mxu0 0.0
        %1196 = vmatprep.subr.mxu0 0.0
        %1197 = vmatpush1.msra.mxu0 0.0
        %1198 = vmatprep.subr.mxu0 0.0
        %1199 = vmatpush1.msra.mxu0 0.0
        %1200 = vmatprep.subr.mxu0 0.0
        %1201 = vmatpush1.msra.mxu0 0.0
        %1202 = vmatprep.subr.mxu0 0.0
        %1203 = vmatpush1.msra.mxu0 0.0
        %1204 = vmatprep.subr.mxu0 0.0
        %1205 = vmatpush1.msra.mxu0 0.0
        %1206 = vmatprep.subr.mxu0 0.0
        %1207 = vmatpush1.msra.mxu0 0.0
        %1208 = vmatprep.subr.mxu0 0.0
        %1209 = vmatpush1.msra.mxu0 0.0
        %1210 = vmatprep.subr.mxu0 0.0
        %1211 = vmatpush1.msra.mxu0 0.0
        %1212 = vmatprep.subr.mxu0 0.0
        %1213 = vmatpush1.msra.mxu0 0.0
        %1214 = vmatprep.subr.mxu0 0.0
        %1215 = vmatpush1.msra.mxu0 0.0
        %1216 = vmatprep.subr.mxu0 0.0
        %1217 = vmatpush1.msra.mxu0 0.0
        %1218 = vmatprep.subr.mxu0 0.0
        %1219 = vmatpush1.msra.mxu0 0.0
        %1220 = vmatprep.subr.mxu0 0.0
        %1221 = vmatpush1.msra.mxu0 0.0
        %1222 = vmatprep.subr.mxu0 0.0
        %1223 = vmatpush1.msra.mxu0 0.0
        %1224 = vmatprep.mubr.f32.mxu0 0.0
        %1225 = vmatmul.mubr.f32.gmra.mrb[0].mxu0 %v1108
        %v1226 = vpop.f32.mrb[0].mxu0
        %v1227 = vadd.f32 0.0, %v1226
        %v1228 = vpop.f32.mrb[0].mxu0
        %1229 = vmatprep.mubr.f32.mxu0 0.0
        %1230 = vmatmul.mubr.f32.gmra.mrb[0].mxu0 %v1109
        %v1231 = vpop.f32.mrb[0].mxu0
        %v1232 = vadd.f32 0.0, %v1231
        %v1233 = vpop.f32.mrb[0].mxu0
        %1234 = vmatprep.mubr.f32.mxu0 0.0
        %1235 = vmatmul.mubr.f32.gmra.mrb[0].mxu0 %v1110
        %v1236 = vpop.f32.mrb[0].mxu0
        %v1237 = vadd.f32 0.0, %v1236
        %v1238 = vpop.f32.mrb[0].mxu0
        %1239 = vmatprep.mubr.f32.mxu0 0.0
        %1240 = vmatmul.mubr.f32.gmra.mrb[0].mxu0 %v1111
        %v1241 = vpop.f32.mrb[0].mxu0
        %v1242 = vadd.f32 0.0, %v1241
        %v1243 = vpop.f32.mrb[0].mxu0
        %1244 = vmatprep.mubr.f32.mxu0 0.0
        %1245 = vmatmul.mubr.f32.gmra.mrb[0].mxu0 %v1112
        %v1246 = vpop.f32.mrb[0].mxu0
        %v1247 = vadd.f32 0.0, %v1246
        %v1248 = vpop.f32.mrb[0].mxu0
        %1249 = vmatprep.mubr.f32.mxu0 0.0
        %1250 = vmatmul.mubr.f32.gmra.mrb[0].mxu0 %v1113
        %v1251 = vpop.f32.mrb[0].mxu0
        %v1252 = vadd.f32 0.0, %v1251
        %v1253 = vpop.f32.mrb[0].mxu0
        %1254 = vmatprep.mubr.f32.mxu0 0.0
        %1255 = vmatmul.mubr.f32.gmra.mrb[0].mxu0 %v1114
        %v1256 = vpop.f32.mrb[0].mxu0
        %v1257 = vadd.f32 0.0, %v1256
        %v1258 = vpop.f32.mrb[0].mxu0
        %1259 = vmatprep.mubr.f32.mxu0 0.0
        %1260 = vmatmul.mubr.f32.gmra.mrb[0].mxu0 %v1115
        %v1261 = vpop.f32.mrb[0].mxu0
        %v1262 = vadd.f32 0.0, %v1261
        %v1263 = vpop.f32.mrb[0].mxu0
        %1264 = vmatprep.mubr.f32.mxu0 0.0
        %1265 = vmatmul.mubr.f32.gmra.mrb[0].mxu0 %v1116
        %v1266 = vpop.f32.mrb[0].mxu0
        %v1267 = vadd.f32 0.0, %v1266
        %v1268 = vpop.f32.mrb[0].mxu0
        %1269 = vmatprep.mubr.f32.mxu0 0.0
        %1270 = vmatmul.mubr.f32.gmra.mrb[0].mxu0 %v1117
        %v1271 = vpop.f32.mrb[0].mxu0
        %v1272 = vadd.f32 0.0, %v1271
        %v1273 = vpop.f32.mrb[0].mxu0
        %1274 = vmatprep.mubr.f32.mxu0 0.0
        %1275 = vmatmul.mubr.f32.gmra.mrb[0].mxu0 %v1118
        %v1276 = vpop.f32.mrb[0].mxu0
        %v1277 = vadd.f32 0.0, %v1276
        %v1278 = vpop.f32.mrb[0].mxu0
        %1279 = vmatprep.mubr.f32.mxu0 0.0
        %1280 = vmatmul.mubr.f32.gmra.mrb[0].mxu0 %v1119
        %v1281 = vpop.f32.mrb[0].mxu0
        %v1282 = vadd.f32 0.0, %v1281
        %v1283 = vpop.f32.mrb[0].mxu0
        %1284 = vmatprep.mubr.f32.mxu0 0.0
        %1285 = vmatmul.mubr.f32.gmra.mrb[0].mxu0 %v1120
        %v1286 = vpop.f32.mrb[0].mxu0
        %v1287 = vadd.f32 0.0, %v1286
        %v1288 = vpop.f32.mrb[0].mxu0
        %1289 = vmatprep.mubr.f32.mxu0 0.0
        %1290 = vmatmul.mubr.f32.gmra.mrb[0].mxu0 %v1121
        %v1291 = vpop.f32.mrb[0].mxu0
        %v1292 = vadd.f32 0.0, %v1291
        %v1293 = vpop.f32.mrb[0].mxu0
        %1294 = vmatprep.mubr.f32.mxu0 0.0
        %1295 = vmatmul.mubr.f32.gmra.mrb[0].mxu0 %v1122
        %v1296 = vpop.f32.mrb[0].mxu0
        %v1297 = vadd.f32 0.0, %v1296
        %v1298 = vpop.f32.mrb[0].mxu0
        %1299 = vmatprep.mubr.f32.mxu0 0.0
        %1300 = vmatmul.mubr.f32.gmra.mrb[0].mxu0 %v1123
        %v1301 = vpop.f32.mrb[0].mxu0
        %v1302 = vadd.f32 0.0, %v1301
        %v1303 = vpop.f32.mrb[0].mxu0
        %1304 = vmatprep.mubr.f32.mxu0 0.0
        %1305 = vmatmul.mubr.f32.gmra.mrb[0].mxu0 %v1124
        %v1306 = vpop.f32.mrb[0].mxu0
        %v1307 = vadd.f32 0.0, %v1306
        %v1308 = vpop.f32.mrb[0].mxu0
        %1309 = vmatprep.mubr.f32.mxu0 0.0
        %1310 = vmatmul.mubr.f32.gmra.mrb[0].mxu0 %v1125
        %v1311 = vpop.f32.mrb[0].mxu0
        %v1312 = vadd.f32 0.0, %v1311
        %v1313 = vpop.f32.mrb[0].mxu0
        %1314 = vmatprep.mubr.f32.mxu0 0.0
        %1315 = vmatmul.mubr.f32.gmra.mrb[0].mxu0 %v1126
        %v1316 = vpop.f32.mrb[0].mxu0
        %v1317 = vadd.f32 0.0, %v1316
        %v1318 = vpop.f32.mrb[0].mxu0
        %1319 = vmatprep.mubr.f32.mxu0 0.0
        %1320 = vmatmul.mubr.f32.gmra.mrb[0].mxu0 %v1127
        %v1321 = vpop.f32.mrb[0].mxu0
        %v1322 = vadd.f32 0.0, %v1321
        %v1323 = vpop.f32.mrb[0].mxu0
        %1324 = vmatprep.mubr.f32.mxu0 0.0
        %1325 = vmatmul.mubr.f32.gmra.mrb[0].mxu0 %v1128
        %v1326 = vpop.f32.mrb[0].mxu0
        %v1327 = vadd.f32 0.0, %v1326
        %v1328 = vpop.f32.mrb[0].mxu0
        %1329 = vmatprep.mubr.f32.mxu0 0.0
        %1330 = vmatmul.mubr.f32.gmra.mrb[0].mxu0 %v1129
        %v1331 = vpop.f32.mrb[0].mxu0
        %v1332 = vadd.f32 0.0, %v1331
        %v1333 = vpop.f32.mrb[0].mxu0
        %1334 = vmatprep.mubr.f32.mxu0 0.0
        %1335 = vmatmul.mubr.f32.gmra.mrb[0].mxu0 %v1130
        %v1336 = vpop.f32.mrb[0].mxu0
        %v1337 = vadd.f32 0.0, %v1336
        %v1338 = vpop.f32.mrb[0].mxu0
        %1339 = vmatprep.mubr.f32.mxu0 0.0
        %1340 = vmatmul.mubr.f32.gmra.mrb[0].mxu0 %v1131
        %v1341 = vpop.f32.mrb[0].mxu0
        %v1342 = vadd.f32 0.0, %v1341
        %v1343 = vpop.f32.mrb[0].mxu0
        %1344 = vmatprep.mubr.f32.mxu0 0.0
        %1345 = vmatmul.mubr.f32.gmra.mrb[0].mxu0 %v1132
        %v1346 = vpop.f32.mrb[0].mxu0
        %v1347 = vadd.f32 0.0, %v1346
        %v1348 = vpop.f32.mrb[0].mxu0
        %1349 = vmatprep.mubr.f32.mxu0 0.0
        %1350 = vmatmul.mubr.f32.gmra.mrb[0].mxu0 %v1133
        %v1351 = vpop.f32.mrb[0].mxu0
        %v1352 = vadd.f32 0.0, %v1351
        %v1353 = vpop.f32.mrb[0].mxu0
        %1354 = vmatprep.mubr.f32.mxu0 0.0
        %1355 = vmatmul.mubr.f32.gmra.mrb[0].mxu0 %v1134
        %v1356 = vpop.f32.mrb[0].mxu0
        %v1357 = vadd.f32 0.0, %v1356
        %v1358 = vpop.f32.mrb[0].mxu0
        %1359 = vmatprep.mubr.f32.mxu0 0.0
        %1360 = vmatmul.mubr.f32.gmra.mrb[0].mxu0 %v1135
        %v1361 = vpop.f32.mrb[0].mxu0
        %v1362 = vadd.f32 0.0, %v1361
        %v1363 = vpop.f32.mrb[0].mxu0
        %1364 = vmatprep.mubr.f32.mxu0 0.0
        %1365 = vmatmul.mubr.f32.gmra.mrb[0].mxu0 %v1136
        %v1366 = vpop.f32.mrb[0].mxu0
        %v1367 = vadd.f32 0.0, %v1366
        %v1368 = vpop.f32.mrb[0].mxu0
        %1369 = vmatprep.mubr.f32.mxu0 0.0
        %1370 = vmatmul.mubr.f32.gmra.mrb[0].mxu0 %v1137
        %v1371 = vpop.f32.mrb[0].mxu0
        %v1372 = vadd.f32 0.0, %v1371
        %v1373 = vpop.f32.mrb[0].mxu0
        %1374 = vmatprep.mubr.f32.mxu0 0.0
        %1375 = vmatmul.mubr.f32.gmra.mrb[0].mxu0 %v1138
        %v1376 = vpop.f32.mrb[0].mxu0
        %v1377 = vadd.f32 0.0, %v1376
        %v1378 = vpop.f32.mrb[0].mxu0
        %1379 = vmatprep.mubr.f32.mxu0 0.0
        %1380 = vmatmul.mubr.f32.gmra.mrb[0].mxu0 %v1139
        %v1381 = vpop.f32.mrb[0].mxu0
        %v1382 = vadd.f32 0.0, %v1381
        %v1383 = vpop.f32.mrb[0].mxu0
        %1384 = vmatprep.mubr.f32.mxu0 0.0
        %1385 = vmatmul.mubr.f32.gmra.mrb[0].mxu0 %v1140
        %v1386 = vpop.f32.mrb[0].mxu0
        %v1387 = vadd.f32 0.0, %v1386
        %v1388 = vpop.f32.mrb[0].mxu0
        %1389 = vmatprep.mubr.f32.mxu0 0.0
        %1390 = vmatmul.mubr.f32.gmra.mrb[0].mxu0 %v1141
        %v1391 = vpop.f32.mrb[0].mxu0
        %v1392 = vadd.f32 0.0, %v1391
        %v1393 = vpop.f32.mrb[0].mxu0
        %1394 = vmatprep.mubr.f32.mxu0 0.0
        %1395 = vmatmul.mubr.f32.gmra.mrb[0].mxu0 %v1142
        %v1396 = vpop.f32.mrb[0].mxu0
        %v1397 = vadd.f32 0.0, %v1396
        %v1398 = vpop.f32.mrb[0].mxu0
        %1399 = vmatprep.mubr.f32.mxu0 0.0
        %1400 = vmatmul.mubr.f32.gmra.mrb[0].mxu0 %v1143
        %v1401 = vpop.f32.mrb[0].mxu0
        %v1402 = vadd.f32 0.0, %v1401
        %v1403 = vpop.f32.mrb[0].mxu0
        %1404 = vdwg.mxu0
        %v1405 = vadd.f32 %v930, %v1227
        %v1406 = vadd.f32 %v935, %v1232
        %v1407 = vadd.f32 %v940, %v1237
        %v1408 = vadd.f32 %v945, %v1242
        %v1409 = vadd.f32 %v950, %v1247
        %v1410 = vadd.f32 %v955, %v1252
        %v1411 = vadd.f32 %v960, %v1257
        %v1412 = vadd.f32 %v965, %v1262
        %v1413 = vadd.f32 %v970, %v1267
        %v1414 = vadd.f32 %v975, %v1272
        %v1415 = vadd.f32 %v980, %v1277
        %v1416 = vadd.f32 %v985, %v1282
        %v1417 = vadd.f32 %v990, %v1287
        %v1418 = vadd.f32 %v995, %v1292
        %v1419 = vadd.f32 %v1000, %v1297
        %v1420 = vadd.f32 %v1005, %v1302
        %v1421 = vadd.f32 %v1010, %v1307
        %v1422 = vadd.f32 %v1015, %v1312
        %v1423 = vadd.f32 %v1020, %v1317
        %v1424 = vadd.f32 %v1025, %v1322
        %v1425 = vadd.f32 %v1030, %v1327
        %v1426 = vadd.f32 %v1035, %v1332
        %v1427 = vadd.f32 %v1040, %v1337
        %v1428 = vadd.f32 %v1045, %v1342
        %v1429 = vadd.f32 %v1050, %v1347
        %v1430 = vadd.f32 %v1055, %v1352
        %v1431 = vadd.f32 %v1060, %v1357
        %v1432 = vadd.f32 %v1065, %v1362
        %v1433 = vadd.f32 %v1070, %v1367
        %v1434 = vadd.f32 %v1075, %v1372
        %v1435 = vadd.f32 %v1080, %v1377
        %v1436 = vadd.f32 %v1085, %v1382
        %v1437 = vadd.f32 %v1090, %v1387
        %v1438 = vadd.f32 %v1095, %v1392
        %v1439 = vadd.f32 %v1100, %v1397
        %v1440 = vadd.f32 %v1105, %v1402
        %v1441 = vld [vmem:[%s428 + $0x12] sm:$0xff]
        %v1442 = vld [vmem:[%s428 + $0x1a] sm:$0xff]
        %v1443 = vld [vmem:[%s428 + $0x22] sm:$0xff]
        %v1444 = vld [vmem:[%s428 + $0x2a] sm:$0xff]
        %v1445 = vld [vmem:[%s428 + $0x32] sm:$0xff]
        %v1446 = vld [vmem:[%s428 + $0x3a] sm:$0xff]
        %v1447 = vld [vmem:[%s428 + $0x42] sm:$0xff]
        %v1448 = vld [vmem:[%s428 + $0x4a] sm:$0xff]
        %v1449 = vld [vmem:[%s428 + $0x52] sm:$0xff]
        %v1450 = vld [vmem:[%s428 + $0x5a] sm:$0xff]
        %v1451 = vld [vmem:[%s428 + $0x62] sm:$0xff]
        %v1452 = vld [vmem:[%s428 + $0x6a] sm:$0xff]
        %v1453 = vld [vmem:[%s428 + $0x72] sm:$0xff]
        %v1454 = vld [vmem:[%s428 + $0x7a] sm:$0xff]
        %v1455 = vld [vmem:[%s428 + $0x82] sm:$0xff]
        %v1456 = vld [vmem:[%s428 + $0x8a] sm:$0xff]
        %v1457 = vld [vmem:[%s428 + $0x92] sm:$0xff]
        %v1458 = vld [vmem:[%s428 + $0x9a] sm:$0xff]
        %v1459 = vld [vmem:[%s428 + $0xa2] sm:$0xff]
        %v1460 = vld [vmem:[%s428 + $0xaa] sm:$0xff]
        %v1461 = vld [vmem:[%s428 + $0xb2] sm:$0xff]
        %v1462 = vld [vmem:[%s428 + $0xba] sm:$0xff]
        %v1463 = vld [vmem:[%s428 + $0xc2] sm:$0xff]
        %v1464 = vld [vmem:[%s428 + $0xca] sm:$0xff]
        %v1465 = vld [vmem:[%s428 + $0xd2] sm:$0xff]
        %v1466 = vld [vmem:[%s428 + $0xda] sm:$0xff]
        %v1467 = vld [vmem:[%s428 + $0xe2] sm:$0xff]
        %v1468 = vld [vmem:[%s428 + $0xea] sm:$0xff]
        %v1469 = vld [vmem:[%s428 + $0xf2] sm:$0xff]
        %v1470 = vld [vmem:[%s428 + $0xfa] sm:$0xff]
        %v1471 = vld [vmem:[%s428 + $0x102] sm:$0xff]
        %v1472 = vld [vmem:[%s428 + $0x10a] sm:$0xff]
        %v1473 = vld [vmem:[%s428 + $0x112] sm:$0xff]
        %v1474 = vld [vmem:[%s428 + $0x11a] sm:$0xff]
        %v1475 = vld [vmem:[%s428 + $0x122] sm:$0xff]
        %v1476 = vld [vmem:[%s428 + $0x12a] sm:$0xff]
        %v1477 = vld [vmem:[#allocation9 + $0x180] sm:$0xff]
        %v1478 = vld [vmem:[#allocation9 + $0x188] sm:$0xff]
        %v1479 = vld [vmem:[#allocation9 + $0x190] sm:$0xff]
        %v1480 = vld [vmem:[#allocation9 + $0x198] sm:$0xff]
        %v1481 = vld [vmem:[#allocation9 + $0x1a0] sm:$0xff]
        %v1482 = vld [vmem:[#allocation9 + $0x1a8] sm:$0xff]
        %v1483 = vld [vmem:[#allocation9 + $0x1b0] sm:$0xff]
        %v1484 = vld [vmem:[#allocation9 + $0x1b8] sm:$0xff]
        %v1485 = vld [vmem:[#allocation9 + $0x1c0] sm:$0xff]
        %v1486 = vld [vmem:[#allocation9 + $0x1c8] sm:$0xff]
        %v1487 = vld [vmem:[#allocation9 + $0x1d0] sm:$0xff]
        %v1488 = vld [vmem:[#allocation9 + $0x1d8] sm:$0xff]
        %v1489 = vld [vmem:[#allocation9 + $0x1e0] sm:$0xff]
        %v1490 = vld [vmem:[#allocation9 + $0x1e8] sm:$0xff]
        %v1491 = vld [vmem:[#allocation9 + $0x1f0] sm:$0xff]
        %v1492 = vld [vmem:[#allocation9 + $0x1f8] sm:$0xff]
        %1493 = vmatprep.subr.mxu0 0.0
        %1494 = vmatpush1.msra.mxu0 %v1477
        %1495 = vmatprep.subr.mxu0 0.0
        %1496 = vmatpush1.msra.mxu0 %v1478
        %1497 = vmatprep.subr.mxu0 0.0
        %1498 = vmatpush1.msra.mxu0 %v1479
        %1499 = vmatprep.subr.mxu0 0.0
        %1500 = vmatpush1.msra.mxu0 %v1480
        %1501 = vmatprep.subr.mxu0 0.0
        %1502 = vmatpush1.msra.mxu0 %v1481
        %1503 = vmatprep.subr.mxu0 0.0
        %1504 = vmatpush1.msra.mxu0 %v1482
        %1505 = vmatprep.subr.mxu0 0.0
        %1506 = vmatpush1.msra.mxu0 %v1483
        %1507 = vmatprep.subr.mxu0 0.0
        %1508 = vmatpush1.msra.mxu0 %v1484
        %1509 = vmatprep.subr.mxu0 0.0
        %1510 = vmatpush1.msra.mxu0 %v1485
        %1511 = vmatprep.subr.mxu0 0.0
        %1512 = vmatpush1.msra.mxu0 %v1486
        %1513 = vmatprep.subr.mxu0 0.0
        %1514 = vmatpush1.msra.mxu0 %v1487
        %1515 = vmatprep.subr.mxu0 0.0
        %1516 = vmatpush1.msra.mxu0 %v1488
        %1517 = vmatprep.subr.mxu0 0.0
        %1518 = vmatpush1.msra.mxu0 %v1489
        %1519 = vmatprep.subr.mxu0 0.0
        %1520 = vmatpush1.msra.mxu0 %v1490
        %1521 = vmatprep.subr.mxu0 0.0
        %1522 = vmatpush1.msra.mxu0 %v1491
        %1523 = vmatprep.subr.mxu0 0.0
        %1524 = vmatpush1.msra.mxu0 %v1492
        %1525 = vmatprep.subr.mxu0 0.0
        %1526 = vmatpush1.msra.mxu0 0.0
        %1527 = vmatprep.subr.mxu0 0.0
        %1528 = vmatpush1.msra.mxu0 0.0
        %1529 = vmatprep.subr.mxu0 0.0
        %1530 = vmatpush1.msra.mxu0 0.0
        %1531 = vmatprep.subr.mxu0 0.0
        %1532 = vmatpush1.msra.mxu0 0.0
        %1533 = vmatprep.subr.mxu0 0.0
        %1534 = vmatpush1.msra.mxu0 0.0
        %1535 = vmatprep.subr.mxu0 0.0
        %1536 = vmatpush1.msra.mxu0 0.0
        %1537 = vmatprep.subr.mxu0 0.0
        %1538 = vmatpush1.msra.mxu0 0.0
        %1539 = vmatprep.subr.mxu0 0.0
        %1540 = vmatpush1.msra.mxu0 0.0
        %1541 = vmatprep.subr.mxu0 0.0
        %1542 = vmatpush1.msra.mxu0 0.0
        %1543 = vmatprep.subr.mxu0 0.0
        %1544 = vmatpush1.msra.mxu0 0.0
        %1545 = vmatprep.subr.mxu0 0.0
        %1546 = vmatpush1.msra.mxu0 0.0
        %1547 = vmatprep.subr.mxu0 0.0
        %1548 = vmatpush1.msra.mxu0 0.0
        %1549 = vmatprep.subr.mxu0 0.0
        %1550 = vmatpush1.msra.mxu0 0.0
        %1551 = vmatprep.subr.mxu0 0.0
        %1552 = vmatpush1.msra.mxu0 0.0
        %1553 = vmatprep.subr.mxu0 0.0
        %1554 = vmatpush1.msra.mxu0 0.0
        %1555 = vmatprep.subr.mxu0 0.0
        %1556 = vmatpush1.msra.mxu0 0.0
        %1557 = vmatprep.mubr.f32.mxu0 0.0
        %1558 = vmatmul.mubr.f32.gmra.mrb[0].mxu0 %v1441
        %v1559 = vpop.f32.mrb[0].mxu0
        %v1560 = vadd.f32 0.0, %v1559
        %v1561 = vpop.f32.mrb[0].mxu0
        %1562 = vmatprep.mubr.f32.mxu0 0.0
        %1563 = vmatmul.mubr.f32.gmra.mrb[0].mxu0 %v1442
        %v1564 = vpop.f32.mrb[0].mxu0
        %v1565 = vadd.f32 0.0, %v1564
        %v1566 = vpop.f32.mrb[0].mxu0
        %1567 = vmatprep.mubr.f32.mxu0 0.0
        %1568 = vmatmul.mubr.f32.gmra.mrb[0].mxu0 %v1443
        %v1569 = vpop.f32.mrb[0].mxu0
        %v1570 = vadd.f32 0.0, %v1569
        %v1571 = vpop.f32.mrb[0].mxu0
        %1572 = vmatprep.mubr.f32.mxu0 0.0
        %1573 = vmatmul.mubr.f32.gmra.mrb[0].mxu0 %v1444
        %v1574 = vpop.f32.mrb[0].mxu0
        %v1575 = vadd.f32 0.0, %v1574
        %v1576 = vpop.f32.mrb[0].mxu0
        %1577 = vmatprep.mubr.f32.mxu0 0.0
        %1578 = vmatmul.mubr.f32.gmra.mrb[0].mxu0 %v1445
        %v1579 = vpop.f32.mrb[0].mxu0
        %v1580 = vadd.f32 0.0, %v1579
        %v1581 = vpop.f32.mrb[0].mxu0
        %1582 = vmatprep.mubr.f32.mxu0 0.0
        %1583 = vmatmul.mubr.f32.gmra.mrb[0].mxu0 %v1446
        %v1584 = vpop.f32.mrb[0].mxu0
        %v1585 = vadd.f32 0.0, %v1584
        %v1586 = vpop.f32.mrb[0].mxu0
        %1587 = vmatprep.mubr.f32.mxu0 0.0
        %1588 = vmatmul.mubr.f32.gmra.mrb[0].mxu0 %v1447
        %v1589 = vpop.f32.mrb[0].mxu0
        %v1590 = vadd.f32 0.0, %v1589
        %v1591 = vpop.f32.mrb[0].mxu0
        %1592 = vmatprep.mubr.f32.mxu0 0.0
        %1593 = vmatmul.mubr.f32.gmra.mrb[0].mxu0 %v1448
        %v1594 = vpop.f32.mrb[0].mxu0
        %v1595 = vadd.f32 0.0, %v1594
        %v1596 = vpop.f32.mrb[0].mxu0
        %1597 = vmatprep.mubr.f32.mxu0 0.0
        %1598 = vmatmul.mubr.f32.gmra.mrb[0].mxu0 %v1449
        %v1599 = vpop.f32.mrb[0].mxu0
        %v1600 = vadd.f32 0.0, %v1599
        %v1601 = vpop.f32.mrb[0].mxu0
        %1602 = vmatprep.mubr.f32.mxu0 0.0
        %1603 = vmatmul.mubr.f32.gmra.mrb[0].mxu0 %v1450
        %v1604 = vpop.f32.mrb[0].mxu0
        %v1605 = vadd.f32 0.0, %v1604
        %v1606 = vpop.f32.mrb[0].mxu0
        %1607 = vmatprep.mubr.f32.mxu0 0.0
        %1608 = vmatmul.mubr.f32.gmra.mrb[0].mxu0 %v1451
        %v1609 = vpop.f32.mrb[0].mxu0
        %v1610 = vadd.f32 0.0, %v1609
        %v1611 = vpop.f32.mrb[0].mxu0
        %1612 = vmatprep.mubr.f32.mxu0 0.0
        %1613 = vmatmul.mubr.f32.gmra.mrb[0].mxu0 %v1452
        %v1614 = vpop.f32.mrb[0].mxu0
        %v1615 = vadd.f32 0.0, %v1614
        %v1616 = vpop.f32.mrb[0].mxu0
        %1617 = vmatprep.mubr.f32.mxu0 0.0
        %1618 = vmatmul.mubr.f32.gmra.mrb[0].mxu0 %v1453
        %v1619 = vpop.f32.mrb[0].mxu0
        %v1620 = vadd.f32 0.0, %v1619
        %v1621 = vpop.f32.mrb[0].mxu0
        %1622 = vmatprep.mubr.f32.mxu0 0.0
        %1623 = vmatmul.mubr.f32.gmra.mrb[0].mxu0 %v1454
        %v1624 = vpop.f32.mrb[0].mxu0
        %v1625 = vadd.f32 0.0, %v1624
        %v1626 = vpop.f32.mrb[0].mxu0
        %1627 = vmatprep.mubr.f32.mxu0 0.0
        %1628 = vmatmul.mubr.f32.gmra.mrb[0].mxu0 %v1455
        %v1629 = vpop.f32.mrb[0].mxu0
        %v1630 = vadd.f32 0.0, %v1629
        %v1631 = vpop.f32.mrb[0].mxu0
        %1632 = vmatprep.mubr.f32.mxu0 0.0
        %1633 = vmatmul.mubr.f32.gmra.mrb[0].mxu0 %v1456
        %v1634 = vpop.f32.mrb[0].mxu0
        %v1635 = vadd.f32 0.0, %v1634
        %v1636 = vpop.f32.mrb[0].mxu0
        %1637 = vmatprep.mubr.f32.mxu0 0.0
        %1638 = vmatmul.mubr.f32.gmra.mrb[0].mxu0 %v1457
        %v1639 = vpop.f32.mrb[0].mxu0
        %v1640 = vadd.f32 0.0, %v1639
        %v1641 = vpop.f32.mrb[0].mxu0
        %1642 = vmatprep.mubr.f32.mxu0 0.0
        %1643 = vmatmul.mubr.f32.gmra.mrb[0].mxu0 %v1458
        %v1644 = vpop.f32.mrb[0].mxu0
        %v1645 = vadd.f32 0.0, %v1644
        %v1646 = vpop.f32.mrb[0].mxu0
        %1647 = vmatprep.mubr.f32.mxu0 0.0
        %1648 = vmatmul.mubr.f32.gmra.mrb[0].mxu0 %v1459
        %v1649 = vpop.f32.mrb[0].mxu0
        %v1650 = vadd.f32 0.0, %v1649
        %v1651 = vpop.f32.mrb[0].mxu0
        %1652 = vmatprep.mubr.f32.mxu0 0.0
        %1653 = vmatmul.mubr.f32.gmra.mrb[0].mxu0 %v1460
        %v1654 = vpop.f32.mrb[0].mxu0
        %v1655 = vadd.f32 0.0, %v1654
        %v1656 = vpop.f32.mrb[0].mxu0
        %1657 = vmatprep.mubr.f32.mxu0 0.0
        %1658 = vmatmul.mubr.f32.gmra.mrb[0].mxu0 %v1461
        %v1659 = vpop.f32.mrb[0].mxu0
        %v1660 = vadd.f32 0.0, %v1659
        %v1661 = vpop.f32.mrb[0].mxu0
        %1662 = vmatprep.mubr.f32.mxu0 0.0
        %1663 = vmatmul.mubr.f32.gmra.mrb[0].mxu0 %v1462
        %v1664 = vpop.f32.mrb[0].mxu0
        %v1665 = vadd.f32 0.0, %v1664
        %v1666 = vpop.f32.mrb[0].mxu0
        %1667 = vmatprep.mubr.f32.mxu0 0.0
        %1668 = vmatmul.mubr.f32.gmra.mrb[0].mxu0 %v1463
        %v1669 = vpop.f32.mrb[0].mxu0
        %v1670 = vadd.f32 0.0, %v1669
        %v1671 = vpop.f32.mrb[0].mxu0
        %1672 = vmatprep.mubr.f32.mxu0 0.0
        %1673 = vmatmul.mubr.f32.gmra.mrb[0].mxu0 %v1464
        %v1674 = vpop.f32.mrb[0].mxu0
        %v1675 = vadd.f32 0.0, %v1674
        %v1676 = vpop.f32.mrb[0].mxu0
        %1677 = vmatprep.mubr.f32.mxu0 0.0
        %1678 = vmatmul.mubr.f32.gmra.mrb[0].mxu0 %v1465
        %v1679 = vpop.f32.mrb[0].mxu0
        %v1680 = vadd.f32 0.0, %v1679
        %v1681 = vpop.f32.mrb[0].mxu0
        %1682 = vmatprep.mubr.f32.mxu0 0.0
        %1683 = vmatmul.mubr.f32.gmra.mrb[0].mxu0 %v1466
        %v1684 = vpop.f32.mrb[0].mxu0
        %v1685 = vadd.f32 0.0, %v1684
        %v1686 = vpop.f32.mrb[0].mxu0
        %1687 = vmatprep.mubr.f32.mxu0 0.0
        %1688 = vmatmul.mubr.f32.gmra.mrb[0].mxu0 %v1467
        %v1689 = vpop.f32.mrb[0].mxu0
        %v1690 = vadd.f32 0.0, %v1689
        %v1691 = vpop.f32.mrb[0].mxu0
        %1692 = vmatprep.mubr.f32.mxu0 0.0
        %1693 = vmatmul.mubr.f32.gmra.mrb[0].mxu0 %v1468
        %v1694 = vpop.f32.mrb[0].mxu0
        %v1695 = vadd.f32 0.0, %v1694
        %v1696 = vpop.f32.mrb[0].mxu0
        %1697 = vmatprep.mubr.f32.mxu0 0.0
        %1698 = vmatmul.mubr.f32.gmra.mrb[0].mxu0 %v1469
        %v1699 = vpop.f32.mrb[0].mxu0
        %v1700 = vadd.f32 0.0, %v1699
        %v1701 = vpop.f32.mrb[0].mxu0
        %1702 = vmatprep.mubr.f32.mxu0 0.0
        %1703 = vmatmul.mubr.f32.gmra.mrb[0].mxu0 %v1470
        %v1704 = vpop.f32.mrb[0].mxu0
        %v1705 = vadd.f32 0.0, %v1704
        %v1706 = vpop.f32.mrb[0].mxu0
        %1707 = vmatprep.mubr.f32.mxu0 0.0
        %1708 = vmatmul.mubr.f32.gmra.mrb[0].mxu0 %v1471
        %v1709 = vpop.f32.mrb[0].mxu0
        %v1710 = vadd.f32 0.0, %v1709
        %v1711 = vpop.f32.mrb[0].mxu0
        %1712 = vmatprep.mubr.f32.mxu0 0.0
        %1713 = vmatmul.mubr.f32.gmra.mrb[0].mxu0 %v1472
        %v1714 = vpop.f32.mrb[0].mxu0
        %v1715 = vadd.f32 0.0, %v1714
        %v1716 = vpop.f32.mrb[0].mxu0
        %1717 = vmatprep.mubr.f32.mxu0 0.0
        %1718 = vmatmul.mubr.f32.gmra.mrb[0].mxu0 %v1473
        %v1719 = vpop.f32.mrb[0].mxu0
        %v1720 = vadd.f32 0.0, %v1719
        %v1721 = vpop.f32.mrb[0].mxu0
        %1722 = vmatprep.mubr.f32.mxu0 0.0
        %1723 = vmatmul.mubr.f32.gmra.mrb[0].mxu0 %v1474
        %v1724 = vpop.f32.mrb[0].mxu0
        %v1725 = vadd.f32 0.0, %v1724
        %v1726 = vpop.f32.mrb[0].mxu0
        %1727 = vmatprep.mubr.f32.mxu0 0.0
        %1728 = vmatmul.mubr.f32.gmra.mrb[0].mxu0 %v1475
        %v1729 = vpop.f32.mrb[0].mxu0
        %v1730 = vadd.f32 0.0, %v1729
        %v1731 = vpop.f32.mrb[0].mxu0
        %1732 = vmatprep.mubr.f32.mxu0 0.0
        %1733 = vmatmul.mubr.f32.gmra.mrb[0].mxu0 %v1476
        %v1734 = vpop.f32.mrb[0].mxu0
        %v1735 = vadd.f32 0.0, %v1734
        %v1736 = vpop.f32.mrb[0].mxu0
        %1737 = vdwg.mxu0
        %v1738 = vadd.f32 %v1405, %v1560
        %v1739 = vadd.f32 %v1406, %v1565
        %v1740 = vadd.f32 %v1407, %v1570
        %v1741 = vadd.f32 %v1408, %v1575
        %v1742 = vadd.f32 %v1409, %v1580
        %v1743 = vadd.f32 %v1410, %v1585
        %v1744 = vadd.f32 %v1411, %v1590
        %v1745 = vadd.f32 %v1412, %v1595
        %v1746 = vadd.f32 %v1413, %v1600
        %v1747 = vadd.f32 %v1414, %v1605
        %v1748 = vadd.f32 %v1415, %v1610
        %v1749 = vadd.f32 %v1416, %v1615
        %v1750 = vadd.f32 %v1417, %v1620
        %v1751 = vadd.f32 %v1418, %v1625
        %v1752 = vadd.f32 %v1419, %v1630
        %v1753 = vadd.f32 %v1420, %v1635
        %v1754 = vadd.f32 %v1421, %v1640
        %v1755 = vadd.f32 %v1422, %v1645
        %v1756 = vadd.f32 %v1423, %v1650
        %v1757 = vadd.f32 %v1424, %v1655
        %v1758 = vadd.f32 %v1425, %v1660
        %v1759 = vadd.f32 %v1426, %v1665
        %v1760 = vadd.f32 %v1427, %v1670
        %v1761 = vadd.f32 %v1428, %v1675
        %v1762 = vadd.f32 %v1429, %v1680
        %v1763 = vadd.f32 %v1430, %v1685
        %v1764 = vadd.f32 %v1431, %v1690
        %v1765 = vadd.f32 %v1432, %v1695
        %v1766 = vadd.f32 %v1433, %v1700
        %v1767 = vadd.f32 %v1434, %v1705
        %v1768 = vadd.f32 %v1435, %v1710
        %v1769 = vadd.f32 %v1436, %v1715
        %v1770 = vadd.f32 %v1437, %v1720
        %v1771 = vadd.f32 %v1438, %v1725
        %v1772 = vadd.f32 %v1439, %v1730
        %v1773 = vadd.f32 %v1440, %v1735
        %v1774 = vld [vmem:[%s428 + $0x13] sm:$0xff]
        %v1775 = vld [vmem:[%s428 + $0x1b] sm:$0xff]
        %v1776 = vld [vmem:[%s428 + $0x23] sm:$0xff]
        %v1777 = vld [vmem:[%s428 + $0x2b] sm:$0xff]
        %v1778 = vld [vmem:[%s428 + $0x33] sm:$0xff]
        %v1779 = vld [vmem:[%s428 + $0x3b] sm:$0xff]
        %v1780 = vld [vmem:[%s428 + $0x43] sm:$0xff]
        %v1781 = vld [vmem:[%s428 + $0x4b] sm:$0xff]
        %v1782 = vld [vmem:[%s428 + $0x53] sm:$0xff]
        %v1783 = vld [vmem:[%s428 + $0x5b] sm:$0xff]
        %v1784 = vld [vmem:[%s428 + $0x63] sm:$0xff]
        %v1785 = vld [vmem:[%s428 + $0x6b] sm:$0xff]
        %v1786 = vld [vmem:[%s428 + $0x73] sm:$0xff]
        %v1787 = vld [vmem:[%s428 + $0x7b] sm:$0xff]
        %v1788 = vld [vmem:[%s428 + $0x83] sm:$0xff]
        %v1789 = vld [vmem:[%s428 + $0x8b] sm:$0xff]
        %v1790 = vld [vmem:[%s428 + $0x93] sm:$0xff]
        %v1791 = vld [vmem:[%s428 + $0x9b] sm:$0xff]
        %v1792 = vld [vmem:[%s428 + $0xa3] sm:$0xff]
        %v1793 = vld [vmem:[%s428 + $0xab] sm:$0xff]
        %v1794 = vld [vmem:[%s428 + $0xb3] sm:$0xff]
        %v1795 = vld [vmem:[%s428 + $0xbb] sm:$0xff]
        %v1796 = vld [vmem:[%s428 + $0xc3] sm:$0xff]
        %v1797 = vld [vmem:[%s428 + $0xcb] sm:$0xff]
        %v1798 = vld [vmem:[%s428 + $0xd3] sm:$0xff]
        %v1799 = vld [vmem:[%s428 + $0xdb] sm:$0xff]
        %v1800 = vld [vmem:[%s428 + $0xe3] sm:$0xff]
        %v1801 = vld [vmem:[%s428 + $0xeb] sm:$0xff]
        %v1802 = vld [vmem:[%s428 + $0xf3] sm:$0xff]
        %v1803 = vld [vmem:[%s428 + $0xfb] sm:$0xff]
        %v1804 = vld [vmem:[%s428 + $0x103] sm:$0xff]
        %v1805 = vld [vmem:[%s428 + $0x10b] sm:$0xff]
        %v1806 = vld [vmem:[%s428 + $0x113] sm:$0xff]
        %v1807 = vld [vmem:[%s428 + $0x11b] sm:$0xff]
        %v1808 = vld [vmem:[%s428 + $0x123] sm:$0xff]
        %v1809 = vld [vmem:[%s428 + $0x12b] sm:$0xff]
        %v1810 = vld [vmem:[#allocation9 + $0x200] sm:$0xff]
        %v1811 = vld [vmem:[#allocation9 + $0x208] sm:$0xff]
        %v1812 = vld [vmem:[#allocation9 + $0x210] sm:$0xff]
        %v1813 = vld [vmem:[#allocation9 + $0x218] sm:$0xff]
        %v1814 = vld [vmem:[#allocation9 + $0x220] sm:$0xff]
        %v1815 = vld [vmem:[#allocation9 + $0x228] sm:$0xff]
        %v1816 = vld [vmem:[#allocation9 + $0x230] sm:$0xff]
        %v1817 = vld [vmem:[#allocation9 + $0x238] sm:$0xff]
        %v1818 = vld [vmem:[#allocation9 + $0x240] sm:$0xff]
        %v1819 = vld [vmem:[#allocation9 + $0x248] sm:$0xff]
        %v1820 = vld [vmem:[#allocation9 + $0x250] sm:$0xff]
        %v1821 = vld [vmem:[#allocation9 + $0x258] sm:$0xff]
        %v1822 = vld [vmem:[#allocation9 + $0x260] sm:$0xff]
        %v1823 = vld [vmem:[#allocation9 + $0x268] sm:$0xff]
        %v1824 = vld [vmem:[#allocation9 + $0x270] sm:$0xff]
        %v1825 = vld [vmem:[#allocation9 + $0x278] sm:$0xff]
        %1826 = vmatprep.subr.mxu0 0.0
        %1827 = vmatpush1.msra.mxu0 %v1810
        %1828 = vmatprep.subr.mxu0 0.0
        %1829 = vmatpush1.msra.mxu0 %v1811
        %1830 = vmatprep.subr.mxu0 0.0
        %1831 = vmatpush1.msra.mxu0 %v1812
        %1832 = vmatprep.subr.mxu0 0.0
        %1833 = vmatpush1.msra.mxu0 %v1813
        %1834 = vmatprep.subr.mxu0 0.0
        %1835 = vmatpush1.msra.mxu0 %v1814
        %1836 = vmatprep.subr.mxu0 0.0
        %1837 = vmatpush1.msra.mxu0 %v1815
        %1838 = vmatprep.subr.mxu0 0.0
        %1839 = vmatpush1.msra.mxu0 %v1816
        %1840 = vmatprep.subr.mxu0 0.0
        %1841 = vmatpush1.msra.mxu0 %v1817
        %1842 = vmatprep.subr.mxu0 0.0
        %1843 = vmatpush1.msra.mxu0 %v1818
        %1844 = vmatprep.subr.mxu0 0.0
        %1845 = vmatpush1.msra.mxu0 %v1819
        %1846 = vmatprep.subr.mxu0 0.0
        %1847 = vmatpush1.msra.mxu0 %v1820
        %1848 = vmatprep.subr.mxu0 0.0
        %1849 = vmatpush1.msra.mxu0 %v1821
        %1850 = vmatprep.subr.mxu0 0.0
        %1851 = vmatpush1.msra.mxu0 %v1822
        %1852 = vmatprep.subr.mxu0 0.0
        %1853 = vmatpush1.msra.mxu0 %v1823
        %1854 = vmatprep.subr.mxu0 0.0
        %1855 = vmatpush1.msra.mxu0 %v1824
        %1856 = vmatprep.subr.mxu0 0.0
        %1857 = vmatpush1.msra.mxu0 %v1825
        %1858 = vmatprep.subr.mxu0 0.0
        %1859 = vmatpush1.msra.mxu0 0.0
        %1860 = vmatprep.subr.mxu0 0.0
        %1861 = vmatpush1.msra.mxu0 0.0
        %1862 = vmatprep.subr.mxu0 0.0
        %1863 = vmatpush1.msra.mxu0 0.0
        %1864 = vmatprep.subr.mxu0 0.0
        %1865 = vmatpush1.msra.mxu0 0.0
        %1866 = vmatprep.subr.mxu0 0.0
        %1867 = vmatpush1.msra.mxu0 0.0
        %1868 = vmatprep.subr.mxu0 0.0
        %1869 = vmatpush1.msra.mxu0 0.0
        %1870 = vmatprep.subr.mxu0 0.0
        %1871 = vmatpush1.msra.mxu0 0.0
        %1872 = vmatprep.subr.mxu0 0.0
        %1873 = vmatpush1.msra.mxu0 0.0
        %1874 = vmatprep.subr.mxu0 0.0
        %1875 = vmatpush1.msra.mxu0 0.0
        %1876 = vmatprep.subr.mxu0 0.0
        %1877 = vmatpush1.msra.mxu0 0.0
        %1878 = vmatprep.subr.mxu0 0.0
        %1879 = vmatpush1.msra.mxu0 0.0
        %1880 = vmatprep.subr.mxu0 0.0
        %1881 = vmatpush1.msra.mxu0 0.0
        %1882 = vmatprep.subr.mxu0 0.0
        %1883 = vmatpush1.msra.mxu0 0.0
        %1884 = vmatprep.subr.mxu0 0.0
        %1885 = vmatpush1.msra.mxu0 0.0
        %1886 = vmatprep.subr.mxu0 0.0
        %1887 = vmatpush1.msra.mxu0 0.0
        %1888 = vmatprep.subr.mxu0 0.0
        %1889 = vmatpush1.msra.mxu0 0.0
        %1890 = vmatprep.mubr.f32.mxu0 0.0
        %1891 = vmatmul.mubr.f32.gmra.mrb[0].mxu0 %v1774
        %v1892 = vpop.f32.mrb[0].mxu0
        %v1893 = vadd.f32 0.0, %v1892
        %v1894 = vpop.f32.mrb[0].mxu0
        %1895 = vmatprep.mubr.f32.mxu0 0.0
        %1896 = vmatmul.mubr.f32.gmra.mrb[0].mxu0 %v1775
        %v1897 = vpop.f32.mrb[0].mxu0
        %v1898 = vadd.f32 0.0, %v1897
        %v1899 = vpop.f32.mrb[0].mxu0
        %1900 = vmatprep.mubr.f32.mxu0 0.0
        %1901 = vmatmul.mubr.f32.gmra.mrb[0].mxu0 %v1776
        %v1902 = vpop.f32.mrb[0].mxu0
        %v1903 = vadd.f32 0.0, %v1902
        %v1904 = vpop.f32.mrb[0].mxu0
        %1905 = vmatprep.mubr.f32.mxu0 0.0
        %1906 = vmatmul.mubr.f32.gmra.mrb[0].mxu0 %v1777
        %v1907 = vpop.f32.mrb[0].mxu0
        %v1908 = vadd.f32 0.0, %v1907
        %v1909 = vpop.f32.mrb[0].mxu0
        %1910 = vmatprep.mubr.f32.mxu0 0.0
        %1911 = vmatmul.mubr.f32.gmra.mrb[0].mxu0 %v1778
        %v1912 = vpop.f32.mrb[0].mxu0
        %v1913 = vadd.f32 0.0, %v1912
        %v1914 = vpop.f32.mrb[0].mxu0
        %1915 = vmatprep.mubr.f32.mxu0 0.0
        %1916 = vmatmul.mubr.f32.gmra.mrb[0].mxu0 %v1779
        %v1917 = vpop.f32.mrb[0].mxu0
        %v1918 = vadd.f32 0.0, %v1917
        %v1919 = vpop.f32.mrb[0].mxu0
        %1920 = vmatprep.mubr.f32.mxu0 0.0
        %1921 = vmatmul.mubr.f32.gmra.mrb[0].mxu0 %v1780
        %v1922 = vpop.f32.mrb[0].mxu0
        %v1923 = vadd.f32 0.0, %v1922
        %v1924 = vpop.f32.mrb[0].mxu0
        %1925 = vmatprep.mubr.f32.mxu0 0.0
        %1926 = vmatmul.mubr.f32.gmra.mrb[0].mxu0 %v1781
        %v1927 = vpop.f32.mrb[0].mxu0
        %v1928 = vadd.f32 0.0, %v1927
        %v1929 = vpop.f32.mrb[0].mxu0
        %1930 = vmatprep.mubr.f32.mxu0 0.0
        %1931 = vmatmul.mubr.f32.gmra.mrb[0].mxu0 %v1782
        %v1932 = vpop.f32.mrb[0].mxu0
        %v1933 = vadd.f32 0.0, %v1932
        %v1934 = vpop.f32.mrb[0].mxu0
        %1935 = vmatprep.mubr.f32.mxu0 0.0
        %1936 = vmatmul.mubr.f32.gmra.mrb[0].mxu0 %v1783
        %v1937 = vpop.f32.mrb[0].mxu0
        %v1938 = vadd.f32 0.0, %v1937
        %v1939 = vpop.f32.mrb[0].mxu0
        %1940 = vmatprep.mubr.f32.mxu0 0.0
        %1941 = vmatmul.mubr.f32.gmra.mrb[0].mxu0 %v1784
        %v1942 = vpop.f32.mrb[0].mxu0
        %v1943 = vadd.f32 0.0, %v1942
        %v1944 = vpop.f32.mrb[0].mxu0
        %1945 = vmatprep.mubr.f32.mxu0 0.0
        %1946 = vmatmul.mubr.f32.gmra.mrb[0].mxu0 %v1785
        %v1947 = vpop.f32.mrb[0].mxu0
        %v1948 = vadd.f32 0.0, %v1947
        %v1949 = vpop.f32.mrb[0].mxu0
        %1950 = vmatprep.mubr.f32.mxu0 0.0
        %1951 = vmatmul.mubr.f32.gmra.mrb[0].mxu0 %v1786
        %v1952 = vpop.f32.mrb[0].mxu0
        %v1953 = vadd.f32 0.0, %v1952
        %v1954 = vpop.f32.mrb[0].mxu0
        %1955 = vmatprep.mubr.f32.mxu0 0.0
        %1956 = vmatmul.mubr.f32.gmra.mrb[0].mxu0 %v1787
        %v1957 = vpop.f32.mrb[0].mxu0
        %v1958 = vadd.f32 0.0, %v1957
        %v1959 = vpop.f32.mrb[0].mxu0
        %1960 = vmatprep.mubr.f32.mxu0 0.0
        %1961 = vmatmul.mubr.f32.gmra.mrb[0].mxu0 %v1788
        %v1962 = vpop.f32.mrb[0].mxu0
        %v1963 = vadd.f32 0.0, %v1962
        %v1964 = vpop.f32.mrb[0].mxu0
        %1965 = vmatprep.mubr.f32.mxu0 0.0
        %1966 = vmatmul.mubr.f32.gmra.mrb[0].mxu0 %v1789
        %v1967 = vpop.f32.mrb[0].mxu0
        %v1968 = vadd.f32 0.0, %v1967
        %v1969 = vpop.f32.mrb[0].mxu0
        %1970 = vmatprep.mubr.f32.mxu0 0.0
        %1971 = vmatmul.mubr.f32.gmra.mrb[0].mxu0 %v1790
        %v1972 = vpop.f32.mrb[0].mxu0
        %v1973 = vadd.f32 0.0, %v1972
        %v1974 = vpop.f32.mrb[0].mxu0
        %1975 = vmatprep.mubr.f32.mxu0 0.0
        %1976 = vmatmul.mubr.f32.gmra.mrb[0].mxu0 %v1791
        %v1977 = vpop.f32.mrb[0].mxu0
        %v1978 = vadd.f32 0.0, %v1977
        %v1979 = vpop.f32.mrb[0].mxu0
        %1980 = vmatprep.mubr.f32.mxu0 0.0
        %1981 = vmatmul.mubr.f32.gmra.mrb[0].mxu0 %v1792
        %v1982 = vpop.f32.mrb[0].mxu0
        %v1983 = vadd.f32 0.0, %v1982
        %v1984 = vpop.f32.mrb[0].mxu0
        %1985 = vmatprep.mubr.f32.mxu0 0.0
        %1986 = vmatmul.mubr.f32.gmra.mrb[0].mxu0 %v1793
        %v1987 = vpop.f32.mrb[0].mxu0
        %v1988 = vadd.f32 0.0, %v1987
        %v1989 = vpop.f32.mrb[0].mxu0
        %1990 = vmatprep.mubr.f32.mxu0 0.0
        %1991 = vmatmul.mubr.f32.gmra.mrb[0].mxu0 %v1794
        %v1992 = vpop.f32.mrb[0].mxu0
        %v1993 = vadd.f32 0.0, %v1992
        %v1994 = vpop.f32.mrb[0].mxu0
        %1995 = vmatprep.mubr.f32.mxu0 0.0
        %1996 = vmatmul.mubr.f32.gmra.mrb[0].mxu0 %v1795
        %v1997 = vpop.f32.mrb[0].mxu0
        %v1998 = vadd.f32 0.0, %v1997
        %v1999 = vpop.f32.mrb[0].mxu0
        %2000 = vmatprep.mubr.f32.mxu0 0.0
        %2001 = vmatmul.mubr.f32.gmra.mrb[0].mxu0 %v1796
        %v2002 = vpop.f32.mrb[0].mxu0
        %v2003 = vadd.f32 0.0, %v2002
        %v2004 = vpop.f32.mrb[0].mxu0
        %2005 = vmatprep.mubr.f32.mxu0 0.0
        %2006 = vmatmul.mubr.f32.gmra.mrb[0].mxu0 %v1797
        %v2007 = vpop.f32.mrb[0].mxu0
        %v2008 = vadd.f32 0.0, %v2007
        %v2009 = vpop.f32.mrb[0].mxu0
        %2010 = vmatprep.mubr.f32.mxu0 0.0
        %2011 = vmatmul.mubr.f32.gmra.mrb[0].mxu0 %v1798
        %v2012 = vpop.f32.mrb[0].mxu0
        %v2013 = vadd.f32 0.0, %v2012
        %v2014 = vpop.f32.mrb[0].mxu0
        %2015 = vmatprep.mubr.f32.mxu0 0.0
        %2016 = vmatmul.mubr.f32.gmra.mrb[0].mxu0 %v1799
        %v2017 = vpop.f32.mrb[0].mxu0
        %v2018 = vadd.f32 0.0, %v2017
        %v2019 = vpop.f32.mrb[0].mxu0
        %2020 = vmatprep.mubr.f32.mxu0 0.0
        %2021 = vmatmul.mubr.f32.gmra.mrb[0].mxu0 %v1800
        %v2022 = vpop.f32.mrb[0].mxu0
        %v2023 = vadd.f32 0.0, %v2022
        %v2024 = vpop.f32.mrb[0].mxu0
        %2025 = vmatprep.mubr.f32.mxu0 0.0
        %2026 = vmatmul.mubr.f32.gmra.mrb[0].mxu0 %v1801
        %v2027 = vpop.f32.mrb[0].mxu0
        %v2028 = vadd.f32 0.0, %v2027
        %v2029 = vpop.f32.mrb[0].mxu0
        %2030 = vmatprep.mubr.f32.mxu0 0.0
        %2031 = vmatmul.mubr.f32.gmra.mrb[0].mxu0 %v1802
        %v2032 = vpop.f32.mrb[0].mxu0
        %v2033 = vadd.f32 0.0, %v2032
        %v2034 = vpop.f32.mrb[0].mxu0
        %2035 = vmatprep.mubr.f32.mxu0 0.0
        %2036 = vmatmul.mubr.f32.gmra.mrb[0].mxu0 %v1803
        %v2037 = vpop.f32.mrb[0].mxu0
        %v2038 = vadd.f32 0.0, %v2037
        %v2039 = vpop.f32.mrb[0].mxu0
        %2040 = vmatprep.mubr.f32.mxu0 0.0
        %2041 = vmatmul.mubr.f32.gmra.mrb[0].mxu0 %v1804
        %v2042 = vpop.f32.mrb[0].mxu0
        %v2043 = vadd.f32 0.0, %v2042
        %v2044 = vpop.f32.mrb[0].mxu0
        %2045 = vmatprep.mubr.f32.mxu0 0.0
        %2046 = vmatmul.mubr.f32.gmra.mrb[0].mxu0 %v1805
        %v2047 = vpop.f32.mrb[0].mxu0
        %v2048 = vadd.f32 0.0, %v2047
        %v2049 = vpop.f32.mrb[0].mxu0
        %2050 = vmatprep.mubr.f32.mxu0 0.0
        %2051 = vmatmul.mubr.f32.gmra.mrb[0].mxu0 %v1806
        %v2052 = vpop.f32.mrb[0].mxu0
        %v2053 = vadd.f32 0.0, %v2052
        %v2054 = vpop.f32.mrb[0].mxu0
        %2055 = vmatprep.mubr.f32.mxu0 0.0
        %2056 = vmatmul.mubr.f32.gmra.mrb[0].mxu0 %v1807
        %v2057 = vpop.f32.mrb[0].mxu0
        %v2058 = vadd.f32 0.0, %v2057
        %v2059 = vpop.f32.mrb[0].mxu0
        %2060 = vmatprep.mubr.f32.mxu0 0.0
        %2061 = vmatmul.mubr.f32.gmra.mrb[0].mxu0 %v1808
        %v2062 = vpop.f32.mrb[0].mxu0
        %v2063 = vadd.f32 0.0, %v2062
        %v2064 = vpop.f32.mrb[0].mxu0
        %2065 = vmatprep.mubr.f32.mxu0 0.0
        %2066 = vmatmul.mubr.f32.gmra.mrb[0].mxu0 %v1809
        %v2067 = vpop.f32.mrb[0].mxu0
        %v2068 = vadd.f32 0.0, %v2067
        %v2069 = vpop.f32.mrb[0].mxu0
        %2070 = vdwg.mxu0
        %v2071 = vadd.f32 %v1738, %v1893
        %v2072 = vadd.f32 %v1739, %v1898
        %v2073 = vadd.f32 %v1740, %v1903
        %v2074 = vadd.f32 %v1741, %v1908
        %v2075 = vadd.f32 %v1742, %v1913
        %v2076 = vadd.f32 %v1743, %v1918
        %v2077 = vadd.f32 %v1744, %v1923
        %v2078 = vadd.f32 %v1745, %v1928
        %v2079 = vadd.f32 %v1746, %v1933
        %v2080 = vadd.f32 %v1747, %v1938
        %v2081 = vadd.f32 %v1748, %v1943
        %v2082 = vadd.f32 %v1749, %v1948
        %v2083 = vadd.f32 %v1750, %v1953
        %v2084 = vadd.f32 %v1751, %v1958
        %v2085 = vadd.f32 %v1752, %v1963
        %v2086 = vadd.f32 %v1753, %v1968
        %v2087 = vadd.f32 %v1754, %v1973
        %v2088 = vadd.f32 %v1755, %v1978
        %v2089 = vadd.f32 %v1756, %v1983
        %v2090 = vadd.f32 %v1757, %v1988
        %v2091 = vadd.f32 %v1758, %v1993
        %v2092 = vadd.f32 %v1759, %v1998
        %v2093 = vadd.f32 %v1760, %v2003
        %v2094 = vadd.f32 %v1761, %v2008
        %v2095 = vadd.f32 %v1762, %v2013
        %v2096 = vadd.f32 %v1763, %v2018
        %v2097 = vadd.f32 %v1764, %v2023
        %v2098 = vadd.f32 %v1765, %v2028
        %v2099 = vadd.f32 %v1766, %v2033
        %v2100 = vadd.f32 %v1767, %v2038
        %v2101 = vadd.f32 %v1768, %v2043
        %v2102 = vadd.f32 %v1769, %v2048
        %v2103 = vadd.f32 %v1770, %v2053
        %v2104 = vadd.f32 %v1771, %v2058
        %v2105 = vadd.f32 %v1772, %v2063
        %v2106 = vadd.f32 %v1773, %v2068
        %v2107 = vld [vmem:[%s428 + $0x14] sm:$0xff]
        %v2108 = vld [vmem:[%s428 + $0x1c] sm:$0xff]
        %v2109 = vld [vmem:[%s428 + $0x24] sm:$0xff]
        %v2110 = vld [vmem:[%s428 + $0x2c] sm:$0xff]
        %v2111 = vld [vmem:[%s428 + $0x34] sm:$0xff]
        %v2112 = vld [vmem:[%s428 + $0x3c] sm:$0xff]
        %v2113 = vld [vmem:[%s428 + $0x44] sm:$0xff]
        %v2114 = vld [vmem:[%s428 + $0x4c] sm:$0xff]
        %v2115 = vld [vmem:[%s428 + $0x54] sm:$0xff]
        %v2116 = vld [vmem:[%s428 + $0x5c] sm:$0xff]
        %v2117 = vld [vmem:[%s428 + $0x64] sm:$0xff]
        %v2118 = vld [vmem:[%s428 + $0x6c] sm:$0xff]
        %v2119 = vld [vmem:[%s428 + $0x74] sm:$0xff]
        %v2120 = vld [vmem:[%s428 + $0x7c] sm:$0xff]
        %v2121 = vld [vmem:[%s428 + $0x84] sm:$0xff]
        %v2122 = vld [vmem:[%s428 + $0x8c] sm:$0xff]
        %v2123 = vld [vmem:[%s428 + $0x94] sm:$0xff]
        %v2124 = vld [vmem:[%s428 + $0x9c] sm:$0xff]
        %v2125 = vld [vmem:[%s428 + $0xa4] sm:$0xff]
        %v2126 = vld [vmem:[%s428 + $0xac] sm:$0xff]
        %v2127 = vld [vmem:[%s428 + $0xb4] sm:$0xff]
        %v2128 = vld [vmem:[%s428 + $0xbc] sm:$0xff]
        %v2129 = vld [vmem:[%s428 + $0xc4] sm:$0xff]
        %v2130 = vld [vmem:[%s428 + $0xcc] sm:$0xff]
        %v2131 = vld [vmem:[%s428 + $0xd4] sm:$0xff]
        %v2132 = vld [vmem:[%s428 + $0xdc] sm:$0xff]
        %v2133 = vld [vmem:[%s428 + $0xe4] sm:$0xff]
        %v2134 = vld [vmem:[%s428 + $0xec] sm:$0xff]
        %v2135 = vld [vmem:[%s428 + $0xf4] sm:$0xff]
        %v2136 = vld [vmem:[%s428 + $0xfc] sm:$0xff]
        %v2137 = vld [vmem:[%s428 + $0x104] sm:$0xff]
        %v2138 = vld [vmem:[%s428 + $0x10c] sm:$0xff]
        %v2139 = vld [vmem:[%s428 + $0x114] sm:$0xff]
        %v2140 = vld [vmem:[%s428 + $0x11c] sm:$0xff]
        %v2141 = vld [vmem:[%s428 + $0x124] sm:$0xff]
        %v2142 = vld [vmem:[%s428 + $0x12c] sm:$0xff]
        %v2143 = vld [vmem:[#allocation9 + $0x280] sm:$0xff]
        %v2144 = vld [vmem:[#allocation9 + $0x288] sm:$0xff]
        %v2145 = vld [vmem:[#allocation9 + $0x290] sm:$0xff]
        %v2146 = vld [vmem:[#allocation9 + $0x298] sm:$0xff]
        %v2147 = vld [vmem:[#allocation9 + $0x2a0] sm:$0xff]
        %v2148 = vld [vmem:[#allocation9 + $0x2a8] sm:$0xff]
        %v2149 = vld [vmem:[#allocation9 + $0x2b0] sm:$0xff]
        %v2150 = vld [vmem:[#allocation9 + $0x2b8] sm:$0xff]
        %v2151 = vld [vmem:[#allocation9 + $0x2c0] sm:$0xff]
        %v2152 = vld [vmem:[#allocation9 + $0x2c8] sm:$0xff]
        %v2153 = vld [vmem:[#allocation9 + $0x2d0] sm:$0xff]
        %v2154 = vld [vmem:[#allocation9 + $0x2d8] sm:$0xff]
        %v2155 = vld [vmem:[#allocation9 + $0x2e0] sm:$0xff]
        %v2156 = vld [vmem:[#allocation9 + $0x2e8] sm:$0xff]
        %v2157 = vld [vmem:[#allocation9 + $0x2f0] sm:$0xff]
        %v2158 = vld [vmem:[#allocation9 + $0x2f8] sm:$0xff]
        %2159 = vmatprep.subr.mxu0 0.0
        %2160 = vmatpush1.msra.mxu0 %v2143
        %2161 = vmatprep.subr.mxu0 0.0
        %2162 = vmatpush1.msra.mxu0 %v2144
        %2163 = vmatprep.subr.mxu0 0.0
        %2164 = vmatpush1.msra.mxu0 %v2145
        %2165 = vmatprep.subr.mxu0 0.0
        %2166 = vmatpush1.msra.mxu0 %v2146
        %2167 = vmatprep.subr.mxu0 0.0
        %2168 = vmatpush1.msra.mxu0 %v2147
        %2169 = vmatprep.subr.mxu0 0.0
        %2170 = vmatpush1.msra.mxu0 %v2148
        %2171 = vmatprep.subr.mxu0 0.0
        %2172 = vmatpush1.msra.mxu0 %v2149
        %2173 = vmatprep.subr.mxu0 0.0
        %2174 = vmatpush1.msra.mxu0 %v2150
        %2175 = vmatprep.subr.mxu0 0.0
        %2176 = vmatpush1.msra.mxu0 %v2151
        %2177 = vmatprep.subr.mxu0 0.0
        %2178 = vmatpush1.msra.mxu0 %v2152
        %2179 = vmatprep.subr.mxu0 0.0
        %2180 = vmatpush1.msra.mxu0 %v2153
        %2181 = vmatprep.subr.mxu0 0.0
        %2182 = vmatpush1.msra.mxu0 %v2154
        %2183 = vmatprep.subr.mxu0 0.0
        %2184 = vmatpush1.msra.mxu0 %v2155
        %2185 = vmatprep.subr.mxu0 0.0
        %2186 = vmatpush1.msra.mxu0 %v2156
        %2187 = vmatprep.subr.mxu0 0.0
        %2188 = vmatpush1.msra.mxu0 %v2157
        %2189 = vmatprep.subr.mxu0 0.0
        %2190 = vmatpush1.msra.mxu0 %v2158
        %2191 = vmatprep.subr.mxu0 0.0
        %2192 = vmatpush1.msra.mxu0 0.0
        %2193 = vmatprep.subr.mxu0 0.0
        %2194 = vmatpush1.msra.mxu0 0.0
        %2195 = vmatprep.subr.mxu0 0.0
        %2196 = vmatpush1.msra.mxu0 0.0
        %2197 = vmatprep.subr.mxu0 0.0
        %2198 = vmatpush1.msra.mxu0 0.0
        %2199 = vmatprep.subr.mxu0 0.0
        %2200 = vmatpush1.msra.mxu0 0.0
        %2201 = vmatprep.subr.mxu0 0.0
        %2202 = vmatpush1.msra.mxu0 0.0
        %2203 = vmatprep.subr.mxu0 0.0
        %2204 = vmatpush1.msra.mxu0 0.0
        %2205 = vmatprep.subr.mxu0 0.0
        %2206 = vmatpush1.msra.mxu0 0.0
        %2207 = vmatprep.subr.mxu0 0.0
        %2208 = vmatpush1.msra.mxu0 0.0
        %2209 = vmatprep.subr.mxu0 0.0
        %2210 = vmatpush1.msra.mxu0 0.0
        %2211 = vmatprep.subr.mxu0 0.0
        %2212 = vmatpush1.msra.mxu0 0.0
        %2213 = vmatprep.subr.mxu0 0.0
        %2214 = vmatpush1.msra.mxu0 0.0
        %2215 = vmatprep.subr.mxu0 0.0
        %2216 = vmatpush1.msra.mxu0 0.0
        %2217 = vmatprep.subr.mxu0 0.0
        %2218 = vmatpush1.msra.mxu0 0.0
        %2219 = vmatprep.subr.mxu0 0.0
        %2220 = vmatpush1.msra.mxu0 0.0
        %2221 = vmatprep.subr.mxu0 0.0
        %2222 = vmatpush1.msra.mxu0 0.0
        %2223 = vmatprep.mubr.f32.mxu0 0.0
        %2224 = vmatmul.mubr.f32.gmra.mrb[0].mxu0 %v2107
        %v2225 = vpop.f32.mrb[0].mxu0
        %v2226 = vadd.f32 0.0, %v2225
        %v2227 = vpop.f32.mrb[0].mxu0
        %2228 = vmatprep.mubr.f32.mxu0 0.0
        %2229 = vmatmul.mubr.f32.gmra.mrb[0].mxu0 %v2108
        %v2230 = vpop.f32.mrb[0].mxu0
        %v2231 = vadd.f32 0.0, %v2230
        %v2232 = vpop.f32.mrb[0].mxu0
        %2233 = vmatprep.mubr.f32.mxu0 0.0
        %2234 = vmatmul.mubr.f32.gmra.mrb[0].mxu0 %v2109
        %v2235 = vpop.f32.mrb[0].mxu0
        %v2236 = vadd.f32 0.0, %v2235
        %v2237 = vpop.f32.mrb[0].mxu0
        %2238 = vmatprep.mubr.f32.mxu0 0.0
        %2239 = vmatmul.mubr.f32.gmra.mrb[0].mxu0 %v2110
        %v2240 = vpop.f32.mrb[0].mxu0
        %v2241 = vadd.f32 0.0, %v2240
        %v2242 = vpop.f32.mrb[0].mxu0
        %2243 = vmatprep.mubr.f32.mxu0 0.0
        %2244 = vmatmul.mubr.f32.gmra.mrb[0].mxu0 %v2111
        %v2245 = vpop.f32.mrb[0].mxu0
        %v2246 = vadd.f32 0.0, %v2245
        %v2247 = vpop.f32.mrb[0].mxu0
        %2248 = vmatprep.mubr.f32.mxu0 0.0
        %2249 = vmatmul.mubr.f32.gmra.mrb[0].mxu0 %v2112
        %v2250 = vpop.f32.mrb[0].mxu0
        %v2251 = vadd.f32 0.0, %v2250
        %v2252 = vpop.f32.mrb[0].mxu0
        %2253 = vmatprep.mubr.f32.mxu0 0.0
        %2254 = vmatmul.mubr.f32.gmra.mrb[0].mxu0 %v2113
        %v2255 = vpop.f32.mrb[0].mxu0
        %v2256 = vadd.f32 0.0, %v2255
        %v2257 = vpop.f32.mrb[0].mxu0
        %2258 = vmatprep.mubr.f32.mxu0 0.0
        %2259 = vmatmul.mubr.f32.gmra.mrb[0].mxu0 %v2114
        %v2260 = vpop.f32.mrb[0].mxu0
        %v2261 = vadd.f32 0.0, %v2260
        %v2262 = vpop.f32.mrb[0].mxu0
        %2263 = vmatprep.mubr.f32.mxu0 0.0
        %2264 = vmatmul.mubr.f32.gmra.mrb[0].mxu0 %v2115
        %v2265 = vpop.f32.mrb[0].mxu0
        %v2266 = vadd.f32 0.0, %v2265
        %v2267 = vpop.f32.mrb[0].mxu0
        %2268 = vmatprep.mubr.f32.mxu0 0.0
        %2269 = vmatmul.mubr.f32.gmra.mrb[0].mxu0 %v2116
        %v2270 = vpop.f32.mrb[0].mxu0
        %v2271 = vadd.f32 0.0, %v2270
        %v2272 = vpop.f32.mrb[0].mxu0
        %2273 = vmatprep.mubr.f32.mxu0 0.0
        %2274 = vmatmul.mubr.f32.gmra.mrb[0].mxu0 %v2117
        %v2275 = vpop.f32.mrb[0].mxu0
        %v2276 = vadd.f32 0.0, %v2275
        %v2277 = vpop.f32.mrb[0].mxu0
        %2278 = vmatprep.mubr.f32.mxu0 0.0
        %2279 = vmatmul.mubr.f32.gmra.mrb[0].mxu0 %v2118
        %v2280 = vpop.f32.mrb[0].mxu0
        %v2281 = vadd.f32 0.0, %v2280
        %v2282 = vpop.f32.mrb[0].mxu0
        %2283 = vmatprep.mubr.f32.mxu0 0.0
        %2284 = vmatmul.mubr.f32.gmra.mrb[0].mxu0 %v2119
        %v2285 = vpop.f32.mrb[0].mxu0
        %v2286 = vadd.f32 0.0, %v2285
        %v2287 = vpop.f32.mrb[0].mxu0
        %2288 = vmatprep.mubr.f32.mxu0 0.0
        %2289 = vmatmul.mubr.f32.gmra.mrb[0].mxu0 %v2120
        %v2290 = vpop.f32.mrb[0].mxu0
        %v2291 = vadd.f32 0.0, %v2290
        %v2292 = vpop.f32.mrb[0].mxu0
        %2293 = vmatprep.mubr.f32.mxu0 0.0
        %2294 = vmatmul.mubr.f32.gmra.mrb[0].mxu0 %v2121
        %v2295 = vpop.f32.mrb[0].mxu0
        %v2296 = vadd.f32 0.0, %v2295
        %v2297 = vpop.f32.mrb[0].mxu0
        %2298 = vmatprep.mubr.f32.mxu0 0.0
        %2299 = vmatmul.mubr.f32.gmra.mrb[0].mxu0 %v2122
        %v2300 = vpop.f32.mrb[0].mxu0
        %v2301 = vadd.f32 0.0, %v2300
        %v2302 = vpop.f32.mrb[0].mxu0
        %2303 = vmatprep.mubr.f32.mxu0 0.0
        %2304 = vmatmul.mubr.f32.gmra.mrb[0].mxu0 %v2123
        %v2305 = vpop.f32.mrb[0].mxu0
        %v2306 = vadd.f32 0.0, %v2305
        %v2307 = vpop.f32.mrb[0].mxu0
        %2308 = vmatprep.mubr.f32.mxu0 0.0
        %2309 = vmatmul.mubr.f32.gmra.mrb[0].mxu0 %v2124
        %v2310 = vpop.f32.mrb[0].mxu0
        %v2311 = vadd.f32 0.0, %v2310
        %v2312 = vpop.f32.mrb[0].mxu0
        %2313 = vmatprep.mubr.f32.mxu0 0.0
        %2314 = vmatmul.mubr.f32.gmra.mrb[0].mxu0 %v2125
        %v2315 = vpop.f32.mrb[0].mxu0
        %v2316 = vadd.f32 0.0, %v2315
        %v2317 = vpop.f32.mrb[0].mxu0
        %2318 = vmatprep.mubr.f32.mxu0 0.0
        %2319 = vmatmul.mubr.f32.gmra.mrb[0].mxu0 %v2126
        %v2320 = vpop.f32.mrb[0].mxu0
        %v2321 = vadd.f32 0.0, %v2320
        %v2322 = vpop.f32.mrb[0].mxu0
        %2323 = vmatprep.mubr.f32.mxu0 0.0
        %2324 = vmatmul.mubr.f32.gmra.mrb[0].mxu0 %v2127
        %v2325 = vpop.f32.mrb[0].mxu0
        %v2326 = vadd.f32 0.0, %v2325
        %v2327 = vpop.f32.mrb[0].mxu0
        %2328 = vmatprep.mubr.f32.mxu0 0.0
        %2329 = vmatmul.mubr.f32.gmra.mrb[0].mxu0 %v2128
        %v2330 = vpop.f32.mrb[0].mxu0
        %v2331 = vadd.f32 0.0, %v2330
        %v2332 = vpop.f32.mrb[0].mxu0
        %2333 = vmatprep.mubr.f32.mxu0 0.0
        %2334 = vmatmul.mubr.f32.gmra.mrb[0].mxu0 %v2129
        %v2335 = vpop.f32.mrb[0].mxu0
        %v2336 = vadd.f32 0.0, %v2335
        %v2337 = vpop.f32.mrb[0].mxu0
        %2338 = vmatprep.mubr.f32.mxu0 0.0
        %2339 = vmatmul.mubr.f32.gmra.mrb[0].mxu0 %v2130
        %v2340 = vpop.f32.mrb[0].mxu0
        %v2341 = vadd.f32 0.0, %v2340
        %v2342 = vpop.f32.mrb[0].mxu0
        %2343 = vmatprep.mubr.f32.mxu0 0.0
        %2344 = vmatmul.mubr.f32.gmra.mrb[0].mxu0 %v2131
        %v2345 = vpop.f32.mrb[0].mxu0
        %v2346 = vadd.f32 0.0, %v2345
        %v2347 = vpop.f32.mrb[0].mxu0
        %2348 = vmatprep.mubr.f32.mxu0 0.0
        %2349 = vmatmul.mubr.f32.gmra.mrb[0].mxu0 %v2132
        %v2350 = vpop.f32.mrb[0].mxu0
        %v2351 = vadd.f32 0.0, %v2350
        %v2352 = vpop.f32.mrb[0].mxu0
        %2353 = vmatprep.mubr.f32.mxu0 0.0
        %2354 = vmatmul.mubr.f32.gmra.mrb[0].mxu0 %v2133
        %v2355 = vpop.f32.mrb[0].mxu0
        %v2356 = vadd.f32 0.0, %v2355
        %v2357 = vpop.f32.mrb[0].mxu0
        %2358 = vmatprep.mubr.f32.mxu0 0.0
        %2359 = vmatmul.mubr.f32.gmra.mrb[0].mxu0 %v2134
        %v2360 = vpop.f32.mrb[0].mxu0
        %v2361 = vadd.f32 0.0, %v2360
        %v2362 = vpop.f32.mrb[0].mxu0
        %2363 = vmatprep.mubr.f32.mxu0 0.0
        %2364 = vmatmul.mubr.f32.gmra.mrb[0].mxu0 %v2135
        %v2365 = vpop.f32.mrb[0].mxu0
        %v2366 = vadd.f32 0.0, %v2365
        %v2367 = vpop.f32.mrb[0].mxu0
        %2368 = vmatprep.mubr.f32.mxu0 0.0
        %2369 = vmatmul.mubr.f32.gmra.mrb[0].mxu0 %v2136
        %v2370 = vpop.f32.mrb[0].mxu0
        %v2371 = vadd.f32 0.0, %v2370
        %v2372 = vpop.f32.mrb[0].mxu0
        %2373 = vmatprep.mubr.f32.mxu0 0.0
        %2374 = vmatmul.mubr.f32.gmra.mrb[0].mxu0 %v2137
        %v2375 = vpop.f32.mrb[0].mxu0
        %v2376 = vadd.f32 0.0, %v2375
        %v2377 = vpop.f32.mrb[0].mxu0
        %2378 = vmatprep.mubr.f32.mxu0 0.0
        %2379 = vmatmul.mubr.f32.gmra.mrb[0].mxu0 %v2138
        %v2380 = vpop.f32.mrb[0].mxu0
        %v2381 = vadd.f32 0.0, %v2380
        %v2382 = vpop.f32.mrb[0].mxu0
        %2383 = vmatprep.mubr.f32.mxu0 0.0
        %2384 = vmatmul.mubr.f32.gmra.mrb[0].mxu0 %v2139
        %v2385 = vpop.f32.mrb[0].mxu0
        %v2386 = vadd.f32 0.0, %v2385
        %v2387 = vpop.f32.mrb[0].mxu0
        %2388 = vmatprep.mubr.f32.mxu0 0.0
        %2389 = vmatmul.mubr.f32.gmra.mrb[0].mxu0 %v2140
        %v2390 = vpop.f32.mrb[0].mxu0
        %v2391 = vadd.f32 0.0, %v2390
        %v2392 = vpop.f32.mrb[0].mxu0
        %2393 = vmatprep.mubr.f32.mxu0 0.0
        %2394 = vmatmul.mubr.f32.gmra.mrb[0].mxu0 %v2141
        %v2395 = vpop.f32.mrb[0].mxu0
        %v2396 = vadd.f32 0.0, %v2395
        %v2397 = vpop.f32.mrb[0].mxu0
        %2398 = vmatprep.mubr.f32.mxu0 0.0
        %2399 = vmatmul.mubr.f32.gmra.mrb[0].mxu0 %v2142
        %v2400 = vpop.f32.mrb[0].mxu0
        %v2401 = vadd.f32 0.0, %v2400
        %v2402 = vpop.f32.mrb[0].mxu0
        %2403 = vdwg.mxu0
        %v2404 = vadd.f32 %v2071, %v2226
        %v2405 = vadd.f32 %v2072, %v2231
        %v2406 = vadd.f32 %v2073, %v2236
        %v2407 = vadd.f32 %v2074, %v2241
        %v2408 = vadd.f32 %v2075, %v2246
        %v2409 = vadd.f32 %v2076, %v2251
        %v2410 = vadd.f32 %v2077, %v2256
        %v2411 = vadd.f32 %v2078, %v2261
        %v2412 = vadd.f32 %v2079, %v2266
        %v2413 = vadd.f32 %v2080, %v2271
        %v2414 = vadd.f32 %v2081, %v2276
        %v2415 = vadd.f32 %v2082, %v2281
        %v2416 = vadd.f32 %v2083, %v2286
        %v2417 = vadd.f32 %v2084, %v2291
        %v2418 = vadd.f32 %v2085, %v2296
        %v2419 = vadd.f32 %v2086, %v2301
        %v2420 = vadd.f32 %v2087, %v2306
        %v2421 = vadd.f32 %v2088, %v2311
        %v2422 = vadd.f32 %v2089, %v2316
        %v2423 = vadd.f32 %v2090, %v2321
        %v2424 = vadd.f32 %v2091, %v2326
        %v2425 = vadd.f32 %v2092, %v2331
        %v2426 = vadd.f32 %v2093, %v2336
        %v2427 = vadd.f32 %v2094, %v2341
        %v2428 = vadd.f32 %v2095, %v2346
        %v2429 = vadd.f32 %v2096, %v2351
        %v2430 = vadd.f32 %v2097, %v2356
        %v2431 = vadd.f32 %v2098, %v2361
        %v2432 = vadd.f32 %v2099, %v2366
        %v2433 = vadd.f32 %v2100, %v2371
        %v2434 = vadd.f32 %v2101, %v2376
        %v2435 = vadd.f32 %v2102, %v2381
        %v2436 = vadd.f32 %v2103, %v2386
        %v2437 = vadd.f32 %v2104, %v2391
        %v2438 = vadd.f32 %v2105, %v2396
        %v2439 = vadd.f32 %v2106, %v2401
        %v2440 = vld [vmem:[%s428 + $0x24] sm:$0xff]
        %v2441 = vld [vmem:[%s428 + $0x2c] sm:$0xff]
        %v2442 = vld [vmem:[%s428 + $0x34] sm:$0xff]
        %v2443 = vld [vmem:[%s428 + $0x3c] sm:$0xff]
        %v2444 = vld [vmem:[%s428 + $0x44] sm:$0xff]
        %v2445 = vld [vmem:[%s428 + $0x4c] sm:$0xff]
        %v2446 = vld [vmem:[%s428 + $0x54] sm:$0xff]
        %v2447 = vld [vmem:[%s428 + $0x5c] sm:$0xff]
        %v2448 = vld [vmem:[%s428 + $0x64] sm:$0xff]
        %v2449 = vld [vmem:[%s428 + $0x6c] sm:$0xff]
        %v2450 = vld [vmem:[%s428 + $0x74] sm:$0xff]
        %v2451 = vld [vmem:[%s428 + $0x7c] sm:$0xff]
        %v2452 = vld [vmem:[%s428 + $0x84] sm:$0xff]
        %v2453 = vld [vmem:[%s428 + $0x8c] sm:$0xff]
        %v2454 = vld [vmem:[%s428 + $0x94] sm:$0xff]
        %v2455 = vld [vmem:[%s428 + $0x9c] sm:$0xff]
        %v2456 = vld [vmem:[%s428 + $0xa4] sm:$0xff]
        %v2457 = vld [vmem:[%s428 + $0xac] sm:$0xff]
        %v2458 = vld [vmem:[%s428 + $0xb4] sm:$0xff]
        %v2459 = vld [vmem:[%s428 + $0xbc] sm:$0xff]
        %v2460 = vld [vmem:[%s428 + $0xc4] sm:$0xff]
        %v2461 = vld [vmem:[%s428 + $0xcc] sm:$0xff]
        %v2462 = vld [vmem:[%s428 + $0xd4] sm:$0xff]
        %v2463 = vld [vmem:[%s428 + $0xdc] sm:$0xff]
        %v2464 = vld [vmem:[%s428 + $0xe4] sm:$0xff]
        %v2465 = vld [vmem:[%s428 + $0xec] sm:$0xff]
        %v2466 = vld [vmem:[%s428 + $0xf4] sm:$0xff]
        %v2467 = vld [vmem:[%s428 + $0xfc] sm:$0xff]
        %v2468 = vld [vmem:[%s428 + $0x104] sm:$0xff]
        %v2469 = vld [vmem:[%s428 + $0x10c] sm:$0xff]
        %v2470 = vld [vmem:[%s428 + $0x114] sm:$0xff]
        %v2471 = vld [vmem:[%s428 + $0x11c] sm:$0xff]
        %v2472 = vld [vmem:[%s428 + $0x124] sm:$0xff]
        %v2473 = vld [vmem:[%s428 + $0x12c] sm:$0xff]
        %v2474 = vld [vmem:[%s428 + $0x134] sm:$0xff]
        %v2475 = vld [vmem:[%s428 + $0x13c] sm:$0xff]
        %v2476 = vld [vmem:[#allocation9 + $0x300] sm:$0xff]
        %v2477 = vld [vmem:[#allocation9 + $0x308] sm:$0xff]
        %v2478 = vld [vmem:[#allocation9 + $0x310] sm:$0xff]
        %v2479 = vld [vmem:[#allocation9 + $0x318] sm:$0xff]
        %v2480 = vld [vmem:[#allocation9 + $0x320] sm:$0xff]
        %v2481 = vld [vmem:[#allocation9 + $0x328] sm:$0xff]
        %v2482 = vld [vmem:[#allocation9 + $0x330] sm:$0xff]
        %v2483 = vld [vmem:[#allocation9 + $0x338] sm:$0xff]
        %v2484 = vld [vmem:[#allocation9 + $0x340] sm:$0xff]
        %v2485 = vld [vmem:[#allocation9 + $0x348] sm:$0xff]
        %v2486 = vld [vmem:[#allocation9 + $0x350] sm:$0xff]
        %v2487 = vld [vmem:[#allocation9 + $0x358] sm:$0xff]
        %v2488 = vld [vmem:[#allocation9 + $0x360] sm:$0xff]
        %v2489 = vld [vmem:[#allocation9 + $0x368] sm:$0xff]
        %v2490 = vld [vmem:[#allocation9 + $0x370] sm:$0xff]
        %v2491 = vld [vmem:[#allocation9 + $0x378] sm:$0xff]
        %2492 = vmatprep.subr.mxu0 0.0
        %2493 = vmatpush1.msra.mxu0 %v2476
        %2494 = vmatprep.subr.mxu0 0.0
        %2495 = vmatpush1.msra.mxu0 %v2477
        %2496 = vmatprep.subr.mxu0 0.0
        %2497 = vmatpush1.msra.mxu0 %v2478
        %2498 = vmatprep.subr.mxu0 0.0
        %2499 = vmatpush1.msra.mxu0 %v2479
        %2500 = vmatprep.subr.mxu0 0.0
        %2501 = vmatpush1.msra.mxu0 %v2480
        %2502 = vmatprep.subr.mxu0 0.0
        %2503 = vmatpush1.msra.mxu0 %v2481
        %2504 = vmatprep.subr.mxu0 0.0
        %2505 = vmatpush1.msra.mxu0 %v2482
        %2506 = vmatprep.subr.mxu0 0.0
        %2507 = vmatpush1.msra.mxu0 %v2483
        %2508 = vmatprep.subr.mxu0 0.0
        %2509 = vmatpush1.msra.mxu0 %v2484
        %2510 = vmatprep.subr.mxu0 0.0
        %2511 = vmatpush1.msra.mxu0 %v2485
        %2512 = vmatprep.subr.mxu0 0.0
        %2513 = vmatpush1.msra.mxu0 %v2486
        %2514 = vmatprep.subr.mxu0 0.0
        %2515 = vmatpush1.msra.mxu0 %v2487
        %2516 = vmatprep.subr.mxu0 0.0
        %2517 = vmatpush1.msra.mxu0 %v2488
        %2518 = vmatprep.subr.mxu0 0.0
        %2519 = vmatpush1.msra.mxu0 %v2489
        %2520 = vmatprep.subr.mxu0 0.0
        %2521 = vmatpush1.msra.mxu0 %v2490
        %2522 = vmatprep.subr.mxu0 0.0
        %2523 = vmatpush1.msra.mxu0 %v2491
        %2524 = vmatprep.subr.mxu0 0.0
        %2525 = vmatpush1.msra.mxu0 0.0
        %2526 = vmatprep.subr.mxu0 0.0
        %2527 = vmatpush1.msra.mxu0 0.0
        %2528 = vmatprep.subr.mxu0 0.0
        %2529 = vmatpush1.msra.mxu0 0.0
        %2530 = vmatprep.subr.mxu0 0.0
        %2531 = vmatpush1.msra.mxu0 0.0
        %2532 = vmatprep.subr.mxu0 0.0
        %2533 = vmatpush1.msra.mxu0 0.0
        %2534 = vmatprep.subr.mxu0 0.0
        %2535 = vmatpush1.msra.mxu0 0.0
        %2536 = vmatprep.subr.mxu0 0.0
        %2537 = vmatpush1.msra.mxu0 0.0
        %2538 = vmatprep.subr.mxu0 0.0
        %2539 = vmatpush1.msra.mxu0 0.0
        %2540 = vmatprep.subr.mxu0 0.0
        %2541 = vmatpush1.msra.mxu0 0.0
        %2542 = vmatprep.subr.mxu0 0.0
        %2543 = vmatpush1.msra.mxu0 0.0
        %2544 = vmatprep.subr.mxu0 0.0
        %2545 = vmatpush1.msra.mxu0 0.0
        %2546 = vmatprep.subr.mxu0 0.0
        %2547 = vmatpush1.msra.mxu0 0.0
        %2548 = vmatprep.subr.mxu0 0.0
        %2549 = vmatpush1.msra.mxu0 0.0
        %2550 = vmatprep.subr.mxu0 0.0
        %2551 = vmatpush1.msra.mxu0 0.0
        %2552 = vmatprep.subr.mxu0 0.0
        %2553 = vmatpush1.msra.mxu0 0.0
        %2554 = vmatprep.subr.mxu0 0.0
        %2555 = vmatpush1.msra.mxu0 0.0
        %2556 = vmatprep.mubr.f32.mxu0 0.0
        %2557 = vmatmul.mubr.f32.gmra.mrb[0].mxu0 %v2440
        %v2558 = vpop.f32.mrb[0].mxu0
        %v2559 = vadd.f32 0.0, %v2558
        %v2560 = vpop.f32.mrb[0].mxu0
        %2561 = vmatprep.mubr.f32.mxu0 0.0
        %2562 = vmatmul.mubr.f32.gmra.mrb[0].mxu0 %v2441
        %v2563 = vpop.f32.mrb[0].mxu0
        %v2564 = vadd.f32 0.0, %v2563
        %v2565 = vpop.f32.mrb[0].mxu0
        %2566 = vmatprep.mubr.f32.mxu0 0.0
        %2567 = vmatmul.mubr.f32.gmra.mrb[0].mxu0 %v2442
        %v2568 = vpop.f32.mrb[0].mxu0
        %v2569 = vadd.f32 0.0, %v2568
        %v2570 = vpop.f32.mrb[0].mxu0
        %2571 = vmatprep.mubr.f32.mxu0 0.0
        %2572 = vmatmul.mubr.f32.gmra.mrb[0].mxu0 %v2443
        %v2573 = vpop.f32.mrb[0].mxu0
        %v2574 = vadd.f32 0.0, %v2573
        %v2575 = vpop.f32.mrb[0].mxu0
        %2576 = vmatprep.mubr.f32.mxu0 0.0
        %2577 = vmatmul.mubr.f32.gmra.mrb[0].mxu0 %v2444
        %v2578 = vpop.f32.mrb[0].mxu0
        %v2579 = vadd.f32 0.0, %v2578
        %v2580 = vpop.f32.mrb[0].mxu0
        %2581 = vmatprep.mubr.f32.mxu0 0.0
        %2582 = vmatmul.mubr.f32.gmra.mrb[0].mxu0 %v2445
        %v2583 = vpop.f32.mrb[0].mxu0
        %v2584 = vadd.f32 0.0, %v2583
        %v2585 = vpop.f32.mrb[0].mxu0
        %2586 = vmatprep.mubr.f32.mxu0 0.0
        %2587 = vmatmul.mubr.f32.gmra.mrb[0].mxu0 %v2446
        %v2588 = vpop.f32.mrb[0].mxu0
        %v2589 = vadd.f32 0.0, %v2588
        %v2590 = vpop.f32.mrb[0].mxu0
        %2591 = vmatprep.mubr.f32.mxu0 0.0
        %2592 = vmatmul.mubr.f32.gmra.mrb[0].mxu0 %v2447
        %v2593 = vpop.f32.mrb[0].mxu0
        %v2594 = vadd.f32 0.0, %v2593
        %v2595 = vpop.f32.mrb[0].mxu0
        %2596 = vmatprep.mubr.f32.mxu0 0.0
        %2597 = vmatmul.mubr.f32.gmra.mrb[0].mxu0 %v2448
        %v2598 = vpop.f32.mrb[0].mxu0
        %v2599 = vadd.f32 0.0, %v2598
        %v2600 = vpop.f32.mrb[0].mxu0
        %2601 = vmatprep.mubr.f32.mxu0 0.0
        %2602 = vmatmul.mubr.f32.gmra.mrb[0].mxu0 %v2449
        %v2603 = vpop.f32.mrb[0].mxu0
        %v2604 = vadd.f32 0.0, %v2603
        %v2605 = vpop.f32.mrb[0].mxu0
        %2606 = vmatprep.mubr.f32.mxu0 0.0
        %2607 = vmatmul.mubr.f32.gmra.mrb[0].mxu0 %v2450
        %v2608 = vpop.f32.mrb[0].mxu0
        %v2609 = vadd.f32 0.0, %v2608
        %v2610 = vpop.f32.mrb[0].mxu0
        %2611 = vmatprep.mubr.f32.mxu0 0.0
        %2612 = vmatmul.mubr.f32.gmra.mrb[0].mxu0 %v2451
        %v2613 = vpop.f32.mrb[0].mxu0
        %v2614 = vadd.f32 0.0, %v2613
        %v2615 = vpop.f32.mrb[0].mxu0
        %2616 = vmatprep.mubr.f32.mxu0 0.0
        %2617 = vmatmul.mubr.f32.gmra.mrb[0].mxu0 %v2452
        %v2618 = vpop.f32.mrb[0].mxu0
        %v2619 = vadd.f32 0.0, %v2618
        %v2620 = vpop.f32.mrb[0].mxu0
        %2621 = vmatprep.mubr.f32.mxu0 0.0
        %2622 = vmatmul.mubr.f32.gmra.mrb[0].mxu0 %v2453
        %v2623 = vpop.f32.mrb[0].mxu0
        %v2624 = vadd.f32 0.0, %v2623
        %v2625 = vpop.f32.mrb[0].mxu0
        %2626 = vmatprep.mubr.f32.mxu0 0.0
        %2627 = vmatmul.mubr.f32.gmra.mrb[0].mxu0 %v2454
        %v2628 = vpop.f32.mrb[0].mxu0
        %v2629 = vadd.f32 0.0, %v2628
        %v2630 = vpop.f32.mrb[0].mxu0
        %2631 = vmatprep.mubr.f32.mxu0 0.0
        %2632 = vmatmul.mubr.f32.gmra.mrb[0].mxu0 %v2455
        %v2633 = vpop.f32.mrb[0].mxu0
        %v2634 = vadd.f32 0.0, %v2633
        %v2635 = vpop.f32.mrb[0].mxu0
        %2636 = vmatprep.mubr.f32.mxu0 0.0
        %2637 = vmatmul.mubr.f32.gmra.mrb[0].mxu0 %v2456
        %v2638 = vpop.f32.mrb[0].mxu0
        %v2639 = vadd.f32 0.0, %v2638
        %v2640 = vpop.f32.mrb[0].mxu0
        %2641 = vmatprep.mubr.f32.mxu0 0.0
        %2642 = vmatmul.mubr.f32.gmra.mrb[0].mxu0 %v2457
        %v2643 = vpop.f32.mrb[0].mxu0
        %v2644 = vadd.f32 0.0, %v2643
        %v2645 = vpop.f32.mrb[0].mxu0
        %2646 = vmatprep.mubr.f32.mxu0 0.0
        %2647 = vmatmul.mubr.f32.gmra.mrb[0].mxu0 %v2458
        %v2648 = vpop.f32.mrb[0].mxu0
        %v2649 = vadd.f32 0.0, %v2648
        %v2650 = vpop.f32.mrb[0].mxu0
        %2651 = vmatprep.mubr.f32.mxu0 0.0
        %2652 = vmatmul.mubr.f32.gmra.mrb[0].mxu0 %v2459
        %v2653 = vpop.f32.mrb[0].mxu0
        %v2654 = vadd.f32 0.0, %v2653
        %v2655 = vpop.f32.mrb[0].mxu0
        %2656 = vmatprep.mubr.f32.mxu0 0.0
        %2657 = vmatmul.mubr.f32.gmra.mrb[0].mxu0 %v2460
        %v2658 = vpop.f32.mrb[0].mxu0
        %v2659 = vadd.f32 0.0, %v2658
        %v2660 = vpop.f32.mrb[0].mxu0
        %2661 = vmatprep.mubr.f32.mxu0 0.0
        %2662 = vmatmul.mubr.f32.gmra.mrb[0].mxu0 %v2461
        %v2663 = vpop.f32.mrb[0].mxu0
        %v2664 = vadd.f32 0.0, %v2663
        %v2665 = vpop.f32.mrb[0].mxu0
        %2666 = vmatprep.mubr.f32.mxu0 0.0
        %2667 = vmatmul.mubr.f32.gmra.mrb[0].mxu0 %v2462
        %v2668 = vpop.f32.mrb[0].mxu0
        %v2669 = vadd.f32 0.0, %v2668
        %v2670 = vpop.f32.mrb[0].mxu0
        %2671 = vmatprep.mubr.f32.mxu0 0.0
        %2672 = vmatmul.mubr.f32.gmra.mrb[0].mxu0 %v2463
        %v2673 = vpop.f32.mrb[0].mxu0
        %v2674 = vadd.f32 0.0, %v2673
        %v2675 = vpop.f32.mrb[0].mxu0
        %2676 = vmatprep.mubr.f32.mxu0 0.0
        %2677 = vmatmul.mubr.f32.gmra.mrb[0].mxu0 %v2464
        %v2678 = vpop.f32.mrb[0].mxu0
        %v2679 = vadd.f32 0.0, %v2678
        %v2680 = vpop.f32.mrb[0].mxu0
        %2681 = vmatprep.mubr.f32.mxu0 0.0
        %2682 = vmatmul.mubr.f32.gmra.mrb[0].mxu0 %v2465
        %v2683 = vpop.f32.mrb[0].mxu0
        %v2684 = vadd.f32 0.0, %v2683
        %v2685 = vpop.f32.mrb[0].mxu0
        %2686 = vmatprep.mubr.f32.mxu0 0.0
        %2687 = vmatmul.mubr.f32.gmra.mrb[0].mxu0 %v2466
        %v2688 = vpop.f32.mrb[0].mxu0
        %v2689 = vadd.f32 0.0, %v2688
        %v2690 = vpop.f32.mrb[0].mxu0
        %2691 = vmatprep.mubr.f32.mxu0 0.0
        %2692 = vmatmul.mubr.f32.gmra.mrb[0].mxu0 %v2467
        %v2693 = vpop.f32.mrb[0].mxu0
        %v2694 = vadd.f32 0.0, %v2693
        %v2695 = vpop.f32.mrb[0].mxu0
        %2696 = vmatprep.mubr.f32.mxu0 0.0
        %2697 = vmatmul.mubr.f32.gmra.mrb[0].mxu0 %v2468
        %v2698 = vpop.f32.mrb[0].mxu0
        %v2699 = vadd.f32 0.0, %v2698
        %v2700 = vpop.f32.mrb[0].mxu0
        %2701 = vmatprep.mubr.f32.mxu0 0.0
        %2702 = vmatmul.mubr.f32.gmra.mrb[0].mxu0 %v2469
        %v2703 = vpop.f32.mrb[0].mxu0
        %v2704 = vadd.f32 0.0, %v2703
        %v2705 = vpop.f32.mrb[0].mxu0
        %2706 = vmatprep.mubr.f32.mxu0 0.0
        %2707 = vmatmul.mubr.f32.gmra.mrb[0].mxu0 %v2470
        %v2708 = vpop.f32.mrb[0].mxu0
        %v2709 = vadd.f32 0.0, %v2708
        %v2710 = vpop.f32.mrb[0].mxu0
        %2711 = vmatprep.mubr.f32.mxu0 0.0
        %2712 = vmatmul.mubr.f32.gmra.mrb[0].mxu0 %v2471
        %v2713 = vpop.f32.mrb[0].mxu0
        %v2714 = vadd.f32 0.0, %v2713
        %v2715 = vpop.f32.mrb[0].mxu0
        %2716 = vmatprep.mubr.f32.mxu0 0.0
        %2717 = vmatmul.mubr.f32.gmra.mrb[0].mxu0 %v2472
        %v2718 = vpop.f32.mrb[0].mxu0
        %v2719 = vadd.f32 0.0, %v2718
        %v2720 = vpop.f32.mrb[0].mxu0
        %2721 = vmatprep.mubr.f32.mxu0 0.0
        %2722 = vmatmul.mubr.f32.gmra.mrb[0].mxu0 %v2473
        %v2723 = vpop.f32.mrb[0].mxu0
        %v2724 = vadd.f32 0.0, %v2723
        %v2725 = vpop.f32.mrb[0].mxu0
        %2726 = vmatprep.mubr.f32.mxu0 0.0
        %2727 = vmatmul.mubr.f32.gmra.mrb[0].mxu0 %v2474
        %v2728 = vpop.f32.mrb[0].mxu0
        %v2729 = vadd.f32 0.0, %v2728
        %v2730 = vpop.f32.mrb[0].mxu0
        %2731 = vmatprep.mubr.f32.mxu0 0.0
        %2732 = vmatmul.mubr.f32.gmra.mrb[0].mxu0 %v2475
        %v2733 = vpop.f32.mrb[0].mxu0
        %v2734 = vadd.f32 0.0, %v2733
        %v2735 = vpop.f32.mrb[0].mxu0
        %2736 = vdwg.mxu0
        %v2737 = vadd.f32 %v2404, %v2559
        %v2738 = vadd.f32 %v2405, %v2564
        %v2739 = vadd.f32 %v2406, %v2569
        %v2740 = vadd.f32 %v2407, %v2574
        %v2741 = vadd.f32 %v2408, %v2579
        %v2742 = vadd.f32 %v2409, %v2584
        %v2743 = vadd.f32 %v2410, %v2589
        %v2744 = vadd.f32 %v2411, %v2594
        %v2745 = vadd.f32 %v2412, %v2599
        %v2746 = vadd.f32 %v2413, %v2604
        %v2747 = vadd.f32 %v2414, %v2609
        %v2748 = vadd.f32 %v2415, %v2614
        %v2749 = vadd.f32 %v2416, %v2619
        %v2750 = vadd.f32 %v2417, %v2624
        %v2751 = vadd.f32 %v2418, %v2629
        %v2752 = vadd.f32 %v2419, %v2634
        %v2753 = vadd.f32 %v2420, %v2639
        %v2754 = vadd.f32 %v2421, %v2644
        %v2755 = vadd.f32 %v2422, %v2649
        %v2756 = vadd.f32 %v2423, %v2654
        %v2757 = vadd.f32 %v2424, %v2659
        %v2758 = vadd.f32 %v2425, %v2664
        %v2759 = vadd.f32 %v2426, %v2669
        %v2760 = vadd.f32 %v2427, %v2674
        %v2761 = vadd.f32 %v2428, %v2679
        %v2762 = vadd.f32 %v2429, %v2684
        %v2763 = vadd.f32 %v2430, %v2689
        %v2764 = vadd.f32 %v2431, %v2694
        %v2765 = vadd.f32 %v2432, %v2699
        %v2766 = vadd.f32 %v2433, %v2704
        %v2767 = vadd.f32 %v2434, %v2709
        %v2768 = vadd.f32 %v2435, %v2714
        %v2769 = vadd.f32 %v2436, %v2719
        %v2770 = vadd.f32 %v2437, %v2724
        %v2771 = vadd.f32 %v2438, %v2729
        %v2772 = vadd.f32 %v2439, %v2734
        %v2773 = vld [vmem:[%s428 + $0x25] sm:$0xff]
        %v2774 = vld [vmem:[%s428 + $0x2d] sm:$0xff]
        %v2775 = vld [vmem:[%s428 + $0x35] sm:$0xff]
        %v2776 = vld [vmem:[%s428 + $0x3d] sm:$0xff]
        %v2777 = vld [vmem:[%s428 + $0x45] sm:$0xff]
        %v2778 = vld [vmem:[%s428 + $0x4d] sm:$0xff]
        %v2779 = vld [vmem:[%s428 + $0x55] sm:$0xff]
        %v2780 = vld [vmem:[%s428 + $0x5d] sm:$0xff]
        %v2781 = vld [vmem:[%s428 + $0x65] sm:$0xff]
        %v2782 = vld [vmem:[%s428 + $0x6d] sm:$0xff]
        %v2783 = vld [vmem:[%s428 + $0x75] sm:$0xff]
        %v2784 = vld [vmem:[%s428 + $0x7d] sm:$0xff]
        %v2785 = vld [vmem:[%s428 + $0x85] sm:$0xff]
        %v2786 = vld [vmem:[%s428 + $0x8d] sm:$0xff]
        %v2787 = vld [vmem:[%s428 + $0x95] sm:$0xff]
        %v2788 = vld [vmem:[%s428 + $0x9d] sm:$0xff]
        %v2789 = vld [vmem:[%s428 + $0xa5] sm:$0xff]
        %v2790 = vld [vmem:[%s428 + $0xad] sm:$0xff]
        %v2791 = vld [vmem:[%s428 + $0xb5] sm:$0xff]
        %v2792 = vld [vmem:[%s428 + $0xbd] sm:$0xff]
        %v2793 = vld [vmem:[%s428 + $0xc5] sm:$0xff]
        %v2794 = vld [vmem:[%s428 + $0xcd] sm:$0xff]
        %v2795 = vld [vmem:[%s428 + $0xd5] sm:$0xff]
        %v2796 = vld [vmem:[%s428 + $0xdd] sm:$0xff]
        %v2797 = vld [vmem:[%s428 + $0xe5] sm:$0xff]
        %v2798 = vld [vmem:[%s428 + $0xed] sm:$0xff]
        %v2799 = vld [vmem:[%s428 + $0xf5] sm:$0xff]
        %v2800 = vld [vmem:[%s428 + $0xfd] sm:$0xff]
        %v2801 = vld [vmem:[%s428 + $0x105] sm:$0xff]
        %v2802 = vld [vmem:[%s428 + $0x10d] sm:$0xff]
        %v2803 = vld [vmem:[%s428 + $0x115] sm:$0xff]
        %v2804 = vld [vmem:[%s428 + $0x11d] sm:$0xff]
        %v2805 = vld [vmem:[%s428 + $0x125] sm:$0xff]
        %v2806 = vld [vmem:[%s428 + $0x12d] sm:$0xff]
        %v2807 = vld [vmem:[%s428 + $0x135] sm:$0xff]
        %v2808 = vld [vmem:[%s428 + $0x13d] sm:$0xff]
        %v2809 = vld [vmem:[#allocation9 + $0x380] sm:$0xff]
        %v2810 = vld [vmem:[#allocation9 + $0x388] sm:$0xff]
        %v2811 = vld [vmem:[#allocation9 + $0x390] sm:$0xff]
        %v2812 = vld [vmem:[#allocation9 + $0x398] sm:$0xff]
        %v2813 = vld [vmem:[#allocation9 + $0x3a0] sm:$0xff]
        %v2814 = vld [vmem:[#allocation9 + $0x3a8] sm:$0xff]
        %v2815 = vld [vmem:[#allocation9 + $0x3b0] sm:$0xff]
        %v2816 = vld [vmem:[#allocation9 + $0x3b8] sm:$0xff]
        %v2817 = vld [vmem:[#allocation9 + $0x3c0] sm:$0xff]
        %v2818 = vld [vmem:[#allocation9 + $0x3c8] sm:$0xff]
        %v2819 = vld [vmem:[#allocation9 + $0x3d0] sm:$0xff]
        %v2820 = vld [vmem:[#allocation9 + $0x3d8] sm:$0xff]
        %v2821 = vld [vmem:[#allocation9 + $0x3e0] sm:$0xff]
        %v2822 = vld [vmem:[#allocation9 + $0x3e8] sm:$0xff]
        %v2823 = vld [vmem:[#allocation9 + $0x3f0] sm:$0xff]
        %v2824 = vld [vmem:[#allocation9 + $0x3f8] sm:$0xff]
        %2825 = vmatprep.subr.mxu0 0.0
        %2826 = vmatpush1.msra.mxu0 %v2809
        %2827 = vmatprep.subr.mxu0 0.0
        %2828 = vmatpush1.msra.mxu0 %v2810
        %2829 = vmatprep.subr.mxu0 0.0
        %2830 = vmatpush1.msra.mxu0 %v2811
        %2831 = vmatprep.subr.mxu0 0.0
        %2832 = vmatpush1.msra.mxu0 %v2812
        %2833 = vmatprep.subr.mxu0 0.0
        %2834 = vmatpush1.msra.mxu0 %v2813
        %2835 = vmatprep.subr.mxu0 0.0
        %2836 = vmatpush1.msra.mxu0 %v2814
        %2837 = vmatprep.subr.mxu0 0.0
        %2838 = vmatpush1.msra.mxu0 %v2815
        %2839 = vmatprep.subr.mxu0 0.0
        %2840 = vmatpush1.msra.mxu0 %v2816
        %2841 = vmatprep.subr.mxu0 0.0
        %2842 = vmatpush1.msra.mxu0 %v2817
        %2843 = vmatprep.subr.mxu0 0.0
        %2844 = vmatpush1.msra.mxu0 %v2818
        %2845 = vmatprep.subr.mxu0 0.0
        %2846 = vmatpush1.msra.mxu0 %v2819
        %2847 = vmatprep.subr.mxu0 0.0
        %2848 = vmatpush1.msra.mxu0 %v2820
        %2849 = vmatprep.subr.mxu0 0.0
        %2850 = vmatpush1.msra.mxu0 %v2821
        %2851 = vmatprep.subr.mxu0 0.0
        %2852 = vmatpush1.msra.mxu0 %v2822
        %2853 = vmatprep.subr.mxu0 0.0
        %2854 = vmatpush1.msra.mxu0 %v2823
        %2855 = vmatprep.subr.mxu0 0.0
        %2856 = vmatpush1.msra.mxu0 %v2824
        %2857 = vmatprep.subr.mxu0 0.0
        %2858 = vmatpush1.msra.mxu0 0.0
        %2859 = vmatprep.subr.mxu0 0.0
        %2860 = vmatpush1.msra.mxu0 0.0
        %2861 = vmatprep.subr.mxu0 0.0
        %2862 = vmatpush1.msra.mxu0 0.0
        %2863 = vmatprep.subr.mxu0 0.0
        %2864 = vmatpush1.msra.mxu0 0.0
        %2865 = vmatprep.subr.mxu0 0.0
        %2866 = vmatpush1.msra.mxu0 0.0
        %2867 = vmatprep.subr.mxu0 0.0
        %2868 = vmatpush1.msra.mxu0 0.0
        %2869 = vmatprep.subr.mxu0 0.0
        %2870 = vmatpush1.msra.mxu0 0.0
        %2871 = vmatprep.subr.mxu0 0.0
        %2872 = vmatpush1.msra.mxu0 0.0
        %2873 = vmatprep.subr.mxu0 0.0
        %2874 = vmatpush1.msra.mxu0 0.0
        %2875 = vmatprep.subr.mxu0 0.0
        %2876 = vmatpush1.msra.mxu0 0.0
        %2877 = vmatprep.subr.mxu0 0.0
        %2878 = vmatpush1.msra.mxu0 0.0
        %2879 = vmatprep.subr.mxu0 0.0
        %2880 = vmatpush1.msra.mxu0 0.0
        %2881 = vmatprep.subr.mxu0 0.0
        %2882 = vmatpush1.msra.mxu0 0.0
        %2883 = vmatprep.subr.mxu0 0.0
        %2884 = vmatpush1.msra.mxu0 0.0
        %2885 = vmatprep.subr.mxu0 0.0
        %2886 = vmatpush1.msra.mxu0 0.0
        %2887 = vmatprep.subr.mxu0 0.0
        %2888 = vmatpush1.msra.mxu0 0.0
        %2889 = vmatprep.mubr.f32.mxu0 0.0
        %2890 = vmatmul.mubr.f32.gmra.mrb[0].mxu0 %v2773
        %v2891 = vpop.f32.mrb[0].mxu0
        %v2892 = vadd.f32 0.0, %v2891
        %v2893 = vpop.f32.mrb[0].mxu0
        %2894 = vmatprep.mubr.f32.mxu0 0.0
        %2895 = vmatmul.mubr.f32.gmra.mrb[0].mxu0 %v2774
        %v2896 = vpop.f32.mrb[0].mxu0
        %v2897 = vadd.f32 0.0, %v2896
        %v2898 = vpop.f32.mrb[0].mxu0
        %2899 = vmatprep.mubr.f32.mxu0 0.0
        %2900 = vmatmul.mubr.f32.gmra.mrb[0].mxu0 %v2775
        %v2901 = vpop.f32.mrb[0].mxu0
        %v2902 = vadd.f32 0.0, %v2901
        %v2903 = vpop.f32.mrb[0].mxu0
        %2904 = vmatprep.mubr.f32.mxu0 0.0
        %2905 = vmatmul.mubr.f32.gmra.mrb[0].mxu0 %v2776
        %v2906 = vpop.f32.mrb[0].mxu0
        %v2907 = vadd.f32 0.0, %v2906
        %v2908 = vpop.f32.mrb[0].mxu0
        %2909 = vmatprep.mubr.f32.mxu0 0.0
        %2910 = vmatmul.mubr.f32.gmra.mrb[0].mxu0 %v2777
        %v2911 = vpop.f32.mrb[0].mxu0
        %v2912 = vadd.f32 0.0, %v2911
        %v2913 = vpop.f32.mrb[0].mxu0
        %2914 = vmatprep.mubr.f32.mxu0 0.0
        %2915 = vmatmul.mubr.f32.gmra.mrb[0].mxu0 %v2778
        %v2916 = vpop.f32.mrb[0].mxu0
        %v2917 = vadd.f32 0.0, %v2916
        %v2918 = vpop.f32.mrb[0].mxu0
        %2919 = vmatprep.mubr.f32.mxu0 0.0
        %2920 = vmatmul.mubr.f32.gmra.mrb[0].mxu0 %v2779
        %v2921 = vpop.f32.mrb[0].mxu0
        %v2922 = vadd.f32 0.0, %v2921
        %v2923 = vpop.f32.mrb[0].mxu0
        %2924 = vmatprep.mubr.f32.mxu0 0.0
        %2925 = vmatmul.mubr.f32.gmra.mrb[0].mxu0 %v2780
        %v2926 = vpop.f32.mrb[0].mxu0
        %v2927 = vadd.f32 0.0, %v2926
        %v2928 = vpop.f32.mrb[0].mxu0
        %2929 = vmatprep.mubr.f32.mxu0 0.0
        %2930 = vmatmul.mubr.f32.gmra.mrb[0].mxu0 %v2781
        %v2931 = vpop.f32.mrb[0].mxu0
        %v2932 = vadd.f32 0.0, %v2931
        %v2933 = vpop.f32.mrb[0].mxu0
        %2934 = vmatprep.mubr.f32.mxu0 0.0
        %2935 = vmatmul.mubr.f32.gmra.mrb[0].mxu0 %v2782
        %v2936 = vpop.f32.mrb[0].mxu0
        %v2937 = vadd.f32 0.0, %v2936
        %v2938 = vpop.f32.mrb[0].mxu0
        %2939 = vmatprep.mubr.f32.mxu0 0.0
        %2940 = vmatmul.mubr.f32.gmra.mrb[0].mxu0 %v2783
        %v2941 = vpop.f32.mrb[0].mxu0
        %v2942 = vadd.f32 0.0, %v2941
        %v2943 = vpop.f32.mrb[0].mxu0
        %2944 = vmatprep.mubr.f32.mxu0 0.0
        %2945 = vmatmul.mubr.f32.gmra.mrb[0].mxu0 %v2784
        %v2946 = vpop.f32.mrb[0].mxu0
        %v2947 = vadd.f32 0.0, %v2946
        %v2948 = vpop.f32.mrb[0].mxu0
        %2949 = vmatprep.mubr.f32.mxu0 0.0
        %2950 = vmatmul.mubr.f32.gmra.mrb[0].mxu0 %v2785
        %v2951 = vpop.f32.mrb[0].mxu0
        %v2952 = vadd.f32 0.0, %v2951
        %v2953 = vpop.f32.mrb[0].mxu0
        %2954 = vmatprep.mubr.f32.mxu0 0.0
        %2955 = vmatmul.mubr.f32.gmra.mrb[0].mxu0 %v2786
        %v2956 = vpop.f32.mrb[0].mxu0
        %v2957 = vadd.f32 0.0, %v2956
        %v2958 = vpop.f32.mrb[0].mxu0
        %2959 = vmatprep.mubr.f32.mxu0 0.0
        %2960 = vmatmul.mubr.f32.gmra.mrb[0].mxu0 %v2787
        %v2961 = vpop.f32.mrb[0].mxu0
        %v2962 = vadd.f32 0.0, %v2961
        %v2963 = vpop.f32.mrb[0].mxu0
        %2964 = vmatprep.mubr.f32.mxu0 0.0
        %2965 = vmatmul.mubr.f32.gmra.mrb[0].mxu0 %v2788
        %v2966 = vpop.f32.mrb[0].mxu0
        %v2967 = vadd.f32 0.0, %v2966
        %v2968 = vpop.f32.mrb[0].mxu0
        %2969 = vmatprep.mubr.f32.mxu0 0.0
        %2970 = vmatmul.mubr.f32.gmra.mrb[0].mxu0 %v2789
        %v2971 = vpop.f32.mrb[0].mxu0
        %v2972 = vadd.f32 0.0, %v2971
        %v2973 = vpop.f32.mrb[0].mxu0
        %2974 = vmatprep.mubr.f32.mxu0 0.0
        %2975 = vmatmul.mubr.f32.gmra.mrb[0].mxu0 %v2790
        %v2976 = vpop.f32.mrb[0].mxu0
        %v2977 = vadd.f32 0.0, %v2976
        %v2978 = vpop.f32.mrb[0].mxu0
        %2979 = vmatprep.mubr.f32.mxu0 0.0
        %2980 = vmatmul.mubr.f32.gmra.mrb[0].mxu0 %v2791
        %v2981 = vpop.f32.mrb[0].mxu0
        %v2982 = vadd.f32 0.0, %v2981
        %v2983 = vpop.f32.mrb[0].mxu0
        %2984 = vmatprep.mubr.f32.mxu0 0.0
        %2985 = vmatmul.mubr.f32.gmra.mrb[0].mxu0 %v2792
        %v2986 = vpop.f32.mrb[0].mxu0
        %v2987 = vadd.f32 0.0, %v2986
        %v2988 = vpop.f32.mrb[0].mxu0
        %2989 = vmatprep.mubr.f32.mxu0 0.0
        %2990 = vmatmul.mubr.f32.gmra.mrb[0].mxu0 %v2793
        %v2991 = vpop.f32.mrb[0].mxu0
        %v2992 = vadd.f32 0.0, %v2991
        %v2993 = vpop.f32.mrb[0].mxu0
        %2994 = vmatprep.mubr.f32.mxu0 0.0
        %2995 = vmatmul.mubr.f32.gmra.mrb[0].mxu0 %v2794
        %v2996 = vpop.f32.mrb[0].mxu0
        %v2997 = vadd.f32 0.0, %v2996
        %v2998 = vpop.f32.mrb[0].mxu0
        %2999 = vmatprep.mubr.f32.mxu0 0.0
        %3000 = vmatmul.mubr.f32.gmra.mrb[0].mxu0 %v2795
        %v3001 = vpop.f32.mrb[0].mxu0
        %v3002 = vadd.f32 0.0, %v3001
        %v3003 = vpop.f32.mrb[0].mxu0
        %3004 = vmatprep.mubr.f32.mxu0 0.0
        %3005 = vmatmul.mubr.f32.gmra.mrb[0].mxu0 %v2796
        %v3006 = vpop.f32.mrb[0].mxu0
        %v3007 = vadd.f32 0.0, %v3006
        %v3008 = vpop.f32.mrb[0].mxu0
        %3009 = vmatprep.mubr.f32.mxu0 0.0
        %3010 = vmatmul.mubr.f32.gmra.mrb[0].mxu0 %v2797
        %v3011 = vpop.f32.mrb[0].mxu0
        %v3012 = vadd.f32 0.0, %v3011
        %v3013 = vpop.f32.mrb[0].mxu0
        %3014 = vmatprep.mubr.f32.mxu0 0.0
        %3015 = vmatmul.mubr.f32.gmra.mrb[0].mxu0 %v2798
        %v3016 = vpop.f32.mrb[0].mxu0
        %v3017 = vadd.f32 0.0, %v3016
        %v3018 = vpop.f32.mrb[0].mxu0
        %3019 = vmatprep.mubr.f32.mxu0 0.0
        %3020 = vmatmul.mubr.f32.gmra.mrb[0].mxu0 %v2799
        %v3021 = vpop.f32.mrb[0].mxu0
        %v3022 = vadd.f32 0.0, %v3021
        %v3023 = vpop.f32.mrb[0].mxu0
        %3024 = vmatprep.mubr.f32.mxu0 0.0
        %3025 = vmatmul.mubr.f32.gmra.mrb[0].mxu0 %v2800
        %v3026 = vpop.f32.mrb[0].mxu0
        %v3027 = vadd.f32 0.0, %v3026
        %v3028 = vpop.f32.mrb[0].mxu0
        %3029 = vmatprep.mubr.f32.mxu0 0.0
        %3030 = vmatmul.mubr.f32.gmra.mrb[0].mxu0 %v2801
        %v3031 = vpop.f32.mrb[0].mxu0
        %v3032 = vadd.f32 0.0, %v3031
        %v3033 = vpop.f32.mrb[0].mxu0
        %3034 = vmatprep.mubr.f32.mxu0 0.0
        %3035 = vmatmul.mubr.f32.gmra.mrb[0].mxu0 %v2802
        %v3036 = vpop.f32.mrb[0].mxu0
        %v3037 = vadd.f32 0.0, %v3036
        %v3038 = vpop.f32.mrb[0].mxu0
        %3039 = vmatprep.mubr.f32.mxu0 0.0
        %3040 = vmatmul.mubr.f32.gmra.mrb[0].mxu0 %v2803
        %v3041 = vpop.f32.mrb[0].mxu0
        %v3042 = vadd.f32 0.0, %v3041
        %v3043 = vpop.f32.mrb[0].mxu0
        %3044 = vmatprep.mubr.f32.mxu0 0.0
        %3045 = vmatmul.mubr.f32.gmra.mrb[0].mxu0 %v2804
        %v3046 = vpop.f32.mrb[0].mxu0
        %v3047 = vadd.f32 0.0, %v3046
        %v3048 = vpop.f32.mrb[0].mxu0
        %3049 = vmatprep.mubr.f32.mxu0 0.0
        %3050 = vmatmul.mubr.f32.gmra.mrb[0].mxu0 %v2805
        %v3051 = vpop.f32.mrb[0].mxu0
        %v3052 = vadd.f32 0.0, %v3051
        %v3053 = vpop.f32.mrb[0].mxu0
        %3054 = vmatprep.mubr.f32.mxu0 0.0
        %3055 = vmatmul.mubr.f32.gmra.mrb[0].mxu0 %v2806
        %v3056 = vpop.f32.mrb[0].mxu0
        %v3057 = vadd.f32 0.0, %v3056
        %v3058 = vpop.f32.mrb[0].mxu0
        %3059 = vmatprep.mubr.f32.mxu0 0.0
        %3060 = vmatmul.mubr.f32.gmra.mrb[0].mxu0 %v2807
        %v3061 = vpop.f32.mrb[0].mxu0
        %v3062 = vadd.f32 0.0, %v3061
        %v3063 = vpop.f32.mrb[0].mxu0
        %3064 = vmatprep.mubr.f32.mxu0 0.0
        %3065 = vmatmul.mubr.f32.gmra.mrb[0].mxu0 %v2808
        %v3066 = vpop.f32.mrb[0].mxu0
        %v3067 = vadd.f32 0.0, %v3066
        %v3068 = vpop.f32.mrb[0].mxu0
        %3069 = vdwg.mxu0
        %v3070 = vadd.f32 %v2737, %v2892
        %v3071 = vadd.f32 %v2738, %v2897
        %v3072 = vadd.f32 %v2739, %v2902
        %v3073 = vadd.f32 %v2740, %v2907
        %v3074 = vadd.f32 %v2741, %v2912
        %v3075 = vadd.f32 %v2742, %v2917
        %v3076 = vadd.f32 %v2743, %v2922
        %v3077 = vadd.f32 %v2744, %v2927
        %v3078 = vadd.f32 %v2745, %v2932
        %v3079 = vadd.f32 %v2746, %v2937
        %v3080 = vadd.f32 %v2747, %v2942
        %v3081 = vadd.f32 %v2748, %v2947
        %v3082 = vadd.f32 %v2749, %v2952
        %v3083 = vadd.f32 %v2750, %v2957
        %v3084 = vadd.f32 %v2751, %v2962
        %v3085 = vadd.f32 %v2752, %v2967
        %v3086 = vadd.f32 %v2753, %v2972
        %v3087 = vadd.f32 %v2754, %v2977
        %v3088 = vadd.f32 %v2755, %v2982
        %v3089 = vadd.f32 %v2756, %v2987
        %v3090 = vadd.f32 %v2757, %v2992
        %v3091 = vadd.f32 %v2758, %v2997
        %v3092 = vadd.f32 %v2759, %v3002
        %v3093 = vadd.f32 %v2760, %v3007
        %v3094 = vadd.f32 %v2761, %v3012
        %v3095 = vadd.f32 %v2762, %v3017
        %v3096 = vadd.f32 %v2763, %v3022
        %v3097 = vadd.f32 %v2764, %v3027
        %v3098 = vadd.f32 %v2765, %v3032
        %v3099 = vadd.f32 %v2766, %v3037
        %v3100 = vadd.f32 %v2767, %v3042
        %v3101 = vadd.f32 %v2768, %v3047
        %v3102 = vadd.f32 %v2769, %v3052
        %v3103 = vadd.f32 %v2770, %v3057
        %v3104 = vadd.f32 %v2771, %v3062
        %v3105 = vadd.f32 %v2772, %v3067
        %v3106 = vld [vmem:[%s428 + $0x26] sm:$0xff]
        %v3107 = vld [vmem:[%s428 + $0x2e] sm:$0xff]
        %v3108 = vld [vmem:[%s428 + $0x36] sm:$0xff]
        %v3109 = vld [vmem:[%s428 + $0x3e] sm:$0xff]
        %v3110 = vld [vmem:[%s428 + $0x46] sm:$0xff]
        %v3111 = vld [vmem:[%s428 + $0x4e] sm:$0xff]
        %v3112 = vld [vmem:[%s428 + $0x56] sm:$0xff]
        %v3113 = vld [vmem:[%s428 + $0x5e] sm:$0xff]
        %v3114 = vld [vmem:[%s428 + $0x66] sm:$0xff]
        %v3115 = vld [vmem:[%s428 + $0x6e] sm:$0xff]
        %v3116 = vld [vmem:[%s428 + $0x76] sm:$0xff]
        %v3117 = vld [vmem:[%s428 + $0x7e] sm:$0xff]
        %v3118 = vld [vmem:[%s428 + $0x86] sm:$0xff]
        %v3119 = vld [vmem:[%s428 + $0x8e] sm:$0xff]
        %v3120 = vld [vmem:[%s428 + $0x96] sm:$0xff]
        %v3121 = vld [vmem:[%s428 + $0x9e] sm:$0xff]
        %v3122 = vld [vmem:[%s428 + $0xa6] sm:$0xff]
        %v3123 = vld [vmem:[%s428 + $0xae] sm:$0xff]
        %v3124 = vld [vmem:[%s428 + $0xb6] sm:$0xff]
        %v3125 = vld [vmem:[%s428 + $0xbe] sm:$0xff]
        %v3126 = vld [vmem:[%s428 + $0xc6] sm:$0xff]
        %v3127 = vld [vmem:[%s428 + $0xce] sm:$0xff]
        %v3128 = vld [vmem:[%s428 + $0xd6] sm:$0xff]
        %v3129 = vld [vmem:[%s428 + $0xde] sm:$0xff]
        %v3130 = vld [vmem:[%s428 + $0xe6] sm:$0xff]
        %v3131 = vld [vmem:[%s428 + $0xee] sm:$0xff]
        %v3132 = vld [vmem:[%s428 + $0xf6] sm:$0xff]
        %v3133 = vld [vmem:[%s428 + $0xfe] sm:$0xff]
        %v3134 = vld [vmem:[%s428 + $0x106] sm:$0xff]
        %v3135 = vld [vmem:[%s428 + $0x10e] sm:$0xff]
        %v3136 = vld [vmem:[%s428 + $0x116] sm:$0xff]
        %v3137 = vld [vmem:[%s428 + $0x11e] sm:$0xff]
        %v3138 = vld [vmem:[%s428 + $0x126] sm:$0xff]
        %v3139 = vld [vmem:[%s428 + $0x12e] sm:$0xff]
        %v3140 = vld [vmem:[%s428 + $0x136] sm:$0xff]
        %v3141 = vld [vmem:[%s428 + $0x13e] sm:$0xff]
        %v3142 = vld [vmem:[#allocation9 + $0x400] sm:$0xff]
        %v3143 = vld [vmem:[#allocation9 + $0x408] sm:$0xff]
        %v3144 = vld [vmem:[#allocation9 + $0x410] sm:$0xff]
        %v3145 = vld [vmem:[#allocation9 + $0x418] sm:$0xff]
        %v3146 = vld [vmem:[#allocation9 + $0x420] sm:$0xff]
        %v3147 = vld [vmem:[#allocation9 + $0x428] sm:$0xff]
        %v3148 = vld [vmem:[#allocation9 + $0x430] sm:$0xff]
        %v3149 = vld [vmem:[#allocation9 + $0x438] sm:$0xff]
        %v3150 = vld [vmem:[#allocation9 + $0x440] sm:$0xff]
        %v3151 = vld [vmem:[#allocation9 + $0x448] sm:$0xff]
        %v3152 = vld [vmem:[#allocation9 + $0x450] sm:$0xff]
        %v3153 = vld [vmem:[#allocation9 + $0x458] sm:$0xff]
        %v3154 = vld [vmem:[#allocation9 + $0x460] sm:$0xff]
        %v3155 = vld [vmem:[#allocation9 + $0x468] sm:$0xff]
        %v3156 = vld [vmem:[#allocation9 + $0x470] sm:$0xff]
        %v3157 = vld [vmem:[#allocation9 + $0x478] sm:$0xff]
        %3158 = vmatprep.subr.mxu0 0.0
        %3159 = vmatpush1.msra.mxu0 %v3142
        %3160 = vmatprep.subr.mxu0 0.0
        %3161 = vmatpush1.msra.mxu0 %v3143
        %3162 = vmatprep.subr.mxu0 0.0
        %3163 = vmatpush1.msra.mxu0 %v3144
        %3164 = vmatprep.subr.mxu0 0.0
        %3165 = vmatpush1.msra.mxu0 %v3145
        %3166 = vmatprep.subr.mxu0 0.0
        %3167 = vmatpush1.msra.mxu0 %v3146
        %3168 = vmatprep.subr.mxu0 0.0
        %3169 = vmatpush1.msra.mxu0 %v3147
        %3170 = vmatprep.subr.mxu0 0.0
        %3171 = vmatpush1.msra.mxu0 %v3148
        %3172 = vmatprep.subr.mxu0 0.0
        %3173 = vmatpush1.msra.mxu0 %v3149
        %3174 = vmatprep.subr.mxu0 0.0
        %3175 = vmatpush1.msra.mxu0 %v3150
        %3176 = vmatprep.subr.mxu0 0.0
        %3177 = vmatpush1.msra.mxu0 %v3151
        %3178 = vmatprep.subr.mxu0 0.0
        %3179 = vmatpush1.msra.mxu0 %v3152
        %3180 = vmatprep.subr.mxu0 0.0
        %3181 = vmatpush1.msra.mxu0 %v3153
        %3182 = vmatprep.subr.mxu0 0.0
        %3183 = vmatpush1.msra.mxu0 %v3154
        %3184 = vmatprep.subr.mxu0 0.0
        %3185 = vmatpush1.msra.mxu0 %v3155
        %3186 = vmatprep.subr.mxu0 0.0
        %3187 = vmatpush1.msra.mxu0 %v3156
        %3188 = vmatprep.subr.mxu0 0.0
        %3189 = vmatpush1.msra.mxu0 %v3157
        %3190 = vmatprep.subr.mxu0 0.0
        %3191 = vmatpush1.msra.mxu0 0.0
        %3192 = vmatprep.subr.mxu0 0.0
        %3193 = vmatpush1.msra.mxu0 0.0
        %3194 = vmatprep.subr.mxu0 0.0
        %3195 = vmatpush1.msra.mxu0 0.0
        %3196 = vmatprep.subr.mxu0 0.0
        %3197 = vmatpush1.msra.mxu0 0.0
        %3198 = vmatprep.subr.mxu0 0.0
        %3199 = vmatpush1.msra.mxu0 0.0
        %3200 = vmatprep.subr.mxu0 0.0
        %3201 = vmatpush1.msra.mxu0 0.0
        %3202 = vmatprep.subr.mxu0 0.0
        %3203 = vmatpush1.msra.mxu0 0.0
        %3204 = vmatprep.subr.mxu0 0.0
        %3205 = vmatpush1.msra.mxu0 0.0
        %3206 = vmatprep.subr.mxu0 0.0
        %3207 = vmatpush1.msra.mxu0 0.0
        %3208 = vmatprep.subr.mxu0 0.0
        %3209 = vmatpush1.msra.mxu0 0.0
        %3210 = vmatprep.subr.mxu0 0.0
        %3211 = vmatpush1.msra.mxu0 0.0
        %3212 = vmatprep.subr.mxu0 0.0
        %3213 = vmatpush1.msra.mxu0 0.0
        %3214 = vmatprep.subr.mxu0 0.0
        %3215 = vmatpush1.msra.mxu0 0.0
        %3216 = vmatprep.subr.mxu0 0.0
        %3217 = vmatpush1.msra.mxu0 0.0
        %3218 = vmatprep.subr.mxu0 0.0
        %3219 = vmatpush1.msra.mxu0 0.0
        %3220 = vmatprep.subr.mxu0 0.0
        %3221 = vmatpush1.msra.mxu0 0.0
        %3222 = vmatprep.mubr.f32.mxu0 0.0
        %3223 = vmatmul.mubr.f32.gmra.mrb[0].mxu0 %v3106
        %v3224 = vpop.f32.mrb[0].mxu0
        %v3225 = vadd.f32 0.0, %v3224
        %v3226 = vpop.f32.mrb[0].mxu0
        %3227 = vmatprep.mubr.f32.mxu0 0.0
        %3228 = vmatmul.mubr.f32.gmra.mrb[0].mxu0 %v3107
        %v3229 = vpop.f32.mrb[0].mxu0
        %v3230 = vadd.f32 0.0, %v3229
        %v3231 = vpop.f32.mrb[0].mxu0
        %3232 = vmatprep.mubr.f32.mxu0 0.0
        %3233 = vmatmul.mubr.f32.gmra.mrb[0].mxu0 %v3108
        %v3234 = vpop.f32.mrb[0].mxu0
        %v3235 = vadd.f32 0.0, %v3234
        %v3236 = vpop.f32.mrb[0].mxu0
        %3237 = vmatprep.mubr.f32.mxu0 0.0
        %3238 = vmatmul.mubr.f32.gmra.mrb[0].mxu0 %v3109
        %v3239 = vpop.f32.mrb[0].mxu0
        %v3240 = vadd.f32 0.0, %v3239
        %v3241 = vpop.f32.mrb[0].mxu0
        %3242 = vmatprep.mubr.f32.mxu0 0.0
        %3243 = vmatmul.mubr.f32.gmra.mrb[0].mxu0 %v3110
        %v3244 = vpop.f32.mrb[0].mxu0
        %v3245 = vadd.f32 0.0, %v3244
        %v3246 = vpop.f32.mrb[0].mxu0
        %3247 = vmatprep.mubr.f32.mxu0 0.0
        %3248 = vmatmul.mubr.f32.gmra.mrb[0].mxu0 %v3111
        %v3249 = vpop.f32.mrb[0].mxu0
        %v3250 = vadd.f32 0.0, %v3249
        %v3251 = vpop.f32.mrb[0].mxu0
        %3252 = vmatprep.mubr.f32.mxu0 0.0
        %3253 = vmatmul.mubr.f32.gmra.mrb[0].mxu0 %v3112
        %v3254 = vpop.f32.mrb[0].mxu0
        %v3255 = vadd.f32 0.0, %v3254
        %v3256 = vpop.f32.mrb[0].mxu0
        %3257 = vmatprep.mubr.f32.mxu0 0.0
        %3258 = vmatmul.mubr.f32.gmra.mrb[0].mxu0 %v3113
        %v3259 = vpop.f32.mrb[0].mxu0
        %v3260 = vadd.f32 0.0, %v3259
        %v3261 = vpop.f32.mrb[0].mxu0
        %3262 = vmatprep.mubr.f32.mxu0 0.0
        %3263 = vmatmul.mubr.f32.gmra.mrb[0].mxu0 %v3114
        %v3264 = vpop.f32.mrb[0].mxu0
        %v3265 = vadd.f32 0.0, %v3264
        %v3266 = vpop.f32.mrb[0].mxu0
        %3267 = vmatprep.mubr.f32.mxu0 0.0
        %3268 = vmatmul.mubr.f32.gmra.mrb[0].mxu0 %v3115
        %v3269 = vpop.f32.mrb[0].mxu0
        %v3270 = vadd.f32 0.0, %v3269
        %v3271 = vpop.f32.mrb[0].mxu0
        %3272 = vmatprep.mubr.f32.mxu0 0.0
        %3273 = vmatmul.mubr.f32.gmra.mrb[0].mxu0 %v3116
        %v3274 = vpop.f32.mrb[0].mxu0
        %v3275 = vadd.f32 0.0, %v3274
        %v3276 = vpop.f32.mrb[0].mxu0
        %3277 = vmatprep.mubr.f32.mxu0 0.0
        %3278 = vmatmul.mubr.f32.gmra.mrb[0].mxu0 %v3117
        %v3279 = vpop.f32.mrb[0].mxu0
        %v3280 = vadd.f32 0.0, %v3279
        %v3281 = vpop.f32.mrb[0].mxu0
        %3282 = vmatprep.mubr.f32.mxu0 0.0
        %3283 = vmatmul.mubr.f32.gmra.mrb[0].mxu0 %v3118
        %v3284 = vpop.f32.mrb[0].mxu0
        %v3285 = vadd.f32 0.0, %v3284
        %v3286 = vpop.f32.mrb[0].mxu0
        %3287 = vmatprep.mubr.f32.mxu0 0.0
        %3288 = vmatmul.mubr.f32.gmra.mrb[0].mxu0 %v3119
        %v3289 = vpop.f32.mrb[0].mxu0
        %v3290 = vadd.f32 0.0, %v3289
        %v3291 = vpop.f32.mrb[0].mxu0
        %3292 = vmatprep.mubr.f32.mxu0 0.0
        %3293 = vmatmul.mubr.f32.gmra.mrb[0].mxu0 %v3120
        %v3294 = vpop.f32.mrb[0].mxu0
        %v3295 = vadd.f32 0.0, %v3294
        %v3296 = vpop.f32.mrb[0].mxu0
        %3297 = vmatprep.mubr.f32.mxu0 0.0
        %3298 = vmatmul.mubr.f32.gmra.mrb[0].mxu0 %v3121
        %v3299 = vpop.f32.mrb[0].mxu0
        %v3300 = vadd.f32 0.0, %v3299
        %v3301 = vpop.f32.mrb[0].mxu0
        %3302 = vmatprep.mubr.f32.mxu0 0.0
        %3303 = vmatmul.mubr.f32.gmra.mrb[0].mxu0 %v3122
        %v3304 = vpop.f32.mrb[0].mxu0
        %v3305 = vadd.f32 0.0, %v3304
        %v3306 = vpop.f32.mrb[0].mxu0
        %3307 = vmatprep.mubr.f32.mxu0 0.0
        %3308 = vmatmul.mubr.f32.gmra.mrb[0].mxu0 %v3123
        %v3309 = vpop.f32.mrb[0].mxu0
        %v3310 = vadd.f32 0.0, %v3309
        %v3311 = vpop.f32.mrb[0].mxu0
        %3312 = vmatprep.mubr.f32.mxu0 0.0
        %3313 = vmatmul.mubr.f32.gmra.mrb[0].mxu0 %v3124
        %v3314 = vpop.f32.mrb[0].mxu0
        %v3315 = vadd.f32 0.0, %v3314
        %v3316 = vpop.f32.mrb[0].mxu0
        %3317 = vmatprep.mubr.f32.mxu0 0.0
        %3318 = vmatmul.mubr.f32.gmra.mrb[0].mxu0 %v3125
        %v3319 = vpop.f32.mrb[0].mxu0
        %v3320 = vadd.f32 0.0, %v3319
        %v3321 = vpop.f32.mrb[0].mxu0
        %3322 = vmatprep.mubr.f32.mxu0 0.0
        %3323 = vmatmul.mubr.f32.gmra.mrb[0].mxu0 %v3126
        %v3324 = vpop.f32.mrb[0].mxu0
        %v3325 = vadd.f32 0.0, %v3324
        %v3326 = vpop.f32.mrb[0].mxu0
        %3327 = vmatprep.mubr.f32.mxu0 0.0
        %3328 = vmatmul.mubr.f32.gmra.mrb[0].mxu0 %v3127
        %v3329 = vpop.f32.mrb[0].mxu0
        %v3330 = vadd.f32 0.0, %v3329
        %v3331 = vpop.f32.mrb[0].mxu0
        %3332 = vmatprep.mubr.f32.mxu0 0.0
        %3333 = vmatmul.mubr.f32.gmra.mrb[0].mxu0 %v3128
        %v3334 = vpop.f32.mrb[0].mxu0
        %v3335 = vadd.f32 0.0, %v3334
        %v3336 = vpop.f32.mrb[0].mxu0
        %3337 = vmatprep.mubr.f32.mxu0 0.0
        %3338 = vmatmul.mubr.f32.gmra.mrb[0].mxu0 %v3129
        %v3339 = vpop.f32.mrb[0].mxu0
        %v3340 = vadd.f32 0.0, %v3339
        %v3341 = vpop.f32.mrb[0].mxu0
        %3342 = vmatprep.mubr.f32.mxu0 0.0
        %3343 = vmatmul.mubr.f32.gmra.mrb[0].mxu0 %v3130
        %v3344 = vpop.f32.mrb[0].mxu0
        %v3345 = vadd.f32 0.0, %v3344
        %v3346 = vpop.f32.mrb[0].mxu0
        %3347 = vmatprep.mubr.f32.mxu0 0.0
        %3348 = vmatmul.mubr.f32.gmra.mrb[0].mxu0 %v3131
        %v3349 = vpop.f32.mrb[0].mxu0
        %v3350 = vadd.f32 0.0, %v3349
        %v3351 = vpop.f32.mrb[0].mxu0
        %3352 = vmatprep.mubr.f32.mxu0 0.0
        %3353 = vmatmul.mubr.f32.gmra.mrb[0].mxu0 %v3132
        %v3354 = vpop.f32.mrb[0].mxu0
        %v3355 = vadd.f32 0.0, %v3354
        %v3356 = vpop.f32.mrb[0].mxu0
        %3357 = vmatprep.mubr.f32.mxu0 0.0
        %3358 = vmatmul.mubr.f32.gmra.mrb[0].mxu0 %v3133
        %v3359 = vpop.f32.mrb[0].mxu0
        %v3360 = vadd.f32 0.0, %v3359
        %v3361 = vpop.f32.mrb[0].mxu0
        %3362 = vmatprep.mubr.f32.mxu0 0.0
        %3363 = vmatmul.mubr.f32.gmra.mrb[0].mxu0 %v3134
        %v3364 = vpop.f32.mrb[0].mxu0
        %v3365 = vadd.f32 0.0, %v3364
        %v3366 = vpop.f32.mrb[0].mxu0
        %3367 = vmatprep.mubr.f32.mxu0 0.0
        %3368 = vmatmul.mubr.f32.gmra.mrb[0].mxu0 %v3135
        %v3369 = vpop.f32.mrb[0].mxu0
        %v3370 = vadd.f32 0.0, %v3369
        %v3371 = vpop.f32.mrb[0].mxu0
        %3372 = vmatprep.mubr.f32.mxu0 0.0
        %3373 = vmatmul.mubr.f32.gmra.mrb[0].mxu0 %v3136
        %v3374 = vpop.f32.mrb[0].mxu0
        %v3375 = vadd.f32 0.0, %v3374
        %v3376 = vpop.f32.mrb[0].mxu0
        %3377 = vmatprep.mubr.f32.mxu0 0.0
        %3378 = vmatmul.mubr.f32.gmra.mrb[0].mxu0 %v3137
        %v3379 = vpop.f32.mrb[0].mxu0
        %v3380 = vadd.f32 0.0, %v3379
        %v3381 = vpop.f32.mrb[0].mxu0
        %3382 = vmatprep.mubr.f32.mxu0 0.0
        %3383 = vmatmul.mubr.f32.gmra.mrb[0].mxu0 %v3138
        %v3384 = vpop.f32.mrb[0].mxu0
        %v3385 = vadd.f32 0.0, %v3384
        %v3386 = vpop.f32.mrb[0].mxu0
        %3387 = vmatprep.mubr.f32.mxu0 0.0
        %3388 = vmatmul.mubr.f32.gmra.mrb[0].mxu0 %v3139
        %v3389 = vpop.f32.mrb[0].mxu0
        %v3390 = vadd.f32 0.0, %v3389
        %v3391 = vpop.f32.mrb[0].mxu0
        %3392 = vmatprep.mubr.f32.mxu0 0.0
        %3393 = vmatmul.mubr.f32.gmra.mrb[0].mxu0 %v3140
        %v3394 = vpop.f32.mrb[0].mxu0
        %v3395 = vadd.f32 0.0, %v3394
        %v3396 = vpop.f32.mrb[0].mxu0
        %3397 = vmatprep.mubr.f32.mxu0 0.0
        %3398 = vmatmul.mubr.f32.gmra.mrb[0].mxu0 %v3141
        %v3399 = vpop.f32.mrb[0].mxu0
        %v3400 = vadd.f32 0.0, %v3399
        %v3401 = vpop.f32.mrb[0].mxu0
        %3402 = vdwg.mxu0
        %v3403 = vadd.f32 %v3070, %v3225
        %v3404 = vadd.f32 %v3071, %v3230
        %v3405 = vadd.f32 %v3072, %v3235
        %v3406 = vadd.f32 %v3073, %v3240
        %v3407 = vadd.f32 %v3074, %v3245
        %v3408 = vadd.f32 %v3075, %v3250
        %v3409 = vadd.f32 %v3076, %v3255
        %v3410 = vadd.f32 %v3077, %v3260
        %v3411 = vadd.f32 %v3078, %v3265
        %v3412 = vadd.f32 %v3079, %v3270
        %v3413 = vadd.f32 %v3080, %v3275
        %v3414 = vadd.f32 %v3081, %v3280
        %v3415 = vadd.f32 %v3082, %v3285
        %v3416 = vadd.f32 %v3083, %v3290
        %v3417 = vadd.f32 %v3084, %v3295
        %v3418 = vadd.f32 %v3085, %v3300
        %v3419 = vadd.f32 %v3086, %v3305
        %v3420 = vadd.f32 %v3087, %v3310
        %v3421 = vadd.f32 %v3088, %v3315
        %v3422 = vadd.f32 %v3089, %v3320
        %v3423 = vadd.f32 %v3090, %v3325
        %v3424 = vadd.f32 %v3091, %v3330
        %v3425 = vadd.f32 %v3092, %v3335
        %v3426 = vadd.f32 %v3093, %v3340
        %v3427 = vadd.f32 %v3094, %v3345
        %v3428 = vadd.f32 %v3095, %v3350
        %v3429 = vadd.f32 %v3096, %v3355
        %v3430 = vadd.f32 %v3097, %v3360
        %v3431 = vadd.f32 %v3098, %v3365
        %v3432 = vadd.f32 %v3099, %v3370
        %v3433 = vadd.f32 %v3100, %v3375
        %v3434 = vadd.f32 %v3101, %v3380
        %v3435 = vadd.f32 %v3102, %v3385
        %v3436 = vadd.f32 %v3103, %v3390
        %v3437 = vadd.f32 %v3104, %v3395
        %v3438 = vadd.f32 %v3105, %v3400
        %3439 = vst [vmem:[#allocation2] sm:$0xff] %v3403
        %3440 = vst [vmem:[#allocation2 + $0x8] sm:$0xff] %v3404
        %3441 = vst [vmem:[#allocation2 + $0x10] sm:$0xff] %v3405
        %3442 = vst [vmem:[#allocation2 + $0x18] sm:$0xff] %v3406
        %3443 = vst [vmem:[#allocation2 + $0x20] sm:$0xff] %v3407
        %3444 = vst [vmem:[#allocation2 + $0x28] sm:$0xff] %v3408
        %3445 = vst [vmem:[#allocation2 + $0x30] sm:$0xff] %v3409
        %3446 = vst [vmem:[#allocation2 + $0x38] sm:$0xff] %v3410
        %3447 = vst [vmem:[#allocation2 + $0x40] sm:$0xff] %v3411
        %3448 = vst [vmem:[#allocation2 + $0x48] sm:$0xff] %v3412
        %3449 = vst [vmem:[#allocation2 + $0x50] sm:$0xff] %v3413
        %3450 = vst [vmem:[#allocation2 + $0x58] sm:$0xff] %v3414
        %3451 = vst [vmem:[#allocation2 + $0x60] sm:$0xff] %v3415
        %3452 = vst [vmem:[#allocation2 + $0x68] sm:$0xff] %v3416
        %3453 = vst [vmem:[#allocation2 + $0x70] sm:$0xff] %v3417
        %3454 = vst [vmem:[#allocation2 + $0x78] sm:$0xff] %v3418
        %3455 = vst [vmem:[#allocation2 + $0x80] sm:$0xff] %v3419
        %3456 = vst [vmem:[#allocation2 + $0x88] sm:$0xff] %v3420
        %3457 = vst [vmem:[#allocation2 + $0x90] sm:$0xff] %v3421
        %3458 = vst [vmem:[#allocation2 + $0x98] sm:$0xff] %v3422
        %3459 = vst [vmem:[#allocation2 + $0xa0] sm:$0xff] %v3423
        %3460 = vst [vmem:[#allocation2 + $0xa8] sm:$0xff] %v3424
        %3461 = vst [vmem:[#allocation2 + $0xb0] sm:$0xff] %v3425
        %3462 = vst [vmem:[#allocation2 + $0xb8] sm:$0xff] %v3426
        %3463 = vst [vmem:[#allocation2 + $0xc0] sm:$0xff] %v3427
        %3464 = vst [vmem:[#allocation2 + $0xc8] sm:$0xff] %v3428
        %3465 = vst [vmem:[#allocation2 + $0xd0] sm:$0xff] %v3429
        %3466 = vst [vmem:[#allocation2 + $0xd8] sm:$0xff] %v3430
        %3467 = vst [vmem:[#allocation2 + $0xe0] sm:$0xff] %v3431
        %3468 = vst [vmem:[#allocation2 + $0xe8] sm:$0xff] %v3432
        %3469 = vst [vmem:[#allocation2 + $0xf0] sm:$0xff] %v3433
        %3470 = vst [vmem:[#allocation2 + $0xf8] sm:$0xff] %v3434
        %3471 = vst [vmem:[#allocation2 + $0x100] sm:$0xff] %v3435
        %3472 = vst [vmem:[#allocation2 + $0x108] sm:$0xff] %v3436
        %3473 = vst [vmem:[#allocation2 + $0x110] sm:$0xff] %v3437
        %3474 = vst [vmem:[#allocation2 + $0x118] sm:$0xff] %v3438
        %v3475 = vld [vmem:[#allocation11] sm:$0x1]
        %v3477 = vlaneseq
        %v3478 = vshrl.u32 %v3477, 7
        %v3479 = vsub.s32 0, %v3478
        %v3480 = vrot.slane %v3475, %v3479
        %v3482 = vld [vmem:[#allocation2] ss:$2 sm:$0xff]
        %s3483 = scalar_lea.vmem [#allocation2], 1
        %v3484 = vld [vmem:[%s3483] ss:$2 sm:$0xff]
        %v3485 = vmax.f32 %v3482, %v3484
        %s3486 = scalar_lea.vmem [#allocation2], 18
        %v3487 = vld [vmem:[%s3486] ss:$2 sm:$0xff]
        %v3488 = vmax.f32 %v3485, %v3487
        %s3489 = scalar_lea.vmem [#allocation2], 19
        %v3490 = vld [vmem:[%s3489] ss:$2 sm:$0xff]
        %v3491 = vmax.f32 %v3488, %v3490
        %v3492 = vadd.f32 %v3491, %v3480
        %v3493 = vmax.f32 %v3492, 0.0
        %3494 = vst [vmem:[#allocation3 + $0xb] sm:$0xff] %v3493
        %s3495 = scalar_lea.vmem [#allocation2], 36
        %v3496 = vld [vmem:[%s3495] ss:$2 sm:$0xff]
        %s3497 = scalar_lea.vmem [#allocation2], 37
        %v3498 = vld [vmem:[%s3497] ss:$2 sm:$0xff]
        %v3499 = vmax.f32 %v3496, %v3498
        %s3500 = scalar_lea.vmem [#allocation2], 54
        %v3501 = vld [vmem:[%s3500] ss:$2 sm:$0xff]
        %v3502 = vmax.f32 %v3499, %v3501
        %s3503 = scalar_lea.vmem [#allocation2], 55
        %v3504 = vld [vmem:[%s3503] ss:$2 sm:$0xff]
        %v3505 = vmax.f32 %v3502, %v3504
        %v3506 = vadd.f32 %v3505, %v3480
        %v3507 = vmax.f32 %v3506, 0.0
        %3508 = vst [vmem:[#allocation3 + $0x15] sm:$0xff] %v3507
        %s3509 = scalar_lea.vmem [#allocation2], 72
        %v3510 = vld [vmem:[%s3509] ss:$2 sm:$0xff]
        %s3511 = scalar_lea.vmem [#allocation2], 73
        %v3512 = vld [vmem:[%s3511] ss:$2 sm:$0xff]
        %v3513 = vmax.f32 %v3510, %v3512
        %s3514 = scalar_lea.vmem [#allocation2], 90
        %v3515 = vld [vmem:[%s3514] ss:$2 sm:$0xff]
        %v3516 = vmax.f32 %v3513, %v3515
        %s3517 = scalar_lea.vmem [#allocation2], 91
        %v3518 = vld [vmem:[%s3517] ss:$2 sm:$0xff]
        %v3519 = vmax.f32 %v3516, %v3518
        %v3520 = vadd.f32 %v3519, %v3480
        %v3521 = vmax.f32 %v3520, 0.0
        %3522 = vst [vmem:[#allocation3 + $0x1f] sm:$0xff] %v3521
        %s3523 = scalar_lea.vmem [#allocation2], 108
        %v3524 = vld [vmem:[%s3523] ss:$2 sm:$0xff]
        %s3525 = scalar_lea.vmem [#allocation2], 109
        %v3526 = vld [vmem:[%s3525] ss:$2 sm:$0xff]
        %v3527 = vmax.f32 %v3524, %v3526
        %s3528 = scalar_lea.vmem [#allocation2], 126
        %v3529 = vld [vmem:[%s3528] ss:$2 sm:$0xff]
        %v3530 = vmax.f32 %v3527, %v3529
        %s3531 = scalar_lea.vmem [#allocation2], 127
        %v3532 = vld [vmem:[%s3531] ss:$2 sm:$0xff]
        %v3533 = vmax.f32 %v3530, %v3532
        %v3534 = vadd.f32 %v3533, %v3480
        %v3535 = vmax.f32 %v3534, 0.0
        %3536 = vst [vmem:[#allocation3 + $0x29] sm:$0xff] %v3535
        %s3537 = scalar_lea.vmem [#allocation2], 144
        %v3538 = vld [vmem:[%s3537] ss:$2 sm:$0xff]
        %s3539 = scalar_lea.vmem [#allocation2], 145
        %v3540 = vld [vmem:[%s3539] ss:$2 sm:$0xff]
        %v3541 = vmax.f32 %v3538, %v3540
        %s3542 = scalar_lea.vmem [#allocation2], 162
        %v3543 = vld [vmem:[%s3542] ss:$2 sm:$0xff]
        %v3544 = vmax.f32 %v3541, %v3543
        %s3545 = scalar_lea.vmem [#allocation2], 163
        %v3546 = vld [vmem:[%s3545] ss:$2 sm:$0xff]
        %v3547 = vmax.f32 %v3544, %v3546
        %v3548 = vadd.f32 %v3547, %v3480
        %v3549 = vmax.f32 %v3548, 0.0
        %3550 = vst [vmem:[#allocation3 + $0x33] sm:$0xff] %v3549
        %s3551 = scalar_lea.vmem [#allocation2], 180
        %v3552 = vld [vmem:[%s3551] ss:$2 sm:$0xff]
        %s3553 = scalar_lea.vmem [#allocation2], 181
        %v3554 = vld [vmem:[%s3553] ss:$2 sm:$0xff]
        %v3555 = vmax.f32 %v3552, %v3554
        %s3556 = scalar_lea.vmem [#allocation2], 198
        %v3557 = vld [vmem:[%s3556] ss:$2 sm:$0xff]
        %v3558 = vmax.f32 %v3555, %v3557
        %s3559 = scalar_lea.vmem [#allocation2], 199
        %v3560 = vld [vmem:[%s3559] ss:$2 sm:$0xff]
        %v3561 = vmax.f32 %v3558, %v3560
        %v3562 = vadd.f32 %v3561, %v3480
        %v3563 = vmax.f32 %v3562, 0.0
        %3564 = vst [vmem:[#allocation3 + $0x3d] sm:$0xff] %v3563
        %s3565 = scalar_lea.vmem [#allocation2], 216
        %v3566 = vld [vmem:[%s3565] ss:$2 sm:$0xff]
        %s3567 = scalar_lea.vmem [#allocation2], 217
        %v3568 = vld [vmem:[%s3567] ss:$2 sm:$0xff]
        %v3569 = vmax.f32 %v3566, %v3568
        %s3570 = scalar_lea.vmem [#allocation2], 234
        %v3571 = vld [vmem:[%s3570] ss:$2 sm:$0xff]
        %v3572 = vmax.f32 %v3569, %v3571
        %s3573 = scalar_lea.vmem [#allocation2], 235
        %v3574 = vld [vmem:[%s3573] ss:$2 sm:$0xff]
        %v3575 = vmax.f32 %v3572, %v3574
        %v3576 = vadd.f32 %v3575, %v3480
        %v3577 = vmax.f32 %v3576, 0.0
        %3578 = vst [vmem:[#allocation3 + $0x47] sm:$0xff] %v3577
        %s3579 = scalar_lea.vmem [#allocation2], 252
        %v3580 = vld [vmem:[%s3579] ss:$2 sm:$0xff]
        %s3581 = scalar_lea.vmem [#allocation2], 253
        %v3582 = vld [vmem:[%s3581] ss:$2 sm:$0xff]
        %v3583 = vmax.f32 %v3580, %v3582
        %s3584 = scalar_lea.vmem [#allocation2], 270
        %v3585 = vld [vmem:[%s3584] ss:$2 sm:$0xff]
        %v3586 = vmax.f32 %v3583, %v3585
        %s3587 = scalar_lea.vmem [#allocation2], 271
        %v3588 = vld [vmem:[%s3587] ss:$2 sm:$0xff]
        %v3589 = vmax.f32 %v3586, %v3588
        %v3590 = vadd.f32 %v3589, %v3480
        %v3591 = vmax.f32 %v3590, 0.0
        %3592 = vst [vmem:[#allocation3 + $0x51] sm:$0xff] %v3591
        %v3593 = vld [vmem:[#allocation3] sm:$0xff]
        %v3594 = vld [vmem:[#allocation3 + $0x8] sm:$0xff]
        %v3595 = vld [vmem:[#allocation3 + $0x10] sm:$0xff]
        %v3596 = vld [vmem:[#allocation3 + $0x18] sm:$0xff]
        %v3597 = vld [vmem:[#allocation3 + $0x20] sm:$0xff]
        %v3598 = vld [vmem:[#allocation3 + $0x28] sm:$0xff]
        %v3599 = vld [vmem:[#allocation3 + $0x30] sm:$0xff]
        %v3600 = vld [vmem:[#allocation3 + $0x38] sm:$0xff]
        %v3601 = vld [vmem:[#allocation3 + $0x40] sm:$0xff]
        %v3602 = vld [vmem:[#allocation3 + $0x48] sm:$0xff]
        %v3603 = vld [vmem:[#allocation12] sm:$0xff]
        %v3604 = vld [vmem:[#allocation12 + $0x8] sm:$0xff]
        %v3605 = vld [vmem:[#allocation12 + $0x10] sm:$0xff]
        %v3606 = vld [vmem:[#allocation12 + $0x18] sm:$0xff]
        %v3607 = vld [vmem:[#allocation12 + $0x20] sm:$0xff]
        %v3608 = vld [vmem:[#allocation12 + $0x28] sm:$0xff]
        %v3609 = vld [vmem:[#allocation12 + $0x30] sm:$0xff]
        %v3610 = vld [vmem:[#allocation12 + $0x38] sm:$0xff]
        %v3611 = vld [vmem:[#allocation12 + $0x40] sm:$0xff]
        %v3612 = vld [vmem:[#allocation12 + $0x48] sm:$0xff]
        %v3613 = vld [vmem:[#allocation12 + $0x50] sm:$0xff]
        %v3614 = vld [vmem:[#allocation12 + $0x58] sm:$0xff]
        %v3615 = vld [vmem:[#allocation12 + $0x60] sm:$0xff]
        %v3616 = vld [vmem:[#allocation12 + $0x68] sm:$0xff]
        %v3617 = vld [vmem:[#allocation12 + $0x70] sm:$0xff]
        %v3618 = vld [vmem:[#allocation12 + $0x78] sm:$0xff]
        %v3619 = vld [vmem:[#allocation3 + $0x1] sm:$0xff]
        %v3620 = vld [vmem:[#allocation3 + $0x9] sm:$0xff]
        %v3621 = vld [vmem:[#allocation3 + $0x11] sm:$0xff]
        %v3622 = vld [vmem:[#allocation3 + $0x19] sm:$0xff]
        %v3623 = vld [vmem:[#allocation3 + $0x21] sm:$0xff]
        %v3624 = vld [vmem:[#allocation3 + $0x29] sm:$0xff]
        %v3625 = vld [vmem:[#allocation3 + $0x31] sm:$0xff]
        %v3626 = vld [vmem:[#allocation3 + $0x39] sm:$0xff]
        %v3627 = vld [vmem:[#allocation3 + $0x41] sm:$0xff]
        %v3628 = vld [vmem:[#allocation3 + $0x49] sm:$0xff]
        %v3629 = vld [vmem:[#allocation12 + $0x80] sm:$0xff]
        %v3630 = vld [vmem:[#allocation12 + $0x88] sm:$0xff]
        %v3631 = vld [vmem:[#allocation12 + $0x90] sm:$0xff]
        %v3632 = vld [vmem:[#allocation12 + $0x98] sm:$0xff]
        %v3633 = vld [vmem:[#allocation12 + $0xa0] sm:$0xff]
        %v3634 = vld [vmem:[#allocation12 + $0xa8] sm:$0xff]
        %v3635 = vld [vmem:[#allocation12 + $0xb0] sm:$0xff]
        %v3636 = vld [vmem:[#allocation12 + $0xb8] sm:$0xff]
        %v3637 = vld [vmem:[#allocation12 + $0xc0] sm:$0xff]
        %v3638 = vld [vmem:[#allocation12 + $0xc8] sm:$0xff]
        %v3639 = vld [vmem:[#allocation12 + $0xd0] sm:$0xff]
        %v3640 = vld [vmem:[#allocation12 + $0xd8] sm:$0xff]
        %v3641 = vld [vmem:[#allocation12 + $0xe0] sm:$0xff]
        %v3642 = vld [vmem:[#allocation12 + $0xe8] sm:$0xff]
        %v3643 = vld [vmem:[#allocation12 + $0xf0] sm:$0xff]
        %v3644 = vld [vmem:[#allocation12 + $0xf8] sm:$0xff]
        %3645 = vmatprep.subr.mxu0 0.0
        %3646 = vmatpush1.msra.mxu0 %v3629
        %3647 = vmatprep.subr.mxu0 0.0
        %3648 = vmatpush1.msra.mxu0 %v3630
        %3649 = vmatprep.subr.mxu0 0.0
        %3650 = vmatpush1.msra.mxu0 %v3631
        %3651 = vmatprep.subr.mxu0 0.0
        %3652 = vmatpush1.msra.mxu0 %v3632
        %3653 = vmatprep.subr.mxu0 0.0
        %3654 = vmatpush1.msra.mxu0 %v3633
        %3655 = vmatprep.subr.mxu0 0.0
        %3656 = vmatpush1.msra.mxu0 %v3634
        %3657 = vmatprep.subr.mxu0 0.0
        %3658 = vmatpush1.msra.mxu0 %v3635
        %3659 = vmatprep.subr.mxu0 0.0
        %3660 = vmatpush1.msra.mxu0 %v3636
        %3661 = vmatprep.subr.mxu0 0.0
        %3662 = vmatpush1.msra.mxu0 %v3637
        %3663 = vmatprep.subr.mxu0 0.0
        %3664 = vmatpush1.msra.mxu0 %v3638
        %3665 = vmatprep.subr.mxu0 0.0
        %3666 = vmatpush1.msra.mxu0 %v3639
        %3667 = vmatprep.subr.mxu0 0.0
        %3668 = vmatpush1.msra.mxu0 %v3640
        %3669 = vmatprep.subr.mxu0 0.0
        %3670 = vmatpush1.msra.mxu0 %v3641
        %3671 = vmatprep.subr.mxu0 0.0
        %3672 = vmatpush1.msra.mxu0 %v3642
        %3673 = vmatprep.subr.mxu0 0.0
        %3674 = vmatpush1.msra.mxu0 %v3643
        %3675 = vmatprep.subr.mxu0 0.0
        %3676 = vmatpush1.msra.mxu0 %v3644
        %3677 = vmatprep.subr.mxu0 0.0
        %3678 = vmatpush1.msra.mxu0 0.0
        %3679 = vmatprep.subr.mxu0 0.0
        %3680 = vmatpush1.msra.mxu0 0.0
        %3681 = vmatprep.subr.mxu0 0.0
        %3682 = vmatpush1.msra.mxu0 0.0
        %3683 = vmatprep.subr.mxu0 0.0
        %3684 = vmatpush1.msra.mxu0 0.0
        %3685 = vmatprep.subr.mxu0 0.0
        %3686 = vmatpush1.msra.mxu0 0.0
        %3687 = vmatprep.subr.mxu0 0.0
        %3688 = vmatpush1.msra.mxu0 0.0
        %3689 = vmatprep.subr.mxu0 0.0
        %3690 = vmatpush1.msra.mxu0 0.0
        %3691 = vmatprep.subr.mxu0 0.0
        %3692 = vmatpush1.msra.mxu0 0.0
        %3693 = vmatprep.subr.mxu0 0.0
        %3694 = vmatpush1.msra.mxu0 0.0
        %3695 = vmatprep.subr.mxu0 0.0
        %3696 = vmatpush1.msra.mxu0 0.0
        %3697 = vmatprep.subr.mxu0 0.0
        %3698 = vmatpush1.msra.mxu0 0.0
        %3699 = vmatprep.subr.mxu0 0.0
        %3700 = vmatpush1.msra.mxu0 0.0
        %3701 = vmatprep.subr.mxu0 0.0
        %3702 = vmatpush1.msra.mxu0 0.0
        %3703 = vmatprep.subr.mxu0 0.0
        %3704 = vmatpush1.msra.mxu0 0.0
        %3705 = vmatprep.subr.mxu0 0.0
        %3706 = vmatpush1.msra.mxu0 0.0
        %3707 = vmatprep.subr.mxu0 0.0
        %3708 = vmatpush1.msra.mxu0 0.0
        %3709 = vmatprep.mubr.f32.mxu0 0.0
        %3710 = vmatmul.mubr.f32.gmra.mrb[0].mxu0 %v3619
        %v3711 = vpop.f32.mrb[0].mxu0
        %v3712 = vadd.f32 0.0, %v3711
        %v3713 = vpop.f32.mrb[0].mxu0
        %3714 = vmatprep.mubr.f32.mxu0 0.0
        %3715 = vmatmul.mubr.f32.gmra.mrb[0].mxu0 %v3620
        %v3716 = vpop.f32.mrb[0].mxu0
        %v3717 = vadd.f32 0.0, %v3716
        %v3718 = vpop.f32.mrb[0].mxu0
        %3719 = vmatprep.mubr.f32.mxu0 0.0
        %3720 = vmatmul.mubr.f32.gmra.mrb[0].mxu0 %v3621
        %v3721 = vpop.f32.mrb[0].mxu0
        %v3722 = vadd.f32 0.0, %v3721
        %v3723 = vpop.f32.mrb[0].mxu0
        %3724 = vmatprep.mubr.f32.mxu0 0.0
        %3725 = vmatmul.mubr.f32.gmra.mrb[0].mxu0 %v3622
        %v3726 = vpop.f32.mrb[0].mxu0
        %v3727 = vadd.f32 0.0, %v3726
        %v3728 = vpop.f32.mrb[0].mxu0
        %3729 = vmatprep.mubr.f32.mxu0 0.0
        %3730 = vmatmul.mubr.f32.gmra.mrb[0].mxu0 %v3623
        %v3731 = vpop.f32.mrb[0].mxu0
        %v3732 = vadd.f32 0.0, %v3731
        %v3733 = vpop.f32.mrb[0].mxu0
        %3734 = vmatprep.mubr.f32.mxu0 0.0
        %3735 = vmatmul.mubr.f32.gmra.mrb[0].mxu0 %v3624
        %v3736 = vpop.f32.mrb[0].mxu0
        %v3737 = vadd.f32 0.0, %v3736
        %v3738 = vpop.f32.mrb[0].mxu0
        %3739 = vmatprep.mubr.f32.mxu0 0.0
        %3740 = vmatmul.mubr.f32.gmra.mrb[0].mxu0 %v3625
        %v3741 = vpop.f32.mrb[0].mxu0
        %v3742 = vadd.f32 0.0, %v3741
        %v3743 = vpop.f32.mrb[0].mxu0
        %3744 = vmatprep.mubr.f32.mxu0 0.0
        %3745 = vmatmul.mubr.f32.gmra.mrb[0].mxu0 %v3626
        %v3746 = vpop.f32.mrb[0].mxu0
        %v3747 = vadd.f32 0.0, %v3746
        %v3748 = vpop.f32.mrb[0].mxu0
        %3749 = vmatprep.mubr.f32.mxu0 0.0
        %3750 = vmatmul.mubr.f32.gmra.mrb[0].mxu0 %v3627
        %v3751 = vpop.f32.mrb[0].mxu0
        %v3752 = vadd.f32 0.0, %v3751
        %v3753 = vpop.f32.mrb[0].mxu0
        %3754 = vmatprep.mubr.f32.mxu0 0.0
        %3755 = vmatmul.mubr.f32.gmra.mrb[0].mxu0 %v3628
        %v3756 = vpop.f32.mrb[0].mxu0
        %v3757 = vadd.f32 0.0, %v3756
        %v3758 = vpop.f32.mrb[0].mxu0
        %3759 = vdwg.mxu0
        %3760 = vmatprep.subr.mxu0 0.0
        %3761 = vmatpush1.msra.mxu0 %v3603
        %3762 = vmatprep.subr.mxu0 0.0
        %3763 = vmatpush1.msra.mxu0 %v3604
        %3764 = vmatprep.subr.mxu0 0.0
        %3765 = vmatpush1.msra.mxu0 %v3605
        %3766 = vmatprep.subr.mxu0 0.0
        %3767 = vmatpush1.msra.mxu0 %v3606
        %3768 = vmatprep.subr.mxu0 0.0
        %3769 = vmatpush1.msra.mxu0 %v3607
        %3770 = vmatprep.subr.mxu0 0.0
        %3771 = vmatpush1.msra.mxu0 %v3608
        %3772 = vmatprep.subr.mxu0 0.0
        %3773 = vmatpush1.msra.mxu0 %v3609
        %3774 = vmatprep.subr.mxu0 0.0
        %3775 = vmatpush1.msra.mxu0 %v3610
        %3776 = vmatprep.subr.mxu0 0.0
        %3777 = vmatpush1.msra.mxu0 %v3611
        %3778 = vmatprep.subr.mxu0 0.0
        %3779 = vmatpush1.msra.mxu0 %v3612
        %3780 = vmatprep.subr.mxu0 0.0
        %3781 = vmatpush1.msra.mxu0 %v3613
        %3782 = vmatprep.subr.mxu0 0.0
        %3783 = vmatpush1.msra.mxu0 %v3614
        %3784 = vmatprep.subr.mxu0 0.0
        %3785 = vmatpush1.msra.mxu0 %v3615
        %3786 = vmatprep.subr.mxu0 0.0
        %3787 = vmatpush1.msra.mxu0 %v3616
        %3788 = vmatprep.subr.mxu0 0.0
        %3789 = vmatpush1.msra.mxu0 %v3617
        %3790 = vmatprep.subr.mxu0 0.0
        %3791 = vmatpush1.msra.mxu0 %v3618
        %3792 = vmatprep.subr.mxu0 0.0
        %3793 = vmatpush1.msra.mxu0 0.0
        %3794 = vmatprep.subr.mxu0 0.0
        %3795 = vmatpush1.msra.mxu0 0.0
        %3796 = vmatprep.subr.mxu0 0.0
        %3797 = vmatpush1.msra.mxu0 0.0
        %3798 = vmatprep.subr.mxu0 0.0
        %3799 = vmatpush1.msra.mxu0 0.0
        %3800 = vmatprep.subr.mxu0 0.0
        %3801 = vmatpush1.msra.mxu0 0.0
        %3802 = vmatprep.subr.mxu0 0.0
        %3803 = vmatpush1.msra.mxu0 0.0
        %3804 = vmatprep.subr.mxu0 0.0
        %3805 = vmatpush1.msra.mxu0 0.0
        %3806 = vmatprep.subr.mxu0 0.0
        %3807 = vmatpush1.msra.mxu0 0.0
        %3808 = vmatprep.subr.mxu0 0.0
        %3809 = vmatpush1.msra.mxu0 0.0
        %3810 = vmatprep.subr.mxu0 0.0
        %3811 = vmatpush1.msra.mxu0 0.0
        %3812 = vmatprep.subr.mxu0 0.0
        %3813 = vmatpush1.msra.mxu0 0.0
        %3814 = vmatprep.subr.mxu0 0.0
        %3815 = vmatpush1.msra.mxu0 0.0
        %3816 = vmatprep.subr.mxu0 0.0
        %3817 = vmatpush1.msra.mxu0 0.0
        %3818 = vmatprep.subr.mxu0 0.0
        %3819 = vmatpush1.msra.mxu0 0.0
        %3820 = vmatprep.subr.mxu0 0.0
        %3821 = vmatpush1.msra.mxu0 0.0
        %3822 = vmatprep.subr.mxu0 0.0
        %3823 = vmatpush1.msra.mxu0 0.0
        %3824 = vmatprep.mubr.f32.mxu0 0.0
        %3825 = vmatmul.mubr.f32.gmra.mrb[0].mxu0 %v3593
        %v3826 = vpop.f32.mrb[0].mxu0
        %v3827 = vadd.f32 %v3712, %v3826
        %v3828 = vpop.f32.mrb[0].mxu0
        %3829 = vmatprep.mubr.f32.mxu0 0.0
        %3830 = vmatmul.mubr.f32.gmra.mrb[0].mxu0 %v3594
        %v3831 = vpop.f32.mrb[0].mxu0
        %v3832 = vadd.f32 %v3717, %v3831
        %v3833 = vpop.f32.mrb[0].mxu0
        %3834 = vmatprep.mubr.f32.mxu0 0.0
        %3835 = vmatmul.mubr.f32.gmra.mrb[0].mxu0 %v3595
        %v3836 = vpop.f32.mrb[0].mxu0
        %v3837 = vadd.f32 %v3722, %v3836
        %v3838 = vpop.f32.mrb[0].mxu0
        %3839 = vmatprep.mubr.f32.mxu0 0.0
        %3840 = vmatmul.mubr.f32.gmra.mrb[0].mxu0 %v3596
        %v3841 = vpop.f32.mrb[0].mxu0
        %v3842 = vadd.f32 %v3727, %v3841
        %v3843 = vpop.f32.mrb[0].mxu0
        %3844 = vmatprep.mubr.f32.mxu0 0.0
        %3845 = vmatmul.mubr.f32.gmra.mrb[0].mxu0 %v3597
        %v3846 = vpop.f32.mrb[0].mxu0
        %v3847 = vadd.f32 %v3732, %v3846
        %v3848 = vpop.f32.mrb[0].mxu0
        %3849 = vmatprep.mubr.f32.mxu0 0.0
        %3850 = vmatmul.mubr.f32.gmra.mrb[0].mxu0 %v3598
        %v3851 = vpop.f32.mrb[0].mxu0
        %v3852 = vadd.f32 %v3737, %v3851
        %v3853 = vpop.f32.mrb[0].mxu0
        %3854 = vmatprep.mubr.f32.mxu0 0.0
        %3855 = vmatmul.mubr.f32.gmra.mrb[0].mxu0 %v3599
        %v3856 = vpop.f32.mrb[0].mxu0
        %v3857 = vadd.f32 %v3742, %v3856
        %v3858 = vpop.f32.mrb[0].mxu0
        %3859 = vmatprep.mubr.f32.mxu0 0.0
        %3860 = vmatmul.mubr.f32.gmra.mrb[0].mxu0 %v3600
        %v3861 = vpop.f32.mrb[0].mxu0
        %v3862 = vadd.f32 %v3747, %v3861
        %v3863 = vpop.f32.mrb[0].mxu0
        %3864 = vmatprep.mubr.f32.mxu0 0.0
        %3865 = vmatmul.mubr.f32.gmra.mrb[0].mxu0 %v3601
        %v3866 = vpop.f32.mrb[0].mxu0
        %v3867 = vadd.f32 %v3752, %v3866
        %v3868 = vpop.f32.mrb[0].mxu0
        %3869 = vmatprep.mubr.f32.mxu0 0.0
        %3870 = vmatmul.mubr.f32.gmra.mrb[0].mxu0 %v3602
        %v3871 = vpop.f32.mrb[0].mxu0
        %v3872 = vadd.f32 %v3757, %v3871
        %v3873 = vpop.f32.mrb[0].mxu0
        %3874 = vdwg.mxu0
        %v3875 = vld [vmem:[#allocation3 + $0x2] sm:$0xff]
        %v3876 = vld [vmem:[#allocation3 + $0xa] sm:$0xff]
        %v3877 = vld [vmem:[#allocation3 + $0x12] sm:$0xff]
        %v3878 = vld [vmem:[#allocation3 + $0x1a] sm:$0xff]
        %v3879 = vld [vmem:[#allocation3 + $0x22] sm:$0xff]
        %v3880 = vld [vmem:[#allocation3 + $0x2a] sm:$0xff]
        %v3881 = vld [vmem:[#allocation3 + $0x32] sm:$0xff]
        %v3882 = vld [vmem:[#allocation3 + $0x3a] sm:$0xff]
        %v3883 = vld [vmem:[#allocation3 + $0x42] sm:$0xff]
        %v3884 = vld [vmem:[#allocation3 + $0x4a] sm:$0xff]
        %v3885 = vld [vmem:[#allocation12 + $0x100] sm:$0xff]
        %v3886 = vld [vmem:[#allocation12 + $0x108] sm:$0xff]
        %v3887 = vld [vmem:[#allocation12 + $0x110] sm:$0xff]
        %v3888 = vld [vmem:[#allocation12 + $0x118] sm:$0xff]
        %v3889 = vld [vmem:[#allocation12 + $0x120] sm:$0xff]
        %v3890 = vld [vmem:[#allocation12 + $0x128] sm:$0xff]
        %v3891 = vld [vmem:[#allocation12 + $0x130] sm:$0xff]
        %v3892 = vld [vmem:[#allocation12 + $0x138] sm:$0xff]
        %v3893 = vld [vmem:[#allocation12 + $0x140] sm:$0xff]
        %v3894 = vld [vmem:[#allocation12 + $0x148] sm:$0xff]
        %v3895 = vld [vmem:[#allocation12 + $0x150] sm:$0xff]
        %v3896 = vld [vmem:[#allocation12 + $0x158] sm:$0xff]
        %v3897 = vld [vmem:[#allocation12 + $0x160] sm:$0xff]
        %v3898 = vld [vmem:[#allocation12 + $0x168] sm:$0xff]
        %v3899 = vld [vmem:[#allocation12 + $0x170] sm:$0xff]
        %v3900 = vld [vmem:[#allocation12 + $0x178] sm:$0xff]
        %3901 = vmatprep.subr.mxu0 0.0
        %3902 = vmatpush1.msra.mxu0 %v3885
        %3903 = vmatprep.subr.mxu0 0.0
        %3904 = vmatpush1.msra.mxu0 %v3886
        %3905 = vmatprep.subr.mxu0 0.0
        %3906 = vmatpush1.msra.mxu0 %v3887
        %3907 = vmatprep.subr.mxu0 0.0
        %3908 = vmatpush1.msra.mxu0 %v3888
        %3909 = vmatprep.subr.mxu0 0.0
        %3910 = vmatpush1.msra.mxu0 %v3889
        %3911 = vmatprep.subr.mxu0 0.0
        %3912 = vmatpush1.msra.mxu0 %v3890
        %3913 = vmatprep.subr.mxu0 0.0
        %3914 = vmatpush1.msra.mxu0 %v3891
        %3915 = vmatprep.subr.mxu0 0.0
        %3916 = vmatpush1.msra.mxu0 %v3892
        %3917 = vmatprep.subr.mxu0 0.0
        %3918 = vmatpush1.msra.mxu0 %v3893
        %3919 = vmatprep.subr.mxu0 0.0
        %3920 = vmatpush1.msra.mxu0 %v3894
        %3921 = vmatprep.subr.mxu0 0.0
        %3922 = vmatpush1.msra.mxu0 %v3895
        %3923 = vmatprep.subr.mxu0 0.0
        %3924 = vmatpush1.msra.mxu0 %v3896
        %3925 = vmatprep.subr.mxu0 0.0
        %3926 = vmatpush1.msra.mxu0 %v3897
        %3927 = vmatprep.subr.mxu0 0.0
        %3928 = vmatpush1.msra.mxu0 %v3898
        %3929 = vmatprep.subr.mxu0 0.0
        %3930 = vmatpush1.msra.mxu0 %v3899
        %3931 = vmatprep.subr.mxu0 0.0
        %3932 = vmatpush1.msra.mxu0 %v3900
        %3933 = vmatprep.subr.mxu0 0.0
        %3934 = vmatpush1.msra.mxu0 0.0
        %3935 = vmatprep.subr.mxu0 0.0
        %3936 = vmatpush1.msra.mxu0 0.0
        %3937 = vmatprep.subr.mxu0 0.0
        %3938 = vmatpush1.msra.mxu0 0.0
        %3939 = vmatprep.subr.mxu0 0.0
        %3940 = vmatpush1.msra.mxu0 0.0
        %3941 = vmatprep.subr.mxu0 0.0
        %3942 = vmatpush1.msra.mxu0 0.0
        %3943 = vmatprep.subr.mxu0 0.0
        %3944 = vmatpush1.msra.mxu0 0.0
        %3945 = vmatprep.subr.mxu0 0.0
        %3946 = vmatpush1.msra.mxu0 0.0
        %3947 = vmatprep.subr.mxu0 0.0
        %3948 = vmatpush1.msra.mxu0 0.0
        %3949 = vmatprep.subr.mxu0 0.0
        %3950 = vmatpush1.msra.mxu0 0.0
        %3951 = vmatprep.subr.mxu0 0.0
        %3952 = vmatpush1.msra.mxu0 0.0
        %3953 = vmatprep.subr.mxu0 0.0
        %3954 = vmatpush1.msra.mxu0 0.0
        %3955 = vmatprep.subr.mxu0 0.0
        %3956 = vmatpush1.msra.mxu0 0.0
        %3957 = vmatprep.subr.mxu0 0.0
        %3958 = vmatpush1.msra.mxu0 0.0
        %3959 = vmatprep.subr.mxu0 0.0
        %3960 = vmatpush1.msra.mxu0 0.0
        %3961 = vmatprep.subr.mxu0 0.0
        %3962 = vmatpush1.msra.mxu0 0.0
        %3963 = vmatprep.subr.mxu0 0.0
        %3964 = vmatpush1.msra.mxu0 0.0
        %3965 = vmatprep.mubr.f32.mxu0 0.0
        %3966 = vmatmul.mubr.f32.gmra.mrb[0].mxu0 %v3875
        %v3967 = vpop.f32.mrb[0].mxu0
        %v3968 = vadd.f32 0.0, %v3967
        %v3969 = vpop.f32.mrb[0].mxu0
        %3970 = vmatprep.mubr.f32.mxu0 0.0
        %3971 = vmatmul.mubr.f32.gmra.mrb[0].mxu0 %v3876
        %v3972 = vpop.f32.mrb[0].mxu0
        %v3973 = vadd.f32 0.0, %v3972
        %v3974 = vpop.f32.mrb[0].mxu0
        %3975 = vmatprep.mubr.f32.mxu0 0.0
        %3976 = vmatmul.mubr.f32.gmra.mrb[0].mxu0 %v3877
        %v3977 = vpop.f32.mrb[0].mxu0
        %v3978 = vadd.f32 0.0, %v3977
        %v3979 = vpop.f32.mrb[0].mxu0
        %3980 = vmatprep.mubr.f32.mxu0 0.0
        %3981 = vmatmul.mubr.f32.gmra.mrb[0].mxu0 %v3878
        %v3982 = vpop.f32.mrb[0].mxu0
        %v3983 = vadd.f32 0.0, %v3982
        %v3984 = vpop.f32.mrb[0].mxu0
        %3985 = vmatprep.mubr.f32.mxu0 0.0
        %3986 = vmatmul.mubr.f32.gmra.mrb[0].mxu0 %v3879
        %v3987 = vpop.f32.mrb[0].mxu0
        %v3988 = vadd.f32 0.0, %v3987
        %v3989 = vpop.f32.mrb[0].mxu0
        %3990 = vmatprep.mubr.f32.mxu0 0.0
        %3991 = vmatmul.mubr.f32.gmra.mrb[0].mxu0 %v3880
        %v3992 = vpop.f32.mrb[0].mxu0
        %v3993 = vadd.f32 0.0, %v3992
        %v3994 = vpop.f32.mrb[0].mxu0
        %3995 = vmatprep.mubr.f32.mxu0 0.0
        %3996 = vmatmul.mubr.f32.gmra.mrb[0].mxu0 %v3881
        %v3997 = vpop.f32.mrb[0].mxu0
        %v3998 = vadd.f32 0.0, %v3997
        %v3999 = vpop.f32.mrb[0].mxu0
        %4000 = vmatprep.mubr.f32.mxu0 0.0
        %4001 = vmatmul.mubr.f32.gmra.mrb[0].mxu0 %v3882
        %v4002 = vpop.f32.mrb[0].mxu0
        %v4003 = vadd.f32 0.0, %v4002
        %v4004 = vpop.f32.mrb[0].mxu0
        %4005 = vmatprep.mubr.f32.mxu0 0.0
        %4006 = vmatmul.mubr.f32.gmra.mrb[0].mxu0 %v3883
        %v4007 = vpop.f32.mrb[0].mxu0
        %v4008 = vadd.f32 0.0, %v4007
        %v4009 = vpop.f32.mrb[0].mxu0
        %4010 = vmatprep.mubr.f32.mxu0 0.0
        %4011 = vmatmul.mubr.f32.gmra.mrb[0].mxu0 %v3884
        %v4012 = vpop.f32.mrb[0].mxu0
        %v4013 = vadd.f32 0.0, %v4012
        %v4014 = vpop.f32.mrb[0].mxu0
        %4015 = vdwg.mxu0
        %v4016 = vadd.f32 %v3827, %v3968
        %v4017 = vadd.f32 %v3832, %v3973
        %v4018 = vadd.f32 %v3837, %v3978
        %v4019 = vadd.f32 %v3842, %v3983
        %v4020 = vadd.f32 %v3847, %v3988
        %v4021 = vadd.f32 %v3852, %v3993
        %v4022 = vadd.f32 %v3857, %v3998
        %v4023 = vadd.f32 %v3862, %v4003
        %v4024 = vadd.f32 %v3867, %v4008
        %v4025 = vadd.f32 %v3872, %v4013
        %v4026 = vld [vmem:[#allocation3 + $0xa] sm:$0xff]
        %v4027 = vld [vmem:[#allocation3 + $0x12] sm:$0xff]
        %v4028 = vld [vmem:[#allocation3 + $0x1a] sm:$0xff]
        %v4029 = vld [vmem:[#allocation3 + $0x22] sm:$0xff]
        %v4030 = vld [vmem:[#allocation3 + $0x2a] sm:$0xff]
        %v4031 = vld [vmem:[#allocation3 + $0x32] sm:$0xff]
        %v4032 = vld [vmem:[#allocation3 + $0x3a] sm:$0xff]
        %v4033 = vld [vmem:[#allocation3 + $0x42] sm:$0xff]
        %v4034 = vld [vmem:[#allocation3 + $0x4a] sm:$0xff]
        %v4035 = vld [vmem:[#allocation3 + $0x52] sm:$0xff]
        %v4036 = vld [vmem:[#allocation12 + $0x180] sm:$0xff]
        %v4037 = vld [vmem:[#allocation12 + $0x188] sm:$0xff]
        %v4038 = vld [vmem:[#allocation12 + $0x190] sm:$0xff]
        %v4039 = vld [vmem:[#allocation12 + $0x198] sm:$0xff]
        %v4040 = vld [vmem:[#allocation12 + $0x1a0] sm:$0xff]
        %v4041 = vld [vmem:[#allocation12 + $0x1a8] sm:$0xff]
        %v4042 = vld [vmem:[#allocation12 + $0x1b0] sm:$0xff]
        %v4043 = vld [vmem:[#allocation12 + $0x1b8] sm:$0xff]
        %v4044 = vld [vmem:[#allocation12 + $0x1c0] sm:$0xff]
        %v4045 = vld [vmem:[#allocation12 + $0x1c8] sm:$0xff]
        %v4046 = vld [vmem:[#allocation12 + $0x1d0] sm:$0xff]
        %v4047 = vld [vmem:[#allocation12 + $0x1d8] sm:$0xff]
        %v4048 = vld [vmem:[#allocation12 + $0x1e0] sm:$0xff]
        %v4049 = vld [vmem:[#allocation12 + $0x1e8] sm:$0xff]
        %v4050 = vld [vmem:[#allocation12 + $0x1f0] sm:$0xff]
        %v4051 = vld [vmem:[#allocation12 + $0x1f8] sm:$0xff]
        %4052 = vmatprep.subr.mxu0 0.0
        %4053 = vmatpush1.msra.mxu0 %v4036
        %4054 = vmatprep.subr.mxu0 0.0
        %4055 = vmatpush1.msra.mxu0 %v4037
        %4056 = vmatprep.subr.mxu0 0.0
        %4057 = vmatpush1.msra.mxu0 %v4038
        %4058 = vmatprep.subr.mxu0 0.0
        %4059 = vmatpush1.msra.mxu0 %v4039
        %4060 = vmatprep.subr.mxu0 0.0
        %4061 = vmatpush1.msra.mxu0 %v4040
        %4062 = vmatprep.subr.mxu0 0.0
        %4063 = vmatpush1.msra.mxu0 %v4041
        %4064 = vmatprep.subr.mxu0 0.0
        %4065 = vmatpush1.msra.mxu0 %v4042
        %4066 = vmatprep.subr.mxu0 0.0
        %4067 = vmatpush1.msra.mxu0 %v4043
        %4068 = vmatprep.subr.mxu0 0.0
        %4069 = vmatpush1.msra.mxu0 %v4044
        %4070 = vmatprep.subr.mxu0 0.0
        %4071 = vmatpush1.msra.mxu0 %v4045
        %4072 = vmatprep.subr.mxu0 0.0
        %4073 = vmatpush1.msra.mxu0 %v4046
        %4074 = vmatprep.subr.mxu0 0.0
        %4075 = vmatpush1.msra.mxu0 %v4047
        %4076 = vmatprep.subr.mxu0 0.0
        %4077 = vmatpush1.msra.mxu0 %v4048
        %4078 = vmatprep.subr.mxu0 0.0
        %4079 = vmatpush1.msra.mxu0 %v4049
        %4080 = vmatprep.subr.mxu0 0.0
        %4081 = vmatpush1.msra.mxu0 %v4050
        %4082 = vmatprep.subr.mxu0 0.0
        %4083 = vmatpush1.msra.mxu0 %v4051
        %4084 = vmatprep.subr.mxu0 0.0
        %4085 = vmatpush1.msra.mxu0 0.0
        %4086 = vmatprep.subr.mxu0 0.0
        %4087 = vmatpush1.msra.mxu0 0.0
        %4088 = vmatprep.subr.mxu0 0.0
        %4089 = vmatpush1.msra.mxu0 0.0
        %4090 = vmatprep.subr.mxu0 0.0
        %4091 = vmatpush1.msra.mxu0 0.0
        %4092 = vmatprep.subr.mxu0 0.0
        %4093 = vmatpush1.msra.mxu0 0.0
        %4094 = vmatprep.subr.mxu0 0.0
        %4095 = vmatpush1.msra.mxu0 0.0
        %4096 = vmatprep.subr.mxu0 0.0
        %4097 = vmatpush1.msra.mxu0 0.0
        %4098 = vmatprep.subr.mxu0 0.0
        %4099 = vmatpush1.msra.mxu0 0.0
        %4100 = vmatprep.subr.mxu0 0.0
        %4101 = vmatpush1.msra.mxu0 0.0
        %4102 = vmatprep.subr.mxu0 0.0
        %4103 = vmatpush1.msra.mxu0 0.0
        %4104 = vmatprep.subr.mxu0 0.0
        %4105 = vmatpush1.msra.mxu0 0.0
        %4106 = vmatprep.subr.mxu0 0.0
        %4107 = vmatpush1.msra.mxu0 0.0
        %4108 = vmatprep.subr.mxu0 0.0
        %4109 = vmatpush1.msra.mxu0 0.0
        %4110 = vmatprep.subr.mxu0 0.0
        %4111 = vmatpush1.msra.mxu0 0.0
        %4112 = vmatprep.subr.mxu0 0.0
        %4113 = vmatpush1.msra.mxu0 0.0
        %4114 = vmatprep.subr.mxu0 0.0
        %4115 = vmatpush1.msra.mxu0 0.0
        %4116 = vmatprep.mubr.f32.mxu0 0.0
        %4117 = vmatmul.mubr.f32.gmra.mrb[0].mxu0 %v4026
        %v4118 = vpop.f32.mrb[0].mxu0
        %v4119 = vadd.f32 0.0, %v4118
        %v4120 = vpop.f32.mrb[0].mxu0
        %4121 = vmatprep.mubr.f32.mxu0 0.0
        %4122 = vmatmul.mubr.f32.gmra.mrb[0].mxu0 %v4027
        %v4123 = vpop.f32.mrb[0].mxu0
        %v4124 = vadd.f32 0.0, %v4123
        %v4125 = vpop.f32.mrb[0].mxu0
        %4126 = vmatprep.mubr.f32.mxu0 0.0
        %4127 = vmatmul.mubr.f32.gmra.mrb[0].mxu0 %v4028
        %v4128 = vpop.f32.mrb[0].mxu0
        %v4129 = vadd.f32 0.0, %v4128
        %v4130 = vpop.f32.mrb[0].mxu0
        %4131 = vmatprep.mubr.f32.mxu0 0.0
        %4132 = vmatmul.mubr.f32.gmra.mrb[0].mxu0 %v4029
        %v4133 = vpop.f32.mrb[0].mxu0
        %v4134 = vadd.f32 0.0, %v4133
        %v4135 = vpop.f32.mrb[0].mxu0
        %4136 = vmatprep.mubr.f32.mxu0 0.0
        %4137 = vmatmul.mubr.f32.gmra.mrb[0].mxu0 %v4030
        %v4138 = vpop.f32.mrb[0].mxu0
        %v4139 = vadd.f32 0.0, %v4138
        %v4140 = vpop.f32.mrb[0].mxu0
        %4141 = vmatprep.mubr.f32.mxu0 0.0
        %4142 = vmatmul.mubr.f32.gmra.mrb[0].mxu0 %v4031
        %v4143 = vpop.f32.mrb[0].mxu0
        %v4144 = vadd.f32 0.0, %v4143
        %v4145 = vpop.f32.mrb[0].mxu0
        %4146 = vmatprep.mubr.f32.mxu0 0.0
        %4147 = vmatmul.mubr.f32.gmra.mrb[0].mxu0 %v4032
        %v4148 = vpop.f32.mrb[0].mxu0
        %v4149 = vadd.f32 0.0, %v4148
        %v4150 = vpop.f32.mrb[0].mxu0
        %4151 = vmatprep.mubr.f32.mxu0 0.0
        %4152 = vmatmul.mubr.f32.gmra.mrb[0].mxu0 %v4033
        %v4153 = vpop.f32.mrb[0].mxu0
        %v4154 = vadd.f32 0.0, %v4153
        %v4155 = vpop.f32.mrb[0].mxu0
        %4156 = vmatprep.mubr.f32.mxu0 0.0
        %4157 = vmatmul.mubr.f32.gmra.mrb[0].mxu0 %v4034
        %v4158 = vpop.f32.mrb[0].mxu0
        %v4159 = vadd.f32 0.0, %v4158
        %v4160 = vpop.f32.mrb[0].mxu0
        %4161 = vmatprep.mubr.f32.mxu0 0.0
        %4162 = vmatmul.mubr.f32.gmra.mrb[0].mxu0 %v4035
        %v4163 = vpop.f32.mrb[0].mxu0
        %v4164 = vadd.f32 0.0, %v4163
        %v4165 = vpop.f32.mrb[0].mxu0
        %4166 = vdwg.mxu0
        %v4167 = vadd.f32 %v4016, %v4119
        %v4168 = vadd.f32 %v4017, %v4124
        %v4169 = vadd.f32 %v4018, %v4129
        %v4170 = vadd.f32 %v4019, %v4134
        %v4171 = vadd.f32 %v4020, %v4139
        %v4172 = vadd.f32 %v4021, %v4144
        %v4173 = vadd.f32 %v4022, %v4149
        %v4174 = vadd.f32 %v4023, %v4154
        %v4175 = vadd.f32 %v4024, %v4159
        %v4176 = vadd.f32 %v4025, %v4164
        %v4177 = vld [vmem:[#allocation3 + $0xb] sm:$0xff]
        %v4178 = vld [vmem:[#allocation3 + $0x13] sm:$0xff]
        %v4179 = vld [vmem:[#allocation3 + $0x1b] sm:$0xff]
        %v4180 = vld [vmem:[#allocation3 + $0x23] sm:$0xff]
        %v4181 = vld [vmem:[#allocation3 + $0x2b] sm:$0xff]
        %v4182 = vld [vmem:[#allocation3 + $0x33] sm:$0xff]
        %v4183 = vld [vmem:[#allocation3 + $0x3b] sm:$0xff]
        %v4184 = vld [vmem:[#allocation3 + $0x43] sm:$0xff]
        %v4185 = vld [vmem:[#allocation3 + $0x4b] sm:$0xff]
        %v4186 = vld [vmem:[#allocation3 + $0x53] sm:$0xff]
        %v4187 = vld [vmem:[#allocation12 + $0x200] sm:$0xff]
        %v4188 = vld [vmem:[#allocation12 + $0x208] sm:$0xff]
        %v4189 = vld [vmem:[#allocation12 + $0x210] sm:$0xff]
        %v4190 = vld [vmem:[#allocation12 + $0x218] sm:$0xff]
        %v4191 = vld [vmem:[#allocation12 + $0x220] sm:$0xff]
        %v4192 = vld [vmem:[#allocation12 + $0x228] sm:$0xff]
        %v4193 = vld [vmem:[#allocation12 + $0x230] sm:$0xff]
        %v4194 = vld [vmem:[#allocation12 + $0x238] sm:$0xff]
        %v4195 = vld [vmem:[#allocation12 + $0x240] sm:$0xff]
        %v4196 = vld [vmem:[#allocation12 + $0x248] sm:$0xff]
        %v4197 = vld [vmem:[#allocation12 + $0x250] sm:$0xff]
        %v4198 = vld [vmem:[#allocation12 + $0x258] sm:$0xff]
        %v4199 = vld [vmem:[#allocation12 + $0x260] sm:$0xff]
        %v4200 = vld [vmem:[#allocation12 + $0x268] sm:$0xff]
        %v4201 = vld [vmem:[#allocation12 + $0x270] sm:$0xff]
        %v4202 = vld [vmem:[#allocation12 + $0x278] sm:$0xff]
        %4203 = vmatprep.subr.mxu0 0.0
        %4204 = vmatpush1.msra.mxu0 %v4187
        %4205 = vmatprep.subr.mxu0 0.0
        %4206 = vmatpush1.msra.mxu0 %v4188
        %4207 = vmatprep.subr.mxu0 0.0
        %4208 = vmatpush1.msra.mxu0 %v4189
        %4209 = vmatprep.subr.mxu0 0.0
        %4210 = vmatpush1.msra.mxu0 %v4190
        %4211 = vmatprep.subr.mxu0 0.0
        %4212 = vmatpush1.msra.mxu0 %v4191
        %4213 = vmatprep.subr.mxu0 0.0
        %4214 = vmatpush1.msra.mxu0 %v4192
        %4215 = vmatprep.subr.mxu0 0.0
        %4216 = vmatpush1.msra.mxu0 %v4193
        %4217 = vmatprep.subr.mxu0 0.0
        %4218 = vmatpush1.msra.mxu0 %v4194
        %4219 = vmatprep.subr.mxu0 0.0
        %4220 = vmatpush1.msra.mxu0 %v4195
        %4221 = vmatprep.subr.mxu0 0.0
        %4222 = vmatpush1.msra.mxu0 %v4196
        %4223 = vmatprep.subr.mxu0 0.0
        %4224 = vmatpush1.msra.mxu0 %v4197
        %4225 = vmatprep.subr.mxu0 0.0
        %4226 = vmatpush1.msra.mxu0 %v4198
        %4227 = vmatprep.subr.mxu0 0.0
        %4228 = vmatpush1.msra.mxu0 %v4199
        %4229 = vmatprep.subr.mxu0 0.0
        %4230 = vmatpush1.msra.mxu0 %v4200
        %4231 = vmatprep.subr.mxu0 0.0
        %4232 = vmatpush1.msra.mxu0 %v4201
        %4233 = vmatprep.subr.mxu0 0.0
        %4234 = vmatpush1.msra.mxu0 %v4202
        %4235 = vmatprep.subr.mxu0 0.0
        %4236 = vmatpush1.msra.mxu0 0.0
        %4237 = vmatprep.subr.mxu0 0.0
        %4238 = vmatpush1.msra.mxu0 0.0
        %4239 = vmatprep.subr.mxu0 0.0
        %4240 = vmatpush1.msra.mxu0 0.0
        %4241 = vmatprep.subr.mxu0 0.0
        %4242 = vmatpush1.msra.mxu0 0.0
        %4243 = vmatprep.subr.mxu0 0.0
        %4244 = vmatpush1.msra.mxu0 0.0
        %4245 = vmatprep.subr.mxu0 0.0
        %4246 = vmatpush1.msra.mxu0 0.0
        %4247 = vmatprep.subr.mxu0 0.0
        %4248 = vmatpush1.msra.mxu0 0.0
        %4249 = vmatprep.subr.mxu0 0.0
        %4250 = vmatpush1.msra.mxu0 0.0
        %4251 = vmatprep.subr.mxu0 0.0
        %4252 = vmatpush1.msra.mxu0 0.0
        %4253 = vmatprep.subr.mxu0 0.0
        %4254 = vmatpush1.msra.mxu0 0.0
        %4255 = vmatprep.subr.mxu0 0.0
        %4256 = vmatpush1.msra.mxu0 0.0
        %4257 = vmatprep.subr.mxu0 0.0
        %4258 = vmatpush1.msra.mxu0 0.0
        %4259 = vmatprep.subr.mxu0 0.0
        %4260 = vmatpush1.msra.mxu0 0.0
        %4261 = vmatprep.subr.mxu0 0.0
        %4262 = vmatpush1.msra.mxu0 0.0
        %4263 = vmatprep.subr.mxu0 0.0
        %4264 = vmatpush1.msra.mxu0 0.0
        %4265 = vmatprep.subr.mxu0 0.0
        %4266 = vmatpush1.msra.mxu0 0.0
        %4267 = vmatprep.mubr.f32.mxu0 0.0
        %4268 = vmatmul.mubr.f32.gmra.mrb[0].mxu0 %v4177
        %v4269 = vpop.f32.mrb[0].mxu0
        %v4270 = vadd.f32 0.0, %v4269
        %v4271 = vpop.f32.mrb[0].mxu0
        %4272 = vmatprep.mubr.f32.mxu0 0.0
        %4273 = vmatmul.mubr.f32.gmra.mrb[0].mxu0 %v4178
        %v4274 = vpop.f32.mrb[0].mxu0
        %v4275 = vadd.f32 0.0, %v4274
        %v4276 = vpop.f32.mrb[0].mxu0
        %4277 = vmatprep.mubr.f32.mxu0 0.0
        %4278 = vmatmul.mubr.f32.gmra.mrb[0].mxu0 %v4179
        %v4279 = vpop.f32.mrb[0].mxu0
        %v4280 = vadd.f32 0.0, %v4279
        %v4281 = vpop.f32.mrb[0].mxu0
        %4282 = vmatprep.mubr.f32.mxu0 0.0
        %4283 = vmatmul.mubr.f32.gmra.mrb[0].mxu0 %v4180
        %v4284 = vpop.f32.mrb[0].mxu0
        %v4285 = vadd.f32 0.0, %v4284
        %v4286 = vpop.f32.mrb[0].mxu0
        %4287 = vmatprep.mubr.f32.mxu0 0.0
        %4288 = vmatmul.mubr.f32.gmra.mrb[0].mxu0 %v4181
        %v4289 = vpop.f32.mrb[0].mxu0
        %v4290 = vadd.f32 0.0, %v4289
        %v4291 = vpop.f32.mrb[0].mxu0
        %4292 = vmatprep.mubr.f32.mxu0 0.0
        %4293 = vmatmul.mubr.f32.gmra.mrb[0].mxu0 %v4182
        %v4294 = vpop.f32.mrb[0].mxu0
        %v4295 = vadd.f32 0.0, %v4294
        %v4296 = vpop.f32.mrb[0].mxu0
        %4297 = vmatprep.mubr.f32.mxu0 0.0
        %4298 = vmatmul.mubr.f32.gmra.mrb[0].mxu0 %v4183
        %v4299 = vpop.f32.mrb[0].mxu0
        %v4300 = vadd.f32 0.0, %v4299
        %v4301 = vpop.f32.mrb[0].mxu0
        %4302 = vmatprep.mubr.f32.mxu0 0.0
        %4303 = vmatmul.mubr.f32.gmra.mrb[0].mxu0 %v4184
        %v4304 = vpop.f32.mrb[0].mxu0
        %v4305 = vadd.f32 0.0, %v4304
        %v4306 = vpop.f32.mrb[0].mxu0
        %4307 = vmatprep.mubr.f32.mxu0 0.0
        %4308 = vmatmul.mubr.f32.gmra.mrb[0].mxu0 %v4185
        %v4309 = vpop.f32.mrb[0].mxu0
        %v4310 = vadd.f32 0.0, %v4309
        %v4311 = vpop.f32.mrb[0].mxu0
        %4312 = vmatprep.mubr.f32.mxu0 0.0
        %4313 = vmatmul.mubr.f32.gmra.mrb[0].mxu0 %v4186
        %v4314 = vpop.f32.mrb[0].mxu0
        %v4315 = vadd.f32 0.0, %v4314
        %v4316 = vpop.f32.mrb[0].mxu0
        %4317 = vdwg.mxu0
        %v4318 = vadd.f32 %v4167, %v4270
        %v4319 = vadd.f32 %v4168, %v4275
        %v4320 = vadd.f32 %v4169, %v4280
        %v4321 = vadd.f32 %v4170, %v4285
        %v4322 = vadd.f32 %v4171, %v4290
        %v4323 = vadd.f32 %v4172, %v4295
        %v4324 = vadd.f32 %v4173, %v4300
        %v4325 = vadd.f32 %v4174, %v4305
        %v4326 = vadd.f32 %v4175, %v4310
        %v4327 = vadd.f32 %v4176, %v4315
        %v4328 = vld [vmem:[#allocation3 + $0xc] sm:$0xff]
        %v4329 = vld [vmem:[#allocation3 + $0x14] sm:$0xff]
        %v4330 = vld [vmem:[#allocation3 + $0x1c] sm:$0xff]
        %v4331 = vld [vmem:[#allocation3 + $0x24] sm:$0xff]
        %v4332 = vld [vmem:[#allocation3 + $0x2c] sm:$0xff]
        %v4333 = vld [vmem:[#allocation3 + $0x34] sm:$0xff]
        %v4334 = vld [vmem:[#allocation3 + $0x3c] sm:$0xff]
        %v4335 = vld [vmem:[#allocation3 + $0x44] sm:$0xff]
        %v4336 = vld [vmem:[#allocation3 + $0x4c] sm:$0xff]
        %v4337 = vld [vmem:[#allocation3 + $0x54] sm:$0xff]
        %v4338 = vld [vmem:[#allocation12 + $0x280] sm:$0xff]
        %v4339 = vld [vmem:[#allocation12 + $0x288] sm:$0xff]
        %v4340 = vld [vmem:[#allocation12 + $0x290] sm:$0xff]
        %v4341 = vld [vmem:[#allocation12 + $0x298] sm:$0xff]
        %v4342 = vld [vmem:[#allocation12 + $0x2a0] sm:$0xff]
        %v4343 = vld [vmem:[#allocation12 + $0x2a8] sm:$0xff]
        %v4344 = vld [vmem:[#allocation12 + $0x2b0] sm:$0xff]
        %v4345 = vld [vmem:[#allocation12 + $0x2b8] sm:$0xff]
        %v4346 = vld [vmem:[#allocation12 + $0x2c0] sm:$0xff]
        %v4347 = vld [vmem:[#allocation12 + $0x2c8] sm:$0xff]
        %v4348 = vld [vmem:[#allocation12 + $0x2d0] sm:$0xff]
        %v4349 = vld [vmem:[#allocation12 + $0x2d8] sm:$0xff]
        %v4350 = vld [vmem:[#allocation12 + $0x2e0] sm:$0xff]
        %v4351 = vld [vmem:[#allocation12 + $0x2e8] sm:$0xff]
        %v4352 = vld [vmem:[#allocation12 + $0x2f0] sm:$0xff]
        %v4353 = vld [vmem:[#allocation12 + $0x2f8] sm:$0xff]
        %4354 = vmatprep.subr.mxu0 0.0
        %4355 = vmatpush1.msra.mxu0 %v4338
        %4356 = vmatprep.subr.mxu0 0.0
        %4357 = vmatpush1.msra.mxu0 %v4339
        %4358 = vmatprep.subr.mxu0 0.0
        %4359 = vmatpush1.msra.mxu0 %v4340
        %4360 = vmatprep.subr.mxu0 0.0
        %4361 = vmatpush1.msra.mxu0 %v4341
        %4362 = vmatprep.subr.mxu0 0.0
        %4363 = vmatpush1.msra.mxu0 %v4342
        %4364 = vmatprep.subr.mxu0 0.0
        %4365 = vmatpush1.msra.mxu0 %v4343
        %4366 = vmatprep.subr.mxu0 0.0
        %4367 = vmatpush1.msra.mxu0 %v4344
        %4368 = vmatprep.subr.mxu0 0.0
        %4369 = vmatpush1.msra.mxu0 %v4345
        %4370 = vmatprep.subr.mxu0 0.0
        %4371 = vmatpush1.msra.mxu0 %v4346
        %4372 = vmatprep.subr.mxu0 0.0
        %4373 = vmatpush1.msra.mxu0 %v4347
        %4374 = vmatprep.subr.mxu0 0.0
        %4375 = vmatpush1.msra.mxu0 %v4348
        %4376 = vmatprep.subr.mxu0 0.0
        %4377 = vmatpush1.msra.mxu0 %v4349
        %4378 = vmatprep.subr.mxu0 0.0
        %4379 = vmatpush1.msra.mxu0 %v4350
        %4380 = vmatprep.subr.mxu0 0.0
        %4381 = vmatpush1.msra.mxu0 %v4351
        %4382 = vmatprep.subr.mxu0 0.0
        %4383 = vmatpush1.msra.mxu0 %v4352
        %4384 = vmatprep.subr.mxu0 0.0
        %4385 = vmatpush1.msra.mxu0 %v4353
        %4386 = vmatprep.subr.mxu0 0.0
        %4387 = vmatpush1.msra.mxu0 0.0
        %4388 = vmatprep.subr.mxu0 0.0
        %4389 = vmatpush1.msra.mxu0 0.0
        %4390 = vmatprep.subr.mxu0 0.0
        %4391 = vmatpush1.msra.mxu0 0.0
        %4392 = vmatprep.subr.mxu0 0.0
        %4393 = vmatpush1.msra.mxu0 0.0
        %4394 = vmatprep.subr.mxu0 0.0
        %4395 = vmatpush1.msra.mxu0 0.0
        %4396 = vmatprep.subr.mxu0 0.0
        %4397 = vmatpush1.msra.mxu0 0.0
        %4398 = vmatprep.subr.mxu0 0.0
        %4399 = vmatpush1.msra.mxu0 0.0
        %4400 = vmatprep.subr.mxu0 0.0
        %4401 = vmatpush1.msra.mxu0 0.0
        %4402 = vmatprep.subr.mxu0 0.0
        %4403 = vmatpush1.msra.mxu0 0.0
        %4404 = vmatprep.subr.mxu0 0.0
        %4405 = vmatpush1.msra.mxu0 0.0
        %4406 = vmatprep.subr.mxu0 0.0
        %4407 = vmatpush1.msra.mxu0 0.0
        %4408 = vmatprep.subr.mxu0 0.0
        %4409 = vmatpush1.msra.mxu0 0.0
        %4410 = vmatprep.subr.mxu0 0.0
        %4411 = vmatpush1.msra.mxu0 0.0
        %4412 = vmatprep.subr.mxu0 0.0
        %4413 = vmatpush1.msra.mxu0 0.0
        %4414 = vmatprep.subr.mxu0 0.0
        %4415 = vmatpush1.msra.mxu0 0.0
        %4416 = vmatprep.subr.mxu0 0.0
        %4417 = vmatpush1.msra.mxu0 0.0
        %4418 = vmatprep.mubr.f32.mxu0 0.0
        %4419 = vmatmul.mubr.f32.gmra.mrb[0].mxu0 %v4328
        %v4420 = vpop.f32.mrb[0].mxu0
        %v4421 = vadd.f32 0.0, %v4420
        %v4422 = vpop.f32.mrb[0].mxu0
        %4423 = vmatprep.mubr.f32.mxu0 0.0
        %4424 = vmatmul.mubr.f32.gmra.mrb[0].mxu0 %v4329
        %v4425 = vpop.f32.mrb[0].mxu0
        %v4426 = vadd.f32 0.0, %v4425
        %v4427 = vpop.f32.mrb[0].mxu0
        %4428 = vmatprep.mubr.f32.mxu0 0.0
        %4429 = vmatmul.mubr.f32.gmra.mrb[0].mxu0 %v4330
        %v4430 = vpop.f32.mrb[0].mxu0
        %v4431 = vadd.f32 0.0, %v4430
        %v4432 = vpop.f32.mrb[0].mxu0
        %4433 = vmatprep.mubr.f32.mxu0 0.0
        %4434 = vmatmul.mubr.f32.gmra.mrb[0].mxu0 %v4331
        %v4435 = vpop.f32.mrb[0].mxu0
        %v4436 = vadd.f32 0.0, %v4435
        %v4437 = vpop.f32.mrb[0].mxu0
        %4438 = vmatprep.mubr.f32.mxu0 0.0
        %4439 = vmatmul.mubr.f32.gmra.mrb[0].mxu0 %v4332
        %v4440 = vpop.f32.mrb[0].mxu0
        %v4441 = vadd.f32 0.0, %v4440
        %v4442 = vpop.f32.mrb[0].mxu0
        %4443 = vmatprep.mubr.f32.mxu0 0.0
        %4444 = vmatmul.mubr.f32.gmra.mrb[0].mxu0 %v4333
        %v4445 = vpop.f32.mrb[0].mxu0
        %v4446 = vadd.f32 0.0, %v4445
        %v4447 = vpop.f32.mrb[0].mxu0
        %4448 = vmatprep.mubr.f32.mxu0 0.0
        %4449 = vmatmul.mubr.f32.gmra.mrb[0].mxu0 %v4334
        %v4450 = vpop.f32.mrb[0].mxu0
        %v4451 = vadd.f32 0.0, %v4450
        %v4452 = vpop.f32.mrb[0].mxu0
        %4453 = vmatprep.mubr.f32.mxu0 0.0
        %4454 = vmatmul.mubr.f32.gmra.mrb[0].mxu0 %v4335
        %v4455 = vpop.f32.mrb[0].mxu0
        %v4456 = vadd.f32 0.0, %v4455
        %v4457 = vpop.f32.mrb[0].mxu0
        %4458 = vmatprep.mubr.f32.mxu0 0.0
        %4459 = vmatmul.mubr.f32.gmra.mrb[0].mxu0 %v4336
        %v4460 = vpop.f32.mrb[0].mxu0
        %v4461 = vadd.f32 0.0, %v4460
        %v4462 = vpop.f32.mrb[0].mxu0
        %4463 = vmatprep.mubr.f32.mxu0 0.0
        %4464 = vmatmul.mubr.f32.gmra.mrb[0].mxu0 %v4337
        %v4465 = vpop.f32.mrb[0].mxu0
        %v4466 = vadd.f32 0.0, %v4465
        %v4467 = vpop.f32.mrb[0].mxu0
        %4468 = vdwg.mxu0
        %v4469 = vadd.f32 %v4318, %v4421
        %v4470 = vadd.f32 %v4319, %v4426
        %v4471 = vadd.f32 %v4320, %v4431
        %v4472 = vadd.f32 %v4321, %v4436
        %v4473 = vadd.f32 %v4322, %v4441
        %v4474 = vadd.f32 %v4323, %v4446
        %v4475 = vadd.f32 %v4324, %v4451
        %v4476 = vadd.f32 %v4325, %v4456
        %v4477 = vadd.f32 %v4326, %v4461
        %v4478 = vadd.f32 %v4327, %v4466
        %v4479 = vld [vmem:[#allocation3 + $0x14] sm:$0xff]
        %v4480 = vld [vmem:[#allocation3 + $0x1c] sm:$0xff]
        %v4481 = vld [vmem:[#allocation3 + $0x24] sm:$0xff]
        %v4482 = vld [vmem:[#allocation3 + $0x2c] sm:$0xff]
        %v4483 = vld [vmem:[#allocation3 + $0x34] sm:$0xff]
        %v4484 = vld [vmem:[#allocation3 + $0x3c] sm:$0xff]
        %v4485 = vld [vmem:[#allocation3 + $0x44] sm:$0xff]
        %v4486 = vld [vmem:[#allocation3 + $0x4c] sm:$0xff]
        %v4487 = vld [vmem:[#allocation3 + $0x54] sm:$0xff]
        %v4488 = vld [vmem:[#allocation3 + $0x5c] sm:$0xff]
        %v4489 = vld [vmem:[#allocation12 + $0x300] sm:$0xff]
        %v4490 = vld [vmem:[#allocation12 + $0x308] sm:$0xff]
        %v4491 = vld [vmem:[#allocation12 + $0x310] sm:$0xff]
        %v4492 = vld [vmem:[#allocation12 + $0x318] sm:$0xff]
        %v4493 = vld [vmem:[#allocation12 + $0x320] sm:$0xff]
        %v4494 = vld [vmem:[#allocation12 + $0x328] sm:$0xff]
        %v4495 = vld [vmem:[#allocation12 + $0x330] sm:$0xff]
        %v4496 = vld [vmem:[#allocation12 + $0x338] sm:$0xff]
        %v4497 = vld [vmem:[#allocation12 + $0x340] sm:$0xff]
        %v4498 = vld [vmem:[#allocation12 + $0x348] sm:$0xff]
        %v4499 = vld [vmem:[#allocation12 + $0x350] sm:$0xff]
        %v4500 = vld [vmem:[#allocation12 + $0x358] sm:$0xff]
        %v4501 = vld [vmem:[#allocation12 + $0x360] sm:$0xff]
        %v4502 = vld [vmem:[#allocation12 + $0x368] sm:$0xff]
        %v4503 = vld [vmem:[#allocation12 + $0x370] sm:$0xff]
        %v4504 = vld [vmem:[#allocation12 + $0x378] sm:$0xff]
        %4505 = vmatprep.subr.mxu0 0.0
        %4506 = vmatpush1.msra.mxu0 %v4489
        %4507 = vmatprep.subr.mxu0 0.0
        %4508 = vmatpush1.msra.mxu0 %v4490
        %4509 = vmatprep.subr.mxu0 0.0
        %4510 = vmatpush1.msra.mxu0 %v4491
        %4511 = vmatprep.subr.mxu0 0.0
        %4512 = vmatpush1.msra.mxu0 %v4492
        %4513 = vmatprep.subr.mxu0 0.0
        %4514 = vmatpush1.msra.mxu0 %v4493
        %4515 = vmatprep.subr.mxu0 0.0
        %4516 = vmatpush1.msra.mxu0 %v4494
        %4517 = vmatprep.subr.mxu0 0.0
        %4518 = vmatpush1.msra.mxu0 %v4495
        %4519 = vmatprep.subr.mxu0 0.0
        %4520 = vmatpush1.msra.mxu0 %v4496
        %4521 = vmatprep.subr.mxu0 0.0
        %4522 = vmatpush1.msra.mxu0 %v4497
        %4523 = vmatprep.subr.mxu0 0.0
        %4524 = vmatpush1.msra.mxu0 %v4498
        %4525 = vmatprep.subr.mxu0 0.0
        %4526 = vmatpush1.msra.mxu0 %v4499
        %4527 = vmatprep.subr.mxu0 0.0
        %4528 = vmatpush1.msra.mxu0 %v4500
        %4529 = vmatprep.subr.mxu0 0.0
        %4530 = vmatpush1.msra.mxu0 %v4501
        %4531 = vmatprep.subr.mxu0 0.0
        %4532 = vmatpush1.msra.mxu0 %v4502
        %4533 = vmatprep.subr.mxu0 0.0
        %4534 = vmatpush1.msra.mxu0 %v4503
        %4535 = vmatprep.subr.mxu0 0.0
        %4536 = vmatpush1.msra.mxu0 %v4504
        %4537 = vmatprep.subr.mxu0 0.0
        %4538 = vmatpush1.msra.mxu0 0.0
        %4539 = vmatprep.subr.mxu0 0.0
        %4540 = vmatpush1.msra.mxu0 0.0
        %4541 = vmatprep.subr.mxu0 0.0
        %4542 = vmatpush1.msra.mxu0 0.0
        %4543 = vmatprep.subr.mxu0 0.0
        %4544 = vmatpush1.msra.mxu0 0.0
        %4545 = vmatprep.subr.mxu0 0.0
        %4546 = vmatpush1.msra.mxu0 0.0
        %4547 = vmatprep.subr.mxu0 0.0
        %4548 = vmatpush1.msra.mxu0 0.0
        %4549 = vmatprep.subr.mxu0 0.0
        %4550 = vmatpush1.msra.mxu0 0.0
        %4551 = vmatprep.subr.mxu0 0.0
        %4552 = vmatpush1.msra.mxu0 0.0
        %4553 = vmatprep.subr.mxu0 0.0
        %4554 = vmatpush1.msra.mxu0 0.0
        %4555 = vmatprep.subr.mxu0 0.0
        %4556 = vmatpush1.msra.mxu0 0.0
        %4557 = vmatprep.subr.mxu0 0.0
        %4558 = vmatpush1.msra.mxu0 0.0
        %4559 = vmatprep.subr.mxu0 0.0
        %4560 = vmatpush1.msra.mxu0 0.0
        %4561 = vmatprep.subr.mxu0 0.0
        %4562 = vmatpush1.msra.mxu0 0.0
        %4563 = vmatprep.subr.mxu0 0.0
        %4564 = vmatpush1.msra.mxu0 0.0
        %4565 = vmatprep.subr.mxu0 0.0
        %4566 = vmatpush1.msra.mxu0 0.0
        %4567 = vmatprep.subr.mxu0 0.0
        %4568 = vmatpush1.msra.mxu0 0.0
        %4569 = vmatprep.mubr.f32.mxu0 0.0
        %4570 = vmatmul.mubr.f32.gmra.mrb[0].mxu0 %v4479
        %v4571 = vpop.f32.mrb[0].mxu0
        %v4572 = vadd.f32 0.0, %v4571
        %v4573 = vpop.f32.mrb[0].mxu0
        %4574 = vmatprep.mubr.f32.mxu0 0.0
        %4575 = vmatmul.mubr.f32.gmra.mrb[0].mxu0 %v4480
        %v4576 = vpop.f32.mrb[0].mxu0
        %v4577 = vadd.f32 0.0, %v4576
        %v4578 = vpop.f32.mrb[0].mxu0
        %4579 = vmatprep.mubr.f32.mxu0 0.0
        %4580 = vmatmul.mubr.f32.gmra.mrb[0].mxu0 %v4481
        %v4581 = vpop.f32.mrb[0].mxu0
        %v4582 = vadd.f32 0.0, %v4581
        %v4583 = vpop.f32.mrb[0].mxu0
        %4584 = vmatprep.mubr.f32.mxu0 0.0
        %4585 = vmatmul.mubr.f32.gmra.mrb[0].mxu0 %v4482
        %v4586 = vpop.f32.mrb[0].mxu0
        %v4587 = vadd.f32 0.0, %v4586
        %v4588 = vpop.f32.mrb[0].mxu0
        %4589 = vmatprep.mubr.f32.mxu0 0.0
        %4590 = vmatmul.mubr.f32.gmra.mrb[0].mxu0 %v4483
        %v4591 = vpop.f32.mrb[0].mxu0
        %v4592 = vadd.f32 0.0, %v4591
        %v4593 = vpop.f32.mrb[0].mxu0
        %4594 = vmatprep.mubr.f32.mxu0 0.0
        %4595 = vmatmul.mubr.f32.gmra.mrb[0].mxu0 %v4484
        %v4596 = vpop.f32.mrb[0].mxu0
        %v4597 = vadd.f32 0.0, %v4596
        %v4598 = vpop.f32.mrb[0].mxu0
        %4599 = vmatprep.mubr.f32.mxu0 0.0
        %4600 = vmatmul.mubr.f32.gmra.mrb[0].mxu0 %v4485
        %v4601 = vpop.f32.mrb[0].mxu0
        %v4602 = vadd.f32 0.0, %v4601
        %v4603 = vpop.f32.mrb[0].mxu0
        %4604 = vmatprep.mubr.f32.mxu0 0.0
        %4605 = vmatmul.mubr.f32.gmra.mrb[0].mxu0 %v4486
        %v4606 = vpop.f32.mrb[0].mxu0
        %v4607 = vadd.f32 0.0, %v4606
        %v4608 = vpop.f32.mrb[0].mxu0
        %4609 = vmatprep.mubr.f32.mxu0 0.0
        %4610 = vmatmul.mubr.f32.gmra.mrb[0].mxu0 %v4487
        %v4611 = vpop.f32.mrb[0].mxu0
        %v4612 = vadd.f32 0.0, %v4611
        %v4613 = vpop.f32.mrb[0].mxu0
        %4614 = vmatprep.mubr.f32.mxu0 0.0
        %4615 = vmatmul.mubr.f32.gmra.mrb[0].mxu0 %v4488
        %v4616 = vpop.f32.mrb[0].mxu0
        %v4617 = vadd.f32 0.0, %v4616
        %v4618 = vpop.f32.mrb[0].mxu0
        %4619 = vdwg.mxu0
        %v4620 = vadd.f32 %v4469, %v4572
        %v4621 = vadd.f32 %v4470, %v4577
        %v4622 = vadd.f32 %v4471, %v4582
        %v4623 = vadd.f32 %v4472, %v4587
        %v4624 = vadd.f32 %v4473, %v4592
        %v4625 = vadd.f32 %v4474, %v4597
        %v4626 = vadd.f32 %v4475, %v4602
        %v4627 = vadd.f32 %v4476, %v4607
        %v4628 = vadd.f32 %v4477, %v4612
        %v4629 = vadd.f32 %v4478, %v4617
        %v4630 = vld [vmem:[#allocation3 + $0x15] sm:$0xff]
        %v4631 = vld [vmem:[#allocation3 + $0x1d] sm:$0xff]
        %v4632 = vld [vmem:[#allocation3 + $0x25] sm:$0xff]
        %v4633 = vld [vmem:[#allocation3 + $0x2d] sm:$0xff]
        %v4634 = vld [vmem:[#allocation3 + $0x35] sm:$0xff]
        %v4635 = vld [vmem:[#allocation3 + $0x3d] sm:$0xff]
        %v4636 = vld [vmem:[#allocation3 + $0x45] sm:$0xff]
        %v4637 = vld [vmem:[#allocation3 + $0x4d] sm:$0xff]
        %v4638 = vld [vmem:[#allocation3 + $0x55] sm:$0xff]
        %v4639 = vld [vmem:[#allocation3 + $0x5d] sm:$0xff]
        %v4640 = vld [vmem:[#allocation12 + $0x380] sm:$0xff]
        %v4641 = vld [vmem:[#allocation12 + $0x388] sm:$0xff]
        %v4642 = vld [vmem:[#allocation12 + $0x390] sm:$0xff]
        %v4643 = vld [vmem:[#allocation12 + $0x398] sm:$0xff]
        %v4644 = vld [vmem:[#allocation12 + $0x3a0] sm:$0xff]
        %v4645 = vld [vmem:[#allocation12 + $0x3a8] sm:$0xff]
        %v4646 = vld [vmem:[#allocation12 + $0x3b0] sm:$0xff]
        %v4647 = vld [vmem:[#allocation12 + $0x3b8] sm:$0xff]
        %v4648 = vld [vmem:[#allocation12 + $0x3c0] sm:$0xff]
        %v4649 = vld [vmem:[#allocation12 + $0x3c8] sm:$0xff]
        %v4650 = vld [vmem:[#allocation12 + $0x3d0] sm:$0xff]
        %v4651 = vld [vmem:[#allocation12 + $0x3d8] sm:$0xff]
        %v4652 = vld [vmem:[#allocation12 + $0x3e0] sm:$0xff]
        %v4653 = vld [vmem:[#allocation12 + $0x3e8] sm:$0xff]
        %v4654 = vld [vmem:[#allocation12 + $0x3f0] sm:$0xff]
        %v4655 = vld [vmem:[#allocation12 + $0x3f8] sm:$0xff]
        %4656 = vmatprep.subr.mxu0 0.0
        %4657 = vmatpush1.msra.mxu0 %v4640
        %4658 = vmatprep.subr.mxu0 0.0
        %4659 = vmatpush1.msra.mxu0 %v4641
        %4660 = vmatprep.subr.mxu0 0.0
        %4661 = vmatpush1.msra.mxu0 %v4642
        %4662 = vmatprep.subr.mxu0 0.0
        %4663 = vmatpush1.msra.mxu0 %v4643
        %4664 = vmatprep.subr.mxu0 0.0
        %4665 = vmatpush1.msra.mxu0 %v4644
        %4666 = vmatprep.subr.mxu0 0.0
        %4667 = vmatpush1.msra.mxu0 %v4645
        %4668 = vmatprep.subr.mxu0 0.0
        %4669 = vmatpush1.msra.mxu0 %v4646
        %4670 = vmatprep.subr.mxu0 0.0
        %4671 = vmatpush1.msra.mxu0 %v4647
        %4672 = vmatprep.subr.mxu0 0.0
        %4673 = vmatpush1.msra.mxu0 %v4648
        %4674 = vmatprep.subr.mxu0 0.0
        %4675 = vmatpush1.msra.mxu0 %v4649
        %4676 = vmatprep.subr.mxu0 0.0
        %4677 = vmatpush1.msra.mxu0 %v4650
        %4678 = vmatprep.subr.mxu0 0.0
        %4679 = vmatpush1.msra.mxu0 %v4651
        %4680 = vmatprep.subr.mxu0 0.0
        %4681 = vmatpush1.msra.mxu0 %v4652
        %4682 = vmatprep.subr.mxu0 0.0
        %4683 = vmatpush1.msra.mxu0 %v4653
        %4684 = vmatprep.subr.mxu0 0.0
        %4685 = vmatpush1.msra.mxu0 %v4654
        %4686 = vmatprep.subr.mxu0 0.0
        %4687 = vmatpush1.msra.mxu0 %v4655
        %4688 = vmatprep.subr.mxu0 0.0
        %4689 = vmatpush1.msra.mxu0 0.0
        %4690 = vmatprep.subr.mxu0 0.0
        %4691 = vmatpush1.msra.mxu0 0.0
        %4692 = vmatprep.subr.mxu0 0.0
        %4693 = vmatpush1.msra.mxu0 0.0
        %4694 = vmatprep.subr.mxu0 0.0
        %4695 = vmatpush1.msra.mxu0 0.0
        %4696 = vmatprep.subr.mxu0 0.0
        %4697 = vmatpush1.msra.mxu0 0.0
        %4698 = vmatprep.subr.mxu0 0.0
        %4699 = vmatpush1.msra.mxu0 0.0
        %4700 = vmatprep.subr.mxu0 0.0
        %4701 = vmatpush1.msra.mxu0 0.0
        %4702 = vmatprep.subr.mxu0 0.0
        %4703 = vmatpush1.msra.mxu0 0.0
        %4704 = vmatprep.subr.mxu0 0.0
        %4705 = vmatpush1.msra.mxu0 0.0
        %4706 = vmatprep.subr.mxu0 0.0
        %4707 = vmatpush1.msra.mxu0 0.0
        %4708 = vmatprep.subr.mxu0 0.0
        %4709 = vmatpush1.msra.mxu0 0.0
        %4710 = vmatprep.subr.mxu0 0.0
        %4711 = vmatpush1.msra.mxu0 0.0
        %4712 = vmatprep.subr.mxu0 0.0
        %4713 = vmatpush1.msra.mxu0 0.0
        %4714 = vmatprep.subr.mxu0 0.0
        %4715 = vmatpush1.msra.mxu0 0.0
        %4716 = vmatprep.subr.mxu0 0.0
        %4717 = vmatpush1.msra.mxu0 0.0
        %4718 = vmatprep.subr.mxu0 0.0
        %4719 = vmatpush1.msra.mxu0 0.0
        %4720 = vmatprep.mubr.f32.mxu0 0.0
        %4721 = vmatmul.mubr.f32.gmra.mrb[0].mxu0 %v4630
        %v4722 = vpop.f32.mrb[0].mxu0
        %v4723 = vadd.f32 0.0, %v4722
        %v4724 = vpop.f32.mrb[0].mxu0
        %4725 = vmatprep.mubr.f32.mxu0 0.0
        %4726 = vmatmul.mubr.f32.gmra.mrb[0].mxu0 %v4631
        %v4727 = vpop.f32.mrb[0].mxu0
        %v4728 = vadd.f32 0.0, %v4727
        %v4729 = vpop.f32.mrb[0].mxu0
        %4730 = vmatprep.mubr.f32.mxu0 0.0
        %4731 = vmatmul.mubr.f32.gmra.mrb[0].mxu0 %v4632
        %v4732 = vpop.f32.mrb[0].mxu0
        %v4733 = vadd.f32 0.0, %v4732
        %v4734 = vpop.f32.mrb[0].mxu0
        %4735 = vmatprep.mubr.f32.mxu0 0.0
        %4736 = vmatmul.mubr.f32.gmra.mrb[0].mxu0 %v4633
        %v4737 = vpop.f32.mrb[0].mxu0
        %v4738 = vadd.f32 0.0, %v4737
        %v4739 = vpop.f32.mrb[0].mxu0
        %4740 = vmatprep.mubr.f32.mxu0 0.0
        %4741 = vmatmul.mubr.f32.gmra.mrb[0].mxu0 %v4634
        %v4742 = vpop.f32.mrb[0].mxu0
        %v4743 = vadd.f32 0.0, %v4742
        %v4744 = vpop.f32.mrb[0].mxu0
        %4745 = vmatprep.mubr.f32.mxu0 0.0
        %4746 = vmatmul.mubr.f32.gmra.mrb[0].mxu0 %v4635
        %v4747 = vpop.f32.mrb[0].mxu0
        %v4748 = vadd.f32 0.0, %v4747
        %v4749 = vpop.f32.mrb[0].mxu0
        %4750 = vmatprep.mubr.f32.mxu0 0.0
        %4751 = vmatmul.mubr.f32.gmra.mrb[0].mxu0 %v4636
        %v4752 = vpop.f32.mrb[0].mxu0
        %v4753 = vadd.f32 0.0, %v4752
        %v4754 = vpop.f32.mrb[0].mxu0
        %4755 = vmatprep.mubr.f32.mxu0 0.0
        %4756 = vmatmul.mubr.f32.gmra.mrb[0].mxu0 %v4637
        %v4757 = vpop.f32.mrb[0].mxu0
        %v4758 = vadd.f32 0.0, %v4757
        %v4759 = vpop.f32.mrb[0].mxu0
        %4760 = vmatprep.mubr.f32.mxu0 0.0
        %4761 = vmatmul.mubr.f32.gmra.mrb[0].mxu0 %v4638
        %v4762 = vpop.f32.mrb[0].mxu0
        %v4763 = vadd.f32 0.0, %v4762
        %v4764 = vpop.f32.mrb[0].mxu0
        %4765 = vmatprep.mubr.f32.mxu0 0.0
        %4766 = vmatmul.mubr.f32.gmra.mrb[0].mxu0 %v4639
        %v4767 = vpop.f32.mrb[0].mxu0
        %v4768 = vadd.f32 0.0, %v4767
        %v4769 = vpop.f32.mrb[0].mxu0
        %4770 = vdwg.mxu0
        %v4771 = vadd.f32 %v4620, %v4723
        %v4772 = vadd.f32 %v4621, %v4728
        %v4773 = vadd.f32 %v4622, %v4733
        %v4774 = vadd.f32 %v4623, %v4738
        %v4775 = vadd.f32 %v4624, %v4743
        %v4776 = vadd.f32 %v4625, %v4748
        %v4777 = vadd.f32 %v4626, %v4753
        %v4778 = vadd.f32 %v4627, %v4758
        %v4779 = vadd.f32 %v4628, %v4763
        %v4780 = vadd.f32 %v4629, %v4768
        %v4781 = vld [vmem:[#allocation3 + $0x16] sm:$0xff]
        %v4782 = vld [vmem:[#allocation3 + $0x1e] sm:$0xff]
        %v4783 = vld [vmem:[#allocation3 + $0x26] sm:$0xff]
        %v4784 = vld [vmem:[#allocation3 + $0x2e] sm:$0xff]
        %v4785 = vld [vmem:[#allocation3 + $0x36] sm:$0xff]
        %v4786 = vld [vmem:[#allocation3 + $0x3e] sm:$0xff]
        %v4787 = vld [vmem:[#allocation3 + $0x46] sm:$0xff]
        %v4788 = vld [vmem:[#allocation3 + $0x4e] sm:$0xff]
        %v4789 = vld [vmem:[#allocation3 + $0x56] sm:$0xff]
        %v4790 = vld [vmem:[#allocation3 + $0x5e] sm:$0xff]
        %v4791 = vld [vmem:[#allocation12 + $0x400] sm:$0xff]
        %v4792 = vld [vmem:[#allocation12 + $0x408] sm:$0xff]
        %v4793 = vld [vmem:[#allocation12 + $0x410] sm:$0xff]
        %v4794 = vld [vmem:[#allocation12 + $0x418] sm:$0xff]
        %v4795 = vld [vmem:[#allocation12 + $0x420] sm:$0xff]
        %v4796 = vld [vmem:[#allocation12 + $0x428] sm:$0xff]
        %v4797 = vld [vmem:[#allocation12 + $0x430] sm:$0xff]
        %v4798 = vld [vmem:[#allocation12 + $0x438] sm:$0xff]
        %v4799 = vld [vmem:[#allocation12 + $0x440] sm:$0xff]
        %v4800 = vld [vmem:[#allocation12 + $0x448] sm:$0xff]
        %v4801 = vld [vmem:[#allocation12 + $0x450] sm:$0xff]
        %v4802 = vld [vmem:[#allocation12 + $0x458] sm:$0xff]
        %v4803 = vld [vmem:[#allocation12 + $0x460] sm:$0xff]
        %v4804 = vld [vmem:[#allocation12 + $0x468] sm:$0xff]
        %v4805 = vld [vmem:[#allocation12 + $0x470] sm:$0xff]
        %v4806 = vld [vmem:[#allocation12 + $0x478] sm:$0xff]
        %4807 = vmatprep.subr.mxu0 0.0
        %4808 = vmatpush1.msra.mxu0 %v4791
        %4809 = vmatprep.subr.mxu0 0.0
        %4810 = vmatpush1.msra.mxu0 %v4792
        %4811 = vmatprep.subr.mxu0 0.0
        %4812 = vmatpush1.msra.mxu0 %v4793
        %4813 = vmatprep.subr.mxu0 0.0
        %4814 = vmatpush1.msra.mxu0 %v4794
        %4815 = vmatprep.subr.mxu0 0.0
        %4816 = vmatpush1.msra.mxu0 %v4795
        %4817 = vmatprep.subr.mxu0 0.0
        %4818 = vmatpush1.msra.mxu0 %v4796
        %4819 = vmatprep.subr.mxu0 0.0
        %4820 = vmatpush1.msra.mxu0 %v4797
        %4821 = vmatprep.subr.mxu0 0.0
        %4822 = vmatpush1.msra.mxu0 %v4798
        %4823 = vmatprep.subr.mxu0 0.0
        %4824 = vmatpush1.msra.mxu0 %v4799
        %4825 = vmatprep.subr.mxu0 0.0
        %4826 = vmatpush1.msra.mxu0 %v4800
        %4827 = vmatprep.subr.mxu0 0.0
        %4828 = vmatpush1.msra.mxu0 %v4801
        %4829 = vmatprep.subr.mxu0 0.0
        %4830 = vmatpush1.msra.mxu0 %v4802
        %4831 = vmatprep.subr.mxu0 0.0
        %4832 = vmatpush1.msra.mxu0 %v4803
        %4833 = vmatprep.subr.mxu0 0.0
        %4834 = vmatpush1.msra.mxu0 %v4804
        %4835 = vmatprep.subr.mxu0 0.0
        %4836 = vmatpush1.msra.mxu0 %v4805
        %4837 = vmatprep.subr.mxu0 0.0
        %4838 = vmatpush1.msra.mxu0 %v4806
        %4839 = vmatprep.subr.mxu0 0.0
        %4840 = vmatpush1.msra.mxu0 0.0
        %4841 = vmatprep.subr.mxu0 0.0
        %4842 = vmatpush1.msra.mxu0 0.0
        %4843 = vmatprep.subr.mxu0 0.0
        %4844 = vmatpush1.msra.mxu0 0.0
        %4845 = vmatprep.subr.mxu0 0.0
        %4846 = vmatpush1.msra.mxu0 0.0
        %4847 = vmatprep.subr.mxu0 0.0
        %4848 = vmatpush1.msra.mxu0 0.0
        %4849 = vmatprep.subr.mxu0 0.0
        %4850 = vmatpush1.msra.mxu0 0.0
        %4851 = vmatprep.subr.mxu0 0.0
        %4852 = vmatpush1.msra.mxu0 0.0
        %4853 = vmatprep.subr.mxu0 0.0
        %4854 = vmatpush1.msra.mxu0 0.0
        %4855 = vmatprep.subr.mxu0 0.0
        %4856 = vmatpush1.msra.mxu0 0.0
        %4857 = vmatprep.subr.mxu0 0.0
        %4858 = vmatpush1.msra.mxu0 0.0
        %4859 = vmatprep.subr.mxu0 0.0
        %4860 = vmatpush1.msra.mxu0 0.0
        %4861 = vmatprep.subr.mxu0 0.0
        %4862 = vmatpush1.msra.mxu0 0.0
        %4863 = vmatprep.subr.mxu0 0.0
        %4864 = vmatpush1.msra.mxu0 0.0
        %4865 = vmatprep.subr.mxu0 0.0
        %4866 = vmatpush1.msra.mxu0 0.0
        %4867 = vmatprep.subr.mxu0 0.0
        %4868 = vmatpush1.msra.mxu0 0.0
        %4869 = vmatprep.subr.mxu0 0.0
        %4870 = vmatpush1.msra.mxu0 0.0
        %4871 = vmatprep.mubr.f32.mxu0 0.0
        %4872 = vmatmul.mubr.f32.gmra.mrb[0].mxu0 %v4781
        %v4873 = vpop.f32.mrb[0].mxu0
        %v4874 = vadd.f32 0.0, %v4873
        %v4875 = vpop.f32.mrb[0].mxu0
        %4876 = vmatprep.mubr.f32.mxu0 0.0
        %4877 = vmatmul.mubr.f32.gmra.mrb[0].mxu0 %v4782
        %v4878 = vpop.f32.mrb[0].mxu0
        %v4879 = vadd.f32 0.0, %v4878
        %v4880 = vpop.f32.mrb[0].mxu0
        %4881 = vmatprep.mubr.f32.mxu0 0.0
        %4882 = vmatmul.mubr.f32.gmra.mrb[0].mxu0 %v4783
        %v4883 = vpop.f32.mrb[0].mxu0
        %v4884 = vadd.f32 0.0, %v4883
        %v4885 = vpop.f32.mrb[0].mxu0
        %4886 = vmatprep.mubr.f32.mxu0 0.0
        %4887 = vmatmul.mubr.f32.gmra.mrb[0].mxu0 %v4784
        %v4888 = vpop.f32.mrb[0].mxu0
        %v4889 = vadd.f32 0.0, %v4888
        %v4890 = vpop.f32.mrb[0].mxu0
        %4891 = vmatprep.mubr.f32.mxu0 0.0
        %4892 = vmatmul.mubr.f32.gmra.mrb[0].mxu0 %v4785
        %v4893 = vpop.f32.mrb[0].mxu0
        %v4894 = vadd.f32 0.0, %v4893
        %v4895 = vpop.f32.mrb[0].mxu0
        %4896 = vmatprep.mubr.f32.mxu0 0.0
        %4897 = vmatmul.mubr.f32.gmra.mrb[0].mxu0 %v4786
        %v4898 = vpop.f32.mrb[0].mxu0
        %v4899 = vadd.f32 0.0, %v4898
        %v4900 = vpop.f32.mrb[0].mxu0
        %4901 = vmatprep.mubr.f32.mxu0 0.0
        %4902 = vmatmul.mubr.f32.gmra.mrb[0].mxu0 %v4787
        %v4903 = vpop.f32.mrb[0].mxu0
        %v4904 = vadd.f32 0.0, %v4903
        %v4905 = vpop.f32.mrb[0].mxu0
        %4906 = vmatprep.mubr.f32.mxu0 0.0
        %4907 = vmatmul.mubr.f32.gmra.mrb[0].mxu0 %v4788
        %v4908 = vpop.f32.mrb[0].mxu0
        %v4909 = vadd.f32 0.0, %v4908
        %v4910 = vpop.f32.mrb[0].mxu0
        %4911 = vmatprep.mubr.f32.mxu0 0.0
        %4912 = vmatmul.mubr.f32.gmra.mrb[0].mxu0 %v4789
        %v4913 = vpop.f32.mrb[0].mxu0
        %v4914 = vadd.f32 0.0, %v4913
        %v4915 = vpop.f32.mrb[0].mxu0
        %4916 = vmatprep.mubr.f32.mxu0 0.0
        %4917 = vmatmul.mubr.f32.gmra.mrb[0].mxu0 %v4790
        %v4918 = vpop.f32.mrb[0].mxu0
        %v4919 = vadd.f32 0.0, %v4918
        %v4920 = vpop.f32.mrb[0].mxu0
        %4921 = vdwg.mxu0
        %v4922 = vadd.f32 %v4771, %v4874
        %v4923 = vadd.f32 %v4772, %v4879
        %v4924 = vadd.f32 %v4773, %v4884
        %v4925 = vadd.f32 %v4774, %v4889
        %v4926 = vadd.f32 %v4775, %v4894
        %v4927 = vadd.f32 %v4776, %v4899
        %v4928 = vadd.f32 %v4777, %v4904
        %v4929 = vadd.f32 %v4778, %v4909
        %v4930 = vadd.f32 %v4779, %v4914
        %v4931 = vadd.f32 %v4780, %v4919
        %4932 = vst [vmem:[#allocation2] sm:$0xff] %v4922
        %4933 = vst [vmem:[#allocation2 + $0x8] sm:$0xff] %v4923
        %4934 = vst [vmem:[#allocation2 + $0x10] sm:$0xff] %v4924
        %4935 = vst [vmem:[#allocation2 + $0x18] sm:$0xff] %v4925
        %4936 = vst [vmem:[#allocation2 + $0x20] sm:$0xff] %v4926
        %4937 = vst [vmem:[#allocation2 + $0x28] sm:$0xff] %v4927
        %4938 = vst [vmem:[#allocation2 + $0x30] sm:$0xff] %v4928
        %4939 = vst [vmem:[#allocation2 + $0x38] sm:$0xff] %v4929
        %4940 = vst [vmem:[#allocation2 + $0x40] sm:$0xff] %v4930
        %4941 = vst [vmem:[#allocation2 + $0x48] sm:$0xff] %v4931
        %v4942 = vld [vmem:[#allocation14] sm:$0x1]
        %v4944 = vlaneseq
        %v4945 = vshrl.u32 %v4944, 7
        %v4946 = vsub.s32 0, %v4945
        %v4947 = vrot.slane %v4942, %v4946
        %v4949 = vld [vmem:[#allocation2] ss:$2 sm:$0xf]
        %v4950 = vld [vmem:[%s3483] ss:$2 sm:$0xf]
        %v4951 = vmax.f32 %v4949, %v4950
        %s4952 = scalar_lea.vmem [#allocation2], 10
        %v4953 = vld [vmem:[%s4952] ss:$2 sm:$0xf]
        %v4954 = vmax.f32 %v4951, %v4953
        %s4955 = scalar_lea.vmem [#allocation2], 11
        %v4956 = vld [vmem:[%s4955] ss:$2 sm:$0xf]
        %v4957 = vmax.f32 %v4954, %v4956
        %v4958 = vadd.f32 %v4957, %v4947
        %v4959 = vmax.f32 %v4958, 0.0
        %4960 = vst [vmem:[#allocation4] sm:$0xf] %v4959
        %s4961 = scalar_lea.vmem [#allocation2], 20
        %v4962 = vld [vmem:[%s4961] ss:$2 sm:$0xf]
        %s4963 = scalar_lea.vmem [#allocation2], 21
        %v4964 = vld [vmem:[%s4963] ss:$2 sm:$0xf]
        %v4965 = vmax.f32 %v4962, %v4964
        %s4966 = scalar_lea.vmem [#allocation2], 30
        %v4967 = vld [vmem:[%s4966] ss:$2 sm:$0xf]
        %v4968 = vmax.f32 %v4965, %v4967
        %s4969 = scalar_lea.vmem [#allocation2], 31
        %v4970 = vld [vmem:[%s4969] ss:$2 sm:$0xf]
        %v4971 = vmax.f32 %v4968, %v4970
        %v4972 = vadd.f32 %v4971, %v4947
        %v4973 = vmax.f32 %v4972, 0.0
        %4974 = vst [vmem:[#allocation4 + $0x4] sm:$0xf] %v4973
        %s4975 = scalar_lea.vmem [#allocation2], 40
        %v4976 = vld [vmem:[%s4975] ss:$2 sm:$0xf]
        %s4977 = scalar_lea.vmem [#allocation2], 41
        %v4978 = vld [vmem:[%s4977] ss:$2 sm:$0xf]
        %v4979 = vmax.f32 %v4976, %v4978
        %s4980 = scalar_lea.vmem [#allocation2], 50
        %v4981 = vld [vmem:[%s4980] ss:$2 sm:$0xf]
        %v4982 = vmax.f32 %v4979, %v4981
        %s4983 = scalar_lea.vmem [#allocation2], 51
        %v4984 = vld [vmem:[%s4983] ss:$2 sm:$0xf]
        %v4985 = vmax.f32 %v4982, %v4984
        %v4986 = vadd.f32 %v4985, %v4947
        %v4987 = vmax.f32 %v4986, 0.0
        %4988 = vst [vmem:[#allocation4 + $0x8] sm:$0xf] %v4987
        %s4989 = scalar_lea.vmem [#allocation2], 60
        %v4990 = vld [vmem:[%s4989] ss:$2 sm:$0xf]
        %s4991 = scalar_lea.vmem [#allocation2], 61
        %v4992 = vld [vmem:[%s4991] ss:$2 sm:$0xf]
        %v4993 = vmax.f32 %v4990, %v4992
        %s4994 = scalar_lea.vmem [#allocation2], 70
        %v4995 = vld [vmem:[%s4994] ss:$2 sm:$0xf]
        %v4996 = vmax.f32 %v4993, %v4995
        %s4997 = scalar_lea.vmem [#allocation2], 71
        %v4998 = vld [vmem:[%s4997] ss:$2 sm:$0xf]
        %v4999 = vmax.f32 %v4996, %v4998
        %v5000 = vadd.f32 %v4999, %v4947
        %v5001 = vmax.f32 %v5000, 0.0
        %5002 = vst [vmem:[#allocation4 + $0xc] sm:$0xf] %v5001
        %v5003 = vld [vmem:[#allocation15] sm:$0xff]
        %v5004 = vld [vmem:[#allocation15 + $0x8] sm:$0xff]
        %v5005 = vld [vmem:[#allocation15 + $0x10] sm:$0xff]
        %v5006 = vld [vmem:[#allocation15 + $0x18] sm:$0xff]
        %v5007 = vld [vmem:[#allocation4] sm:$0xff]
        %v5008 = vld [vmem:[#allocation4 + $0x8] sm:$0xff]
        %vm5009 = vcmask 130048
        %v5011 = vsel %vm5009, %v5003, 0
        %v5014 = vsel %vm5009, %v5004, 0
        %v5017 = vsel %vm5009, %v5005, 0
        %v5020 = vsel %vm5009, %v5006, 0
        %5022 = vmatprep.subr.mxu0 0.0
        %5023 = vmatpush1.msra.mxu0 %v5007
        %5024 = vmatprep.subr.mxu0 0.0
        %5025 = vmatpush1.msra.mxu0 %v5008
        %5026 = vmatprep.subr.mxu0 0.0
        %5027 = vmatpush1.msra.mxu0 0.0
        %5028 = vmatprep.subr.mxu0 0.0
        %5029 = vmatpush1.msra.mxu0 0.0
        %5030 = vmatprep.subr.mxu0 0.0
        %5031 = vmatpush1.msra.mxu0 0.0
        %5032 = vmatprep.subr.mxu0 0.0
        %5033 = vmatpush1.msra.mxu0 0.0
        %5034 = vmatprep.subr.mxu0 0.0
        %5035 = vmatpush1.msra.mxu0 0.0
        %5036 = vmatprep.subr.mxu0 0.0
        %5037 = vmatpush1.msra.mxu0 0.0
        %5038 = vmatprep.subr.mxu0 0.0
        %5039 = vmatpush1.msra.mxu0 0.0
        %5040 = vmatprep.subr.mxu0 0.0
        %5041 = vmatpush1.msra.mxu0 0.0
        %5042 = vmatprep.subr.mxu0 0.0
        %5043 = vmatpush1.msra.mxu0 0.0
        %5044 = vmatprep.subr.mxu0 0.0
        %5045 = vmatpush1.msra.mxu0 0.0
        %5046 = vmatprep.subr.mxu0 0.0
        %5047 = vmatpush1.msra.mxu0 0.0
        %5048 = vmatprep.subr.mxu0 0.0
        %5049 = vmatpush1.msra.mxu0 0.0
        %5050 = vmatprep.subr.mxu0 0.0
        %5051 = vmatpush1.msra.mxu0 0.0
        %5052 = vmatprep.subr.mxu0 0.0
        %5053 = vmatpush1.msra.mxu0 0.0
        %5054 = vmatprep.subr.mxu0 0.0
        %5055 = vmatpush1.msra.mxu0 0.0
        %5056 = vmatprep.subr.mxu0 0.0
        %5057 = vmatpush1.msra.mxu0 0.0
        %5058 = vmatprep.subr.mxu0 0.0
        %5059 = vmatpush1.msra.mxu0 0.0
        %5060 = vmatprep.subr.mxu0 0.0
        %5061 = vmatpush1.msra.mxu0 0.0
        %5062 = vmatprep.subr.mxu0 0.0
        %5063 = vmatpush1.msra.mxu0 0.0
        %5064 = vmatprep.subr.mxu0 0.0
        %5065 = vmatpush1.msra.mxu0 0.0
        %5066 = vmatprep.subr.mxu0 0.0
        %5067 = vmatpush1.msra.mxu0 0.0
        %5068 = vmatprep.subr.mxu0 0.0
        %5069 = vmatpush1.msra.mxu0 0.0
        %5070 = vmatprep.subr.mxu0 0.0
        %5071 = vmatpush1.msra.mxu0 0.0
        %5072 = vmatprep.subr.mxu0 0.0
        %5073 = vmatpush1.msra.mxu0 0.0
        %5074 = vmatprep.subr.mxu0 0.0
        %5075 = vmatpush1.msra.mxu0 0.0
        %5076 = vmatprep.subr.mxu0 0.0
        %5077 = vmatpush1.msra.mxu0 0.0
        %5078 = vmatprep.subr.mxu0 0.0
        %5079 = vmatpush1.msra.mxu0 0.0
        %5080 = vmatprep.subr.mxu0 0.0
        %5081 = vmatpush1.msra.mxu0 0.0
        %5082 = vmatprep.subr.mxu0 0.0
        %5083 = vmatpush1.msra.mxu0 0.0
        %5084 = vmatprep.subr.mxu0 0.0
        %5085 = vmatpush1.msra.mxu0 0.0
        %5086 = vmatprep.mubr.f32.mxu0 0.0
        %5087 = vmatmul.mubr.f32.gmra.mrb[0].mxu0 %v5011
        %v5088 = vpop.f32.mrb[0].mxu0
        %v5089 = vadd.f32 0.0, %v5088
        %v5090 = vpop.f32.mrb[0].mxu0
        %5091 = vmatprep.mubr.f32.mxu0 0.0
        %5092 = vmatmul.mubr.f32.gmra.mrb[0].mxu0 %v5014
        %v5093 = vpop.f32.mrb[0].mxu0
        %v5094 = vadd.f32 0.0, %v5093
        %v5095 = vpop.f32.mrb[0].mxu0
        %5096 = vmatprep.mubr.f32.mxu0 0.0
        %5097 = vmatmul.mubr.f32.gmra.mrb[0].mxu0 %v5017
        %v5098 = vpop.f32.mrb[0].mxu0
        %v5099 = vadd.f32 0.0, %v5098
        %v5100 = vpop.f32.mrb[0].mxu0
        %5101 = vmatprep.mubr.f32.mxu0 0.0
        %5102 = vmatmul.mubr.f32.gmra.mrb[0].mxu0 %v5020
        %v5103 = vpop.f32.mrb[0].mxu0
        %v5104 = vadd.f32 0.0, %v5103
        %v5105 = vpop.f32.mrb[0].mxu0
        %5106 = vdwg.mxu0
        %5107 = vst [vmem:[#allocation5] sm:$0xff] %v5089
        %5108 = vst [vmem:[#allocation5 + $0x8] sm:$0xff] %v5094
        %5109 = vst [vmem:[#allocation5 + $0x10] sm:$0xff] %v5099
        %5110 = vst [vmem:[#allocation5 + $0x18] sm:$0xff] %v5104
        %v5111 = vld [vmem:[#allocation5] sm:$0xff]
        %v5112 = vld [vmem:[#allocation17] sm:$0xff]
        %v5113 = vld [vmem:[#allocation17 + $0x8] sm:$0xff]
        %v5114 = vld [vmem:[#allocation17 + $0x10] sm:$0xff]
        %v5115 = vld [vmem:[#allocation17 + $0x18] sm:$0xff]
        %v5116 = vld [vmem:[#allocation17 + $0x20] sm:$0xff]
        %v5117 = vld [vmem:[#allocation17 + $0x28] sm:$0xff]
        %v5118 = vld [vmem:[#allocation17 + $0x30] sm:$0xff]
        %v5119 = vld [vmem:[#allocation17 + $0x38] sm:$0xff]
        %v5120 = vld [vmem:[#allocation17 + $0x40] sm:$0xff]
        %v5121 = vld [vmem:[#allocation17 + $0x48] sm:$0xff]
        %v5122 = vld [vmem:[#allocation17 + $0x50] sm:$0xff]
        %v5123 = vld [vmem:[#allocation17 + $0x58] sm:$0xff]
        %v5124 = vld [vmem:[#allocation17 + $0x60] sm:$0xff]
        %v5125 = vld [vmem:[#allocation17 + $0x68] sm:$0xff]
        %v5126 = vld [vmem:[#allocation17 + $0x70] sm:$0xff]
        %v5127 = vld [vmem:[#allocation17 + $0x78] sm:$0xff]
        %v5128 = vld [vmem:[#allocation5 + $0x8] sm:$0xff]
        %v5129 = vld [vmem:[#allocation17 + $0x80] sm:$0xff]
        %v5130 = vld [vmem:[#allocation17 + $0x88] sm:$0xff]
        %v5131 = vld [vmem:[#allocation17 + $0x90] sm:$0xff]
        %v5132 = vld [vmem:[#allocation17 + $0x98] sm:$0xff]
        %v5133 = vld [vmem:[#allocation17 + $0xa0] sm:$0xff]
        %v5134 = vld [vmem:[#allocation17 + $0xa8] sm:$0xff]
        %v5135 = vld [vmem:[#allocation17 + $0xb0] sm:$0xff]
        %v5136 = vld [vmem:[#allocation17 + $0xb8] sm:$0xff]
        %v5137 = vld [vmem:[#allocation17 + $0xc0] sm:$0xff]
        %v5138 = vld [vmem:[#allocation17 + $0xc8] sm:$0xff]
        %v5139 = vld [vmem:[#allocation17 + $0xd0] sm:$0xff]
        %v5140 = vld [vmem:[#allocation17 + $0xd8] sm:$0xff]
        %v5141 = vld [vmem:[#allocation17 + $0xe0] sm:$0xff]
        %v5142 = vld [vmem:[#allocation17 + $0xe8] sm:$0xff]
        %v5143 = vld [vmem:[#allocation17 + $0xf0] sm:$0xff]
        %v5144 = vld [vmem:[#allocation17 + $0xf8] sm:$0xff]
        %5145 = vmatprep.subr.mxu0 0.0
        %5146 = vmatpush1.msra.mxu0 %v5129
        %5147 = vmatprep.subr.mxu0 0.0
        %5148 = vmatpush1.msra.mxu0 %v5130
        %5149 = vmatprep.subr.mxu0 0.0
        %5150 = vmatpush1.msra.mxu0 %v5131
        %5151 = vmatprep.subr.mxu0 0.0
        %5152 = vmatpush1.msra.mxu0 %v5132
        %5153 = vmatprep.subr.mxu0 0.0
        %5154 = vmatpush1.msra.mxu0 %v5133
        %5155 = vmatprep.subr.mxu0 0.0
        %5156 = vmatpush1.msra.mxu0 %v5134
        %5157 = vmatprep.subr.mxu0 0.0
        %5158 = vmatpush1.msra.mxu0 %v5135
        %5159 = vmatprep.subr.mxu0 0.0
        %5160 = vmatpush1.msra.mxu0 %v5136
        %5161 = vmatprep.subr.mxu0 0.0
        %5162 = vmatpush1.msra.mxu0 %v5137
        %5163 = vmatprep.subr.mxu0 0.0
        %5164 = vmatpush1.msra.mxu0 %v5138
        %5165 = vmatprep.subr.mxu0 0.0
        %5166 = vmatpush1.msra.mxu0 %v5139
        %5167 = vmatprep.subr.mxu0 0.0
        %5168 = vmatpush1.msra.mxu0 %v5140
        %5169 = vmatprep.subr.mxu0 0.0
        %5170 = vmatpush1.msra.mxu0 %v5141
        %5171 = vmatprep.subr.mxu0 0.0
        %5172 = vmatpush1.msra.mxu0 %v5142
        %5173 = vmatprep.subr.mxu0 0.0
        %5174 = vmatpush1.msra.mxu0 %v5143
        %5175 = vmatprep.subr.mxu0 0.0
        %5176 = vmatpush1.msra.mxu0 %v5144
        %5177 = vmatprep.subr.mxu0 0.0
        %5178 = vmatpush1.msra.mxu0 0.0
        %5179 = vmatprep.subr.mxu0 0.0
        %5180 = vmatpush1.msra.mxu0 0.0
        %5181 = vmatprep.subr.mxu0 0.0
        %5182 = vmatpush1.msra.mxu0 0.0
        %5183 = vmatprep.subr.mxu0 0.0
        %5184 = vmatpush1.msra.mxu0 0.0
        %5185 = vmatprep.subr.mxu0 0.0
        %5186 = vmatpush1.msra.mxu0 0.0
        %5187 = vmatprep.subr.mxu0 0.0
        %5188 = vmatpush1.msra.mxu0 0.0
        %5189 = vmatprep.subr.mxu0 0.0
        %5190 = vmatpush1.msra.mxu0 0.0
        %5191 = vmatprep.subr.mxu0 0.0
        %5192 = vmatpush1.msra.mxu0 0.0
        %5193 = vmatprep.subr.mxu0 0.0
        %5194 = vmatpush1.msra.mxu0 0.0
        %5195 = vmatprep.subr.mxu0 0.0
        %5196 = vmatpush1.msra.mxu0 0.0
        %5197 = vmatprep.subr.mxu0 0.0
        %5198 = vmatpush1.msra.mxu0 0.0
        %5199 = vmatprep.subr.mxu0 0.0
        %5200 = vmatpush1.msra.mxu0 0.0
        %5201 = vmatprep.subr.mxu0 0.0
        %5202 = vmatpush1.msra.mxu0 0.0
        %5203 = vmatprep.subr.mxu0 0.0
        %5204 = vmatpush1.msra.mxu0 0.0
        %5205 = vmatprep.subr.mxu0 0.0
        %5206 = vmatpush1.msra.mxu0 0.0
        %5207 = vmatprep.subr.mxu0 0.0
        %5208 = vmatpush1.msra.mxu0 0.0
        %5209 = vmatprep.mubr.f32.mxu0 0.0
        %5210 = vmatmul.mubr.f32.gmra.mrb[0].mxu0 %v5128
        %v5211 = vpop.f32.mrb[0].mxu0
        %v5212 = vadd.f32 0.0, %v5211
        %v5213 = vpop.f32.mrb[0].mxu0
        %5214 = vdwg.mxu0
        %5215 = vmatprep.subr.mxu0 0.0
        %5216 = vmatpush1.msra.mxu0 %v5112
        %5217 = vmatprep.subr.mxu0 0.0
        %5218 = vmatpush1.msra.mxu0 %v5113
        %5219 = vmatprep.subr.mxu0 0.0
        %5220 = vmatpush1.msra.mxu0 %v5114
        %5221 = vmatprep.subr.mxu0 0.0
        %5222 = vmatpush1.msra.mxu0 %v5115
        %5223 = vmatprep.subr.mxu0 0.0
        %5224 = vmatpush1.msra.mxu0 %v5116
        %5225 = vmatprep.subr.mxu0 0.0
        %5226 = vmatpush1.msra.mxu0 %v5117
        %5227 = vmatprep.subr.mxu0 0.0
        %5228 = vmatpush1.msra.mxu0 %v5118
        %5229 = vmatprep.subr.mxu0 0.0
        %5230 = vmatpush1.msra.mxu0 %v5119
        %5231 = vmatprep.subr.mxu0 0.0
        %5232 = vmatpush1.msra.mxu0 %v5120
        %5233 = vmatprep.subr.mxu0 0.0
        %5234 = vmatpush1.msra.mxu0 %v5121
        %5235 = vmatprep.subr.mxu0 0.0
        %5236 = vmatpush1.msra.mxu0 %v5122
        %5237 = vmatprep.subr.mxu0 0.0
        %5238 = vmatpush1.msra.mxu0 %v5123
        %5239 = vmatprep.subr.mxu0 0.0
        %5240 = vmatpush1.msra.mxu0 %v5124
        %5241 = vmatprep.subr.mxu0 0.0
        %5242 = vmatpush1.msra.mxu0 %v5125
        %5243 = vmatprep.subr.mxu0 0.0
        %5244 = vmatpush1.msra.mxu0 %v5126
        %5245 = vmatprep.subr.mxu0 0.0
        %5246 = vmatpush1.msra.mxu0 %v5127
        %5247 = vmatprep.subr.mxu0 0.0
        %5248 = vmatpush1.msra.mxu0 0.0
        %5249 = vmatprep.subr.mxu0 0.0
        %5250 = vmatpush1.msra.mxu0 0.0
        %5251 = vmatprep.subr.mxu0 0.0
        %5252 = vmatpush1.msra.mxu0 0.0
        %5253 = vmatprep.subr.mxu0 0.0
        %5254 = vmatpush1.msra.mxu0 0.0
        %5255 = vmatprep.subr.mxu0 0.0
        %5256 = vmatpush1.msra.mxu0 0.0
        %5257 = vmatprep.subr.mxu0 0.0
        %5258 = vmatpush1.msra.mxu0 0.0
        %5259 = vmatprep.subr.mxu0 0.0
        %5260 = vmatpush1.msra.mxu0 0.0
        %5261 = vmatprep.subr.mxu0 0.0
        %5262 = vmatpush1.msra.mxu0 0.0
        %5263 = vmatprep.subr.mxu0 0.0
        %5264 = vmatpush1.msra.mxu0 0.0
        %5265 = vmatprep.subr.mxu0 0.0
        %5266 = vmatpush1.msra.mxu0 0.0
        %5267 = vmatprep.subr.mxu0 0.0
        %5268 = vmatpush1.msra.mxu0 0.0
        %5269 = vmatprep.subr.mxu0 0.0
        %5270 = vmatpush1.msra.mxu0 0.0
        %5271 = vmatprep.subr.mxu0 0.0
        %5272 = vmatpush1.msra.mxu0 0.0
        %5273 = vmatprep.subr.mxu0 0.0
        %5274 = vmatpush1.msra.mxu0 0.0
        %5275 = vmatprep.subr.mxu0 0.0
        %5276 = vmatpush1.msra.mxu0 0.0
        %5277 = vmatprep.subr.mxu0 0.0
        %5278 = vmatpush1.msra.mxu0 0.0
        %5279 = vmatprep.mubr.f32.mxu0 0.0
        %5280 = vmatmul.mubr.f32.gmra.mrb[0].mxu0 %v5111
        %v5281 = vpop.f32.mrb[0].mxu0
        %v5282 = vadd.f32 %v5212, %v5281
        %v5283 = vpop.f32.mrb[0].mxu0
        %5284 = vdwg.mxu0
        %v5285 = vld [vmem:[#allocation5 + $0x10] sm:$0xff]
        %v5286 = vld [vmem:[#allocation17 + $0x100] sm:$0xff]
        %v5287 = vld [vmem:[#allocation17 + $0x108] sm:$0xff]
        %v5288 = vld [vmem:[#allocation17 + $0x110] sm:$0xff]
        %v5289 = vld [vmem:[#allocation17 + $0x118] sm:$0xff]
        %v5290 = vld [vmem:[#allocation17 + $0x120] sm:$0xff]
        %v5291 = vld [vmem:[#allocation17 + $0x128] sm:$0xff]
        %v5292 = vld [vmem:[#allocation17 + $0x130] sm:$0xff]
        %v5293 = vld [vmem:[#allocation17 + $0x138] sm:$0xff]
        %v5294 = vld [vmem:[#allocation17 + $0x140] sm:$0xff]
        %v5295 = vld [vmem:[#allocation17 + $0x148] sm:$0xff]
        %v5296 = vld [vmem:[#allocation17 + $0x150] sm:$0xff]
        %v5297 = vld [vmem:[#allocation17 + $0x158] sm:$0xff]
        %v5298 = vld [vmem:[#allocation17 + $0x160] sm:$0xff]
        %v5299 = vld [vmem:[#allocation17 + $0x168] sm:$0xff]
        %v5300 = vld [vmem:[#allocation17 + $0x170] sm:$0xff]
        %v5301 = vld [vmem:[#allocation17 + $0x178] sm:$0xff]
        %5302 = vmatprep.subr.mxu0 0.0
        %5303 = vmatpush1.msra.mxu0 %v5286
        %5304 = vmatprep.subr.mxu0 0.0
        %5305 = vmatpush1.msra.mxu0 %v5287
        %5306 = vmatprep.subr.mxu0 0.0
        %5307 = vmatpush1.msra.mxu0 %v5288
        %5308 = vmatprep.subr.mxu0 0.0
        %5309 = vmatpush1.msra.mxu0 %v5289
        %5310 = vmatprep.subr.mxu0 0.0
        %5311 = vmatpush1.msra.mxu0 %v5290
        %5312 = vmatprep.subr.mxu0 0.0
        %5313 = vmatpush1.msra.mxu0 %v5291
        %5314 = vmatprep.subr.mxu0 0.0
        %5315 = vmatpush1.msra.mxu0 %v5292
        %5316 = vmatprep.subr.mxu0 0.0
        %5317 = vmatpush1.msra.mxu0 %v5293
        %5318 = vmatprep.subr.mxu0 0.0
        %5319 = vmatpush1.msra.mxu0 %v5294
        %5320 = vmatprep.subr.mxu0 0.0
        %5321 = vmatpush1.msra.mxu0 %v5295
        %5322 = vmatprep.subr.mxu0 0.0
        %5323 = vmatpush1.msra.mxu0 %v5296
        %5324 = vmatprep.subr.mxu0 0.0
        %5325 = vmatpush1.msra.mxu0 %v5297
        %5326 = vmatprep.subr.mxu0 0.0
        %5327 = vmatpush1.msra.mxu0 %v5298
        %5328 = vmatprep.subr.mxu0 0.0
        %5329 = vmatpush1.msra.mxu0 %v5299
        %5330 = vmatprep.subr.mxu0 0.0
        %5331 = vmatpush1.msra.mxu0 %v5300
        %5332 = vmatprep.subr.mxu0 0.0
        %5333 = vmatpush1.msra.mxu0 %v5301
        %5334 = vmatprep.subr.mxu0 0.0
        %5335 = vmatpush1.msra.mxu0 0.0
        %5336 = vmatprep.subr.mxu0 0.0
        %5337 = vmatpush1.msra.mxu0 0.0
        %5338 = vmatprep.subr.mxu0 0.0
        %5339 = vmatpush1.msra.mxu0 0.0
        %5340 = vmatprep.subr.mxu0 0.0
        %5341 = vmatpush1.msra.mxu0 0.0
        %5342 = vmatprep.subr.mxu0 0.0
        %5343 = vmatpush1.msra.mxu0 0.0
        %5344 = vmatprep.subr.mxu0 0.0
        %5345 = vmatpush1.msra.mxu0 0.0
        %5346 = vmatprep.subr.mxu0 0.0
        %5347 = vmatpush1.msra.mxu0 0.0
        %5348 = vmatprep.subr.mxu0 0.0
        %5349 = vmatpush1.msra.mxu0 0.0
        %5350 = vmatprep.subr.mxu0 0.0
        %5351 = vmatpush1.msra.mxu0 0.0
        %5352 = vmatprep.subr.mxu0 0.0
        %5353 = vmatpush1.msra.mxu0 0.0
        %5354 = vmatprep.subr.mxu0 0.0
        %5355 = vmatpush1.msra.mxu0 0.0
        %5356 = vmatprep.subr.mxu0 0.0
        %5357 = vmatpush1.msra.mxu0 0.0
        %5358 = vmatprep.subr.mxu0 0.0
        %5359 = vmatpush1.msra.mxu0 0.0
        %5360 = vmatprep.subr.mxu0 0.0
        %5361 = vmatpush1.msra.mxu0 0.0
        %5362 = vmatprep.subr.mxu0 0.0
        %5363 = vmatpush1.msra.mxu0 0.0
        %5364 = vmatprep.subr.mxu0 0.0
        %5365 = vmatpush1.msra.mxu0 0.0
        %5366 = vmatprep.mubr.f32.mxu0 0.0
        %5367 = vmatmul.mubr.f32.gmra.mrb[0].mxu0 %v5285
        %v5368 = vpop.f32.mrb[0].mxu0
        %v5369 = vadd.f32 0.0, %v5368
        %v5370 = vpop.f32.mrb[0].mxu0
        %5371 = vdwg.mxu0
        %v5372 = vadd.f32 %v5282, %v5369
        %v5373 = vld [vmem:[#allocation5 + $0x18] sm:$0xff]
        %v5374 = vld [vmem:[#allocation17 + $0x180] sm:$0xff]
        %v5375 = vld [vmem:[#allocation17 + $0x188] sm:$0xff]
        %v5376 = vld [vmem:[#allocation17 + $0x190] sm:$0xff]
        %v5377 = vld [vmem:[#allocation17 + $0x198] sm:$0xff]
        %v5378 = vld [vmem:[#allocation17 + $0x1a0] sm:$0xff]
        %v5379 = vld [vmem:[#allocation17 + $0x1a8] sm:$0xff]
        %v5380 = vld [vmem:[#allocation17 + $0x1b0] sm:$0xff]
        %v5381 = vld [vmem:[#allocation17 + $0x1b8] sm:$0xff]
        %v5382 = vld [vmem:[#allocation17 + $0x1c0] sm:$0xff]
        %v5383 = vld [vmem:[#allocation17 + $0x1c8] sm:$0xff]
        %v5384 = vld [vmem:[#allocation17 + $0x1d0] sm:$0xff]
        %v5385 = vld [vmem:[#allocation17 + $0x1d8] sm:$0xff]
        %v5386 = vld [vmem:[#allocation17 + $0x1e0] sm:$0xff]
        %v5387 = vld [vmem:[#allocation17 + $0x1e8] sm:$0xff]
        %v5388 = vld [vmem:[#allocation17 + $0x1f0] sm:$0xff]
        %v5389 = vld [vmem:[#allocation17 + $0x1f8] sm:$0xff]
        %5390 = vmatprep.subr.mxu0 0.0
        %5391 = vmatpush1.msra.mxu0 %v5374
        %5392 = vmatprep.subr.mxu0 0.0
        %5393 = vmatpush1.msra.mxu0 %v5375
        %5394 = vmatprep.subr.mxu0 0.0
        %5395 = vmatpush1.msra.mxu0 %v5376
        %5396 = vmatprep.subr.mxu0 0.0
        %5397 = vmatpush1.msra.mxu0 %v5377
        %5398 = vmatprep.subr.mxu0 0.0
        %5399 = vmatpush1.msra.mxu0 %v5378
        %5400 = vmatprep.subr.mxu0 0.0
        %5401 = vmatpush1.msra.mxu0 %v5379
        %5402 = vmatprep.subr.mxu0 0.0
        %5403 = vmatpush1.msra.mxu0 %v5380
        %5404 = vmatprep.subr.mxu0 0.0
        %5405 = vmatpush1.msra.mxu0 %v5381
        %5406 = vmatprep.subr.mxu0 0.0
        %5407 = vmatpush1.msra.mxu0 %v5382
        %5408 = vmatprep.subr.mxu0 0.0
        %5409 = vmatpush1.msra.mxu0 %v5383
        %5410 = vmatprep.subr.mxu0 0.0
        %5411 = vmatpush1.msra.mxu0 %v5384
        %5412 = vmatprep.subr.mxu0 0.0
        %5413 = vmatpush1.msra.mxu0 %v5385
        %5414 = vmatprep.subr.mxu0 0.0
        %5415 = vmatpush1.msra.mxu0 %v5386
        %5416 = vmatprep.subr.mxu0 0.0
        %5417 = vmatpush1.msra.mxu0 %v5387
        %5418 = vmatprep.subr.mxu0 0.0
        %5419 = vmatpush1.msra.mxu0 %v5388
        %5420 = vmatprep.subr.mxu0 0.0
        %5421 = vmatpush1.msra.mxu0 %v5389
        %5422 = vmatprep.subr.mxu0 0.0
        %5423 = vmatpush1.msra.mxu0 0.0
        %5424 = vmatprep.subr.mxu0 0.0
        %5425 = vmatpush1.msra.mxu0 0.0
        %5426 = vmatprep.subr.mxu0 0.0
        %5427 = vmatpush1.msra.mxu0 0.0
        %5428 = vmatprep.subr.mxu0 0.0
        %5429 = vmatpush1.msra.mxu0 0.0
        %5430 = vmatprep.subr.mxu0 0.0
        %5431 = vmatpush1.msra.mxu0 0.0
        %5432 = vmatprep.subr.mxu0 0.0
        %5433 = vmatpush1.msra.mxu0 0.0
        %5434 = vmatprep.subr.mxu0 0.0
        %5435 = vmatpush1.msra.mxu0 0.0
        %5436 = vmatprep.subr.mxu0 0.0
        %5437 = vmatpush1.msra.mxu0 0.0
        %5438 = vmatprep.subr.mxu0 0.0
        %5439 = vmatpush1.msra.mxu0 0.0
        %5440 = vmatprep.subr.mxu0 0.0
        %5441 = vmatpush1.msra.mxu0 0.0
        %5442 = vmatprep.subr.mxu0 0.0
        %5443 = vmatpush1.msra.mxu0 0.0
        %5444 = vmatprep.subr.mxu0 0.0
        %5445 = vmatpush1.msra.mxu0 0.0
        %5446 = vmatprep.subr.mxu0 0.0
        %5447 = vmatpush1.msra.mxu0 0.0
        %5448 = vmatprep.subr.mxu0 0.0
        %5449 = vmatpush1.msra.mxu0 0.0
        %5450 = vmatprep.subr.mxu0 0.0
        %5451 = vmatpush1.msra.mxu0 0.0
        %5452 = vmatprep.subr.mxu0 0.0
        %5453 = vmatpush1.msra.mxu0 0.0
        %5454 = vmatprep.mubr.f32.mxu0 0.0
        %5455 = vmatmul.mubr.f32.gmra.mrb[0].mxu0 %v5373
        %v5456 = vpop.f32.mrb[0].mxu0
        %v5457 = vadd.f32 0.0, %v5456
        %v5458 = vpop.f32.mrb[0].mxu0
        %5459 = vdwg.mxu0
        %v5460 = vadd.f32 %v5372, %v5457
        %v5461 = vld [vmem:[#allocation18] sm:$0x1]
        %v5463 = vlaneseq
        %v5464 = vshrl.u32 %v5463, 7
        %v5465 = vsub.s32 0, %v5464
        %v5466 = vrot.slane %v5461, %v5465
        %v5468 = vadd.f32 %v5460, %v5466
        %v5469 = vmax.f32 %v5468, 0.0
        %v5470 = vld [vmem:[#allocation20] sm:$0xff]
        %v5471 = vld [vmem:[#allocation20 + $0x8] sm:$0xff]
        %v5472 = vld [vmem:[#allocation20 + $0x10] sm:$0xff]
        %v5473 = vld [vmem:[#allocation20 + $0x18] sm:$0xff]
        %v5474 = vld [vmem:[#allocation20 + $0x20] sm:$0xff]
        %v5475 = vld [vmem:[#allocation20 + $0x28] sm:$0xff]
        %v5476 = vld [vmem:[#allocation20 + $0x30] sm:$0xff]
        %v5477 = vld [vmem:[#allocation20 + $0x38] sm:$0xff]
        %v5478 = vld [vmem:[#allocation20 + $0x40] sm:$0xff]
        %v5479 = vld [vmem:[#allocation20 + $0x48] sm:$0xff]
        %v5480 = vld [vmem:[#allocation20 + $0x50] sm:$0xff]
        %v5481 = vld [vmem:[#allocation20 + $0x58] sm:$0xff]
        %v5482 = vld [vmem:[#allocation20 + $0x60] sm:$0xff]
        %v5483 = vld [vmem:[#allocation20 + $0x68] sm:$0xff]
        %v5484 = vld [vmem:[#allocation20 + $0x70] sm:$0xff]
        %v5485 = vld [vmem:[#allocation20 + $0x78] sm:$0xff]
        %v5486 = vld [vmem:[#allocation21] sm:$0x1]
        %v5488 = vlaneseq
        %v5489 = vshrl.u32 %v5488, 7
        %v5490 = vsub.s32 0, %v5489
        %v5491 = vrot.slane %v5486, %v5490
        %5493 = vmatprep.subr.mxu0 0.0
        %5494 = vmatpush1.msra.mxu0 %v5470
        %5495 = vmatprep.subr.mxu0 0.0
        %5496 = vmatpush1.msra.mxu0 %v5471
        %5497 = vmatprep.subr.mxu0 0.0
        %5498 = vmatpush1.msra.mxu0 %v5472
        %5499 = vmatprep.subr.mxu0 0.0
        %5500 = vmatpush1.msra.mxu0 %v5473
        %5501 = vmatprep.subr.mxu0 0.0
        %5502 = vmatpush1.msra.mxu0 %v5474
        %5503 = vmatprep.subr.mxu0 0.0
        %5504 = vmatpush1.msra.mxu0 %v5475
        %5505 = vmatprep.subr.mxu0 0.0
        %5506 = vmatpush1.msra.mxu0 %v5476
        %5507 = vmatprep.subr.mxu0 0.0
        %5508 = vmatpush1.msra.mxu0 %v5477
        %5509 = vmatprep.subr.mxu0 0.0
        %5510 = vmatpush1.msra.mxu0 %v5478
        %5511 = vmatprep.subr.mxu0 0.0
        %5512 = vmatpush1.msra.mxu0 %v5479
        %5513 = vmatprep.subr.mxu0 0.0
        %5514 = vmatpush1.msra.mxu0 %v5480
        %5515 = vmatprep.subr.mxu0 0.0
        %5516 = vmatpush1.msra.mxu0 %v5481
        %5517 = vmatprep.subr.mxu0 0.0
        %5518 = vmatpush1.msra.mxu0 %v5482
        %5519 = vmatprep.subr.mxu0 0.0
        %5520 = vmatpush1.msra.mxu0 %v5483
        %5521 = vmatprep.subr.mxu0 0.0
        %5522 = vmatpush1.msra.mxu0 %v5484
        %5523 = vmatprep.subr.mxu0 0.0
        %5524 = vmatpush1.msra.mxu0 %v5485
        %5525 = vmatprep.subr.mxu0 0.0
        %5526 = vmatpush1.msra.mxu0 0.0
        %5527 = vmatprep.subr.mxu0 0.0
        %5528 = vmatpush1.msra.mxu0 0.0
        %5529 = vmatprep.subr.mxu0 0.0
        %5530 = vmatpush1.msra.mxu0 0.0
        %5531 = vmatprep.subr.mxu0 0.0
        %5532 = vmatpush1.msra.mxu0 0.0
        %5533 = vmatprep.subr.mxu0 0.0
        %5534 = vmatpush1.msra.mxu0 0.0
        %5535 = vmatprep.subr.mxu0 0.0
        %5536 = vmatpush1.msra.mxu0 0.0
        %5537 = vmatprep.subr.mxu0 0.0
        %5538 = vmatpush1.msra.mxu0 0.0
        %5539 = vmatprep.subr.mxu0 0.0
        %5540 = vmatpush1.msra.mxu0 0.0
        %5541 = vmatprep.subr.mxu0 0.0
        %5542 = vmatpush1.msra.mxu0 0.0
        %5543 = vmatprep.subr.mxu0 0.0
        %5544 = vmatpush1.msra.mxu0 0.0
        %5545 = vmatprep.subr.mxu0 0.0
        %5546 = vmatpush1.msra.mxu0 0.0
        %5547 = vmatprep.subr.mxu0 0.0
        %5548 = vmatpush1.msra.mxu0 0.0
        %5549 = vmatprep.subr.mxu0 0.0
        %5550 = vmatpush1.msra.mxu0 0.0
        %5551 = vmatprep.subr.mxu0 0.0
        %5552 = vmatpush1.msra.mxu0 0.0
        %5553 = vmatprep.subr.mxu0 0.0
        %5554 = vmatpush1.msra.mxu0 0.0
        %5555 = vmatprep.subr.mxu0 0.0
        %5556 = vmatpush1.msra.mxu0 0.0
        %5557 = vmatprep.mubr.f32.mxu0 0.0
        %5558 = vmatmul.mubr.f32.gmra.mrb[0].mxu0 %v5469
        %v5559 = vpop.f32.mrb[0].mxu0
        %v5560 = vadd.f32 %v5491, %v5559
        %v5561 = vpop.f32.mrb[0].mxu0
        %5562 = vdwg.mxu0
        %5563 = vst [vmem:[%s500] sm:$0xff] %v5560
        %s5564 = sand.u32 %s255, 1
        %s5565 = scalar_lea.sflag [#allocation8], %s5564
        %s5566 = sand.u32 %s255, 1
        %s5567 = smul.addr %s5566, 8
        %s5568 = scalar_lea.vmem [#allocation23], %s5567
        // Predicated region
        $region101: #{tpu_custom_call.1} parent=59 // pred_check
          %p5569 = pneg %p265
        $region102: #{tpu_custom_call.1} parent=59 // pred_check_branch
          %5571 = sbr.rel (%p5569) target = $region104
        $region103: #{tpu_custom_call.1} parent=59 // pred_region
          %s5573 = ssub.s32 128, 128
          %5574 = vsyncadd %s5565, %s5573
          %s5575 = smul.addr %s32, 128
          %s5576 = scalar_lea.hbm %s10, %s5575
          %s5578 = sshll.u32 %s5568, 4
          %s5579 = int_to_ptr.vmem [resolvable:$true] %s5578
          %5581 = dma.vmem_to_hbm [thread:$0]  %s5579, 128, %s5576, %s5565
        $region104: #{tpu_custom_call.1} parent=59 // pred_fallthru
          _
      $region60: #{tpu_custom_call.1} parent=5 // pred_fallthru
        _
      %p5582 = scmp.le.s32.totalorder 2, %s27
      // Predicated region
      $region105: #{tpu_custom_call.1} parent=5 // pred_check
        %p5583 = pneg %p5582
      $region106: #{tpu_custom_call.1} parent=5 // pred_check_branch
        %5585 = sbr.rel (%p5583) target = $region108
      $region107: #{tpu_custom_call.1} parent=5 // pred_region
        %s5586 = ssub.s32 %s27, 2
        // Predicated region
        $region109: #{tpu_custom_call.1} parent=107 // pred_check
          %p5587 = pneg %p271
        $region110: #{tpu_custom_call.1} parent=107 // pred_check_branch
          %5589 = sbr.rel (%p5587) target = $region112
        $region111: #{tpu_custom_call.1} parent=107 // pred_region
          %s5590 = sand.u32 %s256, 1
          %s5591 = scalar_lea.sflag [#allocation8], %s5590
          %s5592 = sand.u32 %s256, 1
          %s5593 = smul.addr %s5592, 8
          %s5594 = scalar_lea.vmem [#allocation23], %s5593
          %5595 = dma.done %s5591, 128
        $region112: #{tpu_custom_call.1} parent=107 // pred_fallthru
          _
      $region108: #{tpu_custom_call.1} parent=5 // pred_fallthru
        _
    $region6: #{tpu_custom_call.1} parent=1 // loop_footer
      %s31 = sadd.s32 1, %s27
    $region7: #{tpu_custom_call.1} parent=1 // loop_footer_branch
      %26 = sbr.rel target = $region3
    $region8: #{tpu_custom_call.1} parent=1 // loop_exit
      _
    %5596 = vsyncpa [#allocation7], 1
    %s5597 = scalar_lea.sflag [#allocation7], 1
    %5598 = vsyncpa %s5597, 1
    %5599 = vsyncpa [#allocation10], 1
    %5600 = vsyncpa [#allocation13], 1
    %5601 = vsyncpa [#allocation16], 1
    %5602 = vsyncpa [#allocation19], 1
    %5603 = vsyncpa [#allocation22], 1
    %5604 = vsyncpa [#allocation8], 1
    %s5605 = scalar_lea.sflag [#allocation8], 1
    %5606 = vsyncpa %s5605, 1

</llo_original>
